<compile_context>
chip_gen: v7x
topology: tpu7x:2x2x1
jax: 0.10.0
libtpu: 0.0.40
codegen_flags: <defaults>
</compile_context>

<pallas_src>
import jax
import jax.numpy as jnp
from jax import lax
from jax.experimental import pallas as pl
from jax.experimental.pallas import tpu as pltpu


# ----------------------------------------------------------------------------
# Fused Pallas kernel (built per static shape set, per batch block of BB imgs)
# ----------------------------------------------------------------------------
def _make_fused_kernel(BB, H1, W1, C0, C1, C2, C3, n_classes, fuse_taps=True):
    H2, W2 = H1 // 2, W1 // 2
    H3, W3 = H2 // 2, W2 // 2
    Hp1, Wp1 = H1 + 2, W1 + 2
    Hp2, Wp2 = H2 + 2, W2 + 2
    Hp3, Wp3 = H3 + 2, W3 + 2
    S1, S2, S3 = BB * Hp1 * Wp1, BB * Hp2 * Wp2, BB * Hp3 * Wp3
    M1, M2, M3 = Wp1 + 1, Wp2 + 1, Wp3 + 1        # tap-margin rows on each side

    def conv3x3(xp_ref, w_ref, S, Wp, cin):
        """3x3 / pad-1 conv over the row-flattened padded activation.

        xp_ref rows: [margin (Wp+1) | padded images, S rows | margin (Wp+1)].
        Output row s = conv response at padded position s (pad-ring / image-seam
        rows are garbage; they are never consumed downstream).
        """
        if fuse_taps:
            # Gather the 9 shifted row slices into one (S, 9*Cin) tap matrix and
            # do a single MXU dot with K = 9*Cin (amortizes MXU fill, 1 push
            # instead of 9).
            taps = [xp_ref[pl.ds(dh * Wp + dw, S), :]
                    for dh in range(3) for dw in range(3)]
            tap_mat = jnp.concatenate(taps, axis=-1)           # (S, 9*Cin)
            return jnp.dot(tap_mat, w_ref[...],
                           preferred_element_type=jnp.float32)  # (S, Cout)
        # Portability fallback (identical numerics): 9 accumulating per-tap dots.
        acc = None
        for t in range(9):
            dh, dw = divmod(t, 3)
            tap = xp_ref[pl.ds(dh * Wp + dw, S), :]            # (S, Cin)
            w_t = w_ref[pl.ds(t * cin, cin), :]                # (Cin, Cout)
            z = tap * w_t if cin == 1 else jnp.dot(
                tap, w_t, preferred_element_type=jnp.float32)
            acc = z if acc is None else acc + z
        return acc

    def pool_into(y_ref, b_ref, nxt_ref, Hp, Wp, Hn, Wn, Mn):
        """2x2/2 max-pool + hoisted (exact) bias+ReLU, written straight into the
        interior of the next layer's zero-padded flat VMEM scratch.

        Per pooled row: 4 strided loads + 3 maxes + bias/ReLU + 1 store, which is
        within ~20% of the op floor for this layout; a full-tile max over the
        padded grid would cost ~5x more vreg ops at these shapes (see header).
        """
        Hpn, Wpn = Hn + 2, Wn + 2
        # Only the pad ring of nxt strictly needs zeroing, but the ring is
        # scattered (top/bottom rows + 2 columns per image row), so one
        # full-tile zero store is cheaper/simpler than ~Hn tiny ring stores.
        nxt_ref[...] = jnp.zeros_like(nxt_ref)
        bias = b_ref[...]                                      # (1, Cout)
        for b in range(BB):
            for yn in range(1, Hn + 1):
                src = b * Hp * Wp + (2 * yn - 1) * Wp + 1      # top-left of 2x2 rows
                r00 = y_ref[pl.ds(src,          Wn, stride=2), :]
                r01 = y_ref[pl.ds(src + 1,      Wn, stride=2), :]
                r10 = y_ref[pl.ds(src + Wp,     Wn, stride=2), :]
                r11 = y_ref[pl.ds(src + Wp + 1, Wn, stride=2), :]
                m = jnp.maximum(jnp.maximum(r00, r01), jnp.maximum(r10, r11))
                m = jnp.maximum(m + bias, 0.0)                 # bias+ReLU after max: exact
                dst = Mn + b * Hpn * Wpn + yn * Wpn + 1
                nxt_ref[pl.ds(dst, Wn), :] = m

    def kernel(xp1_ref, w1_ref, b1_ref, w2_ref, b2_ref, w3_ref, b3_ref,
               wfc_ref, bfc_ref, o_ref,
               y1_ref, xp2_ref, y2_ref, xp3_ref, y3_ref, gm_ref):
        # ---- layer 1: conv -> (pool + bias + ReLU) into padded scratch 2 ----
        y1_ref[...] = conv3x3(xp1_ref, w1_ref, S1, Wp1, C0)
        pool_into(y1_ref, b1_ref, xp2_ref, Hp1, Wp1, H2, W2, M2)
        # ---- layer 2 ----
        y2_ref[...] = conv3x3(xp2_ref, w2_ref, S2, Wp2, C1)
        pool_into(y2_ref, b2_ref, xp3_ref, Hp2, Wp2, H3, W3, M3)
        # ---- layer 3: pool3 + AdaptiveMaxPool2d(1) fuse into one global max --
        y3_ref[...] = conv3x3(xp3_ref, w3_ref, S3, Wp3, C2)

        # ---- head: per-image global max over valid H3 x W3 positions, then one
        #      batched (BB, C3) @ (C3, n_classes) dot and ONE output store. ----
        for b in range(BB):
            m = None
            for yy in range(1, H3 + 1):
                row = y3_ref[pl.ds(b * Hp3 * Wp3 + yy * Wp3 + 1, W3), :]  # (W3, C3)
                m = row if m is None else jnp.maximum(m, row)
            gm_ref[pl.ds(b, 1), :] = jnp.max(m, axis=0, keepdims=True)
        gm = jnp.maximum(gm_ref[...] + b3_ref[...], 0.0)       # hoisted bias+ReLU: exact
        o_ref[...] = (jnp.dot(gm, wfc_ref[...],
                              preferred_element_type=jnp.float32) + bfc_ref[...])

    scratch = [
        pltpu.VMEM((S1, C1), jnp.float32),              # y1  (conv1 out, padded grid)
        pltpu.VMEM((S2 + 2 * M2, C1), jnp.float32),     # xp2 (padded act 2 + margin)
        pltpu.VMEM((S2, C2), jnp.float32),              # y2
        pltpu.VMEM((S3 + 2 * M3, C2), jnp.float32),     # xp3
        pltpu.VMEM((S3, C3), jnp.float32),              # y3
        pltpu.VMEM((BB, C3), jnp.float32),              # per-block global-max rows
    ]
    return kernel, scratch


# ----------------------------------------------------------------------------
# Forward-pass wrapper: single pallas_call, grid over batch blocks
# ----------------------------------------------------------------------------
def adaptive_convnet_forward(x_nchw, params, fuse_taps=True):
    B, C0, H, W = x_nchw.shape
    assert H % 4 == 0 and W % 4 == 0, "spatial dims must be divisible by 4"
    C1 = params["w1"].shape[0]
    C2 = params["w2"].shape[0]
    C3 = params["w3"].shape[0]
    n_classes = params["wfc"].shape[0]

    # Batch grid: 2 parallel blocks when possible so both v7x TensorCores get
    # work (plain loop on v5e/v6e).  Per-block scratch keeps VMEM bounded.
    num_blocks = 2 if (B >= 2 and B % 2 == 0) else 1
    BB = B // num_blocks

    kernel, scratch = _make_fused_kernel(BB, H, W, C0, C1, C2, C3, n_classes,
                                         fuse_taps=fuse_taps)

    # NCHW -> NHWC, zero-pad spatially, flatten each block's images into a
    # row-major (rows, C) slab and add the +-(Wp+1) tap-margin rows (their
    # contents only feed never-consumed border conv rows).
    Hp, Wp = H + 2, W + 2
    M1 = Wp + 1
    x = jnp.transpose(x_nchw, (0, 2, 3, 1)).astype(jnp.float32)
    x = jnp.pad(x, ((0, 0), (1, 1), (1, 1), (0, 0)))           # (B, Hp, Wp, C0)
    x = x.reshape(num_blocks, BB * Hp * Wp, C0)
    x = jnp.pad(x, ((0, 0), (M1, M1), (0, 0)))                 # (nb, S1 + 2*M1, C0)
    S1slab = BB * Hp * Wp + 2 * M1

    def conv_w(wt):  # torch (Cout, Cin, 3, 3) -> (9*Cin, Cout), tap-major K
        co, ci = wt.shape[0], wt.shape[1]
        return jnp.transpose(wt, (2, 3, 1, 0)).reshape(9 * ci, co).astype(jnp.float32)

    args = (
        x,
        conv_w(params["w1"]), params["b1"].reshape(1, -1).astype(jnp.float32),
        conv_w(params["w2"]), params["b2"].reshape(1, -1).astype(jnp.float32),
        conv_w(params["w3"]), params["b3"].reshape(1, -1).astype(jnp.float32),
        params["wfc"].T.astype(jnp.float32),
        params["bfc"].reshape(1, -1).astype(jnp.float32),
    )

    vmem = pl.BlockSpec(memory_space=pltpu.MemorySpace.VMEM)   # whole array resident
    in_specs = ([pl.BlockSpec((None, S1slab, C0), lambda i: (i, 0, 0))]
                + [vmem] * 8)
    out_specs = pl.BlockSpec((None, BB, n_classes), lambda i: (i, 0, 0))

    out = pl.pallas_call(
        kernel,
        out_shape=jax.ShapeDtypeStruct((num_blocks, BB, n_classes), jnp.float32),
        grid=(num_blocks,),
        in_specs=in_specs,
        out_specs=out_specs,
        scratch_shapes=scratch,
        compiler_params=pltpu.CompilerParams(
            dimension_semantics=("parallel",)),
    )(*args)
    return out.reshape(B, n_classes)


# ----------------------------------------------------------------------------
# Parameters (deterministic, synthetic) and plain-JAX reference
# ----------------------------------------------------------------------------
def init_params(key, n=16):
    ks = jax.random.split(key, 8)

    def w(k, shape):
        return jax.random.normal(k, shape, jnp.float32) * 0.1

    return {
        "w1": w(ks[0], (16, 1, 3, 3)),  "b1": w(ks[1], (16,)),
        "w2": w(ks[2], (32, 16, 3, 3)), "b2": w(ks[3], (32,)),
        "w3": w(ks[4], (n, 32, 3, 3)),  "b3": w(ks[5], (n,)),
        "wfc": w(ks[6], (10, n)),       "bfc": w(ks[7], (10,)),
    }


def reference_forward(x_nchw, params):
    """Plain-JAX reference mirroring the PyTorch forward (for validation)."""
    x = jnp.transpose(x_nchw, (0, 2, 3, 1)).astype(jnp.float32)
    for wt, bs in [(params["w1"], params["b1"]),
                   (params["w2"], params["b2"]),
                   (params["w3"], params["b3"])]:
        wh = jnp.transpose(wt, (2, 3, 1, 0))                   # HWIO
        x = lax.conv_general_dilated(x, wh, window_strides=(1, 1),
                                     padding=((1, 1), (1, 1)),
                                     dimension_numbers=("NHWC", "HWIO", "NHWC"))
        x = jax.nn.relu(x + bs)
        x = lax.reduce_window(x, -jnp.inf, lax.max,
                              (1, 2, 2, 1), (1, 2, 2, 1), "VALID")
    gm = jnp.max(x, axis=(1, 2))
    return gm @ params["wfc"].T + params["bfc"]


if __name__ == "__main__":
    key = jax.random.PRNGKey(0)
    pkey, xkey = jax.random.split(key)
    params = init_params(pkey, n=16)
    x = jax.random.normal(xkey, (2, 1, 16, 16), jnp.float32)   # NCHW, like PyTorch

    try:
        fwd = jax.jit(adaptive_convnet_forward)
        out = jax.block_until_ready(fwd(x, params))
    except Exception:
        # Belt-and-braces portability: if this Mosaic build rejects the
        # unaligned minor-dim tap concatenation, fall back to the per-tap
        # accumulating-dot conv (identical numerics, compiles everywhere).
        fwd = jax.jit(lambda xx, pp: adaptive_convnet_forward(xx, pp,
                                                              fuse_taps=False))
        out = jax.block_until_ready(fwd(x, params))

    ref = reference_forward(x, params)
    assert out.shape == (2, 10), out.shape
    assert jnp.allclose(out, ref, rtol=1e-3, atol=1e-3), (out, ref)
    print("KERNEL_OK")
</pallas_src>

<mosaic_0001>
module attributes {stable_mosaic.version = 11 : i64} {
  func.func @kernel(%arg0: i32, %arg1: memref<1x362x1xf32, #tpu.memory_space<vmem>>, %arg2: memref<9x16xf32, #tpu.memory_space<vmem>>, %arg3: memref<1x16xf32, #tpu.memory_space<vmem>>, %arg4: memref<144x32xf32, #tpu.memory_space<vmem>>, %arg5: memref<1x32xf32, #tpu.memory_space<vmem>>, %arg6: memref<288x16xf32, #tpu.memory_space<vmem>>, %arg7: memref<1x16xf32, #tpu.memory_space<vmem>>, %arg8: memref<16x10xf32, #tpu.memory_space<vmem>>, %arg9: memref<1x10xf32, #tpu.memory_space<vmem>>, %arg10: memref<1x1x10xf32, #tpu.memory_space<vmem>>, %arg11: memref<324x16xf32, #tpu.memory_space<vmem>>, %arg12: memref<122x16xf32, #tpu.memory_space<vmem>>, %arg13: memref<100x32xf32, #tpu.memory_space<vmem>>, %arg14: memref<50x32xf32, #tpu.memory_space<vmem>>, %arg15: memref<36x16xf32, #tpu.memory_space<vmem>>, %arg16: memref<1x16xf32, #tpu.memory_space<vmem>>) attributes {dimension_semantics = [#tpu.dimension_semantics<parallel>], iteration_bounds = array<i64: 2>, scalar_prefetch = 0 : i64, scratch_operands = 6 : i64, tpu.core_type = #tpu.core_type<tc>, window_params = [{transform_indices = @transform_0, window_bounds = array<i64: 1, 362, 1>}, {pipeline_mode = #tpu.pipeline_mode<synchronous>, transform_indices = @transform_1, window_bounds = array<i64: 9, 16>}, {pipeline_mode = #tpu.pipeline_mode<synchronous>, transform_indices = @transform_2, window_bounds = array<i64: 1, 16>}, {pipeline_mode = #tpu.pipeline_mode<synchronous>, transform_indices = @transform_3, window_bounds = array<i64: 144, 32>}, {pipeline_mode = #tpu.pipeline_mode<synchronous>, transform_indices = @transform_4, window_bounds = array<i64: 1, 32>}, {pipeline_mode = #tpu.pipeline_mode<synchronous>, transform_indices = @transform_5, window_bounds = array<i64: 288, 16>}, {pipeline_mode = #tpu.pipeline_mode<synchronous>, transform_indices = @transform_6, window_bounds = array<i64: 1, 16>}, {pipeline_mode = #tpu.pipeline_mode<synchronous>, transform_indices = @transform_7, window_bounds = array<i64: 16, 10>}, {pipeline_mode = #tpu.pipeline_mode<synchronous>, transform_indices = @transform_8, window_bounds = array<i64: 1, 10>}, {transform_indices = @transform_9, window_bounds = array<i64: 1, 1, 10>}]} {
    %c0 = arith.constant 0 : index
    %c0_0 = arith.constant 0 : index
    %c0_1 = arith.constant 0 : index
    %0 = vector.load %arg1[%c0, %c0_0, %c0_1] : memref<1x362x1xf32, #tpu.memory_space<vmem>>, vector<1x324x1xf32>
    %1 = vector.shape_cast %0 : vector<1x324x1xf32> to vector<324x1xf32>
    %c0_2 = arith.constant 0 : index
    %c1 = arith.constant 1 : index
    %c0_3 = arith.constant 0 : index
    %2 = vector.load %arg1[%c0_2, %c1, %c0_3] : memref<1x362x1xf32, #tpu.memory_space<vmem>>, vector<1x324x1xf32>
    %3 = vector.shape_cast %2 : vector<1x324x1xf32> to vector<324x1xf32>
    %c0_4 = arith.constant 0 : index
    %c2 = arith.constant 2 : index
    %c0_5 = arith.constant 0 : index
    %4 = vector.load %arg1[%c0_4, %c2, %c0_5] : memref<1x362x1xf32, #tpu.memory_space<vmem>>, vector<1x324x1xf32>
    %5 = vector.shape_cast %4 : vector<1x324x1xf32> to vector<324x1xf32>
    %c0_6 = arith.constant 0 : index
    %c18 = arith.constant 18 : index
    %c0_7 = arith.constant 0 : index
    %6 = vector.load %arg1[%c0_6, %c18, %c0_7] : memref<1x362x1xf32, #tpu.memory_space<vmem>>, vector<1x324x1xf32>
    %7 = vector.shape_cast %6 : vector<1x324x1xf32> to vector<324x1xf32>
    %c0_8 = arith.constant 0 : index
    %c19 = arith.constant 19 : index
    %c0_9 = arith.constant 0 : index
    %8 = vector.load %arg1[%c0_8, %c19, %c0_9] : memref<1x362x1xf32, #tpu.memory_space<vmem>>, vector<1x324x1xf32>
    %9 = vector.shape_cast %8 : vector<1x324x1xf32> to vector<324x1xf32>
    %c0_10 = arith.constant 0 : index
    %c20 = arith.constant 20 : index
    %c0_11 = arith.constant 0 : index
    %10 = vector.load %arg1[%c0_10, %c20, %c0_11] : memref<1x362x1xf32, #tpu.memory_space<vmem>>, vector<1x324x1xf32>
    %11 = vector.shape_cast %10 : vector<1x324x1xf32> to vector<324x1xf32>
    %c0_12 = arith.constant 0 : index
    %c36 = arith.constant 36 : index
    %c0_13 = arith.constant 0 : index
    %12 = vector.load %arg1[%c0_12, %c36, %c0_13] : memref<1x362x1xf32, #tpu.memory_space<vmem>>, vector<1x324x1xf32>
    %13 = vector.shape_cast %12 : vector<1x324x1xf32> to vector<324x1xf32>
    %c0_14 = arith.constant 0 : index
    %c37 = arith.constant 37 : index
    %c0_15 = arith.constant 0 : index
    %14 = vector.load %arg1[%c0_14, %c37, %c0_15] : memref<1x362x1xf32, #tpu.memory_space<vmem>>, vector<1x324x1xf32>
    %15 = vector.shape_cast %14 : vector<1x324x1xf32> to vector<324x1xf32>
    %c0_16 = arith.constant 0 : index
    %c38 = arith.constant 38 : index
    %c0_17 = arith.constant 0 : index
    %16 = vector.load %arg1[%c0_16, %c38, %c0_17] : memref<1x362x1xf32, #tpu.memory_space<vmem>>, vector<1x324x1xf32>
    %17 = vector.shape_cast %16 : vector<1x324x1xf32> to vector<324x1xf32>
    %18 = tpu.concatenate %1, %3, %5, %7, %9, %11, %13, %15, %17 in 1 : vector<324x1xf32>, vector<324x1xf32>, vector<324x1xf32>, vector<324x1xf32>, vector<324x1xf32>, vector<324x1xf32>, vector<324x1xf32>, vector<324x1xf32>, vector<324x1xf32> -> vector<324x9xf32>
    %c0_18 = arith.constant 0 : index
    %c0_19 = arith.constant 0 : index
    %19 = vector.load %arg2[%c0_18, %c0_19] : memref<9x16xf32, #tpu.memory_space<vmem>>, vector<9x16xf32>
    %cst = arith.constant dense<0.000000e+00> : vector<324x16xf32>
    %20 = tpu.matmul %18, %19, %cst {dimension_numbers = #tpu.dot_dimension_numbers<[1], [0], [0], [1], [0, 0, 1, 1], [], []>} : vector<324x9xf32>, vector<9x16xf32>, vector<324x16xf32> -> vector<324x16xf32>
    %c0_20 = arith.constant 0 : index
    %c0_21 = arith.constant 0 : index
    %21 = vector.load %arg11[%c0_20, %c0_21] : memref<324x16xf32, #tpu.memory_space<vmem>>, vector<324x16xf32>
    tpu.vector_store %arg11[%c0_20, %c0_21], %20 {strides = array<i32>} : memref<324x16xf32, #tpu.memory_space<vmem>>, vector<324x16xf32>,
    %cst_22 = arith.constant 0.000000e+00 : f32
    %22 = vector.broadcast %cst_22 : f32 to vector<122x16xf32>
    %c0_23 = arith.constant 0 : index
    %c0_24 = arith.constant 0 : index
    %23 = vector.load %arg12[%c0_23, %c0_24] : memref<122x16xf32, #tpu.memory_space<vmem>>, vector<122x16xf32>
    tpu.vector_store %arg12[%c0_23, %c0_24], %22 {strides = array<i32>} : memref<122x16xf32, #tpu.memory_space<vmem>>, vector<122x16xf32>,
    %c0_25 = arith.constant 0 : index
    %c0_26 = arith.constant 0 : index
    %24 = vector.load %arg3[%c0_25, %c0_26] : memref<1x16xf32, #tpu.memory_space<vmem>>, vector<1x16xf32>
    %c19_27 = arith.constant 19 : index
    %c0_28 = arith.constant 0 : index
    %25 = tpu.strided_load %arg11[%c19_27, %c0_28] {strides = array<i32: 2, 1>} : memref<324x16xf32, #tpu.memory_space<vmem>>, vector<8x16xf32>
    %c20_29 = arith.constant 20 : index
    %c0_30 = arith.constant 0 : index
    %26 = tpu.strided_load %arg11[%c20_29, %c0_30] {strides = array<i32: 2, 1>} : memref<324x16xf32, #tpu.memory_space<vmem>>, vector<8x16xf32>
    %c37_31 = arith.constant 37 : index
    %c0_32 = arith.constant 0 : index
    %27 = tpu.strided_load %arg11[%c37_31, %c0_32] {strides = array<i32: 2, 1>} : memref<324x16xf32, #tpu.memory_space<vmem>>, vector<8x16xf32>
    %c38_33 = arith.constant 38 : index
    %c0_34 = arith.constant 0 : index
    %28 = tpu.strided_load %arg11[%c38_33, %c0_34] {strides = array<i32: 2, 1>} : memref<324x16xf32, #tpu.memory_space<vmem>>, vector<8x16xf32>
    %29 = arith.maximumf %25, %26 : vector<8x16xf32>
    %30 = arith.maximumf %27, %28 : vector<8x16xf32>
    %31 = arith.maximumf %29, %30 : vector<8x16xf32>
    %32 = vector.broadcast %24 : vector<1x16xf32> to vector<8x16xf32>
    %33 = arith.addf %31, %32 : vector<8x16xf32>
    %cst_35 = arith.constant 0.000000e+00 : f32
    %34 = vector.broadcast %cst_35 : f32 to vector<8x16xf32>
    %35 = arith.maximumf %33, %34 : vector<8x16xf32>
    %c22 = arith.constant 22 : index
    %c0_36 = arith.constant 0 : index
    %36 = vector.load %arg12[%c22, %c0_36] : memref<122x16xf32, #tpu.memory_space<vmem>>, vector<8x16xf32>
    tpu.vector_store %arg12[%c22, %c0_36], %35 {strides = array<i32>} : memref<122x16xf32, #tpu.memory_space<vmem>>, vector<8x16xf32>,
    %c55 = arith.constant 55 : index
    %c0_37 = arith.constant 0 : index
    %37 = tpu.strided_load %arg11[%c55, %c0_37] {strides = array<i32: 2, 1>} : memref<324x16xf32, #tpu.memory_space<vmem>>, vector<8x16xf32>
    %c56 = arith.constant 56 : index
    %c0_38 = arith.constant 0 : index
    %38 = tpu.strided_load %arg11[%c56, %c0_38] {strides = array<i32: 2, 1>} : memref<324x16xf32, #tpu.memory_space<vmem>>, vector<8x16xf32>
    %c73 = arith.constant 73 : index
    %c0_39 = arith.constant 0 : index
    %39 = tpu.strided_load %arg11[%c73, %c0_39] {strides = array<i32: 2, 1>} : memref<324x16xf32, #tpu.memory_space<vmem>>, vector<8x16xf32>
    %c74 = arith.constant 74 : index
    %c0_40 = arith.constant 0 : index
    %40 = tpu.strided_load %arg11[%c74, %c0_40] {strides = array<i32: 2, 1>} : memref<324x16xf32, #tpu.memory_space<vmem>>, vector<8x16xf32>
    %41 = arith.maximumf %37, %38 : vector<8x16xf32>
    %42 = arith.maximumf %39, %40 : vector<8x16xf32>
    %43 = arith.maximumf %41, %42 : vector<8x16xf32>
    %44 = vector.broadcast %24 : vector<1x16xf32> to vector<8x16xf32>
    %45 = arith.addf %43, %44 : vector<8x16xf32>
    %cst_41 = arith.constant 0.000000e+00 : f32
    %46 = vector.broadcast %cst_41 : f32 to vector<8x16xf32>
    %47 = arith.maximumf %45, %46 : vector<8x16xf32>
    %c32 = arith.constant 32 : index
    %c0_42 = arith.constant 0 : index
    %48 = vector.load %arg12[%c32, %c0_42] : memref<122x16xf32, #tpu.memory_space<vmem>>, vector<8x16xf32>
    tpu.vector_store %arg12[%c32, %c0_42], %47 {strides = array<i32>} : memref<122x16xf32, #tpu.memory_space<vmem>>, vector<8x16xf32>,
    %c91 = arith.constant 91 : index
    %c0_43 = arith.constant 0 : index
    %49 = tpu.strided_load %arg11[%c91, %c0_43] {strides = array<i32: 2, 1>} : memref<324x16xf32, #tpu.memory_space<vmem>>, vector<8x16xf32>
    %c92 = arith.constant 92 : index
    %c0_44 = arith.constant 0 : index
    %50 = tpu.strided_load %arg11[%c92, %c0_44] {strides = array<i32: 2, 1>} : memref<324x16xf32, #tpu.memory_space<vmem>>, vector<8x16xf32>
    %c109 = arith.constant 109 : index
    %c0_45 = arith.constant 0 : index
    %51 = tpu.strided_load %arg11[%c109, %c0_45] {strides = array<i32: 2, 1>} : memref<324x16xf32, #tpu.memory_space<vmem>>, vector<8x16xf32>
    %c110 = arith.constant 110 : index
    %c0_46 = arith.constant 0 : index
    %52 = tpu.strided_load %arg11[%c110, %c0_46] {strides = array<i32: 2, 1>} : memref<324x16xf32, #tpu.memory_space<vmem>>, vector<8x16xf32>
    %53 = arith.maximumf %49, %50 : vector<8x16xf32>
    %54 = arith.maximumf %51, %52 : vector<8x16xf32>
    %55 = arith.maximumf %53, %54 : vector<8x16xf32>
    %56 = vector.broadcast %24 : vector<1x16xf32> to vector<8x16xf32>
    %57 = arith.addf %55, %56 : vector<8x16xf32>
    %cst_47 = arith.constant 0.000000e+00 : f32
    %58 = vector.broadcast %cst_47 : f32 to vector<8x16xf32>
    %59 = arith.maximumf %57, %58 : vector<8x16xf32>
    %c42 = arith.constant 42 : index
    %c0_48 = arith.constant 0 : index
    %60 = vector.load %arg12[%c42, %c0_48] : memref<122x16xf32, #tpu.memory_space<vmem>>, vector<8x16xf32>
    tpu.vector_store %arg12[%c42, %c0_48], %59 {strides = array<i32>} : memref<122x16xf32, #tpu.memory_space<vmem>>, vector<8x16xf32>,
    %c127 = arith.constant 127 : index
    %c0_49 = arith.constant 0 : index
    %61 = tpu.strided_load %arg11[%c127, %c0_49] {strides = array<i32: 2, 1>} : memref<324x16xf32, #tpu.memory_space<vmem>>, vector<8x16xf32>
    %c128 = arith.constant 128 : index
    %c0_50 = arith.constant 0 : index
    %62 = tpu.strided_load %arg11[%c128, %c0_50] {strides = array<i32: 2, 1>} : memref<324x16xf32, #tpu.memory_space<vmem>>, vector<8x16xf32>
    %c145 = arith.constant 145 : index
    %c0_51 = arith.constant 0 : index
    %63 = tpu.strided_load %arg11[%c145, %c0_51] {strides = array<i32: 2, 1>} : memref<324x16xf32, #tpu.memory_space<vmem>>, vector<8x16xf32>
    %c146 = arith.constant 146 : index
    %c0_52 = arith.constant 0 : index
    %64 = tpu.strided_load %arg11[%c146, %c0_52] {strides = array<i32: 2, 1>} : memref<324x16xf32, #tpu.memory_space<vmem>>, vector<8x16xf32>
    %65 = arith.maximumf %61, %62 : vector<8x16xf32>
    %66 = arith.maximumf %63, %64 : vector<8x16xf32>
    %67 = arith.maximumf %65, %66 : vector<8x16xf32>
    %68 = vector.broadcast %24 : vector<1x16xf32> to vector<8x16xf32>
    %69 = arith.addf %67, %68 : vector<8x16xf32>
    %cst_53 = arith.constant 0.000000e+00 : f32
    %70 = vector.broadcast %cst_53 : f32 to vector<8x16xf32>
    %71 = arith.maximumf %69, %70 : vector<8x16xf32>
    %c52 = arith.constant 52 : index
    %c0_54 = arith.constant 0 : index
    %72 = vector.load %arg12[%c52, %c0_54] : memref<122x16xf32, #tpu.memory_space<vmem>>, vector<8x16xf32>
    tpu.vector_store %arg12[%c52, %c0_54], %71 {strides = array<i32>} : memref<122x16xf32, #tpu.memory_space<vmem>>, vector<8x16xf32>,
    %c163 = arith.constant 163 : index
    %c0_55 = arith.constant 0 : index
    %73 = tpu.strided_load %arg11[%c163, %c0_55] {strides = array<i32: 2, 1>} : memref<324x16xf32, #tpu.memory_space<vmem>>, vector<8x16xf32>
    %c164 = arith.constant 164 : index
    %c0_56 = arith.constant 0 : index
    %74 = tpu.strided_load %arg11[%c164, %c0_56] {strides = array<i32: 2, 1>} : memref<324x16xf32, #tpu.memory_space<vmem>>, vector<8x16xf32>
    %c181 = arith.constant 181 : index
    %c0_57 = arith.constant 0 : index
    %75 = tpu.strided_load %arg11[%c181, %c0_57] {strides = array<i32: 2, 1>} : memref<324x16xf32, #tpu.memory_space<vmem>>, vector<8x16xf32>
    %c182 = arith.constant 182 : index
    %c0_58 = arith.constant 0 : index
    %76 = tpu.strided_load %arg11[%c182, %c0_58] {strides = array<i32: 2, 1>} : memref<324x16xf32, #tpu.memory_space<vmem>>, vector<8x16xf32>
    %77 = arith.maximumf %73, %74 : vector<8x16xf32>
    %78 = arith.maximumf %75, %76 : vector<8x16xf32>
    %79 = arith.maximumf %77, %78 : vector<8x16xf32>
    %80 = vector.broadcast %24 : vector<1x16xf32> to vector<8x16xf32>
    %81 = arith.addf %79, %80 : vector<8x16xf32>
    %cst_59 = arith.constant 0.000000e+00 : f32
    %82 = vector.broadcast %cst_59 : f32 to vector<8x16xf32>
    %83 = arith.maximumf %81, %82 : vector<8x16xf32>
    %c62 = arith.constant 62 : index
    %c0_60 = arith.constant 0 : index
    %84 = vector.load %arg12[%c62, %c0_60] : memref<122x16xf32, #tpu.memory_space<vmem>>, vector<8x16xf32>
    tpu.vector_store %arg12[%c62, %c0_60], %83 {strides = array<i32>} : memref<122x16xf32, #tpu.memory_space<vmem>>, vector<8x16xf32>,
    %c199 = arith.constant 199 : index
    %c0_61 = arith.constant 0 : index
    %85 = tpu.strided_load %arg11[%c199, %c0_61] {strides = array<i32: 2, 1>} : memref<324x16xf32, #tpu.memory_space<vmem>>, vector<8x16xf32>
    %c200 = arith.constant 200 : index
    %c0_62 = arith.constant 0 : index
    %86 = tpu.strided_load %arg11[%c200, %c0_62] {strides = array<i32: 2, 1>} : memref<324x16xf32, #tpu.memory_space<vmem>>, vector<8x16xf32>
    %c217 = arith.constant 217 : index
    %c0_63 = arith.constant 0 : index
    %87 = tpu.strided_load %arg11[%c217, %c0_63] {strides = array<i32: 2, 1>} : memref<324x16xf32, #tpu.memory_space<vmem>>, vector<8x16xf32>
    %c218 = arith.constant 218 : index
    %c0_64 = arith.constant 0 : index
    %88 = tpu.strided_load %arg11[%c218, %c0_64] {strides = array<i32: 2, 1>} : memref<324x16xf32, #tpu.memory_space<vmem>>, vector<8x16xf32>
    %89 = arith.maximumf %85, %86 : vector<8x16xf32>
    %90 = arith.maximumf %87, %88 : vector<8x16xf32>
    %91 = arith.maximumf %89, %90 : vector<8x16xf32>
    %92 = vector.broadcast %24 : vector<1x16xf32> to vector<8x16xf32>
    %93 = arith.addf %91, %92 : vector<8x16xf32>
    %cst_65 = arith.constant 0.000000e+00 : f32
    %94 = vector.broadcast %cst_65 : f32 to vector<8x16xf32>
    %95 = arith.maximumf %93, %94 : vector<8x16xf32>
    %c72 = arith.constant 72 : index
    %c0_66 = arith.constant 0 : index
    %96 = vector.load %arg12[%c72, %c0_66] : memref<122x16xf32, #tpu.memory_space<vmem>>, vector<8x16xf32>
    tpu.vector_store %arg12[%c72, %c0_66], %95 {strides = array<i32>} : memref<122x16xf32, #tpu.memory_space<vmem>>, vector<8x16xf32>,
    %c235 = arith.constant 235 : index
    %c0_67 = arith.constant 0 : index
    %97 = tpu.strided_load %arg11[%c235, %c0_67] {strides = array<i32: 2, 1>} : memref<324x16xf32, #tpu.memory_space<vmem>>, vector<8x16xf32>
    %c236 = arith.constant 236 : index
    %c0_68 = arith.constant 0 : index
    %98 = tpu.strided_load %arg11[%c236, %c0_68] {strides = array<i32: 2, 1>} : memref<324x16xf32, #tpu.memory_space<vmem>>, vector<8x16xf32>
    %c253 = arith.constant 253 : index
    %c0_69 = arith.constant 0 : index
    %99 = tpu.strided_load %arg11[%c253, %c0_69] {strides = array<i32: 2, 1>} : memref<324x16xf32, #tpu.memory_space<vmem>>, vector<8x16xf32>
    %c254 = arith.constant 254 : index
    %c0_70 = arith.constant 0 : index
    %100 = tpu.strided_load %arg11[%c254, %c0_70] {strides = array<i32: 2, 1>} : memref<324x16xf32, #tpu.memory_space<vmem>>, vector<8x16xf32>
    %101 = arith.maximumf %97, %98 : vector<8x16xf32>
    %102 = arith.maximumf %99, %100 : vector<8x16xf32>
    %103 = arith.maximumf %101, %102 : vector<8x16xf32>
    %104 = vector.broadcast %24 : vector<1x16xf32> to vector<8x16xf32>
    %105 = arith.addf %103, %104 : vector<8x16xf32>
    %cst_71 = arith.constant 0.000000e+00 : f32
    %106 = vector.broadcast %cst_71 : f32 to vector<8x16xf32>
    %107 = arith.maximumf %105, %106 : vector<8x16xf32>
    %c82 = arith.constant 82 : index
    %c0_72 = arith.constant 0 : index
    %108 = vector.load %arg12[%c82, %c0_72] : memref<122x16xf32, #tpu.memory_space<vmem>>, vector<8x16xf32>
    tpu.vector_store %arg12[%c82, %c0_72], %107 {strides = array<i32>} : memref<122x16xf32, #tpu.memory_space<vmem>>, vector<8x16xf32>,
    %c271 = arith.constant 271 : index
    %c0_73 = arith.constant 0 : index
    %109 = tpu.strided_load %arg11[%c271, %c0_73] {strides = array<i32: 2, 1>} : memref<324x16xf32, #tpu.memory_space<vmem>>, vector<8x16xf32>
    %c272 = arith.constant 272 : index
    %c0_74 = arith.constant 0 : index
    %110 = tpu.strided_load %arg11[%c272, %c0_74] {strides = array<i32: 2, 1>} : memref<324x16xf32, #tpu.memory_space<vmem>>, vector<8x16xf32>
    %c289 = arith.constant 289 : index
    %c0_75 = arith.constant 0 : index
    %111 = tpu.strided_load %arg11[%c289, %c0_75] {strides = array<i32: 2, 1>} : memref<324x16xf32, #tpu.memory_space<vmem>>, vector<8x16xf32>
    %c290 = arith.constant 290 : index
    %c0_76 = arith.constant 0 : index
    %112 = tpu.strided_load %arg11[%c290, %c0_76] {strides = array<i32: 2, 1>} : memref<324x16xf32, #tpu.memory_space<vmem>>, vector<8x16xf32>
    %113 = arith.maximumf %109, %110 : vector<8x16xf32>
    %114 = arith.maximumf %111, %112 : vector<8x16xf32>
    %115 = arith.maximumf %113, %114 : vector<8x16xf32>
    %116 = vector.broadcast %24 : vector<1x16xf32> to vector<8x16xf32>
    %117 = arith.addf %115, %116 : vector<8x16xf32>
    %cst_77 = arith.constant 0.000000e+00 : f32
    %118 = vector.broadcast %cst_77 : f32 to vector<8x16xf32>
    %119 = arith.maximumf %117, %118 : vector<8x16xf32>
    %c92_78 = arith.constant 92 : index
    %c0_79 = arith.constant 0 : index
    %120 = vector.load %arg12[%c92_78, %c0_79] : memref<122x16xf32, #tpu.memory_space<vmem>>, vector<8x16xf32>
    tpu.vector_store %arg12[%c92_78, %c0_79], %119 {strides = array<i32>} : memref<122x16xf32, #tpu.memory_space<vmem>>, vector<8x16xf32>,
    %c0_80 = arith.constant 0 : index
    %c0_81 = arith.constant 0 : index
    %121 = vector.load %arg12[%c0_80, %c0_81] : memref<122x16xf32, #tpu.memory_space<vmem>>, vector<100x16xf32>
    %c1_82 = arith.constant 1 : index
    %c0_83 = arith.constant 0 : index
    %122 = vector.load %arg12[%c1_82, %c0_83] : memref<122x16xf32, #tpu.memory_space<vmem>>, vector<100x16xf32>
    %c2_84 = arith.constant 2 : index
    %c0_85 = arith.constant 0 : index
    %123 = vector.load %arg12[%c2_84, %c0_85] : memref<122x16xf32, #tpu.memory_space<vmem>>, vector<100x16xf32>
    %c10 = arith.constant 10 : index
    %c0_86 = arith.constant 0 : index
    %124 = vector.load %arg12[%c10, %c0_86] : memref<122x16xf32, #tpu.memory_space<vmem>>, vector<100x16xf32>
    %c11 = arith.constant 11 : index
    %c0_87 = arith.constant 0 : index
    %125 = vector.load %arg12[%c11, %c0_87] : memref<122x16xf32, #tpu.memory_space<vmem>>, vector<100x16xf32>
    %c12 = arith.constant 12 : index
    %c0_88 = arith.constant 0 : index
    %126 = vector.load %arg12[%c12, %c0_88] : memref<122x16xf32, #tpu.memory_space<vmem>>, vector<100x16xf32>
    %c20_89 = arith.constant 20 : index
    %c0_90 = arith.constant 0 : index
    %127 = vector.load %arg12[%c20_89, %c0_90] : memref<122x16xf32, #tpu.memory_space<vmem>>, vector<100x16xf32>
    %c21 = arith.constant 21 : index
    %c0_91 = arith.constant 0 : index
    %128 = vector.load %arg12[%c21, %c0_91] : memref<122x16xf32, #tpu.memory_space<vmem>>, vector<100x16xf32>
    %c22_92 = arith.constant 22 : index
    %c0_93 = arith.constant 0 : index
    %129 = vector.load %arg12[%c22_92, %c0_93] : memref<122x16xf32, #tpu.memory_space<vmem>>, vector<100x16xf32>
    %130 = tpu.concatenate %121, %122, %123, %124, %125, %126, %127, %128, %129 in 1 : vector<100x16xf32>, vector<100x16xf32>, vector<100x16xf32>, vector<100x16xf32>, vector<100x16xf32>, vector<100x16xf32>, vector<100x16xf32>, vector<100x16xf32>, vector<100x16xf32> -> vector<100x144xf32>
    %c0_94 = arith.constant 0 : index
    %c0_95 = arith.constant 0 : index
    %131 = vector.load %arg4[%c0_94, %c0_95] : memref<144x32xf32, #tpu.memory_space<vmem>>, vector<144x32xf32>
    %cst_96 = arith.constant dense<0.000000e+00> : vector<100x32xf32>
    %132 = tpu.matmul %130, %131, %cst_96 {dimension_numbers = #tpu.dot_dimension_numbers<[1], [0], [0], [1], [0, 0, 1, 1], [], []>} : vector<100x144xf32>, vector<144x32xf32>, vector<100x32xf32> -> vector<100x32xf32>
    %c0_97 = arith.constant 0 : index
    %c0_98 = arith.constant 0 : index
    %133 = vector.load %arg13[%c0_97, %c0_98] : memref<100x32xf32, #tpu.memory_space<vmem>>, vector<100x32xf32>
    tpu.vector_store %arg13[%c0_97, %c0_98], %132 {strides = array<i32>} : memref<100x32xf32, #tpu.memory_space<vmem>>, vector<100x32xf32>,
    %cst_99 = arith.constant 0.000000e+00 : f32
    %134 = vector.broadcast %cst_99 : f32 to vector<50x32xf32>
    %c0_100 = arith.constant 0 : index
    %c0_101 = arith.constant 0 : index
    %135 = vector.load %arg14[%c0_100, %c0_101] : memref<50x32xf32, #tpu.memory_space<vmem>>, vector<50x32xf32>
    tpu.vector_store %arg14[%c0_100, %c0_101], %134 {strides = array<i32>} : memref<50x32xf32, #tpu.memory_space<vmem>>, vector<50x32xf32>,
    %c0_102 = arith.constant 0 : index
    %c0_103 = arith.constant 0 : index
    %136 = vector.load %arg5[%c0_102, %c0_103] : memref<1x32xf32, #tpu.memory_space<vmem>>, vector<1x32xf32>
    %c11_104 = arith.constant 11 : index
    %c0_105 = arith.constant 0 : index
    %137 = tpu.strided_load %arg13[%c11_104, %c0_105] {strides = array<i32: 2, 1>} : memref<100x32xf32, #tpu.memory_space<vmem>>, vector<4x32xf32>
    %c12_106 = arith.constant 12 : index
    %c0_107 = arith.constant 0 : index
    %138 = tpu.strided_load %arg13[%c12_106, %c0_107] {strides = array<i32: 2, 1>} : memref<100x32xf32, #tpu.memory_space<vmem>>, vector<4x32xf32>
    %c21_108 = arith.constant 21 : index
    %c0_109 = arith.constant 0 : index
    %139 = tpu.strided_load %arg13[%c21_108, %c0_109] {strides = array<i32: 2, 1>} : memref<100x32xf32, #tpu.memory_space<vmem>>, vector<4x32xf32>
    %c22_110 = arith.constant 22 : index
    %c0_111 = arith.constant 0 : index
    %140 = tpu.strided_load %arg13[%c22_110, %c0_111] {strides = array<i32: 2, 1>} : memref<100x32xf32, #tpu.memory_space<vmem>>, vector<4x32xf32>
    %141 = arith.maximumf %137, %138 : vector<4x32xf32>
    %142 = arith.maximumf %139, %140 : vector<4x32xf32>
    %143 = arith.maximumf %141, %142 : vector<4x32xf32>
    %144 = vector.broadcast %136 : vector<1x32xf32> to vector<4x32xf32>
    %145 = arith.addf %143, %144 : vector<4x32xf32>
    %cst_112 = arith.constant 0.000000e+00 : f32
    %146 = vector.broadcast %cst_112 : f32 to vector<4x32xf32>
    %147 = arith.maximumf %145, %146 : vector<4x32xf32>
    %c14 = arith.constant 14 : index
    %c0_113 = arith.constant 0 : index
    %148 = vector.load %arg14[%c14, %c0_113] : memref<50x32xf32, #tpu.memory_space<vmem>>, vector<4x32xf32>
    tpu.vector_store %arg14[%c14, %c0_113], %147 {strides = array<i32>} : memref<50x32xf32, #tpu.memory_space<vmem>>, vector<4x32xf32>,
    %c31 = arith.constant 31 : index
    %c0_114 = arith.constant 0 : index
    %149 = tpu.strided_load %arg13[%c31, %c0_114] {strides = array<i32: 2, 1>} : memref<100x32xf32, #tpu.memory_space<vmem>>, vector<4x32xf32>
    %c32_115 = arith.constant 32 : index
    %c0_116 = arith.constant 0 : index
    %150 = tpu.strided_load %arg13[%c32_115, %c0_116] {strides = array<i32: 2, 1>} : memref<100x32xf32, #tpu.memory_space<vmem>>, vector<4x32xf32>
    %c41 = arith.constant 41 : index
    %c0_117 = arith.constant 0 : index
    %151 = tpu.strided_load %arg13[%c41, %c0_117] {strides = array<i32: 2, 1>} : memref<100x32xf32, #tpu.memory_space<vmem>>, vector<4x32xf32>
    %c42_118 = arith.constant 42 : index
    %c0_119 = arith.constant 0 : index
    %152 = tpu.strided_load %arg13[%c42_118, %c0_119] {strides = array<i32: 2, 1>} : memref<100x32xf32, #tpu.memory_space<vmem>>, vector<4x32xf32>
    %153 = arith.maximumf %149, %150 : vector<4x32xf32>
    %154 = arith.maximumf %151, %152 : vector<4x32xf32>
    %155 = arith.maximumf %153, %154 : vector<4x32xf32>
    %156 = vector.broadcast %136 : vector<1x32xf32> to vector<4x32xf32>
    %157 = arith.addf %155, %156 : vector<4x32xf32>
    %cst_120 = arith.constant 0.000000e+00 : f32
    %158 = vector.broadcast %cst_120 : f32 to vector<4x32xf32>
    %159 = arith.maximumf %157, %158 : vector<4x32xf32>
    %c20_121 = arith.constant 20 : index
    %c0_122 = arith.constant 0 : index
    %160 = vector.load %arg14[%c20_121, %c0_122] : memref<50x32xf32, #tpu.memory_space<vmem>>, vector<4x32xf32>
    tpu.vector_store %arg14[%c20_121, %c0_122], %159 {strides = array<i32>} : memref<50x32xf32, #tpu.memory_space<vmem>>, vector<4x32xf32>,
    %c51 = arith.constant 51 : index
    %c0_123 = arith.constant 0 : index
    %161 = tpu.strided_load %arg13[%c51, %c0_123] {strides = array<i32: 2, 1>} : memref<100x32xf32, #tpu.memory_space<vmem>>, vector<4x32xf32>
    %c52_124 = arith.constant 52 : index
    %c0_125 = arith.constant 0 : index
    %162 = tpu.strided_load %arg13[%c52_124, %c0_125] {strides = array<i32: 2, 1>} : memref<100x32xf32, #tpu.memory_space<vmem>>, vector<4x32xf32>
    %c61 = arith.constant 61 : index
    %c0_126 = arith.constant 0 : index
    %163 = tpu.strided_load %arg13[%c61, %c0_126] {strides = array<i32: 2, 1>} : memref<100x32xf32, #tpu.memory_space<vmem>>, vector<4x32xf32>
    %c62_127 = arith.constant 62 : index
    %c0_128 = arith.constant 0 : index
    %164 = tpu.strided_load %arg13[%c62_127, %c0_128] {strides = array<i32: 2, 1>} : memref<100x32xf32, #tpu.memory_space<vmem>>, vector<4x32xf32>
    %165 = arith.maximumf %161, %162 : vector<4x32xf32>
    %166 = arith.maximumf %163, %164 : vector<4x32xf32>
    %167 = arith.maximumf %165, %166 : vector<4x32xf32>
    %168 = vector.broadcast %136 : vector<1x32xf32> to vector<4x32xf32>
    %169 = arith.addf %167, %168 : vector<4x32xf32>
    %cst_129 = arith.constant 0.000000e+00 : f32
    %170 = vector.broadcast %cst_129 : f32 to vector<4x32xf32>
    %171 = arith.maximumf %169, %170 : vector<4x32xf32>
    %c26 = arith.constant 26 : index
    %c0_130 = arith.constant 0 : index
    %172 = vector.load %arg14[%c26, %c0_130] : memref<50x32xf32, #tpu.memory_space<vmem>>, vector<4x32xf32>
    tpu.vector_store %arg14[%c26, %c0_130], %171 {strides = array<i32>} : memref<50x32xf32, #tpu.memory_space<vmem>>, vector<4x32xf32>,
    %c71 = arith.constant 71 : index
    %c0_131 = arith.constant 0 : index
    %173 = tpu.strided_load %arg13[%c71, %c0_131] {strides = array<i32: 2, 1>} : memref<100x32xf32, #tpu.memory_space<vmem>>, vector<4x32xf32>
    %c72_132 = arith.constant 72 : index
    %c0_133 = arith.constant 0 : index
    %174 = tpu.strided_load %arg13[%c72_132, %c0_133] {strides = array<i32: 2, 1>} : memref<100x32xf32, #tpu.memory_space<vmem>>, vector<4x32xf32>
    %c81 = arith.constant 81 : index
    %c0_134 = arith.constant 0 : index
    %175 = tpu.strided_load %arg13[%c81, %c0_134] {strides = array<i32: 2, 1>} : memref<100x32xf32, #tpu.memory_space<vmem>>, vector<4x32xf32>
    %c82_135 = arith.constant 82 : index
    %c0_136 = arith.constant 0 : index
    %176 = tpu.strided_load %arg13[%c82_135, %c0_136] {strides = array<i32: 2, 1>} : memref<100x32xf32, #tpu.memory_space<vmem>>, vector<4x32xf32>
    %177 = arith.maximumf %173, %174 : vector<4x32xf32>
    %178 = arith.maximumf %175, %176 : vector<4x32xf32>
    %179 = arith.maximumf %177, %178 : vector<4x32xf32>
    %180 = vector.broadcast %136 : vector<1x32xf32> to vector<4x32xf32>
    %181 = arith.addf %179, %180 : vector<4x32xf32>
    %cst_137 = arith.constant 0.000000e+00 : f32
    %182 = vector.broadcast %cst_137 : f32 to vector<4x32xf32>
    %183 = arith.maximumf %181, %182 : vector<4x32xf32>
    %c32_138 = arith.constant 32 : index
    %c0_139 = arith.constant 0 : index
    %184 = vector.load %arg14[%c32_138, %c0_139] : memref<50x32xf32, #tpu.memory_space<vmem>>, vector<4x32xf32>
    tpu.vector_store %arg14[%c32_138, %c0_139], %183 {strides = array<i32>} : memref<50x32xf32, #tpu.memory_space<vmem>>, vector<4x32xf32>,
    %c0_140 = arith.constant 0 : index
    %c0_141 = arith.constant 0 : index
    %185 = vector.load %arg14[%c0_140, %c0_141] : memref<50x32xf32, #tpu.memory_space<vmem>>, vector<36x32xf32>
    %c1_142 = arith.constant 1 : index
    %c0_143 = arith.constant 0 : index
    %186 = vector.load %arg14[%c1_142, %c0_143] : memref<50x32xf32, #tpu.memory_space<vmem>>, vector<36x32xf32>
    %c2_144 = arith.constant 2 : index
    %c0_145 = arith.constant 0 : index
    %187 = vector.load %arg14[%c2_144, %c0_145] : memref<50x32xf32, #tpu.memory_space<vmem>>, vector<36x32xf32>
    %c6 = arith.constant 6 : index
    %c0_146 = arith.constant 0 : index
    %188 = vector.load %arg14[%c6, %c0_146] : memref<50x32xf32, #tpu.memory_space<vmem>>, vector<36x32xf32>
    %c7 = arith.constant 7 : index
    %c0_147 = arith.constant 0 : index
    %189 = vector.load %arg14[%c7, %c0_147] : memref<50x32xf32, #tpu.memory_space<vmem>>, vector<36x32xf32>
    %c8 = arith.constant 8 : index
    %c0_148 = arith.constant 0 : index
    %190 = vector.load %arg14[%c8, %c0_148] : memref<50x32xf32, #tpu.memory_space<vmem>>, vector<36x32xf32>
    %c12_149 = arith.constant 12 : index
    %c0_150 = arith.constant 0 : index
    %191 = vector.load %arg14[%c12_149, %c0_150] : memref<50x32xf32, #tpu.memory_space<vmem>>, vector<36x32xf32>
    %c13 = arith.constant 13 : index
    %c0_151 = arith.constant 0 : index
    %192 = vector.load %arg14[%c13, %c0_151] : memref<50x32xf32, #tpu.memory_space<vmem>>, vector<36x32xf32>
    %c14_152 = arith.constant 14 : index
    %c0_153 = arith.constant 0 : index
    %193 = vector.load %arg14[%c14_152, %c0_153] : memref<50x32xf32, #tpu.memory_space<vmem>>, vector<36x32xf32>
    %194 = tpu.concatenate %185, %186, %187, %188, %189, %190, %191, %192, %193 in 1 : vector<36x32xf32>, vector<36x32xf32>, vector<36x32xf32>, vector<36x32xf32>, vector<36x32xf32>, vector<36x32xf32>, vector<36x32xf32>, vector<36x32xf32>, vector<36x32xf32> -> vector<36x288xf32>
    %c0_154 = arith.constant 0 : index
    %c0_155 = arith.constant 0 : index
    %195 = vector.load %arg6[%c0_154, %c0_155] : memref<288x16xf32, #tpu.memory_space<vmem>>, vector<288x16xf32>
    %cst_156 = arith.constant dense<0.000000e+00> : vector<36x16xf32>
    %196 = tpu.matmul %194, %195, %cst_156 {dimension_numbers = #tpu.dot_dimension_numbers<[1], [0], [0], [1], [0, 0, 1, 1], [], []>} : vector<36x288xf32>, vector<288x16xf32>, vector<36x16xf32> -> vector<36x16xf32>
    %c0_157 = arith.constant 0 : index
    %c0_158 = arith.constant 0 : index
    %197 = vector.load %arg15[%c0_157, %c0_158] : memref<36x16xf32, #tpu.memory_space<vmem>>, vector<36x16xf32>
    tpu.vector_store %arg15[%c0_157, %c0_158], %196 {strides = array<i32>} : memref<36x16xf32, #tpu.memory_space<vmem>>, vector<36x16xf32>,
    %c7_159 = arith.constant 7 : index
    %c0_160 = arith.constant 0 : index
    %198 = vector.load %arg15[%c7_159, %c0_160] : memref<36x16xf32, #tpu.memory_space<vmem>>, vector<4x16xf32>
    %c13_161 = arith.constant 13 : index
    %c0_162 = arith.constant 0 : index
    %199 = vector.load %arg15[%c13_161, %c0_162] : memref<36x16xf32, #tpu.memory_space<vmem>>, vector<4x16xf32>
    %200 = arith.maximumf %198, %199 : vector<4x16xf32>
    %c19_163 = arith.constant 19 : index
    %c0_164 = arith.constant 0 : index
    %201 = vector.load %arg15[%c19_163, %c0_164] : memref<36x16xf32, #tpu.memory_space<vmem>>, vector<4x16xf32>
    %202 = arith.maximumf %200, %201 : vector<4x16xf32>
    %c25 = arith.constant 25 : index
    %c0_165 = arith.constant 0 : index
    %203 = vector.load %arg15[%c25, %c0_165] : memref<36x16xf32, #tpu.memory_space<vmem>>, vector<4x16xf32>
    %204 = arith.maximumf %202, %203 : vector<4x16xf32>
    %cst_166 = arith.constant dense<0xFF800000> : vector<16xf32>
    %205 = vector.multi_reduction <maximumf>, %204, %cst_166 [0] : vector<4x16xf32> to vector<16xf32>
    %206 = vector.shape_cast %205 : vector<16xf32> to vector<1x16xf32>
    %c0_167 = arith.constant 0 : index
    %c0_168 = arith.constant 0 : index
    %207 = vector.load %arg16[%c0_167, %c0_168] : memref<1x16xf32, #tpu.memory_space<vmem>>, vector<1x16xf32>
    tpu.vector_store %arg16[%c0_167, %c0_168], %206 {strides = array<i32>} : memref<1x16xf32, #tpu.memory_space<vmem>>, vector<1x16xf32>,
    %c0_169 = arith.constant 0 : index
    %c0_170 = arith.constant 0 : index
    %208 = vector.load %arg16[%c0_169, %c0_170] : memref<1x16xf32, #tpu.memory_space<vmem>>, vector<1x16xf32>
    %c0_171 = arith.constant 0 : index
    %c0_172 = arith.constant 0 : index
    %209 = vector.load %arg7[%c0_171, %c0_172] : memref<1x16xf32, #tpu.memory_space<vmem>>, vector<1x16xf32>
    %210 = arith.addf %208, %209 : vector<1x16xf32>
    %cst_173 = arith.constant 0.000000e+00 : f32
    %211 = vector.broadcast %cst_173 : f32 to vector<1x16xf32>
    %212 = arith.maximumf %210, %211 : vector<1x16xf32>
    %c0_174 = arith.constant 0 : index
    %c0_175 = arith.constant 0 : index
    %213 = vector.load %arg8[%c0_174, %c0_175] : memref<16x10xf32, #tpu.memory_space<vmem>>, vector<16x10xf32>
    %cst_176 = arith.constant dense<0.000000e+00> : vector<1x10xf32>
    %214 = tpu.matmul %212, %213, %cst_176 {dimension_numbers = #tpu.dot_dimension_numbers<[1], [0], [0], [1], [0, 0, 1, 1], [], []>} : vector<1x16xf32>, vector<16x10xf32>, vector<1x10xf32> -> vector<1x10xf32>
    %c0_177 = arith.constant 0 : index
    %c0_178 = arith.constant 0 : index
    %215 = vector.load %arg9[%c0_177, %c0_178] : memref<1x10xf32, #tpu.memory_space<vmem>>, vector<1x10xf32>
    %216 = arith.addf %214, %215 : vector<1x10xf32>
    %c0_179 = arith.constant 0 : index
    %c0_180 = arith.constant 0 : index
    %c0_181 = arith.constant 0 : index
    %217 = vector.load %arg10[%c0_179, %c0_180, %c0_181] : memref<1x1x10xf32, #tpu.memory_space<vmem>>, vector<1x1x10xf32>
    %218 = vector.shape_cast %217 : vector<1x1x10xf32> to vector<1x10xf32>
    %219 = vector.shape_cast %216 : vector<1x10xf32> to vector<1x1x10xf32>
    tpu.vector_store %arg10[%c0_179, %c0_180, %c0_181], %219 {strides = array<i32>} : memref<1x1x10xf32, #tpu.memory_space<vmem>>, vector<1x1x10xf32>,
    return
  }
  func.func @transform_0(%arg0: i32) -> (i32, i32, i32) {
    %c0_i32 = arith.constant 0 : i32
    %c0_i32_0 = arith.constant 0 : i32
    %c0_i32_1 = arith.constant 0 : i32
    return %arg0, %c0_i32, %c0_i32_0 : i32, i32, i32
  }
  func.func @transform_1(%arg0: i32) -> (i32, i32) {
    %c0_i32 = arith.constant 0 : i32
    %c0_i32_0 = arith.constant 0 : i32
    %c0_i32_1 = arith.constant 0 : i32
    return %c0_i32, %c0_i32_0 : i32, i32
  }
  func.func @transform_2(%arg0: i32) -> (i32, i32) {
    %c0_i32 = arith.constant 0 : i32
    %c0_i32_0 = arith.constant 0 : i32
    %c0_i32_1 = arith.constant 0 : i32
    return %c0_i32, %c0_i32_0 : i32, i32
  }
  func.func @transform_3(%arg0: i32) -> (i32, i32) {
    %c0_i32 = arith.constant 0 : i32
    %c0_i32_0 = arith.constant 0 : i32
    %c0_i32_1 = arith.constant 0 : i32
    return %c0_i32, %c0_i32_0 : i32, i32
  }
  func.func @transform_4(%arg0: i32) -> (i32, i32) {
    %c0_i32 = arith.constant 0 : i32
    %c0_i32_0 = arith.constant 0 : i32
    %c0_i32_1 = arith.constant 0 : i32
    return %c0_i32, %c0_i32_0 : i32, i32
  }
  func.func @transform_5(%arg0: i32) -> (i32, i32) {
    %c0_i32 = arith.constant 0 : i32
    %c0_i32_0 = arith.constant 0 : i32
    %c0_i32_1 = arith.constant 0 : i32
    return %c0_i32, %c0_i32_0 : i32, i32
  }
  func.func @transform_6(%arg0: i32) -> (i32, i32) {
    %c0_i32 = arith.constant 0 : i32
    %c0_i32_0 = arith.constant 0 : i32
    %c0_i32_1 = arith.constant 0 : i32
    return %c0_i32, %c0_i32_0 : i32, i32
  }
  func.func @transform_7(%arg0: i32) -> (i32, i32) {
    %c0_i32 = arith.constant 0 : i32
    %c0_i32_0 = arith.constant 0 : i32
    %c0_i32_1 = arith.constant 0 : i32
    return %c0_i32, %c0_i32_0 : i32, i32
  }
  func.func @transform_8(%arg0: i32) -> (i32, i32) {
    %c0_i32 = arith.constant 0 : i32
    %c0_i32_0 = arith.constant 0 : i32
    %c0_i32_1 = arith.constant 0 : i32
    return %c0_i32, %c0_i32_0 : i32, i32
  }
  func.func @transform_9(%arg0: i32) -> (i32, i32, i32) {
    %c0_i32 = arith.constant 0 : i32
    %c0_i32_0 = arith.constant 0 : i32
    %c0_i32_1 = arith.constant 0 : i32
    return %arg0, %c0_i32, %c0_i32_0 : i32, i32, i32
  }
}

module attributes {stable_mosaic.version = 11 : i64} {
  func.func @kernel(%arg0: i32, %arg1: memref<1x362x1xf32, #tpu.memory_space<vmem>>, %arg2: memref<9x16xf32, #tpu.memory_space<vmem>>, %arg3: memref<1x16xf32, #tpu.memory_space<vmem>>, %arg4: memref<144x32xf32, #tpu.memory_space<vmem>>, %arg5: memref<1x32xf32, #tpu.memory_space<vmem>>, %arg6: memref<288x16xf32, #tpu.memory_space<vmem>>, %arg7: memref<1x16xf32, #tpu.memory_space<vmem>>, %arg8: memref<16x10xf32, #tpu.memory_space<vmem>>, %arg9: memref<1x10xf32, #tpu.memory_space<vmem>>, %arg10: memref<1x1x10xf32, #tpu.memory_space<vmem>>, %arg11: memref<324x16xf32, #tpu.memory_space<vmem>>, %arg12: memref<122x16xf32, #tpu.memory_space<vmem>>, %arg13: memref<100x32xf32, #tpu.memory_space<vmem>>, %arg14: memref<50x32xf32, #tpu.memory_space<vmem>>, %arg15: memref<36x16xf32, #tpu.memory_space<vmem>>, %arg16: memref<1x16xf32, #tpu.memory_space<vmem>>) attributes {dimension_semantics = [#tpu.dimension_semantics<parallel>], iteration_bounds = array<i64: 2>, scalar_prefetch = 0 : i64, scratch_operands = 6 : i64, tpu.core_type = #tpu.core_type<tc>, window_params = [{transform_indices = @transform_0, window_bounds = array<i64: 1, 362, 1>}, {pipeline_mode = #tpu.pipeline_mode<synchronous>, transform_indices = @transform_1, window_bounds = array<i64: 9, 16>}, {pipeline_mode = #tpu.pipeline_mode<synchronous>, transform_indices = @transform_2, window_bounds = array<i64: 1, 16>}, {pipeline_mode = #tpu.pipeline_mode<synchronous>, transform_indices = @transform_3, window_bounds = array<i64: 144, 32>}, {pipeline_mode = #tpu.pipeline_mode<synchronous>, transform_indices = @transform_4, window_bounds = array<i64: 1, 32>}, {pipeline_mode = #tpu.pipeline_mode<synchronous>, transform_indices = @transform_5, window_bounds = array<i64: 288, 16>}, {pipeline_mode = #tpu.pipeline_mode<synchronous>, transform_indices = @transform_6, window_bounds = array<i64: 1, 16>}, {pipeline_mode = #tpu.pipeline_mode<synchronous>, transform_indices = @transform_7, window_bounds = array<i64: 16, 10>}, {pipeline_mode = #tpu.pipeline_mode<synchronous>, transform_indices = @transform_8, window_bounds = array<i64: 1, 10>}, {transform_indices = @transform_9, window_bounds = array<i64: 1, 1, 10>}]} {
    %c0 = arith.constant 0 : index
    %c0_0 = arith.constant 0 : index
    %c0_1 = arith.constant 0 : index
    %0 = vector.load %arg1[%c0, %c0_0, %c0_1] : memref<1x362x1xf32, #tpu.memory_space<vmem>>, vector<1x324x1xf32>
    %1 = vector.shape_cast %0 : vector<1x324x1xf32> to vector<324x1xf32>
    %c0_2 = arith.constant 0 : index
    %c0_3 = arith.constant 0 : index
    %2 = vector.load %arg2[%c0_2, %c0_3] : memref<9x16xf32, #tpu.memory_space<vmem>>, vector<1x16xf32>
    %3 = vector.broadcast %1 : vector<324x1xf32> to vector<324x16xf32>
    %4 = vector.broadcast %2 : vector<1x16xf32> to vector<324x16xf32>
    %5 = arith.mulf %3, %4 : vector<324x16xf32>
    %c0_4 = arith.constant 0 : index
    %c1 = arith.constant 1 : index
    %c0_5 = arith.constant 0 : index
    %6 = vector.load %arg1[%c0_4, %c1, %c0_5] : memref<1x362x1xf32, #tpu.memory_space<vmem>>, vector<1x324x1xf32>
    %7 = vector.shape_cast %6 : vector<1x324x1xf32> to vector<324x1xf32>
    %c1_6 = arith.constant 1 : index
    %c0_7 = arith.constant 0 : index
    %8 = vector.load %arg2[%c1_6, %c0_7] : memref<9x16xf32, #tpu.memory_space<vmem>>, vector<1x16xf32>
    %9 = vector.broadcast %7 : vector<324x1xf32> to vector<324x16xf32>
    %10 = vector.broadcast %8 : vector<1x16xf32> to vector<324x16xf32>
    %11 = arith.mulf %9, %10 : vector<324x16xf32>
    %12 = arith.addf %5, %11 : vector<324x16xf32>
    %c0_8 = arith.constant 0 : index
    %c2 = arith.constant 2 : index
    %c0_9 = arith.constant 0 : index
    %13 = vector.load %arg1[%c0_8, %c2, %c0_9] : memref<1x362x1xf32, #tpu.memory_space<vmem>>, vector<1x324x1xf32>
    %14 = vector.shape_cast %13 : vector<1x324x1xf32> to vector<324x1xf32>
    %c2_10 = arith.constant 2 : index
    %c0_11 = arith.constant 0 : index
    %15 = vector.load %arg2[%c2_10, %c0_11] : memref<9x16xf32, #tpu.memory_space<vmem>>, vector<1x16xf32>
    %16 = vector.broadcast %14 : vector<324x1xf32> to vector<324x16xf32>
    %17 = vector.broadcast %15 : vector<1x16xf32> to vector<324x16xf32>
    %18 = arith.mulf %16, %17 : vector<324x16xf32>
    %19 = arith.addf %12, %18 : vector<324x16xf32>
    %c0_12 = arith.constant 0 : index
    %c18 = arith.constant 18 : index
    %c0_13 = arith.constant 0 : index
    %20 = vector.load %arg1[%c0_12, %c18, %c0_13] : memref<1x362x1xf32, #tpu.memory_space<vmem>>, vector<1x324x1xf32>
    %21 = vector.shape_cast %20 : vector<1x324x1xf32> to vector<324x1xf32>
    %c3 = arith.constant 3 : index
    %c0_14 = arith.constant 0 : index
    %22 = vector.load %arg2[%c3, %c0_14] : memref<9x16xf32, #tpu.memory_space<vmem>>, vector<1x16xf32>
    %23 = vector.broadcast %21 : vector<324x1xf32> to vector<324x16xf32>
    %24 = vector.broadcast %22 : vector<1x16xf32> to vector<324x16xf32>
    %25 = arith.mulf %23, %24 : vector<324x16xf32>
    %26 = arith.addf %19, %25 : vector<324x16xf32>
    %c0_15 = arith.constant 0 : index
    %c19 = arith.constant 19 : index
    %c0_16 = arith.constant 0 : index
    %27 = vector.load %arg1[%c0_15, %c19, %c0_16] : memref<1x362x1xf32, #tpu.memory_space<vmem>>, vector<1x324x1xf32>
    %28 = vector.shape_cast %27 : vector<1x324x1xf32> to vector<324x1xf32>
    %c4 = arith.constant 4 : index
    %c0_17 = arith.constant 0 : index
    %29 = vector.load %arg2[%c4, %c0_17] : memref<9x16xf32, #tpu.memory_space<vmem>>, vector<1x16xf32>
    %30 = vector.broadcast %28 : vector<324x1xf32> to vector<324x16xf32>
    %31 = vector.broadcast %29 : vector<1x16xf32> to vector<324x16xf32>
    %32 = arith.mulf %30, %31 : vector<324x16xf32>
    %33 = arith.addf %26, %32 : vector<324x16xf32>
    %c0_18 = arith.constant 0 : index
    %c20 = arith.constant 20 : index
    %c0_19 = arith.constant 0 : index
    %34 = vector.load %arg1[%c0_18, %c20, %c0_19] : memref<1x362x1xf32, #tpu.memory_space<vmem>>, vector<1x324x1xf32>
    %35 = vector.shape_cast %34 : vector<1x324x1xf32> to vector<324x1xf32>
    %c5 = arith.constant 5 : index
    %c0_20 = arith.constant 0 : index
    %36 = vector.load %arg2[%c5, %c0_20] : memref<9x16xf32, #tpu.memory_space<vmem>>, vector<1x16xf32>
    %37 = vector.broadcast %35 : vector<324x1xf32> to vector<324x16xf32>
    %38 = vector.broadcast %36 : vector<1x16xf32> to vector<324x16xf32>
    %39 = arith.mulf %37, %38 : vector<324x16xf32>
    %40 = arith.addf %33, %39 : vector<324x16xf32>
    %c0_21 = arith.constant 0 : index
    %c36 = arith.constant 36 : index
    %c0_22 = arith.constant 0 : index
    %41 = vector.load %arg1[%c0_21, %c36, %c0_22] : memref<1x362x1xf32, #tpu.memory_space<vmem>>, vector<1x324x1xf32>
    %42 = vector.shape_cast %41 : vector<1x324x1xf32> to vector<324x1xf32>
    %c6 = arith.constant 6 : index
    %c0_23 = arith.constant 0 : index
    %43 = vector.load %arg2[%c6, %c0_23] : memref<9x16xf32, #tpu.memory_space<vmem>>, vector<1x16xf32>
    %44 = vector.broadcast %42 : vector<324x1xf32> to vector<324x16xf32>
    %45 = vector.broadcast %43 : vector<1x16xf32> to vector<324x16xf32>
    %46 = arith.mulf %44, %45 : vector<324x16xf32>
    %47 = arith.addf %40, %46 : vector<324x16xf32>
    %c0_24 = arith.constant 0 : index
    %c37 = arith.constant 37 : index
    %c0_25 = arith.constant 0 : index
    %48 = vector.load %arg1[%c0_24, %c37, %c0_25] : memref<1x362x1xf32, #tpu.memory_space<vmem>>, vector<1x324x1xf32>
    %49 = vector.shape_cast %48 : vector<1x324x1xf32> to vector<324x1xf32>
    %c7 = arith.constant 7 : index
    %c0_26 = arith.constant 0 : index
    %50 = vector.load %arg2[%c7, %c0_26] : memref<9x16xf32, #tpu.memory_space<vmem>>, vector<1x16xf32>
    %51 = vector.broadcast %49 : vector<324x1xf32> to vector<324x16xf32>
    %52 = vector.broadcast %50 : vector<1x16xf32> to vector<324x16xf32>
    %53 = arith.mulf %51, %52 : vector<324x16xf32>
    %54 = arith.addf %47, %53 : vector<324x16xf32>
    %c0_27 = arith.constant 0 : index
    %c38 = arith.constant 38 : index
    %c0_28 = arith.constant 0 : index
    %55 = vector.load %arg1[%c0_27, %c38, %c0_28] : memref<1x362x1xf32, #tpu.memory_space<vmem>>, vector<1x324x1xf32>
    %56 = vector.shape_cast %55 : vector<1x324x1xf32> to vector<324x1xf32>
    %c8 = arith.constant 8 : index
    %c0_29 = arith.constant 0 : index
    %57 = vector.load %arg2[%c8, %c0_29] : memref<9x16xf32, #tpu.memory_space<vmem>>, vector<1x16xf32>
    %58 = vector.broadcast %56 : vector<324x1xf32> to vector<324x16xf32>
    %59 = vector.broadcast %57 : vector<1x16xf32> to vector<324x16xf32>
    %60 = arith.mulf %58, %59 : vector<324x16xf32>
    %61 = arith.addf %54, %60 : vector<324x16xf32>
    %c0_30 = arith.constant 0 : index
    %c0_31 = arith.constant 0 : index
    %62 = vector.load %arg11[%c0_30, %c0_31] : memref<324x16xf32, #tpu.memory_space<vmem>>, vector<324x16xf32>
    tpu.vector_store %arg11[%c0_30, %c0_31], %61 {strides = array<i32>} : memref<324x16xf32, #tpu.memory_space<vmem>>, vector<324x16xf32>,
    %cst = arith.constant 0.000000e+00 : f32
    %63 = vector.broadcast %cst : f32 to vector<122x16xf32>
    %c0_32 = arith.constant 0 : index
    %c0_33 = arith.constant 0 : index
    %64 = vector.load %arg12[%c0_32, %c0_33] : memref<122x16xf32, #tpu.memory_space<vmem>>, vector<122x16xf32>
    tpu.vector_store %arg12[%c0_32, %c0_33], %63 {strides = array<i32>} : memref<122x16xf32, #tpu.memory_space<vmem>>, vector<122x16xf32>,
    %c0_34 = arith.constant 0 : index
    %c0_35 = arith.constant 0 : index
    %65 = vector.load %arg3[%c0_34, %c0_35] : memref<1x16xf32, #tpu.memory_space<vmem>>, vector<1x16xf32>
    %c19_36 = arith.constant 19 : index
    %c0_37 = arith.constant 0 : index
    %66 = tpu.strided_load %arg11[%c19_36, %c0_37] {strides = array<i32: 2, 1>} : memref<324x16xf32, #tpu.memory_space<vmem>>, vector<8x16xf32>
    %c20_38 = arith.constant 20 : index
    %c0_39 = arith.constant 0 : index
    %67 = tpu.strided_load %arg11[%c20_38, %c0_39] {strides = array<i32: 2, 1>} : memref<324x16xf32, #tpu.memory_space<vmem>>, vector<8x16xf32>
    %c37_40 = arith.constant 37 : index
    %c0_41 = arith.constant 0 : index
    %68 = tpu.strided_load %arg11[%c37_40, %c0_41] {strides = array<i32: 2, 1>} : memref<324x16xf32, #tpu.memory_space<vmem>>, vector<8x16xf32>
    %c38_42 = arith.constant 38 : index
    %c0_43 = arith.constant 0 : index
    %69 = tpu.strided_load %arg11[%c38_42, %c0_43] {strides = array<i32: 2, 1>} : memref<324x16xf32, #tpu.memory_space<vmem>>, vector<8x16xf32>
    %70 = arith.maximumf %66, %67 : vector<8x16xf32>
    %71 = arith.maximumf %68, %69 : vector<8x16xf32>
    %72 = arith.maximumf %70, %71 : vector<8x16xf32>
    %73 = vector.broadcast %65 : vector<1x16xf32> to vector<8x16xf32>
    %74 = arith.addf %72, %73 : vector<8x16xf32>
    %cst_44 = arith.constant 0.000000e+00 : f32
    %75 = vector.broadcast %cst_44 : f32 to vector<8x16xf32>
    %76 = arith.maximumf %74, %75 : vector<8x16xf32>
    %c22 = arith.constant 22 : index
    %c0_45 = arith.constant 0 : index
    %77 = vector.load %arg12[%c22, %c0_45] : memref<122x16xf32, #tpu.memory_space<vmem>>, vector<8x16xf32>
    tpu.vector_store %arg12[%c22, %c0_45], %76 {strides = array<i32>} : memref<122x16xf32, #tpu.memory_space<vmem>>, vector<8x16xf32>,
    %c55 = arith.constant 55 : index
    %c0_46 = arith.constant 0 : index
    %78 = tpu.strided_load %arg11[%c55, %c0_46] {strides = array<i32: 2, 1>} : memref<324x16xf32, #tpu.memory_space<vmem>>, vector<8x16xf32>
    %c56 = arith.constant 56 : index
    %c0_47 = arith.constant 0 : index
    %79 = tpu.strided_load %arg11[%c56, %c0_47] {strides = array<i32: 2, 1>} : memref<324x16xf32, #tpu.memory_space<vmem>>, vector<8x16xf32>
    %c73 = arith.constant 73 : index
    %c0_48 = arith.constant 0 : index
    %80 = tpu.strided_load %arg11[%c73, %c0_48] {strides = array<i32: 2, 1>} : memref<324x16xf32, #tpu.memory_space<vmem>>, vector<8x16xf32>
    %c74 = arith.constant 74 : index
    %c0_49 = arith.constant 0 : index
    %81 = tpu.strided_load %arg11[%c74, %c0_49] {strides = array<i32: 2, 1>} : memref<324x16xf32, #tpu.memory_space<vmem>>, vector<8x16xf32>
    %82 = arith.maximumf %78, %79 : vector<8x16xf32>
    %83 = arith.maximumf %80, %81 : vector<8x16xf32>
    %84 = arith.maximumf %82, %83 : vector<8x16xf32>
    %85 = vector.broadcast %65 : vector<1x16xf32> to vector<8x16xf32>
    %86 = arith.addf %84, %85 : vector<8x16xf32>
    %cst_50 = arith.constant 0.000000e+00 : f32
    %87 = vector.broadcast %cst_50 : f32 to vector<8x16xf32>
    %88 = arith.maximumf %86, %87 : vector<8x16xf32>
    %c32 = arith.constant 32 : index
    %c0_51 = arith.constant 0 : index
    %89 = vector.load %arg12[%c32, %c0_51] : memref<122x16xf32, #tpu.memory_space<vmem>>, vector<8x16xf32>
    tpu.vector_store %arg12[%c32, %c0_51], %88 {strides = array<i32>} : memref<122x16xf32, #tpu.memory_space<vmem>>, vector<8x16xf32>,
    %c91 = arith.constant 91 : index
    %c0_52 = arith.constant 0 : index
    %90 = tpu.strided_load %arg11[%c91, %c0_52] {strides = array<i32: 2, 1>} : memref<324x16xf32, #tpu.memory_space<vmem>>, vector<8x16xf32>
    %c92 = arith.constant 92 : index
    %c0_53 = arith.constant 0 : index
    %91 = tpu.strided_load %arg11[%c92, %c0_53] {strides = array<i32: 2, 1>} : memref<324x16xf32, #tpu.memory_space<vmem>>, vector<8x16xf32>
    %c109 = arith.constant 109 : index
    %c0_54 = arith.constant 0 : index
    %92 = tpu.strided_load %arg11[%c109, %c0_54] {strides = array<i32: 2, 1>} : memref<324x16xf32, #tpu.memory_space<vmem>>, vector<8x16xf32>
    %c110 = arith.constant 110 : index
    %c0_55 = arith.constant 0 : index
    %93 = tpu.strided_load %arg11[%c110, %c0_55] {strides = array<i32: 2, 1>} : memref<324x16xf32, #tpu.memory_space<vmem>>, vector<8x16xf32>
    %94 = arith.maximumf %90, %91 : vector<8x16xf32>
    %95 = arith.maximumf %92, %93 : vector<8x16xf32>
    %96 = arith.maximumf %94, %95 : vector<8x16xf32>
    %97 = vector.broadcast %65 : vector<1x16xf32> to vector<8x16xf32>
    %98 = arith.addf %96, %97 : vector<8x16xf32>
    %cst_56 = arith.constant 0.000000e+00 : f32
    %99 = vector.broadcast %cst_56 : f32 to vector<8x16xf32>
    %100 = arith.maximumf %98, %99 : vector<8x16xf32>
    %c42 = arith.constant 42 : index
    %c0_57 = arith.constant 0 : index
    %101 = vector.load %arg12[%c42, %c0_57] : memref<122x16xf32, #tpu.memory_space<vmem>>, vector<8x16xf32>
    tpu.vector_store %arg12[%c42, %c0_57], %100 {strides = array<i32>} : memref<122x16xf32, #tpu.memory_space<vmem>>, vector<8x16xf32>,
    %c127 = arith.constant 127 : index
    %c0_58 = arith.constant 0 : index
    %102 = tpu.strided_load %arg11[%c127, %c0_58] {strides = array<i32: 2, 1>} : memref<324x16xf32, #tpu.memory_space<vmem>>, vector<8x16xf32>
    %c128 = arith.constant 128 : index
    %c0_59 = arith.constant 0 : index
    %103 = tpu.strided_load %arg11[%c128, %c0_59] {strides = array<i32: 2, 1>} : memref<324x16xf32, #tpu.memory_space<vmem>>, vector<8x16xf32>
    %c145 = arith.constant 145 : index
    %c0_60 = arith.constant 0 : index
    %104 = tpu.strided_load %arg11[%c145, %c0_60] {strides = array<i32: 2, 1>} : memref<324x16xf32, #tpu.memory_space<vmem>>, vector<8x16xf32>
    %c146 = arith.constant 146 : index
    %c0_61 = arith.constant 0 : index
    %105 = tpu.strided_load %arg11[%c146, %c0_61] {strides = array<i32: 2, 1>} : memref<324x16xf32, #tpu.memory_space<vmem>>, vector<8x16xf32>
    %106 = arith.maximumf %102, %103 : vector<8x16xf32>
    %107 = arith.maximumf %104, %105 : vector<8x16xf32>
    %108 = arith.maximumf %106, %107 : vector<8x16xf32>
    %109 = vector.broadcast %65 : vector<1x16xf32> to vector<8x16xf32>
    %110 = arith.addf %108, %109 : vector<8x16xf32>
    %cst_62 = arith.constant 0.000000e+00 : f32
    %111 = vector.broadcast %cst_62 : f32 to vector<8x16xf32>
    %112 = arith.maximumf %110, %111 : vector<8x16xf32>
    %c52 = arith.constant 52 : index
    %c0_63 = arith.constant 0 : index
    %113 = vector.load %arg12[%c52, %c0_63] : memref<122x16xf32, #tpu.memory_space<vmem>>, vector<8x16xf32>
    tpu.vector_store %arg12[%c52, %c0_63], %112 {strides = array<i32>} : memref<122x16xf32, #tpu.memory_space<vmem>>, vector<8x16xf32>,
    %c163 = arith.constant 163 : index
    %c0_64 = arith.constant 0 : index
    %114 = tpu.strided_load %arg11[%c163, %c0_64] {strides = array<i32: 2, 1>} : memref<324x16xf32, #tpu.memory_space<vmem>>, vector<8x16xf32>
    %c164 = arith.constant 164 : index
    %c0_65 = arith.constant 0 : index
    %115 = tpu.strided_load %arg11[%c164, %c0_65] {strides = array<i32: 2, 1>} : memref<324x16xf32, #tpu.memory_space<vmem>>, vector<8x16xf32>
    %c181 = arith.constant 181 : index
    %c0_66 = arith.constant 0 : index
    %116 = tpu.strided_load %arg11[%c181, %c0_66] {strides = array<i32: 2, 1>} : memref<324x16xf32, #tpu.memory_space<vmem>>, vector<8x16xf32>
    %c182 = arith.constant 182 : index
    %c0_67 = arith.constant 0 : index
    %117 = tpu.strided_load %arg11[%c182, %c0_67] {strides = array<i32: 2, 1>} : memref<324x16xf32, #tpu.memory_space<vmem>>, vector<8x16xf32>
    %118 = arith.maximumf %114, %115 : vector<8x16xf32>
    %119 = arith.maximumf %116, %117 : vector<8x16xf32>
    %120 = arith.maximumf %118, %119 : vector<8x16xf32>
    %121 = vector.broadcast %65 : vector<1x16xf32> to vector<8x16xf32>
    %122 = arith.addf %120, %121 : vector<8x16xf32>
    %cst_68 = arith.constant 0.000000e+00 : f32
    %123 = vector.broadcast %cst_68 : f32 to vector<8x16xf32>
    %124 = arith.maximumf %122, %123 : vector<8x16xf32>
    %c62 = arith.constant 62 : index
    %c0_69 = arith.constant 0 : index
    %125 = vector.load %arg12[%c62, %c0_69] : memref<122x16xf32, #tpu.memory_space<vmem>>, vector<8x16xf32>
    tpu.vector_store %arg12[%c62, %c0_69], %124 {strides = array<i32>} : memref<122x16xf32, #tpu.memory_space<vmem>>, vector<8x16xf32>,
    %c199 = arith.constant 199 : index
    %c0_70 = arith.constant 0 : index
    %126 = tpu.strided_load %arg11[%c199, %c0_70] {strides = array<i32: 2, 1>} : memref<324x16xf32, #tpu.memory_space<vmem>>, vector<8x16xf32>
    %c200 = arith.constant 200 : index
    %c0_71 = arith.constant 0 : index
    %127 = tpu.strided_load %arg11[%c200, %c0_71] {strides = array<i32: 2, 1>} : memref<324x16xf32, #tpu.memory_space<vmem>>, vector<8x16xf32>
    %c217 = arith.constant 217 : index
    %c0_72 = arith.constant 0 : index
    %128 = tpu.strided_load %arg11[%c217, %c0_72] {strides = array<i32: 2, 1>} : memref<324x16xf32, #tpu.memory_space<vmem>>, vector<8x16xf32>
    %c218 = arith.constant 218 : index
    %c0_73 = arith.constant 0 : index
    %129 = tpu.strided_load %arg11[%c218, %c0_73] {strides = array<i32: 2, 1>} : memref<324x16xf32, #tpu.memory_space<vmem>>, vector<8x16xf32>
    %130 = arith.maximumf %126, %127 : vector<8x16xf32>
    %131 = arith.maximumf %128, %129 : vector<8x16xf32>
    %132 = arith.maximumf %130, %131 : vector<8x16xf32>
    %133 = vector.broadcast %65 : vector<1x16xf32> to vector<8x16xf32>
    %134 = arith.addf %132, %133 : vector<8x16xf32>
    %cst_74 = arith.constant 0.000000e+00 : f32
    %135 = vector.broadcast %cst_74 : f32 to vector<8x16xf32>
    %136 = arith.maximumf %134, %135 : vector<8x16xf32>
    %c72 = arith.constant 72 : index
    %c0_75 = arith.constant 0 : index
    %137 = vector.load %arg12[%c72, %c0_75] : memref<122x16xf32, #tpu.memory_space<vmem>>, vector<8x16xf32>
    tpu.vector_store %arg12[%c72, %c0_75], %136 {strides = array<i32>} : memref<122x16xf32, #tpu.memory_space<vmem>>, vector<8x16xf32>,
    %c235 = arith.constant 235 : index
    %c0_76 = arith.constant 0 : index
    %138 = tpu.strided_load %arg11[%c235, %c0_76] {strides = array<i32: 2, 1>} : memref<324x16xf32, #tpu.memory_space<vmem>>, vector<8x16xf32>
    %c236 = arith.constant 236 : index
    %c0_77 = arith.constant 0 : index
    %139 = tpu.strided_load %arg11[%c236, %c0_77] {strides = array<i32: 2, 1>} : memref<324x16xf32, #tpu.memory_space<vmem>>, vector<8x16xf32>
    %c253 = arith.constant 253 : index
    %c0_78 = arith.constant 0 : index
    %140 = tpu.strided_load %arg11[%c253, %c0_78] {strides = array<i32: 2, 1>} : memref<324x16xf32, #tpu.memory_space<vmem>>, vector<8x16xf32>
    %c254 = arith.constant 254 : index
    %c0_79 = arith.constant 0 : index
    %141 = tpu.strided_load %arg11[%c254, %c0_79] {strides = array<i32: 2, 1>} : memref<324x16xf32, #tpu.memory_space<vmem>>, vector<8x16xf32>
    %142 = arith.maximumf %138, %139 : vector<8x16xf32>
    %143 = arith.maximumf %140, %141 : vector<8x16xf32>
    %144 = arith.maximumf %142, %143 : vector<8x16xf32>
    %145 = vector.broadcast %65 : vector<1x16xf32> to vector<8x16xf32>
    %146 = arith.addf %144, %145 : vector<8x16xf32>
    %cst_80 = arith.constant 0.000000e+00 : f32
    %147 = vector.broadcast %cst_80 : f32 to vector<8x16xf32>
    %148 = arith.maximumf %146, %147 : vector<8x16xf32>
    %c82 = arith.constant 82 : index
    %c0_81 = arith.constant 0 : index
    %149 = vector.load %arg12[%c82, %c0_81] : memref<122x16xf32, #tpu.memory_space<vmem>>, vector<8x16xf32>
    tpu.vector_store %arg12[%c82, %c0_81], %148 {strides = array<i32>} : memref<122x16xf32, #tpu.memory_space<vmem>>, vector<8x16xf32>,
    %c271 = arith.constant 271 : index
    %c0_82 = arith.constant 0 : index
    %150 = tpu.strided_load %arg11[%c271, %c0_82] {strides = array<i32: 2, 1>} : memref<324x16xf32, #tpu.memory_space<vmem>>, vector<8x16xf32>
    %c272 = arith.constant 272 : index
    %c0_83 = arith.constant 0 : index
    %151 = tpu.strided_load %arg11[%c272, %c0_83] {strides = array<i32: 2, 1>} : memref<324x16xf32, #tpu.memory_space<vmem>>, vector<8x16xf32>
    %c289 = arith.constant 289 : index
    %c0_84 = arith.constant 0 : index
    %152 = tpu.strided_load %arg11[%c289, %c0_84] {strides = array<i32: 2, 1>} : memref<324x16xf32, #tpu.memory_space<vmem>>, vector<8x16xf32>
    %c290 = arith.constant 290 : index
    %c0_85 = arith.constant 0 : index
    %153 = tpu.strided_load %arg11[%c290, %c0_85] {strides = array<i32: 2, 1>} : memref<324x16xf32, #tpu.memory_space<vmem>>, vector<8x16xf32>
    %154 = arith.maximumf %150, %151 : vector<8x16xf32>
    %155 = arith.maximumf %152, %153 : vector<8x16xf32>
    %156 = arith.maximumf %154, %155 : vector<8x16xf32>
    %157 = vector.broadcast %65 : vector<1x16xf32> to vector<8x16xf32>
    %158 = arith.addf %156, %157 : vector<8x16xf32>
    %cst_86 = arith.constant 0.000000e+00 : f32
    %159 = vector.broadcast %cst_86 : f32 to vector<8x16xf32>
    %160 = arith.maximumf %158, %159 : vector<8x16xf32>
    %c92_87 = arith.constant 92 : index
    %c0_88 = arith.constant 0 : index
    %161 = vector.load %arg12[%c92_87, %c0_88] : memref<122x16xf32, #tpu.memory_space<vmem>>, vector<8x16xf32>
    tpu.vector_store %arg12[%c92_87, %c0_88], %160 {strides = array<i32>} : memref<122x16xf32, #tpu.memory_space<vmem>>, vector<8x16xf32>,
    %c0_89 = arith.constant 0 : index
    %c0_90 = arith.constant 0 : index
    %162 = vector.load %arg12[%c0_89, %c0_90] : memref<122x16xf32, #tpu.memory_space<vmem>>, vector<100x16xf32>
    %c0_91 = arith.constant 0 : index
    %c0_92 = arith.constant 0 : index
    %163 = vector.load %arg4[%c0_91, %c0_92] : memref<144x32xf32, #tpu.memory_space<vmem>>, vector<16x32xf32>
    %cst_93 = arith.constant dense<0.000000e+00> : vector<100x32xf32>
    %164 = tpu.matmul %162, %163, %cst_93 {dimension_numbers = #tpu.dot_dimension_numbers<[1], [0], [0], [1], [0, 0, 1, 1], [], []>} : vector<100x16xf32>, vector<16x32xf32>, vector<100x32xf32> -> vector<100x32xf32>
    %c1_94 = arith.constant 1 : index
    %c0_95 = arith.constant 0 : index
    %165 = vector.load %arg12[%c1_94, %c0_95] : memref<122x16xf32, #tpu.memory_space<vmem>>, vector<100x16xf32>
    %c16 = arith.constant 16 : index
    %c0_96 = arith.constant 0 : index
    %166 = vector.load %arg4[%c16, %c0_96] : memref<144x32xf32, #tpu.memory_space<vmem>>, vector<16x32xf32>
    %cst_97 = arith.constant dense<0.000000e+00> : vector<100x32xf32>
    %167 = tpu.matmul %165, %166, %cst_97 {dimension_numbers = #tpu.dot_dimension_numbers<[1], [0], [0], [1], [0, 0, 1, 1], [], []>} : vector<100x16xf32>, vector<16x32xf32>, vector<100x32xf32> -> vector<100x32xf32>
    %168 = arith.addf %164, %167 : vector<100x32xf32>
    %c2_98 = arith.constant 2 : index
    %c0_99 = arith.constant 0 : index
    %169 = vector.load %arg12[%c2_98, %c0_99] : memref<122x16xf32, #tpu.memory_space<vmem>>, vector<100x16xf32>
    %c32_100 = arith.constant 32 : index
    %c0_101 = arith.constant 0 : index
    %170 = vector.load %arg4[%c32_100, %c0_101] : memref<144x32xf32, #tpu.memory_space<vmem>>, vector<16x32xf32>
    %cst_102 = arith.constant dense<0.000000e+00> : vector<100x32xf32>
    %171 = tpu.matmul %169, %170, %cst_102 {dimension_numbers = #tpu.dot_dimension_numbers<[1], [0], [0], [1], [0, 0, 1, 1], [], []>} : vector<100x16xf32>, vector<16x32xf32>, vector<100x32xf32> -> vector<100x32xf32>
    %172 = arith.addf %168, %171 : vector<100x32xf32>
    %c10 = arith.constant 10 : index
    %c0_103 = arith.constant 0 : index
    %173 = vector.load %arg12[%c10, %c0_103] : memref<122x16xf32, #tpu.memory_space<vmem>>, vector<100x16xf32>
    %c48 = arith.constant 48 : index
    %c0_104 = arith.constant 0 : index
    %174 = vector.load %arg4[%c48, %c0_104] : memref<144x32xf32, #tpu.memory_space<vmem>>, vector<16x32xf32>
    %cst_105 = arith.constant dense<0.000000e+00> : vector<100x32xf32>
    %175 = tpu.matmul %173, %174, %cst_105 {dimension_numbers = #tpu.dot_dimension_numbers<[1], [0], [0], [1], [0, 0, 1, 1], [], []>} : vector<100x16xf32>, vector<16x32xf32>, vector<100x32xf32> -> vector<100x32xf32>
    %176 = arith.addf %172, %175 : vector<100x32xf32>
    %c11 = arith.constant 11 : index
    %c0_106 = arith.constant 0 : index
    %177 = vector.load %arg12[%c11, %c0_106] : memref<122x16xf32, #tpu.memory_space<vmem>>, vector<100x16xf32>
    %c64 = arith.constant 64 : index
    %c0_107 = arith.constant 0 : index
    %178 = vector.load %arg4[%c64, %c0_107] : memref<144x32xf32, #tpu.memory_space<vmem>>, vector<16x32xf32>
    %cst_108 = arith.constant dense<0.000000e+00> : vector<100x32xf32>
    %179 = tpu.matmul %177, %178, %cst_108 {dimension_numbers = #tpu.dot_dimension_numbers<[1], [0], [0], [1], [0, 0, 1, 1], [], []>} : vector<100x16xf32>, vector<16x32xf32>, vector<100x32xf32> -> vector<100x32xf32>
    %180 = arith.addf %176, %179 : vector<100x32xf32>
    %c12 = arith.constant 12 : index
    %c0_109 = arith.constant 0 : index
    %181 = vector.load %arg12[%c12, %c0_109] : memref<122x16xf32, #tpu.memory_space<vmem>>, vector<100x16xf32>
    %c80 = arith.constant 80 : index
    %c0_110 = arith.constant 0 : index
    %182 = vector.load %arg4[%c80, %c0_110] : memref<144x32xf32, #tpu.memory_space<vmem>>, vector<16x32xf32>
    %cst_111 = arith.constant dense<0.000000e+00> : vector<100x32xf32>
    %183 = tpu.matmul %181, %182, %cst_111 {dimension_numbers = #tpu.dot_dimension_numbers<[1], [0], [0], [1], [0, 0, 1, 1], [], []>} : vector<100x16xf32>, vector<16x32xf32>, vector<100x32xf32> -> vector<100x32xf32>
    %184 = arith.addf %180, %183 : vector<100x32xf32>
    %c20_112 = arith.constant 20 : index
    %c0_113 = arith.constant 0 : index
    %185 = vector.load %arg12[%c20_112, %c0_113] : memref<122x16xf32, #tpu.memory_space<vmem>>, vector<100x16xf32>
    %c96 = arith.constant 96 : index
    %c0_114 = arith.constant 0 : index
    %186 = vector.load %arg4[%c96, %c0_114] : memref<144x32xf32, #tpu.memory_space<vmem>>, vector<16x32xf32>
    %cst_115 = arith.constant dense<0.000000e+00> : vector<100x32xf32>
    %187 = tpu.matmul %185, %186, %cst_115 {dimension_numbers = #tpu.dot_dimension_numbers<[1], [0], [0], [1], [0, 0, 1, 1], [], []>} : vector<100x16xf32>, vector<16x32xf32>, vector<100x32xf32> -> vector<100x32xf32>
    %188 = arith.addf %184, %187 : vector<100x32xf32>
    %c21 = arith.constant 21 : index
    %c0_116 = arith.constant 0 : index
    %189 = vector.load %arg12[%c21, %c0_116] : memref<122x16xf32, #tpu.memory_space<vmem>>, vector<100x16xf32>
    %c112 = arith.constant 112 : index
    %c0_117 = arith.constant 0 : index
    %190 = vector.load %arg4[%c112, %c0_117] : memref<144x32xf32, #tpu.memory_space<vmem>>, vector<16x32xf32>
    %cst_118 = arith.constant dense<0.000000e+00> : vector<100x32xf32>
    %191 = tpu.matmul %189, %190, %cst_118 {dimension_numbers = #tpu.dot_dimension_numbers<[1], [0], [0], [1], [0, 0, 1, 1], [], []>} : vector<100x16xf32>, vector<16x32xf32>, vector<100x32xf32> -> vector<100x32xf32>
    %192 = arith.addf %188, %191 : vector<100x32xf32>
    %c22_119 = arith.constant 22 : index
    %c0_120 = arith.constant 0 : index
    %193 = vector.load %arg12[%c22_119, %c0_120] : memref<122x16xf32, #tpu.memory_space<vmem>>, vector<100x16xf32>
    %c128_121 = arith.constant 128 : index
    %c0_122 = arith.constant 0 : index
    %194 = vector.load %arg4[%c128_121, %c0_122] : memref<144x32xf32, #tpu.memory_space<vmem>>, vector<16x32xf32>
    %cst_123 = arith.constant dense<0.000000e+00> : vector<100x32xf32>
    %195 = tpu.matmul %193, %194, %cst_123 {dimension_numbers = #tpu.dot_dimension_numbers<[1], [0], [0], [1], [0, 0, 1, 1], [], []>} : vector<100x16xf32>, vector<16x32xf32>, vector<100x32xf32> -> vector<100x32xf32>
    %196 = arith.addf %192, %195 : vector<100x32xf32>
    %c0_124 = arith.constant 0 : index
    %c0_125 = arith.constant 0 : index
    %197 = vector.load %arg13[%c0_124, %c0_125] : memref<100x32xf32, #tpu.memory_space<vmem>>, vector<100x32xf32>
    tpu.vector_store %arg13[%c0_124, %c0_125], %196 {strides = array<i32>} : memref<100x32xf32, #tpu.memory_space<vmem>>, vector<100x32xf32>,
    %cst_126 = arith.constant 0.000000e+00 : f32
    %198 = vector.broadcast %cst_126 : f32 to vector<50x32xf32>
    %c0_127 = arith.constant 0 : index
    %c0_128 = arith.constant 0 : index
    %199 = vector.load %arg14[%c0_127, %c0_128] : memref<50x32xf32, #tpu.memory_space<vmem>>, vector<50x32xf32>
    tpu.vector_store %arg14[%c0_127, %c0_128], %198 {strides = array<i32>} : memref<50x32xf32, #tpu.memory_space<vmem>>, vector<50x32xf32>,
    %c0_129 = arith.constant 0 : index
    %c0_130 = arith.constant 0 : index
    %200 = vector.load %arg5[%c0_129, %c0_130] : memref<1x32xf32, #tpu.memory_space<vmem>>, vector<1x32xf32>
    %c11_131 = arith.constant 11 : index
    %c0_132 = arith.constant 0 : index
    %201 = tpu.strided_load %arg13[%c11_131, %c0_132] {strides = array<i32: 2, 1>} : memref<100x32xf32, #tpu.memory_space<vmem>>, vector<4x32xf32>
    %c12_133 = arith.constant 12 : index
    %c0_134 = arith.constant 0 : index
    %202 = tpu.strided_load %arg13[%c12_133, %c0_134] {strides = array<i32: 2, 1>} : memref<100x32xf32, #tpu.memory_space<vmem>>, vector<4x32xf32>
    %c21_135 = arith.constant 21 : index
    %c0_136 = arith.constant 0 : index
    %203 = tpu.strided_load %arg13[%c21_135, %c0_136] {strides = array<i32: 2, 1>} : memref<100x32xf32, #tpu.memory_space<vmem>>, vector<4x32xf32>
    %c22_137 = arith.constant 22 : index
    %c0_138 = arith.constant 0 : index
    %204 = tpu.strided_load %arg13[%c22_137, %c0_138] {strides = array<i32: 2, 1>} : memref<100x32xf32, #tpu.memory_space<vmem>>, vector<4x32xf32>
    %205 = arith.maximumf %201, %202 : vector<4x32xf32>
    %206 = arith.maximumf %203, %204 : vector<4x32xf32>
    %207 = arith.maximumf %205, %206 : vector<4x32xf32>
    %208 = vector.broadcast %200 : vector<1x32xf32> to vector<4x32xf32>
    %209 = arith.addf %207, %208 : vector<4x32xf32>
    %cst_139 = arith.constant 0.000000e+00 : f32
    %210 = vector.broadcast %cst_139 : f32 to vector<4x32xf32>
    %211 = arith.maximumf %209, %210 : vector<4x32xf32>
    %c14 = arith.constant 14 : index
    %c0_140 = arith.constant 0 : index
    %212 = vector.load %arg14[%c14, %c0_140] : memref<50x32xf32, #tpu.memory_space<vmem>>, vector<4x32xf32>
    tpu.vector_store %arg14[%c14, %c0_140], %211 {strides = array<i32>} : memref<50x32xf32, #tpu.memory_space<vmem>>, vector<4x32xf32>,
    %c31 = arith.constant 31 : index
    %c0_141 = arith.constant 0 : index
    %213 = tpu.strided_load %arg13[%c31, %c0_141] {strides = array<i32: 2, 1>} : memref<100x32xf32, #tpu.memory_space<vmem>>, vector<4x32xf32>
    %c32_142 = arith.constant 32 : index
    %c0_143 = arith.constant 0 : index
    %214 = tpu.strided_load %arg13[%c32_142, %c0_143] {strides = array<i32: 2, 1>} : memref<100x32xf32, #tpu.memory_space<vmem>>, vector<4x32xf32>
    %c41 = arith.constant 41 : index
    %c0_144 = arith.constant 0 : index
    %215 = tpu.strided_load %arg13[%c41, %c0_144] {strides = array<i32: 2, 1>} : memref<100x32xf32, #tpu.memory_space<vmem>>, vector<4x32xf32>
    %c42_145 = arith.constant 42 : index
    %c0_146 = arith.constant 0 : index
    %216 = tpu.strided_load %arg13[%c42_145, %c0_146] {strides = array<i32: 2, 1>} : memref<100x32xf32, #tpu.memory_space<vmem>>, vector<4x32xf32>
    %217 = arith.maximumf %213, %214 : vector<4x32xf32>
    %218 = arith.maximumf %215, %216 : vector<4x32xf32>
    %219 = arith.maximumf %217, %218 : vector<4x32xf32>
    %220 = vector.broadcast %200 : vector<1x32xf32> to vector<4x32xf32>
    %221 = arith.addf %219, %220 : vector<4x32xf32>
    %cst_147 = arith.constant 0.000000e+00 : f32
    %222 = vector.broadcast %cst_147 : f32 to vector<4x32xf32>
    %223 = arith.maximumf %221, %222 : vector<4x32xf32>
    %c20_148 = arith.constant 20 : index
    %c0_149 = arith.constant 0 : index
    %224 = vector.load %arg14[%c20_148, %c0_149] : memref<50x32xf32, #tpu.memory_space<vmem>>, vector<4x32xf32>
    tpu.vector_store %arg14[%c20_148, %c0_149], %223 {strides = array<i32>} : memref<50x32xf32, #tpu.memory_space<vmem>>, vector<4x32xf32>,
    %c51 = arith.constant 51 : index
    %c0_150 = arith.constant 0 : index
    %225 = tpu.strided_load %arg13[%c51, %c0_150] {strides = array<i32: 2, 1>} : memref<100x32xf32, #tpu.memory_space<vmem>>, vector<4x32xf32>
    %c52_151 = arith.constant 52 : index
    %c0_152 = arith.constant 0 : index
    %226 = tpu.strided_load %arg13[%c52_151, %c0_152] {strides = array<i32: 2, 1>} : memref<100x32xf32, #tpu.memory_space<vmem>>, vector<4x32xf32>
    %c61 = arith.constant 61 : index
    %c0_153 = arith.constant 0 : index
    %227 = tpu.strided_load %arg13[%c61, %c0_153] {strides = array<i32: 2, 1>} : memref<100x32xf32, #tpu.memory_space<vmem>>, vector<4x32xf32>
    %c62_154 = arith.constant 62 : index
    %c0_155 = arith.constant 0 : index
    %228 = tpu.strided_load %arg13[%c62_154, %c0_155] {strides = array<i32: 2, 1>} : memref<100x32xf32, #tpu.memory_space<vmem>>, vector<4x32xf32>
    %229 = arith.maximumf %225, %226 : vector<4x32xf32>
    %230 = arith.maximumf %227, %228 : vector<4x32xf32>
    %231 = arith.maximumf %229, %230 : vector<4x32xf32>
    %232 = vector.broadcast %200 : vector<1x32xf32> to vector<4x32xf32>
    %233 = arith.addf %231, %232 : vector<4x32xf32>
    %cst_156 = arith.constant 0.000000e+00 : f32
    %234 = vector.broadcast %cst_156 : f32 to vector<4x32xf32>
    %235 = arith.maximumf %233, %234 : vector<4x32xf32>
    %c26 = arith.constant 26 : index
    %c0_157 = arith.constant 0 : index
    %236 = vector.load %arg14[%c26, %c0_157] : memref<50x32xf32, #tpu.memory_space<vmem>>, vector<4x32xf32>
    tpu.vector_store %arg14[%c26, %c0_157], %235 {strides = array<i32>} : memref<50x32xf32, #tpu.memory_space<vmem>>, vector<4x32xf32>,
    %c71 = arith.constant 71 : index
    %c0_158 = arith.constant 0 : index
    %237 = tpu.strided_load %arg13[%c71, %c0_158] {strides = array<i32: 2, 1>} : memref<100x32xf32, #tpu.memory_space<vmem>>, vector<4x32xf32>
    %c72_159 = arith.constant 72 : index
    %c0_160 = arith.constant 0 : index
    %238 = tpu.strided_load %arg13[%c72_159, %c0_160] {strides = array<i32: 2, 1>} : memref<100x32xf32, #tpu.memory_space<vmem>>, vector<4x32xf32>
    %c81 = arith.constant 81 : index
    %c0_161 = arith.constant 0 : index
    %239 = tpu.strided_load %arg13[%c81, %c0_161] {strides = array<i32: 2, 1>} : memref<100x32xf32, #tpu.memory_space<vmem>>, vector<4x32xf32>
    %c82_162 = arith.constant 82 : index
    %c0_163 = arith.constant 0 : index
    %240 = tpu.strided_load %arg13[%c82_162, %c0_163] {strides = array<i32: 2, 1>} : memref<100x32xf32, #tpu.memory_space<vmem>>, vector<4x32xf32>
    %241 = arith.maximumf %237, %238 : vector<4x32xf32>
    %242 = arith.maximumf %239, %240 : vector<4x32xf32>
    %243 = arith.maximumf %241, %242 : vector<4x32xf32>
    %244 = vector.broadcast %200 : vector<1x32xf32> to vector<4x32xf32>
    %245 = arith.addf %243, %244 : vector<4x32xf32>
    %cst_164 = arith.constant 0.000000e+00 : f32
    %246 = vector.broadcast %cst_164 : f32 to vector<4x32xf32>
    %247 = arith.maximumf %245, %246 : vector<4x32xf32>
    %c32_165 = arith.constant 32 : index
    %c0_166 = arith.constant 0 : index
    %248 = vector.load %arg14[%c32_165, %c0_166] : memref<50x32xf32, #tpu.memory_space<vmem>>, vector<4x32xf32>
    tpu.vector_store %arg14[%c32_165, %c0_166], %247 {strides = array<i32>} : memref<50x32xf32, #tpu.memory_space<vmem>>, vector<4x32xf32>,
    %c0_167 = arith.constant 0 : index
    %c0_168 = arith.constant 0 : index
    %249 = vector.load %arg14[%c0_167, %c0_168] : memref<50x32xf32, #tpu.memory_space<vmem>>, vector<36x32xf32>
    %c0_169 = arith.constant 0 : index
    %c0_170 = arith.constant 0 : index
    %250 = vector.load %arg6[%c0_169, %c0_170] : memref<288x16xf32, #tpu.memory_space<vmem>>, vector<32x16xf32>
    %cst_171 = arith.constant dense<0.000000e+00> : vector<36x16xf32>
    %251 = tpu.matmul %249, %250, %cst_171 {dimension_numbers = #tpu.dot_dimension_numbers<[1], [0], [0], [1], [0, 0, 1, 1], [], []>} : vector<36x32xf32>, vector<32x16xf32>, vector<36x16xf32> -> vector<36x16xf32>
    %c1_172 = arith.constant 1 : index
    %c0_173 = arith.constant 0 : index
    %252 = vector.load %arg14[%c1_172, %c0_173] : memref<50x32xf32, #tpu.memory_space<vmem>>, vector<36x32xf32>
    %c32_174 = arith.constant 32 : index
    %c0_175 = arith.constant 0 : index
    %253 = vector.load %arg6[%c32_174, %c0_175] : memref<288x16xf32, #tpu.memory_space<vmem>>, vector<32x16xf32>
    %cst_176 = arith.constant dense<0.000000e+00> : vector<36x16xf32>
    %254 = tpu.matmul %252, %253, %cst_176 {dimension_numbers = #tpu.dot_dimension_numbers<[1], [0], [0], [1], [0, 0, 1, 1], [], []>} : vector<36x32xf32>, vector<32x16xf32>, vector<36x16xf32> -> vector<36x16xf32>
    %255 = arith.addf %251, %254 : vector<36x16xf32>
    %c2_177 = arith.constant 2 : index
    %c0_178 = arith.constant 0 : index
    %256 = vector.load %arg14[%c2_177, %c0_178] : memref<50x32xf32, #tpu.memory_space<vmem>>, vector<36x32xf32>
    %c64_179 = arith.constant 64 : index
    %c0_180 = arith.constant 0 : index
    %257 = vector.load %arg6[%c64_179, %c0_180] : memref<288x16xf32, #tpu.memory_space<vmem>>, vector<32x16xf32>
    %cst_181 = arith.constant dense<0.000000e+00> : vector<36x16xf32>
    %258 = tpu.matmul %256, %257, %cst_181 {dimension_numbers = #tpu.dot_dimension_numbers<[1], [0], [0], [1], [0, 0, 1, 1], [], []>} : vector<36x32xf32>, vector<32x16xf32>, vector<36x16xf32> -> vector<36x16xf32>
    %259 = arith.addf %255, %258 : vector<36x16xf32>
    %c6_182 = arith.constant 6 : index
    %c0_183 = arith.constant 0 : index
    %260 = vector.load %arg14[%c6_182, %c0_183] : memref<50x32xf32, #tpu.memory_space<vmem>>, vector<36x32xf32>
    %c96_184 = arith.constant 96 : index
    %c0_185 = arith.constant 0 : index
    %261 = vector.load %arg6[%c96_184, %c0_185] : memref<288x16xf32, #tpu.memory_space<vmem>>, vector<32x16xf32>
    %cst_186 = arith.constant dense<0.000000e+00> : vector<36x16xf32>
    %262 = tpu.matmul %260, %261, %cst_186 {dimension_numbers = #tpu.dot_dimension_numbers<[1], [0], [0], [1], [0, 0, 1, 1], [], []>} : vector<36x32xf32>, vector<32x16xf32>, vector<36x16xf32> -> vector<36x16xf32>
    %263 = arith.addf %259, %262 : vector<36x16xf32>
    %c7_187 = arith.constant 7 : index
    %c0_188 = arith.constant 0 : index
    %264 = vector.load %arg14[%c7_187, %c0_188] : memref<50x32xf32, #tpu.memory_space<vmem>>, vector<36x32xf32>
    %c128_189 = arith.constant 128 : index
    %c0_190 = arith.constant 0 : index
    %265 = vector.load %arg6[%c128_189, %c0_190] : memref<288x16xf32, #tpu.memory_space<vmem>>, vector<32x16xf32>
    %cst_191 = arith.constant dense<0.000000e+00> : vector<36x16xf32>
    %266 = tpu.matmul %264, %265, %cst_191 {dimension_numbers = #tpu.dot_dimension_numbers<[1], [0], [0], [1], [0, 0, 1, 1], [], []>} : vector<36x32xf32>, vector<32x16xf32>, vector<36x16xf32> -> vector<36x16xf32>
    %267 = arith.addf %263, %266 : vector<36x16xf32>
    %c8_192 = arith.constant 8 : index
    %c0_193 = arith.constant 0 : index
    %268 = vector.load %arg14[%c8_192, %c0_193] : memref<50x32xf32, #tpu.memory_space<vmem>>, vector<36x32xf32>
    %c160 = arith.constant 160 : index
    %c0_194 = arith.constant 0 : index
    %269 = vector.load %arg6[%c160, %c0_194] : memref<288x16xf32, #tpu.memory_space<vmem>>, vector<32x16xf32>
    %cst_195 = arith.constant dense<0.000000e+00> : vector<36x16xf32>
    %270 = tpu.matmul %268, %269, %cst_195 {dimension_numbers = #tpu.dot_dimension_numbers<[1], [0], [0], [1], [0, 0, 1, 1], [], []>} : vector<36x32xf32>, vector<32x16xf32>, vector<36x16xf32> -> vector<36x16xf32>
    %271 = arith.addf %267, %270 : vector<36x16xf32>
    %c12_196 = arith.constant 12 : index
    %c0_197 = arith.constant 0 : index
    %272 = vector.load %arg14[%c12_196, %c0_197] : memref<50x32xf32, #tpu.memory_space<vmem>>, vector<36x32xf32>
    %c192 = arith.constant 192 : index
    %c0_198 = arith.constant 0 : index
    %273 = vector.load %arg6[%c192, %c0_198] : memref<288x16xf32, #tpu.memory_space<vmem>>, vector<32x16xf32>
    %cst_199 = arith.constant dense<0.000000e+00> : vector<36x16xf32>
    %274 = tpu.matmul %272, %273, %cst_199 {dimension_numbers = #tpu.dot_dimension_numbers<[1], [0], [0], [1], [0, 0, 1, 1], [], []>} : vector<36x32xf32>, vector<32x16xf32>, vector<36x16xf32> -> vector<36x16xf32>
    %275 = arith.addf %271, %274 : vector<36x16xf32>
    %c13 = arith.constant 13 : index
    %c0_200 = arith.constant 0 : index
    %276 = vector.load %arg14[%c13, %c0_200] : memref<50x32xf32, #tpu.memory_space<vmem>>, vector<36x32xf32>
    %c224 = arith.constant 224 : index
    %c0_201 = arith.constant 0 : index
    %277 = vector.load %arg6[%c224, %c0_201] : memref<288x16xf32, #tpu.memory_space<vmem>>, vector<32x16xf32>
    %cst_202 = arith.constant dense<0.000000e+00> : vector<36x16xf32>
    %278 = tpu.matmul %276, %277, %cst_202 {dimension_numbers = #tpu.dot_dimension_numbers<[1], [0], [0], [1], [0, 0, 1, 1], [], []>} : vector<36x32xf32>, vector<32x16xf32>, vector<36x16xf32> -> vector<36x16xf32>
    %279 = arith.addf %275, %278 : vector<36x16xf32>
    %c14_203 = arith.constant 14 : index
    %c0_204 = arith.constant 0 : index
    %280 = vector.load %arg14[%c14_203, %c0_204] : memref<50x32xf32, #tpu.memory_space<vmem>>, vector<36x32xf32>
    %c256 = arith.constant 256 : index
    %c0_205 = arith.constant 0 : index
    %281 = vector.load %arg6[%c256, %c0_205] : memref<288x16xf32, #tpu.memory_space<vmem>>, vector<32x16xf32>
    %cst_206 = arith.constant dense<0.000000e+00> : vector<36x16xf32>
    %282 = tpu.matmul %280, %281, %cst_206 {dimension_numbers = #tpu.dot_dimension_numbers<[1], [0], [0], [1], [0, 0, 1, 1], [], []>} : vector<36x32xf32>, vector<32x16xf32>, vector<36x16xf32> -> vector<36x16xf32>
    %283 = arith.addf %279, %282 : vector<36x16xf32>
    %c0_207 = arith.constant 0 : index
    %c0_208 = arith.constant 0 : index
    %284 = vector.load %arg15[%c0_207, %c0_208] : memref<36x16xf32, #tpu.memory_space<vmem>>, vector<36x16xf32>
    tpu.vector_store %arg15[%c0_207, %c0_208], %283 {strides = array<i32>} : memref<36x16xf32, #tpu.memory_space<vmem>>, vector<36x16xf32>,
    %c7_209 = arith.constant 7 : index
    %c0_210 = arith.constant 0 : index
    %285 = vector.load %arg15[%c7_209, %c0_210] : memref<36x16xf32, #tpu.memory_space<vmem>>, vector<4x16xf32>
    %c13_211 = arith.constant 13 : index
    %c0_212 = arith.constant 0 : index
    %286 = vector.load %arg15[%c13_211, %c0_212] : memref<36x16xf32, #tpu.memory_space<vmem>>, vector<4x16xf32>
    %287 = arith.maximumf %285, %286 : vector<4x16xf32>
    %c19_213 = arith.constant 19 : index
    %c0_214 = arith.constant 0 : index
    %288 = vector.load %arg15[%c19_213, %c0_214] : memref<36x16xf32, #tpu.memory_space<vmem>>, vector<4x16xf32>
    %289 = arith.maximumf %287, %288 : vector<4x16xf32>
    %c25 = arith.constant 25 : index
    %c0_215 = arith.constant 0 : index
    %290 = vector.load %arg15[%c25, %c0_215] : memref<36x16xf32, #tpu.memory_space<vmem>>, vector<4x16xf32>
    %291 = arith.maximumf %289, %290 : vector<4x16xf32>
    %cst_216 = arith.constant dense<0xFF800000> : vector<16xf32>
    %292 = vector.multi_reduction <maximumf>, %291, %cst_216 [0] : vector<4x16xf32> to vector<16xf32>
    %293 = vector.shape_cast %292 : vector<16xf32> to vector<1x16xf32>
    %c0_217 = arith.constant 0 : index
    %c0_218 = arith.constant 0 : index
    %294 = vector.load %arg16[%c0_217, %c0_218] : memref<1x16xf32, #tpu.memory_space<vmem>>, vector<1x16xf32>
    tpu.vector_store %arg16[%c0_217, %c0_218], %293 {strides = array<i32>} : memref<1x16xf32, #tpu.memory_space<vmem>>, vector<1x16xf32>,
    %c0_219 = arith.constant 0 : index
    %c0_220 = arith.constant 0 : index
    %295 = vector.load %arg16[%c0_219, %c0_220] : memref<1x16xf32, #tpu.memory_space<vmem>>, vector<1x16xf32>
    %c0_221 = arith.constant 0 : index
    %c0_222 = arith.constant 0 : index
    %296 = vector.load %arg7[%c0_221, %c0_222] : memref<1x16xf32, #tpu.memory_space<vmem>>, vector<1x16xf32>
    %297 = arith.addf %295, %296 : vector<1x16xf32>
    %cst_223 = arith.constant 0.000000e+00 : f32
    %298 = vector.broadcast %cst_223 : f32 to vector<1x16xf32>
    %299 = arith.maximumf %297, %298 : vector<1x16xf32>
    %c0_224 = arith.constant 0 : index
    %c0_225 = arith.constant 0 : index
    %300 = vector.load %arg8[%c0_224, %c0_225] : memref<16x10xf32, #tpu.memory_space<vmem>>, vector<16x10xf32>
    %cst_226 = arith.constant dense<0.000000e+00> : vector<1x10xf32>
    %301 = tpu.matmul %299, %300, %cst_226 {dimension_numbers = #tpu.dot_dimension_numbers<[1], [0], [0], [1], [0, 0, 1, 1], [], []>} : vector<1x16xf32>, vector<16x10xf32>, vector<1x10xf32> -> vector<1x10xf32>
    %c0_227 = arith.constant 0 : index
    %c0_228 = arith.constant 0 : index
    %302 = vector.load %arg9[%c0_227, %c0_228] : memref<1x10xf32, #tpu.memory_space<vmem>>, vector<1x10xf32>
    %303 = arith.addf %301, %302 : vector<1x10xf32>
    %c0_229 = arith.constant 0 : index
    %c0_230 = arith.constant 0 : index
    %c0_231 = arith.constant 0 : index
    %304 = vector.load %arg10[%c0_229, %c0_230, %c0_231] : memref<1x1x10xf32, #tpu.memory_space<vmem>>, vector<1x1x10xf32>
    %305 = vector.shape_cast %304 : vector<1x1x10xf32> to vector<1x10xf32>
    %306 = vector.shape_cast %303 : vector<1x10xf32> to vector<1x1x10xf32>
    tpu.vector_store %arg10[%c0_229, %c0_230, %c0_231], %306 {strides = array<i32>} : memref<1x1x10xf32, #tpu.memory_space<vmem>>, vector<1x1x10xf32>,
    return
  }
  func.func @transform_0(%arg0: i32) -> (i32, i32, i32) {
    %c0_i32 = arith.constant 0 : i32
    %c0_i32_0 = arith.constant 0 : i32
    %c0_i32_1 = arith.constant 0 : i32
    return %arg0, %c0_i32, %c0_i32_0 : i32, i32, i32
  }
  func.func @transform_1(%arg0: i32) -> (i32, i32) {
    %c0_i32 = arith.constant 0 : i32
    %c0_i32_0 = arith.constant 0 : i32
    %c0_i32_1 = arith.constant 0 : i32
    return %c0_i32, %c0_i32_0 : i32, i32
  }
  func.func @transform_2(%arg0: i32) -> (i32, i32) {
    %c0_i32 = arith.constant 0 : i32
    %c0_i32_0 = arith.constant 0 : i32
    %c0_i32_1 = arith.constant 0 : i32
    return %c0_i32, %c0_i32_0 : i32, i32
  }
  func.func @transform_3(%arg0: i32) -> (i32, i32) {
    %c0_i32 = arith.constant 0 : i32
    %c0_i32_0 = arith.constant 0 : i32
    %c0_i32_1 = arith.constant 0 : i32
    return %c0_i32, %c0_i32_0 : i32, i32
  }
  func.func @transform_4(%arg0: i32) -> (i32, i32) {
    %c0_i32 = arith.constant 0 : i32
    %c0_i32_0 = arith.constant 0 : i32
    %c0_i32_1 = arith.constant 0 : i32
    return %c0_i32, %c0_i32_0 : i32, i32
  }
  func.func @transform_5(%arg0: i32) -> (i32, i32) {
    %c0_i32 = arith.constant 0 : i32
    %c0_i32_0 = arith.constant 0 : i32
    %c0_i32_1 = arith.constant 0 : i32
    return %c0_i32, %c0_i32_0 : i32, i32
  }
  func.func @transform_6(%arg0: i32) -> (i32, i32) {
    %c0_i32 = arith.constant 0 : i32
    %c0_i32_0 = arith.constant 0 : i32
    %c0_i32_1 = arith.constant 0 : i32
    return %c0_i32, %c0_i32_0 : i32, i32
  }
  func.func @transform_7(%arg0: i32) -> (i32, i32) {
    %c0_i32 = arith.constant 0 : i32
    %c0_i32_0 = arith.constant 0 : i32
    %c0_i32_1 = arith.constant 0 : i32
    return %c0_i32, %c0_i32_0 : i32, i32
  }
  func.func @transform_8(%arg0: i32) -> (i32, i32) {
    %c0_i32 = arith.constant 0 : i32
    %c0_i32_0 = arith.constant 0 : i32
    %c0_i32_1 = arith.constant 0 : i32
    return %c0_i32, %c0_i32_0 : i32, i32
  }
  func.func @transform_9(%arg0: i32) -> (i32, i32, i32) {
    %c0_i32 = arith.constant 0 : i32
    %c0_i32_0 = arith.constant 0 : i32
    %c0_i32_1 = arith.constant 0 : i32
    return %arg0, %c0_i32, %c0_i32_0 : i32, i32, i32
  }
}

</mosaic_0001>

<llo_original>
// kernel: adaptive_convnet_forward.1
$region0: #{adaptive_convnet_forward.1}
  #allocation0 [shape = 'u32[]', space=smem, size = 0x4, offset = 0x4, fixed_abs, tag = 'smem constant byte address 0x4 - core index']
  #allocation1 [shape = 'u32[144,128]{1,0:T(1,128)}', space=vmem, size = 0x12000, scoped, tag = 'internal scratch']
  #allocation2 [shape = 'f32[324,16]{1,0:T(8,128)}', space=vmem, size = 0x29000, scoped, tag = 'scratch operand']
  #allocation3 [shape = 'f32[122,16]{1,0:T(8,128)}', space=vmem, size = 0x10000, scoped, tag = 'scratch operand']
  #allocation4 [shape = 'f32[100,32]{1,0:T(8,128)}', space=vmem, size = 0xd000, scoped, tag = 'scratch operand']
  #allocation5 [shape = 'f32[50,32]{1,0:T(8,128)}', space=vmem, size = 0x7000, scoped, tag = 'scratch operand']
  #allocation6 [shape = 'f32[36,16]{1,0:T(8,128)}', space=vmem, size = 0x5000, scoped, tag = 'scratch operand']
  #allocation7 [shape = 'f32[1,16]{1,0:T(1,128)}', space=vmem, size = 0x200, scoped, tag = 'scratch operand']
  %s0 = inlined_call_operand.vmem [shape: f32[2,362,1], index: 0, kind: input, shape index: {}]
  %s1 = inlined_call_operand.vmem [shape: f32[9,16], index: 1, kind: input, shape index: {}]
  %s2 = inlined_call_operand.vmem [shape: f32[1,16], index: 2, kind: input, shape index: {}]
  %s3 = inlined_call_operand.vmem [shape: f32[144,32], index: 3, kind: input, shape index: {}]
  %s4 = inlined_call_operand.vmem [shape: f32[1,32], index: 4, kind: input, shape index: {}]
  %s5 = inlined_call_operand.vmem [shape: f32[288,16], index: 5, kind: input, shape index: {}]
  %s6 = inlined_call_operand.vmem [shape: f32[1,16], index: 6, kind: input, shape index: {}]
  %s7 = inlined_call_operand.vmem [shape: f32[16,10], index: 7, kind: input, shape index: {}]
  %s8 = inlined_call_operand.vmem [shape: f32[1,10], index: 8, kind: input, shape index: {}]
  %s9 = inlined_call_operand.hbm [shape: f32[2,1,10], index: 9, kind: output, shape index: {}]
  %s10 = sld [smem:[#allocation0]]
  $region69: #{adaptive_convnet_forward.1} parent=0
    _
  %s12 = ssub.s32 1, %s10
  %s13 = scalar_select 0, %s12, %s10
  $region1: #{adaptive_convnet_forward.1} parent=0
    #allocation8 [shape = 'u8[1024]{0}', space=vmem, size = 0x400, scoped, tag = 'output window, operand 0']
    #allocation9 [shape = 's32[2]{0}', space=sflag, size = 0x8, scoped, tag = 'scoped memory for adaptive_convnet_forward.1']
    %14 = vsyncpa [#allocation9], 0
    %s15 = scalar_lea.sflag [#allocation9], 1
    %16 = vsyncpa %s15, 0
    loop: start=0, step=1, limit=4
    $region2: #{adaptive_convnet_forward.1} parent=1 // loop_pre_header
      _
    $region3: #{adaptive_convnet_forward.1} parent=1 // loop_header
      %s18 = sphi 0, %s22
      %p19 = scmp.ge.s32.totalorder %s18, 4
      %s28 = sphi 0, %s30
      %s31 = sphi 0, %s28
      %s32 = sphi 0, %s31
      %s48 = sphi 0, %s32
      %s52 = sphi 0, %s52
      %s54 = sphi 0, %s52
      %s55 = sphi 0, %s54
      %s69 = sphi 0, %s55
      %s73 = sphi 0, %s73
      %s75 = sphi 0, %s73
      %s76 = sphi 0, %s75
      %s90 = sphi 0, %s76
      %s94 = sphi 0, %s94
      %s96 = sphi 0, %s94
      %s97 = sphi 0, %s96
      %s111 = sphi 0, %s97
      %s115 = sphi 0, %s115
      %s117 = sphi 0, %s115
      %s118 = sphi 0, %s117
      %s132 = sphi 0, %s118
      %s136 = sphi 0, %s136
      %s138 = sphi 0, %s136
      %s139 = sphi 0, %s138
      %s153 = sphi 0, %s139
      %s157 = sphi 0, %s157
      %s159 = sphi 0, %s157
      %s160 = sphi 0, %s159
      %s174 = sphi 0, %s160
      %s178 = sphi 0, %s178
      %s180 = sphi 0, %s178
      %s181 = sphi 0, %s180
      %s195 = sphi 0, %s181
      %s199 = sphi 0, %s199
      %s201 = sphi 0, %s199
      %s202 = sphi 0, %s201
      %s216 = sphi 0, %s202
      %s222 = sphi 0, %s224
      %s225 = sphi 0, %s222
      %s226 = sphi 0, %s225
      %s242 = sphi 0, %s226
    $region4: #{adaptive_convnet_forward.1} parent=1 // loop_header_branch
      %21 = sbr.rel (%p19) target = $region8
    $region5: #{adaptive_convnet_forward.1} parent=1 // loop_body
      %s23 = ssub.s32 %s18, 1
      %s24 = ssub.s32 %s18, 2
      %s25 = sadd.s32 %s18, 1
      %s26 = ssub.s32 %s18, %s25
      %p27 = scmp.eq.s32.totalorder %s26, 0
      %s29 = sadd.s32 %s28, 1
      %s30 = scalar_select %p27, %s28, %s29
      %p33 = pneg %p27
      %p34 = scmp.eq.s32.totalorder %s18, 1
      %p35 = por %p33, %p34
      %p36 = scmp.ne.s32.totalorder %s28, %s31
      %p37 = scmp.eq.s32.totalorder %s18, 0
      %p38 = por %p36, %p37
      %p39 = scmp.ne.s32.totalorder %s28, %s31
      %p40 = scmp.eq.s32.totalorder %s23, 1
      %p41 = por %p39, %p40
      %p42 = scmp.ne.s32.totalorder %s31, %s32
      %p43 = scmp.eq.s32.totalorder %s23, 0
      %p44 = por %p42, %p43
      %p45 = scmp.ne.s32.totalorder %s31, %s32
      %p46 = scmp.eq.s32.totalorder %s24, 1
      %p47 = por %p45, %p46
      %p49 = scmp.ne.s32.totalorder %s32, %s48
      %p50 = scmp.eq.s32.totalorder %s24, 0
      %p51 = por %p49, %p50
      %s53 = sadd.s32 %s52, 1
      %p56 = scmp.eq.s32.totalorder %s18, 1
      %p57 = scmp.ne.s32.totalorder %s52, %s54
      %p58 = scmp.eq.s32.totalorder %s18, 0
      %p59 = por %p57, %p58
      %p60 = scmp.ne.s32.totalorder %s52, %s54
      %p61 = scmp.eq.s32.totalorder %s23, 1
      %p62 = por %p60, %p61
      %p63 = scmp.ne.s32.totalorder %s54, %s55
      %p64 = scmp.eq.s32.totalorder %s23, 0
      %p65 = por %p63, %p64
      %p66 = scmp.ne.s32.totalorder %s54, %s55
      %p67 = scmp.eq.s32.totalorder %s24, 1
      %p68 = por %p66, %p67
      %p70 = scmp.ne.s32.totalorder %s55, %s69
      %p71 = scmp.eq.s32.totalorder %s24, 0
      %p72 = por %p70, %p71
      %s74 = sadd.s32 %s73, 1
      %p77 = scmp.eq.s32.totalorder %s18, 1
      %p78 = scmp.ne.s32.totalorder %s73, %s75
      %p79 = scmp.eq.s32.totalorder %s18, 0
      %p80 = por %p78, %p79
      %p81 = scmp.ne.s32.totalorder %s73, %s75
      %p82 = scmp.eq.s32.totalorder %s23, 1
      %p83 = por %p81, %p82
      %p84 = scmp.ne.s32.totalorder %s75, %s76
      %p85 = scmp.eq.s32.totalorder %s23, 0
      %p86 = por %p84, %p85
      %p87 = scmp.ne.s32.totalorder %s75, %s76
      %p88 = scmp.eq.s32.totalorder %s24, 1
      %p89 = por %p87, %p88
      %p91 = scmp.ne.s32.totalorder %s76, %s90
      %p92 = scmp.eq.s32.totalorder %s24, 0
      %p93 = por %p91, %p92
      %s95 = sadd.s32 %s94, 1
      %p98 = scmp.eq.s32.totalorder %s18, 1
      %p99 = scmp.ne.s32.totalorder %s94, %s96
      %p100 = scmp.eq.s32.totalorder %s18, 0
      %p101 = por %p99, %p100
      %p102 = scmp.ne.s32.totalorder %s94, %s96
      %p103 = scmp.eq.s32.totalorder %s23, 1
      %p104 = por %p102, %p103
      %p105 = scmp.ne.s32.totalorder %s96, %s97
      %p106 = scmp.eq.s32.totalorder %s23, 0
      %p107 = por %p105, %p106
      %p108 = scmp.ne.s32.totalorder %s96, %s97
      %p109 = scmp.eq.s32.totalorder %s24, 1
      %p110 = por %p108, %p109
      %p112 = scmp.ne.s32.totalorder %s97, %s111
      %p113 = scmp.eq.s32.totalorder %s24, 0
      %p114 = por %p112, %p113
      %s116 = sadd.s32 %s115, 1
      %p119 = scmp.eq.s32.totalorder %s18, 1
      %p120 = scmp.ne.s32.totalorder %s115, %s117
      %p121 = scmp.eq.s32.totalorder %s18, 0
      %p122 = por %p120, %p121
      %p123 = scmp.ne.s32.totalorder %s115, %s117
      %p124 = scmp.eq.s32.totalorder %s23, 1
      %p125 = por %p123, %p124
      %p126 = scmp.ne.s32.totalorder %s117, %s118
      %p127 = scmp.eq.s32.totalorder %s23, 0
      %p128 = por %p126, %p127
      %p129 = scmp.ne.s32.totalorder %s117, %s118
      %p130 = scmp.eq.s32.totalorder %s24, 1
      %p131 = por %p129, %p130
      %p133 = scmp.ne.s32.totalorder %s118, %s132
      %p134 = scmp.eq.s32.totalorder %s24, 0
      %p135 = por %p133, %p134
      %s137 = sadd.s32 %s136, 1
      %p140 = scmp.eq.s32.totalorder %s18, 1
      %p141 = scmp.ne.s32.totalorder %s136, %s138
      %p142 = scmp.eq.s32.totalorder %s18, 0
      %p143 = por %p141, %p142
      %p144 = scmp.ne.s32.totalorder %s136, %s138
      %p145 = scmp.eq.s32.totalorder %s23, 1
      %p146 = por %p144, %p145
      %p147 = scmp.ne.s32.totalorder %s138, %s139
      %p148 = scmp.eq.s32.totalorder %s23, 0
      %p149 = por %p147, %p148
      %p150 = scmp.ne.s32.totalorder %s138, %s139
      %p151 = scmp.eq.s32.totalorder %s24, 1
      %p152 = por %p150, %p151
      %p154 = scmp.ne.s32.totalorder %s139, %s153
      %p155 = scmp.eq.s32.totalorder %s24, 0
      %p156 = por %p154, %p155
      %s158 = sadd.s32 %s157, 1
      %p161 = scmp.eq.s32.totalorder %s18, 1
      %p162 = scmp.ne.s32.totalorder %s157, %s159
      %p163 = scmp.eq.s32.totalorder %s18, 0
      %p164 = por %p162, %p163
      %p165 = scmp.ne.s32.totalorder %s157, %s159
      %p166 = scmp.eq.s32.totalorder %s23, 1
      %p167 = por %p165, %p166
      %p168 = scmp.ne.s32.totalorder %s159, %s160
      %p169 = scmp.eq.s32.totalorder %s23, 0
      %p170 = por %p168, %p169
      %p171 = scmp.ne.s32.totalorder %s159, %s160
      %p172 = scmp.eq.s32.totalorder %s24, 1
      %p173 = por %p171, %p172
      %p175 = scmp.ne.s32.totalorder %s160, %s174
      %p176 = scmp.eq.s32.totalorder %s24, 0
      %p177 = por %p175, %p176
      %s179 = sadd.s32 %s178, 1
      %p182 = scmp.eq.s32.totalorder %s18, 1
      %p183 = scmp.ne.s32.totalorder %s178, %s180
      %p184 = scmp.eq.s32.totalorder %s18, 0
      %p185 = por %p183, %p184
      %p186 = scmp.ne.s32.totalorder %s178, %s180
      %p187 = scmp.eq.s32.totalorder %s23, 1
      %p188 = por %p186, %p187
      %p189 = scmp.ne.s32.totalorder %s180, %s181
      %p190 = scmp.eq.s32.totalorder %s23, 0
      %p191 = por %p189, %p190
      %p192 = scmp.ne.s32.totalorder %s180, %s181
      %p193 = scmp.eq.s32.totalorder %s24, 1
      %p194 = por %p192, %p193
      %p196 = scmp.ne.s32.totalorder %s181, %s195
      %p197 = scmp.eq.s32.totalorder %s24, 0
      %p198 = por %p196, %p197
      %s200 = sadd.s32 %s199, 1
      %p203 = scmp.eq.s32.totalorder %s18, 1
      %p204 = scmp.ne.s32.totalorder %s199, %s201
      %p205 = scmp.eq.s32.totalorder %s18, 0
      %p206 = por %p204, %p205
      %p207 = scmp.ne.s32.totalorder %s199, %s201
      %p208 = scmp.eq.s32.totalorder %s23, 1
      %p209 = por %p207, %p208
      %p210 = scmp.ne.s32.totalorder %s201, %s202
      %p211 = scmp.eq.s32.totalorder %s23, 0
      %p212 = por %p210, %p211
      %p213 = scmp.ne.s32.totalorder %s201, %s202
      %p214 = scmp.eq.s32.totalorder %s24, 1
      %p215 = por %p213, %p214
      %p217 = scmp.ne.s32.totalorder %s202, %s216
      %p218 = scmp.eq.s32.totalorder %s24, 0
      %p219 = por %p217, %p218
      %s220 = ssub.s32 %s18, %s25
      %p221 = scmp.eq.s32.totalorder %s220, 0
      %s223 = sadd.s32 %s222, 1
      %s224 = scalar_select %p221, %s222, %s223
      %p227 = pneg %p221
      %p228 = scmp.eq.s32.totalorder %s18, 1
      %p229 = por %p227, %p228
      %p230 = scmp.ne.s32.totalorder %s222, %s225
      %p231 = scmp.eq.s32.totalorder %s18, 0
      %p232 = por %p230, %p231
      %p233 = scmp.ne.s32.totalorder %s222, %s225
      %p234 = scmp.eq.s32.totalorder %s23, 1
      %p235 = por %p233, %p234
      %p236 = scmp.ne.s32.totalorder %s225, %s226
      %p237 = scmp.eq.s32.totalorder %s23, 0
      %p238 = por %p236, %p237
      %p239 = scmp.ne.s32.totalorder %s225, %s226
      %p240 = scmp.eq.s32.totalorder %s24, 1
      %p241 = por %p239, %p240
      %p243 = scmp.ne.s32.totalorder %s226, %s242
      %p244 = scmp.eq.s32.totalorder %s24, 0
      %p245 = por %p243, %p244
      %p246 = scmp.le.s32.totalorder 1, %s18
      %p247 = scmp.lt.s32.totalorder %s18, 3
      %p248 = pnand %p246, %p247
      %p249 = pneg %p248
      // Predicated region
      $region9: #{adaptive_convnet_forward.1} parent=5 // pred_check
        _
      $region10: #{adaptive_convnet_forward.1} parent=5 // pred_check_branch
        %251 = sbr.rel (%p248) target = $region12
      $region11: #{adaptive_convnet_forward.1} parent=5 // pred_region
        %s252 = ssub.s32 %s18, 1
        // Predicated region
        $region13: #{adaptive_convnet_forward.1} parent=11 // pred_check
          %p253 = pneg %p65
        $region14: #{adaptive_convnet_forward.1} parent=11 // pred_check_branch
          %255 = sbr.rel (%p253) target = $region16
        $region15: #{adaptive_convnet_forward.1} parent=11 // pred_region
          _
        $region16: #{adaptive_convnet_forward.1} parent=11 // pred_fallthru
          _
        // Predicated region
        $region17: #{adaptive_convnet_forward.1} parent=11 // pred_check
          %p256 = pneg %p86
        $region18: #{adaptive_convnet_forward.1} parent=11 // pred_check_branch
          %258 = sbr.rel (%p256) target = $region20
        $region19: #{adaptive_convnet_forward.1} parent=11 // pred_region
          _
        $region20: #{adaptive_convnet_forward.1} parent=11 // pred_fallthru
          _
        // Predicated region
        $region21: #{adaptive_convnet_forward.1} parent=11 // pred_check
          %p259 = pneg %p107
        $region22: #{adaptive_convnet_forward.1} parent=11 // pred_check_branch
          %261 = sbr.rel (%p259) target = $region24
        $region23: #{adaptive_convnet_forward.1} parent=11 // pred_region
          _
        $region24: #{adaptive_convnet_forward.1} parent=11 // pred_fallthru
          _
        // Predicated region
        $region25: #{adaptive_convnet_forward.1} parent=11 // pred_check
          %p262 = pneg %p128
        $region26: #{adaptive_convnet_forward.1} parent=11 // pred_check_branch
          %264 = sbr.rel (%p262) target = $region28
        $region27: #{adaptive_convnet_forward.1} parent=11 // pred_region
          _
        $region28: #{adaptive_convnet_forward.1} parent=11 // pred_fallthru
          _
        // Predicated region
        $region29: #{adaptive_convnet_forward.1} parent=11 // pred_check
          %p265 = pneg %p149
        $region30: #{adaptive_convnet_forward.1} parent=11 // pred_check_branch
          %267 = sbr.rel (%p265) target = $region32
        $region31: #{adaptive_convnet_forward.1} parent=11 // pred_region
          _
        $region32: #{adaptive_convnet_forward.1} parent=11 // pred_fallthru
          _
        // Predicated region
        $region33: #{adaptive_convnet_forward.1} parent=11 // pred_check
          %p268 = pneg %p170
        $region34: #{adaptive_convnet_forward.1} parent=11 // pred_check_branch
          %270 = sbr.rel (%p268) target = $region36
        $region35: #{adaptive_convnet_forward.1} parent=11 // pred_region
          _
        $region36: #{adaptive_convnet_forward.1} parent=11 // pred_fallthru
          _
        // Predicated region
        $region37: #{adaptive_convnet_forward.1} parent=11 // pred_check
          %p271 = pneg %p191
        $region38: #{adaptive_convnet_forward.1} parent=11 // pred_check_branch
          %273 = sbr.rel (%p271) target = $region40
        $region39: #{adaptive_convnet_forward.1} parent=11 // pred_region
          _
        $region40: #{adaptive_convnet_forward.1} parent=11 // pred_fallthru
          _
        // Predicated region
        $region41: #{adaptive_convnet_forward.1} parent=11 // pred_check
          %p274 = pneg %p212
        $region42: #{adaptive_convnet_forward.1} parent=11 // pred_check_branch
          %276 = sbr.rel (%p274) target = $region44
        $region43: #{adaptive_convnet_forward.1} parent=11 // pred_region
          _
        $region44: #{adaptive_convnet_forward.1} parent=11 // pred_fallthru
          _
      $region12: #{adaptive_convnet_forward.1} parent=5 // pred_fallthru
        _
      %p277 = scmp.lt.s32.totalorder %s18, 2
      // Predicated region
      $region45: #{adaptive_convnet_forward.1} parent=5 // pred_check
        %p278 = pneg %p277
      $region46: #{adaptive_convnet_forward.1} parent=5 // pred_check_branch
        %280 = sbr.rel (%p278) target = $region48
      $region47: #{adaptive_convnet_forward.1} parent=5 // pred_region
        // Predicated region
        $region49: #{adaptive_convnet_forward.1} parent=47 // pred_check
          %p281 = pneg %p38
        $region50: #{adaptive_convnet_forward.1} parent=47 // pred_check_branch
          %283 = sbr.rel (%p281) target = $region52
        $region51: #{adaptive_convnet_forward.1} parent=47 // pred_region
          %p284 = scmp.lt.s32.totalorder %s18, 1
          %s285 = scalar_select %p284, %s18, 1
          %s286 = smul.addr %s285, 46
          %s287 = smul.addr %s286, 8
          %s288 = scalar_lea.vmem %s0, %s287
        $region52: #{adaptive_convnet_forward.1} parent=47 // pred_fallthru
          _
      $region48: #{adaptive_convnet_forward.1} parent=5 // pred_fallthru
        _
      %p289 = scmp.le.s32.totalorder 1, %s18
      %p290 = scmp.lt.s32.totalorder %s18, 3
      %p291 = pnand %p289, %p290
      %p292 = pneg %p291
      // Predicated region
      $region53: #{adaptive_convnet_forward.1} parent=5 // pred_check
        _
      $region54: #{adaptive_convnet_forward.1} parent=5 // pred_check_branch
        %294 = sbr.rel (%p291) target = $region56
      $region55: #{adaptive_convnet_forward.1} parent=5 // pred_region
        %s295 = ssub.s32 %s18, 1
        %p296 = scmp.lt.s32.totalorder %s23, 1
        %s297 = scalar_select %p296, %s23, 1
        %s298 = smul.addr %s297, 46
        %s299 = smul.addr %s298, 8
        %s300 = scalar_lea.vmem %s0, %s299
        %p301 = pneg %p44
        %p302 = pneg %p41
        %p303 = pneg %p65
        %p304 = pneg %p62
        %p305 = pneg %p86
        %p306 = pneg %p83
        %p307 = pneg %p107
        %p308 = pneg %p104
        %p309 = pneg %p128
        %p310 = pneg %p125
        %p311 = pneg %p149
        %p312 = pneg %p146
        %p313 = pneg %p170
        %p314 = pneg %p167
        %p315 = pneg %p191
        %p316 = pneg %p188
        %p317 = pneg %p212
        %p318 = pneg %p209
        %p319 = pneg %p238
        %p320 = pneg %p235
        %s321 = sand.u32 %s225, 1
        %s322 = scalar_lea.sflag [#allocation9], %s321
        %s323 = sand.u32 %s225, 1
        %s324 = scalar_lea.vmem [#allocation8], %s323
        %p325 = scmp.lt.s32.totalorder %s23, 1
        %s326 = scalar_select %p325, %s23, 1
        %s327 = smul.addr %s326, 46
        %s328 = smul.addr %s327, 8
        %s329 = scalar_lea.vmem %s0, %s328
        %v330 = vld [vmem:[%s329] sm:$0xff]
        %v331 = vld [vmem:[%s329 + $0x8] sm:$0xff]
        %v332 = vld [vmem:[%s329 + $0x10] sm:$0xff]
        %v333 = vld [vmem:[%s329 + $0x18] sm:$0xff]
        %v334 = vld [vmem:[%s329 + $0x20] sm:$0xff]
        %v335 = vld [vmem:[%s329 + $0x28] sm:$0xff]
        %v336 = vld [vmem:[%s329 + $0x30] sm:$0xff]
        %v337 = vld [vmem:[%s329 + $0x38] sm:$0xff]
        %v338 = vld [vmem:[%s329 + $0x40] sm:$0xff]
        %v339 = vld [vmem:[%s329 + $0x48] sm:$0xff]
        %v340 = vld [vmem:[%s329 + $0x50] sm:$0xff]
        %v341 = vld [vmem:[%s329 + $0x58] sm:$0xff]
        %v342 = vld [vmem:[%s329 + $0x60] sm:$0xff]
        %v343 = vld [vmem:[%s329 + $0x68] sm:$0xff]
        %v344 = vld [vmem:[%s329 + $0x70] sm:$0xff]
        %v345 = vld [vmem:[%s329 + $0x78] sm:$0xff]
        %v346 = vld [vmem:[%s329 + $0x80] sm:$0xff]
        %v347 = vld [vmem:[%s329 + $0x88] sm:$0xff]
        %v348 = vld [vmem:[%s329 + $0x90] sm:$0xff]
        %v349 = vld [vmem:[%s329 + $0x98] sm:$0xff]
        %v350 = vld [vmem:[%s329 + $0xa0] sm:$0xff]
        %v351 = vld [vmem:[%s329 + $0xa8] sm:$0xff]
        %v352 = vld [vmem:[%s329 + $0xb0] sm:$0xff]
        %v353 = vld [vmem:[%s329 + $0xb8] sm:$0xff]
        %v354 = vld [vmem:[%s329 + $0xc0] sm:$0xff]
        %v355 = vld [vmem:[%s329 + $0xc8] sm:$0xff]
        %v356 = vld [vmem:[%s329 + $0xd0] sm:$0xff]
        %v357 = vld [vmem:[%s329 + $0xd8] sm:$0xff]
        %v358 = vld [vmem:[%s329 + $0xe0] sm:$0xff]
        %v359 = vld [vmem:[%s329 + $0xe8] sm:$0xff]
        %v360 = vld [vmem:[%s329 + $0xf0] sm:$0xff]
        %v361 = vld [vmem:[%s329 + $0xf8] sm:$0xff]
        %v362 = vld [vmem:[%s329 + $0x100] sm:$0xff]
        %v363 = vld [vmem:[%s329 + $0x108] sm:$0xff]
        %v364 = vld [vmem:[%s329 + $0x110] sm:$0xff]
        %v365 = vld [vmem:[%s329 + $0x118] sm:$0xff]
        %v366 = vld [vmem:[%s329 + $0x120] sm:$0xff]
        %v367 = vld [vmem:[%s329 + $0x128] sm:$0xff]
        %v368 = vld [vmem:[%s329 + $0x130] sm:$0xff]
        %v369 = vld [vmem:[%s329 + $0x138] sm:$0xff]
        %v370 = vld [vmem:[%s329 + $0x140] sm:$0xf]
        %v371 = vld [vmem:[%s329 + $0x1] sm:$0xff]
        %v372 = vld [vmem:[%s329 + $0x9] sm:$0xff]
        %v373 = vld [vmem:[%s329 + $0x11] sm:$0xff]
        %v374 = vld [vmem:[%s329 + $0x19] sm:$0xff]
        %v375 = vld [vmem:[%s329 + $0x21] sm:$0xff]
        %v376 = vld [vmem:[%s329 + $0x29] sm:$0xff]
        %v377 = vld [vmem:[%s329 + $0x31] sm:$0xff]
        %v378 = vld [vmem:[%s329 + $0x39] sm:$0xff]
        %v379 = vld [vmem:[%s329 + $0x41] sm:$0xff]
        %v380 = vld [vmem:[%s329 + $0x49] sm:$0xff]
        %v381 = vld [vmem:[%s329 + $0x51] sm:$0xff]
        %v382 = vld [vmem:[%s329 + $0x59] sm:$0xff]
        %v383 = vld [vmem:[%s329 + $0x61] sm:$0xff]
        %v384 = vld [vmem:[%s329 + $0x69] sm:$0xff]
        %v385 = vld [vmem:[%s329 + $0x71] sm:$0xff]
        %v386 = vld [vmem:[%s329 + $0x79] sm:$0xff]
        %v387 = vld [vmem:[%s329 + $0x81] sm:$0xff]
        %v388 = vld [vmem:[%s329 + $0x89] sm:$0xff]
        %v389 = vld [vmem:[%s329 + $0x91] sm:$0xff]
        %v390 = vld [vmem:[%s329 + $0x99] sm:$0xff]
        %v391 = vld [vmem:[%s329 + $0xa1] sm:$0xff]
        %v392 = vld [vmem:[%s329 + $0xa9] sm:$0xff]
        %v393 = vld [vmem:[%s329 + $0xb1] sm:$0xff]
        %v394 = vld [vmem:[%s329 + $0xb9] sm:$0xff]
        %v395 = vld [vmem:[%s329 + $0xc1] sm:$0xff]
        %v396 = vld [vmem:[%s329 + $0xc9] sm:$0xff]
        %v397 = vld [vmem:[%s329 + $0xd1] sm:$0xff]
        %v398 = vld [vmem:[%s329 + $0xd9] sm:$0xff]
        %v399 = vld [vmem:[%s329 + $0xe1] sm:$0xff]
        %v400 = vld [vmem:[%s329 + $0xe9] sm:$0xff]
        %v401 = vld [vmem:[%s329 + $0xf1] sm:$0xff]
        %v402 = vld [vmem:[%s329 + $0xf9] sm:$0xff]
        %v403 = vld [vmem:[%s329 + $0x101] sm:$0xff]
        %v404 = vld [vmem:[%s329 + $0x109] sm:$0xff]
        %v405 = vld [vmem:[%s329 + $0x111] sm:$0xff]
        %v406 = vld [vmem:[%s329 + $0x119] sm:$0xff]
        %v407 = vld [vmem:[%s329 + $0x121] sm:$0xff]
        %v408 = vld [vmem:[%s329 + $0x129] sm:$0xff]
        %v409 = vld [vmem:[%s329 + $0x131] sm:$0xff]
        %v410 = vld [vmem:[%s329 + $0x139] sm:$0xff]
        %v411 = vld [vmem:[%s329 + $0x141] sm:$0xf]
        %v412 = vld [vmem:[%s329 + $0x2] sm:$0xff]
        %v413 = vld [vmem:[%s329 + $0xa] sm:$0xff]
        %v414 = vld [vmem:[%s329 + $0x12] sm:$0xff]
        %v415 = vld [vmem:[%s329 + $0x1a] sm:$0xff]
        %v416 = vld [vmem:[%s329 + $0x22] sm:$0xff]
        %v417 = vld [vmem:[%s329 + $0x2a] sm:$0xff]
        %v418 = vld [vmem:[%s329 + $0x32] sm:$0xff]
        %v419 = vld [vmem:[%s329 + $0x3a] sm:$0xff]
        %v420 = vld [vmem:[%s329 + $0x42] sm:$0xff]
        %v421 = vld [vmem:[%s329 + $0x4a] sm:$0xff]
        %v422 = vld [vmem:[%s329 + $0x52] sm:$0xff]
        %v423 = vld [vmem:[%s329 + $0x5a] sm:$0xff]
        %v424 = vld [vmem:[%s329 + $0x62] sm:$0xff]
        %v425 = vld [vmem:[%s329 + $0x6a] sm:$0xff]
        %v426 = vld [vmem:[%s329 + $0x72] sm:$0xff]
        %v427 = vld [vmem:[%s329 + $0x7a] sm:$0xff]
        %v428 = vld [vmem:[%s329 + $0x82] sm:$0xff]
        %v429 = vld [vmem:[%s329 + $0x8a] sm:$0xff]
        %v430 = vld [vmem:[%s329 + $0x92] sm:$0xff]
        %v431 = vld [vmem:[%s329 + $0x9a] sm:$0xff]
        %v432 = vld [vmem:[%s329 + $0xa2] sm:$0xff]
        %v433 = vld [vmem:[%s329 + $0xaa] sm:$0xff]
        %v434 = vld [vmem:[%s329 + $0xb2] sm:$0xff]
        %v435 = vld [vmem:[%s329 + $0xba] sm:$0xff]
        %v436 = vld [vmem:[%s329 + $0xc2] sm:$0xff]
        %v437 = vld [vmem:[%s329 + $0xca] sm:$0xff]
        %v438 = vld [vmem:[%s329 + $0xd2] sm:$0xff]
        %v439 = vld [vmem:[%s329 + $0xda] sm:$0xff]
        %v440 = vld [vmem:[%s329 + $0xe2] sm:$0xff]
        %v441 = vld [vmem:[%s329 + $0xea] sm:$0xff]
        %v442 = vld [vmem:[%s329 + $0xf2] sm:$0xff]
        %v443 = vld [vmem:[%s329 + $0xfa] sm:$0xff]
        %v444 = vld [vmem:[%s329 + $0x102] sm:$0xff]
        %v445 = vld [vmem:[%s329 + $0x10a] sm:$0xff]
        %v446 = vld [vmem:[%s329 + $0x112] sm:$0xff]
        %v447 = vld [vmem:[%s329 + $0x11a] sm:$0xff]
        %v448 = vld [vmem:[%s329 + $0x122] sm:$0xff]
        %v449 = vld [vmem:[%s329 + $0x12a] sm:$0xff]
        %v450 = vld [vmem:[%s329 + $0x132] sm:$0xff]
        %v451 = vld [vmem:[%s329 + $0x13a] sm:$0xff]
        %v452 = vld [vmem:[%s329 + $0x142] sm:$0xf]
        %v453 = vld [vmem:[%s329 + $0x142] sm:$0xff]
        %v454 = vld [vmem:[%s329 + $0x14a] sm:$0xff]
        %v455 = vld [vmem:[%s329 + $0x152] sm:$0xf]
        %v456 = vld [vmem:[%s329 + $0x13] sm:$0xff]
        %v457 = vld [vmem:[%s329 + $0x1b] sm:$0xff]
        %v458 = vld [vmem:[%s329 + $0x23] sm:$0xff]
        %v459 = vld [vmem:[%s329 + $0x2b] sm:$0xff]
        %v460 = vld [vmem:[%s329 + $0x33] sm:$0xff]
        %v461 = vld [vmem:[%s329 + $0x3b] sm:$0xff]
        %v462 = vld [vmem:[%s329 + $0x43] sm:$0xff]
        %v463 = vld [vmem:[%s329 + $0x4b] sm:$0xff]
        %v464 = vld [vmem:[%s329 + $0x53] sm:$0xff]
        %v465 = vld [vmem:[%s329 + $0x5b] sm:$0xff]
        %v466 = vld [vmem:[%s329 + $0x63] sm:$0xff]
        %v467 = vld [vmem:[%s329 + $0x6b] sm:$0xff]
        %v468 = vld [vmem:[%s329 + $0x73] sm:$0xff]
        %v469 = vld [vmem:[%s329 + $0x7b] sm:$0xff]
        %v470 = vld [vmem:[%s329 + $0x83] sm:$0xff]
        %v471 = vld [vmem:[%s329 + $0x8b] sm:$0xff]
        %v472 = vld [vmem:[%s329 + $0x93] sm:$0xff]
        %v473 = vld [vmem:[%s329 + $0x9b] sm:$0xff]
        %v474 = vld [vmem:[%s329 + $0xa3] sm:$0xff]
        %v475 = vld [vmem:[%s329 + $0xab] sm:$0xff]
        %v476 = vld [vmem:[%s329 + $0xb3] sm:$0xff]
        %v477 = vld [vmem:[%s329 + $0xbb] sm:$0xff]
        %v478 = vld [vmem:[%s329 + $0xc3] sm:$0xff]
        %v479 = vld [vmem:[%s329 + $0xcb] sm:$0xff]
        %v480 = vld [vmem:[%s329 + $0xd3] sm:$0xff]
        %v481 = vld [vmem:[%s329 + $0xdb] sm:$0xff]
        %v482 = vld [vmem:[%s329 + $0xe3] sm:$0xff]
        %v483 = vld [vmem:[%s329 + $0xeb] sm:$0xff]
        %v484 = vld [vmem:[%s329 + $0xf3] sm:$0xff]
        %v485 = vld [vmem:[%s329 + $0xfb] sm:$0xff]
        %v486 = vld [vmem:[%s329 + $0x103] sm:$0xff]
        %v487 = vld [vmem:[%s329 + $0x10b] sm:$0xff]
        %v488 = vld [vmem:[%s329 + $0x113] sm:$0xff]
        %v489 = vld [vmem:[%s329 + $0x11b] sm:$0xff]
        %v490 = vld [vmem:[%s329 + $0x123] sm:$0xff]
        %v491 = vld [vmem:[%s329 + $0x12b] sm:$0xff]
        %v492 = vld [vmem:[%s329 + $0x133] sm:$0xff]
        %v493 = vld [vmem:[%s329 + $0x13b] sm:$0xff]
        %v494 = vld [vmem:[%s329 + $0x143] sm:$0xff]
        %v495 = vld [vmem:[%s329 + $0x14b] sm:$0xff]
        %v496 = vld [vmem:[%s329 + $0x153] sm:$0xf]
        %v497 = vld [vmem:[%s329 + $0x14] sm:$0xff]
        %v498 = vld [vmem:[%s329 + $0x1c] sm:$0xff]
        %v499 = vld [vmem:[%s329 + $0x24] sm:$0xff]
        %v500 = vld [vmem:[%s329 + $0x2c] sm:$0xff]
        %v501 = vld [vmem:[%s329 + $0x34] sm:$0xff]
        %v502 = vld [vmem:[%s329 + $0x3c] sm:$0xff]
        %v503 = vld [vmem:[%s329 + $0x44] sm:$0xff]
        %v504 = vld [vmem:[%s329 + $0x4c] sm:$0xff]
        %v505 = vld [vmem:[%s329 + $0x54] sm:$0xff]
        %v506 = vld [vmem:[%s329 + $0x5c] sm:$0xff]
        %v507 = vld [vmem:[%s329 + $0x64] sm:$0xff]
        %v508 = vld [vmem:[%s329 + $0x6c] sm:$0xff]
        %v509 = vld [vmem:[%s329 + $0x74] sm:$0xff]
        %v510 = vld [vmem:[%s329 + $0x7c] sm:$0xff]
        %v511 = vld [vmem:[%s329 + $0x84] sm:$0xff]
        %v512 = vld [vmem:[%s329 + $0x8c] sm:$0xff]
        %v513 = vld [vmem:[%s329 + $0x94] sm:$0xff]
        %v514 = vld [vmem:[%s329 + $0x9c] sm:$0xff]
        %v515 = vld [vmem:[%s329 + $0xa4] sm:$0xff]
        %v516 = vld [vmem:[%s329 + $0xac] sm:$0xff]
        %v517 = vld [vmem:[%s329 + $0xb4] sm:$0xff]
        %v518 = vld [vmem:[%s329 + $0xbc] sm:$0xff]
        %v519 = vld [vmem:[%s329 + $0xc4] sm:$0xff]
        %v520 = vld [vmem:[%s329 + $0xcc] sm:$0xff]
        %v521 = vld [vmem:[%s329 + $0xd4] sm:$0xff]
        %v522 = vld [vmem:[%s329 + $0xdc] sm:$0xff]
        %v523 = vld [vmem:[%s329 + $0xe4] sm:$0xff]
        %v524 = vld [vmem:[%s329 + $0xec] sm:$0xff]
        %v525 = vld [vmem:[%s329 + $0xf4] sm:$0xff]
        %v526 = vld [vmem:[%s329 + $0xfc] sm:$0xff]
        %v527 = vld [vmem:[%s329 + $0x104] sm:$0xff]
        %v528 = vld [vmem:[%s329 + $0x10c] sm:$0xff]
        %v529 = vld [vmem:[%s329 + $0x114] sm:$0xff]
        %v530 = vld [vmem:[%s329 + $0x11c] sm:$0xff]
        %v531 = vld [vmem:[%s329 + $0x124] sm:$0xff]
        %v532 = vld [vmem:[%s329 + $0x12c] sm:$0xff]
        %v533 = vld [vmem:[%s329 + $0x134] sm:$0xff]
        %v534 = vld [vmem:[%s329 + $0x13c] sm:$0xff]
        %v535 = vld [vmem:[%s329 + $0x144] sm:$0xff]
        %v536 = vld [vmem:[%s329 + $0x14c] sm:$0xff]
        %v537 = vld [vmem:[%s329 + $0x154] sm:$0xf]
        %v538 = vld [vmem:[%s329 + $0x154] sm:$0xff]
        %v539 = vld [vmem:[%s329 + $0x15c] sm:$0xff]
        %v540 = vld [vmem:[%s329 + $0x164] sm:$0xf]
        %v541 = vld [vmem:[%s329 + $0x25] sm:$0xff]
        %v542 = vld [vmem:[%s329 + $0x2d] sm:$0xff]
        %v543 = vld [vmem:[%s329 + $0x35] sm:$0xff]
        %v544 = vld [vmem:[%s329 + $0x3d] sm:$0xff]
        %v545 = vld [vmem:[%s329 + $0x45] sm:$0xff]
        %v546 = vld [vmem:[%s329 + $0x4d] sm:$0xff]
        %v547 = vld [vmem:[%s329 + $0x55] sm:$0xff]
        %v548 = vld [vmem:[%s329 + $0x5d] sm:$0xff]
        %v549 = vld [vmem:[%s329 + $0x65] sm:$0xff]
        %v550 = vld [vmem:[%s329 + $0x6d] sm:$0xff]
        %v551 = vld [vmem:[%s329 + $0x75] sm:$0xff]
        %v552 = vld [vmem:[%s329 + $0x7d] sm:$0xff]
        %v553 = vld [vmem:[%s329 + $0x85] sm:$0xff]
        %v554 = vld [vmem:[%s329 + $0x8d] sm:$0xff]
        %v555 = vld [vmem:[%s329 + $0x95] sm:$0xff]
        %v556 = vld [vmem:[%s329 + $0x9d] sm:$0xff]
        %v557 = vld [vmem:[%s329 + $0xa5] sm:$0xff]
        %v558 = vld [vmem:[%s329 + $0xad] sm:$0xff]
        %v559 = vld [vmem:[%s329 + $0xb5] sm:$0xff]
        %v560 = vld [vmem:[%s329 + $0xbd] sm:$0xff]
        %v561 = vld [vmem:[%s329 + $0xc5] sm:$0xff]
        %v562 = vld [vmem:[%s329 + $0xcd] sm:$0xff]
        %v563 = vld [vmem:[%s329 + $0xd5] sm:$0xff]
        %v564 = vld [vmem:[%s329 + $0xdd] sm:$0xff]
        %v565 = vld [vmem:[%s329 + $0xe5] sm:$0xff]
        %v566 = vld [vmem:[%s329 + $0xed] sm:$0xff]
        %v567 = vld [vmem:[%s329 + $0xf5] sm:$0xff]
        %v568 = vld [vmem:[%s329 + $0xfd] sm:$0xff]
        %v569 = vld [vmem:[%s329 + $0x105] sm:$0xff]
        %v570 = vld [vmem:[%s329 + $0x10d] sm:$0xff]
        %v571 = vld [vmem:[%s329 + $0x115] sm:$0xff]
        %v572 = vld [vmem:[%s329 + $0x11d] sm:$0xff]
        %v573 = vld [vmem:[%s329 + $0x125] sm:$0xff]
        %v574 = vld [vmem:[%s329 + $0x12d] sm:$0xff]
        %v575 = vld [vmem:[%s329 + $0x135] sm:$0xff]
        %v576 = vld [vmem:[%s329 + $0x13d] sm:$0xff]
        %v577 = vld [vmem:[%s329 + $0x145] sm:$0xff]
        %v578 = vld [vmem:[%s329 + $0x14d] sm:$0xff]
        %v579 = vld [vmem:[%s329 + $0x155] sm:$0xff]
        %v580 = vld [vmem:[%s329 + $0x15d] sm:$0xff]
        %v581 = vld [vmem:[%s329 + $0x165] sm:$0xf]
        %v582 = vld [vmem:[%s329 + $0x26] sm:$0xff]
        %v583 = vld [vmem:[%s329 + $0x2e] sm:$0xff]
        %v584 = vld [vmem:[%s329 + $0x36] sm:$0xff]
        %v585 = vld [vmem:[%s329 + $0x3e] sm:$0xff]
        %v586 = vld [vmem:[%s329 + $0x46] sm:$0xff]
        %v587 = vld [vmem:[%s329 + $0x4e] sm:$0xff]
        %v588 = vld [vmem:[%s329 + $0x56] sm:$0xff]
        %v589 = vld [vmem:[%s329 + $0x5e] sm:$0xff]
        %v590 = vld [vmem:[%s329 + $0x66] sm:$0xff]
        %v591 = vld [vmem:[%s329 + $0x6e] sm:$0xff]
        %v592 = vld [vmem:[%s329 + $0x76] sm:$0xff]
        %v593 = vld [vmem:[%s329 + $0x7e] sm:$0xff]
        %v594 = vld [vmem:[%s329 + $0x86] sm:$0xff]
        %v595 = vld [vmem:[%s329 + $0x8e] sm:$0xff]
        %v596 = vld [vmem:[%s329 + $0x96] sm:$0xff]
        %v597 = vld [vmem:[%s329 + $0x9e] sm:$0xff]
        %v598 = vld [vmem:[%s329 + $0xa6] sm:$0xff]
        %v599 = vld [vmem:[%s329 + $0xae] sm:$0xff]
        %v600 = vld [vmem:[%s329 + $0xb6] sm:$0xff]
        %v601 = vld [vmem:[%s329 + $0xbe] sm:$0xff]
        %v602 = vld [vmem:[%s329 + $0xc6] sm:$0xff]
        %v603 = vld [vmem:[%s329 + $0xce] sm:$0xff]
        %v604 = vld [vmem:[%s329 + $0xd6] sm:$0xff]
        %v605 = vld [vmem:[%s329 + $0xde] sm:$0xff]
        %v606 = vld [vmem:[%s329 + $0xe6] sm:$0xff]
        %v607 = vld [vmem:[%s329 + $0xee] sm:$0xff]
        %v608 = vld [vmem:[%s329 + $0xf6] sm:$0xff]
        %v609 = vld [vmem:[%s329 + $0xfe] sm:$0xff]
        %v610 = vld [vmem:[%s329 + $0x106] sm:$0xff]
        %v611 = vld [vmem:[%s329 + $0x10e] sm:$0xff]
        %v612 = vld [vmem:[%s329 + $0x116] sm:$0xff]
        %v613 = vld [vmem:[%s329 + $0x11e] sm:$0xff]
        %v614 = vld [vmem:[%s329 + $0x126] sm:$0xff]
        %v615 = vld [vmem:[%s329 + $0x12e] sm:$0xff]
        %v616 = vld [vmem:[%s329 + $0x136] sm:$0xff]
        %v617 = vld [vmem:[%s329 + $0x13e] sm:$0xff]
        %v618 = vld [vmem:[%s329 + $0x146] sm:$0xff]
        %v619 = vld [vmem:[%s329 + $0x14e] sm:$0xff]
        %v620 = vld [vmem:[%s329 + $0x156] sm:$0xff]
        %v621 = vld [vmem:[%s329 + $0x15e] sm:$0xff]
        %v622 = vld [vmem:[%s329 + $0x166] sm:$0xf]
        %664 = vrot.lane.b32.xlu0 %v371, 1
        %v665 = vpop.permute.xlu0 %664
        %666 = vrot.lane.b32.xlu0 %v372, 1
        %v667 = vpop.permute.xlu0 %666
        %668 = vrot.lane.b32.xlu0 %v373, 1
        %v669 = vpop.permute.xlu0 %668
        %670 = vrot.lane.b32.xlu0 %v374, 1
        %v671 = vpop.permute.xlu0 %670
        %672 = vrot.lane.b32.xlu0 %v375, 1
        %v673 = vpop.permute.xlu0 %672
        %674 = vrot.lane.b32.xlu0 %v376, 1
        %v675 = vpop.permute.xlu0 %674
        %676 = vrot.lane.b32.xlu0 %v377, 1
        %v677 = vpop.permute.xlu0 %676
        %678 = vrot.lane.b32.xlu0 %v378, 1
        %v679 = vpop.permute.xlu0 %678
        %680 = vrot.lane.b32.xlu0 %v379, 1
        %v681 = vpop.permute.xlu0 %680
        %682 = vrot.lane.b32.xlu0 %v380, 1
        %v683 = vpop.permute.xlu0 %682
        %684 = vrot.lane.b32.xlu0 %v381, 1
        %v685 = vpop.permute.xlu0 %684
        %686 = vrot.lane.b32.xlu0 %v382, 1
        %v687 = vpop.permute.xlu0 %686
        %688 = vrot.lane.b32.xlu0 %v383, 1
        %v689 = vpop.permute.xlu0 %688
        %690 = vrot.lane.b32.xlu0 %v384, 1
        %v691 = vpop.permute.xlu0 %690
        %692 = vrot.lane.b32.xlu0 %v385, 1
        %v693 = vpop.permute.xlu0 %692
        %694 = vrot.lane.b32.xlu0 %v386, 1
        %v695 = vpop.permute.xlu0 %694
        %696 = vrot.lane.b32.xlu0 %v387, 1
        %v697 = vpop.permute.xlu0 %696
        %698 = vrot.lane.b32.xlu0 %v388, 1
        %v699 = vpop.permute.xlu0 %698
        %700 = vrot.lane.b32.xlu0 %v389, 1
        %v701 = vpop.permute.xlu0 %700
        %702 = vrot.lane.b32.xlu0 %v390, 1
        %v703 = vpop.permute.xlu0 %702
        %704 = vrot.lane.b32.xlu0 %v391, 1
        %v705 = vpop.permute.xlu0 %704
        %706 = vrot.lane.b32.xlu0 %v392, 1
        %v707 = vpop.permute.xlu0 %706
        %708 = vrot.lane.b32.xlu0 %v393, 1
        %v709 = vpop.permute.xlu0 %708
        %710 = vrot.lane.b32.xlu0 %v394, 1
        %v711 = vpop.permute.xlu0 %710
        %712 = vrot.lane.b32.xlu0 %v395, 1
        %v713 = vpop.permute.xlu0 %712
        %714 = vrot.lane.b32.xlu0 %v396, 1
        %v715 = vpop.permute.xlu0 %714
        %716 = vrot.lane.b32.xlu0 %v397, 1
        %v717 = vpop.permute.xlu0 %716
        %718 = vrot.lane.b32.xlu0 %v398, 1
        %v719 = vpop.permute.xlu0 %718
        %720 = vrot.lane.b32.xlu0 %v399, 1
        %v721 = vpop.permute.xlu0 %720
        %722 = vrot.lane.b32.xlu0 %v400, 1
        %v723 = vpop.permute.xlu0 %722
        %724 = vrot.lane.b32.xlu0 %v401, 1
        %v725 = vpop.permute.xlu0 %724
        %726 = vrot.lane.b32.xlu0 %v402, 1
        %v727 = vpop.permute.xlu0 %726
        %728 = vrot.lane.b32.xlu0 %v403, 1
        %v729 = vpop.permute.xlu0 %728
        %730 = vrot.lane.b32.xlu0 %v404, 1
        %v731 = vpop.permute.xlu0 %730
        %732 = vrot.lane.b32.xlu0 %v405, 1
        %v733 = vpop.permute.xlu0 %732
        %734 = vrot.lane.b32.xlu0 %v406, 1
        %v735 = vpop.permute.xlu0 %734
        %736 = vrot.lane.b32.xlu0 %v407, 1
        %v737 = vpop.permute.xlu0 %736
        %738 = vrot.lane.b32.xlu0 %v408, 1
        %v739 = vpop.permute.xlu0 %738
        %740 = vrot.lane.b32.xlu0 %v409, 1
        %v741 = vpop.permute.xlu0 %740
        %742 = vrot.lane.b32.xlu0 %v410, 1
        %v743 = vpop.permute.xlu0 %742
        %744 = vrot.lane.b32.xlu0 %v411, 1
        %v745 = vpop.permute.xlu0 %744
        %828 = vrot.lane.b32.xlu0 %v412, 2
        %v829 = vpop.permute.xlu0 %828
        %830 = vrot.lane.b32.xlu0 %v413, 2
        %v831 = vpop.permute.xlu0 %830
        %832 = vrot.lane.b32.xlu0 %v414, 2
        %v833 = vpop.permute.xlu0 %832
        %834 = vrot.lane.b32.xlu0 %v415, 2
        %v835 = vpop.permute.xlu0 %834
        %836 = vrot.lane.b32.xlu0 %v416, 2
        %v837 = vpop.permute.xlu0 %836
        %838 = vrot.lane.b32.xlu0 %v417, 2
        %v839 = vpop.permute.xlu0 %838
        %840 = vrot.lane.b32.xlu0 %v418, 2
        %v841 = vpop.permute.xlu0 %840
        %842 = vrot.lane.b32.xlu0 %v419, 2
        %v843 = vpop.permute.xlu0 %842
        %844 = vrot.lane.b32.xlu0 %v420, 2
        %v845 = vpop.permute.xlu0 %844
        %846 = vrot.lane.b32.xlu0 %v421, 2
        %v847 = vpop.permute.xlu0 %846
        %848 = vrot.lane.b32.xlu0 %v422, 2
        %v849 = vpop.permute.xlu0 %848
        %850 = vrot.lane.b32.xlu0 %v423, 2
        %v851 = vpop.permute.xlu0 %850
        %852 = vrot.lane.b32.xlu0 %v424, 2
        %v853 = vpop.permute.xlu0 %852
        %854 = vrot.lane.b32.xlu0 %v425, 2
        %v855 = vpop.permute.xlu0 %854
        %856 = vrot.lane.b32.xlu0 %v426, 2
        %v857 = vpop.permute.xlu0 %856
        %858 = vrot.lane.b32.xlu0 %v427, 2
        %v859 = vpop.permute.xlu0 %858
        %860 = vrot.lane.b32.xlu0 %v428, 2
        %v861 = vpop.permute.xlu0 %860
        %862 = vrot.lane.b32.xlu0 %v429, 2
        %v863 = vpop.permute.xlu0 %862
        %864 = vrot.lane.b32.xlu0 %v430, 2
        %v865 = vpop.permute.xlu0 %864
        %866 = vrot.lane.b32.xlu0 %v431, 2
        %v867 = vpop.permute.xlu0 %866
        %868 = vrot.lane.b32.xlu0 %v432, 2
        %v869 = vpop.permute.xlu0 %868
        %870 = vrot.lane.b32.xlu0 %v433, 2
        %v871 = vpop.permute.xlu0 %870
        %872 = vrot.lane.b32.xlu0 %v434, 2
        %v873 = vpop.permute.xlu0 %872
        %874 = vrot.lane.b32.xlu0 %v435, 2
        %v875 = vpop.permute.xlu0 %874
        %876 = vrot.lane.b32.xlu0 %v436, 2
        %v877 = vpop.permute.xlu0 %876
        %878 = vrot.lane.b32.xlu0 %v437, 2
        %v879 = vpop.permute.xlu0 %878
        %880 = vrot.lane.b32.xlu0 %v438, 2
        %v881 = vpop.permute.xlu0 %880
        %882 = vrot.lane.b32.xlu0 %v439, 2
        %v883 = vpop.permute.xlu0 %882
        %884 = vrot.lane.b32.xlu0 %v440, 2
        %v885 = vpop.permute.xlu0 %884
        %886 = vrot.lane.b32.xlu0 %v441, 2
        %v887 = vpop.permute.xlu0 %886
        %888 = vrot.lane.b32.xlu0 %v442, 2
        %v889 = vpop.permute.xlu0 %888
        %890 = vrot.lane.b32.xlu0 %v443, 2
        %v891 = vpop.permute.xlu0 %890
        %892 = vrot.lane.b32.xlu0 %v444, 2
        %v893 = vpop.permute.xlu0 %892
        %894 = vrot.lane.b32.xlu0 %v445, 2
        %v895 = vpop.permute.xlu0 %894
        %896 = vrot.lane.b32.xlu0 %v446, 2
        %v897 = vpop.permute.xlu0 %896
        %898 = vrot.lane.b32.xlu0 %v447, 2
        %v899 = vpop.permute.xlu0 %898
        %900 = vrot.lane.b32.xlu0 %v448, 2
        %v901 = vpop.permute.xlu0 %900
        %902 = vrot.lane.b32.xlu0 %v449, 2
        %v903 = vpop.permute.xlu0 %902
        %904 = vrot.lane.b32.xlu0 %v450, 2
        %v905 = vpop.permute.xlu0 %904
        %906 = vrot.lane.b32.xlu0 %v451, 2
        %v907 = vpop.permute.xlu0 %906
        %908 = vrot.lane.b32.xlu0 %v452, 2
        %v909 = vpop.permute.xlu0 %908
        %954 = vrot.lane.b32.xlu0 %v414, 3
        %v955 = vpop.permute.xlu0 %954
        %956 = vrot.lane.b32.xlu0 %v415, 3
        %v957 = vpop.permute.xlu0 %956
        %958 = vrot.lane.b32.xlu0 %v416, 3
        %v959 = vpop.permute.xlu0 %958
        %960 = vrot.lane.b32.xlu0 %v417, 3
        %v961 = vpop.permute.xlu0 %960
        %962 = vrot.lane.b32.xlu0 %v418, 3
        %v963 = vpop.permute.xlu0 %962
        %964 = vrot.lane.b32.xlu0 %v419, 3
        %v965 = vpop.permute.xlu0 %964
        %966 = vrot.lane.b32.xlu0 %v420, 3
        %v967 = vpop.permute.xlu0 %966
        %968 = vrot.lane.b32.xlu0 %v421, 3
        %v969 = vpop.permute.xlu0 %968
        %970 = vrot.lane.b32.xlu0 %v422, 3
        %v971 = vpop.permute.xlu0 %970
        %972 = vrot.lane.b32.xlu0 %v423, 3
        %v973 = vpop.permute.xlu0 %972
        %974 = vrot.lane.b32.xlu0 %v424, 3
        %v975 = vpop.permute.xlu0 %974
        %976 = vrot.lane.b32.xlu0 %v425, 3
        %v977 = vpop.permute.xlu0 %976
        %978 = vrot.lane.b32.xlu0 %v426, 3
        %v979 = vpop.permute.xlu0 %978
        %980 = vrot.lane.b32.xlu0 %v427, 3
        %v981 = vpop.permute.xlu0 %980
        %982 = vrot.lane.b32.xlu0 %v428, 3
        %v983 = vpop.permute.xlu0 %982
        %984 = vrot.lane.b32.xlu0 %v429, 3
        %v985 = vpop.permute.xlu0 %984
        %986 = vrot.lane.b32.xlu0 %v430, 3
        %v987 = vpop.permute.xlu0 %986
        %988 = vrot.lane.b32.xlu0 %v431, 3
        %v989 = vpop.permute.xlu0 %988
        %990 = vrot.lane.b32.xlu0 %v432, 3
        %v991 = vpop.permute.xlu0 %990
        %992 = vrot.lane.b32.xlu0 %v433, 3
        %v993 = vpop.permute.xlu0 %992
        %994 = vrot.lane.b32.xlu0 %v434, 3
        %v995 = vpop.permute.xlu0 %994
        %996 = vrot.lane.b32.xlu0 %v435, 3
        %v997 = vpop.permute.xlu0 %996
        %998 = vrot.lane.b32.xlu0 %v436, 3
        %v999 = vpop.permute.xlu0 %998
        %1000 = vrot.lane.b32.xlu0 %v437, 3
        %v1001 = vpop.permute.xlu0 %1000
        %1002 = vrot.lane.b32.xlu0 %v438, 3
        %v1003 = vpop.permute.xlu0 %1002
        %1004 = vrot.lane.b32.xlu0 %v439, 3
        %v1005 = vpop.permute.xlu0 %1004
        %1006 = vrot.lane.b32.xlu0 %v440, 3
        %v1007 = vpop.permute.xlu0 %1006
        %1008 = vrot.lane.b32.xlu0 %v441, 3
        %v1009 = vpop.permute.xlu0 %1008
        %1010 = vrot.lane.b32.xlu0 %v442, 3
        %v1011 = vpop.permute.xlu0 %1010
        %1012 = vrot.lane.b32.xlu0 %v443, 3
        %v1013 = vpop.permute.xlu0 %1012
        %1014 = vrot.lane.b32.xlu0 %v444, 3
        %v1015 = vpop.permute.xlu0 %1014
        %1016 = vrot.lane.b32.xlu0 %v445, 3
        %v1017 = vpop.permute.xlu0 %1016
        %1018 = vrot.lane.b32.xlu0 %v446, 3
        %v1019 = vpop.permute.xlu0 %1018
        %1020 = vrot.lane.b32.xlu0 %v447, 3
        %v1021 = vpop.permute.xlu0 %1020
        %1022 = vrot.lane.b32.xlu0 %v448, 3
        %v1023 = vpop.permute.xlu0 %1022
        %1024 = vrot.lane.b32.xlu0 %v449, 3
        %v1025 = vpop.permute.xlu0 %1024
        %1026 = vrot.lane.b32.xlu0 %v450, 3
        %v1027 = vpop.permute.xlu0 %1026
        %1028 = vrot.lane.b32.xlu0 %v451, 3
        %v1029 = vpop.permute.xlu0 %1028
        %1030 = vrot.lane.b32.xlu0 %v453, 3
        %v1031 = vpop.permute.xlu0 %1030
        %1032 = vrot.lane.b32.xlu0 %v454, 3
        %v1033 = vpop.permute.xlu0 %1032
        %1034 = vrot.lane.b32.xlu0 %v455, 3
        %v1035 = vpop.permute.xlu0 %1034
        %1118 = vrot.lane.b32.xlu0 %v456, 4
        %v1119 = vpop.permute.xlu0 %1118
        %1120 = vrot.lane.b32.xlu0 %v457, 4
        %v1121 = vpop.permute.xlu0 %1120
        %1122 = vrot.lane.b32.xlu0 %v458, 4
        %v1123 = vpop.permute.xlu0 %1122
        %1124 = vrot.lane.b32.xlu0 %v459, 4
        %v1125 = vpop.permute.xlu0 %1124
        %1126 = vrot.lane.b32.xlu0 %v460, 4
        %v1127 = vpop.permute.xlu0 %1126
        %1128 = vrot.lane.b32.xlu0 %v461, 4
        %v1129 = vpop.permute.xlu0 %1128
        %1130 = vrot.lane.b32.xlu0 %v462, 4
        %v1131 = vpop.permute.xlu0 %1130
        %1132 = vrot.lane.b32.xlu0 %v463, 4
        %v1133 = vpop.permute.xlu0 %1132
        %1134 = vrot.lane.b32.xlu0 %v464, 4
        %v1135 = vpop.permute.xlu0 %1134
        %1136 = vrot.lane.b32.xlu0 %v465, 4
        %v1137 = vpop.permute.xlu0 %1136
        %1138 = vrot.lane.b32.xlu0 %v466, 4
        %v1139 = vpop.permute.xlu0 %1138
        %1140 = vrot.lane.b32.xlu0 %v467, 4
        %v1141 = vpop.permute.xlu0 %1140
        %1142 = vrot.lane.b32.xlu0 %v468, 4
        %v1143 = vpop.permute.xlu0 %1142
        %1144 = vrot.lane.b32.xlu0 %v469, 4
        %v1145 = vpop.permute.xlu0 %1144
        %1146 = vrot.lane.b32.xlu0 %v470, 4
        %v1147 = vpop.permute.xlu0 %1146
        %1148 = vrot.lane.b32.xlu0 %v471, 4
        %v1149 = vpop.permute.xlu0 %1148
        %1150 = vrot.lane.b32.xlu0 %v472, 4
        %v1151 = vpop.permute.xlu0 %1150
        %1152 = vrot.lane.b32.xlu0 %v473, 4
        %v1153 = vpop.permute.xlu0 %1152
        %1154 = vrot.lane.b32.xlu0 %v474, 4
        %v1155 = vpop.permute.xlu0 %1154
        %1156 = vrot.lane.b32.xlu0 %v475, 4
        %v1157 = vpop.permute.xlu0 %1156
        %1158 = vrot.lane.b32.xlu0 %v476, 4
        %v1159 = vpop.permute.xlu0 %1158
        %1160 = vrot.lane.b32.xlu0 %v477, 4
        %v1161 = vpop.permute.xlu0 %1160
        %1162 = vrot.lane.b32.xlu0 %v478, 4
        %v1163 = vpop.permute.xlu0 %1162
        %1164 = vrot.lane.b32.xlu0 %v479, 4
        %v1165 = vpop.permute.xlu0 %1164
        %1166 = vrot.lane.b32.xlu0 %v480, 4
        %v1167 = vpop.permute.xlu0 %1166
        %1168 = vrot.lane.b32.xlu0 %v481, 4
        %v1169 = vpop.permute.xlu0 %1168
        %1170 = vrot.lane.b32.xlu0 %v482, 4
        %v1171 = vpop.permute.xlu0 %1170
        %1172 = vrot.lane.b32.xlu0 %v483, 4
        %v1173 = vpop.permute.xlu0 %1172
        %1174 = vrot.lane.b32.xlu0 %v484, 4
        %v1175 = vpop.permute.xlu0 %1174
        %1176 = vrot.lane.b32.xlu0 %v485, 4
        %v1177 = vpop.permute.xlu0 %1176
        %1178 = vrot.lane.b32.xlu0 %v486, 4
        %v1179 = vpop.permute.xlu0 %1178
        %1180 = vrot.lane.b32.xlu0 %v487, 4
        %v1181 = vpop.permute.xlu0 %1180
        %1182 = vrot.lane.b32.xlu0 %v488, 4
        %v1183 = vpop.permute.xlu0 %1182
        %1184 = vrot.lane.b32.xlu0 %v489, 4
        %v1185 = vpop.permute.xlu0 %1184
        %1186 = vrot.lane.b32.xlu0 %v490, 4
        %v1187 = vpop.permute.xlu0 %1186
        %1188 = vrot.lane.b32.xlu0 %v491, 4
        %v1189 = vpop.permute.xlu0 %1188
        %1190 = vrot.lane.b32.xlu0 %v492, 4
        %v1191 = vpop.permute.xlu0 %1190
        %1192 = vrot.lane.b32.xlu0 %v493, 4
        %v1193 = vpop.permute.xlu0 %1192
        %1194 = vrot.lane.b32.xlu0 %v494, 4
        %v1195 = vpop.permute.xlu0 %1194
        %1196 = vrot.lane.b32.xlu0 %v495, 4
        %v1197 = vpop.permute.xlu0 %1196
        %1198 = vrot.lane.b32.xlu0 %v496, 4
        %v1199 = vpop.permute.xlu0 %1198
        %1282 = vrot.lane.b32.xlu0 %v497, 5
        %v1283 = vpop.permute.xlu0 %1282
        %1284 = vrot.lane.b32.xlu0 %v498, 5
        %v1285 = vpop.permute.xlu0 %1284
        %1286 = vrot.lane.b32.xlu0 %v499, 5
        %v1287 = vpop.permute.xlu0 %1286
        %1288 = vrot.lane.b32.xlu0 %v500, 5
        %v1289 = vpop.permute.xlu0 %1288
        %1290 = vrot.lane.b32.xlu0 %v501, 5
        %v1291 = vpop.permute.xlu0 %1290
        %1292 = vrot.lane.b32.xlu0 %v502, 5
        %v1293 = vpop.permute.xlu0 %1292
        %1294 = vrot.lane.b32.xlu0 %v503, 5
        %v1295 = vpop.permute.xlu0 %1294
        %1296 = vrot.lane.b32.xlu0 %v504, 5
        %v1297 = vpop.permute.xlu0 %1296
        %1298 = vrot.lane.b32.xlu0 %v505, 5
        %v1299 = vpop.permute.xlu0 %1298
        %1300 = vrot.lane.b32.xlu0 %v506, 5
        %v1301 = vpop.permute.xlu0 %1300
        %1302 = vrot.lane.b32.xlu0 %v507, 5
        %v1303 = vpop.permute.xlu0 %1302
        %1304 = vrot.lane.b32.xlu0 %v508, 5
        %v1305 = vpop.permute.xlu0 %1304
        %1306 = vrot.lane.b32.xlu0 %v509, 5
        %v1307 = vpop.permute.xlu0 %1306
        %1308 = vrot.lane.b32.xlu0 %v510, 5
        %v1309 = vpop.permute.xlu0 %1308
        %1310 = vrot.lane.b32.xlu0 %v511, 5
        %v1311 = vpop.permute.xlu0 %1310
        %1312 = vrot.lane.b32.xlu0 %v512, 5
        %v1313 = vpop.permute.xlu0 %1312
        %1314 = vrot.lane.b32.xlu0 %v513, 5
        %v1315 = vpop.permute.xlu0 %1314
        %1316 = vrot.lane.b32.xlu0 %v514, 5
        %v1317 = vpop.permute.xlu0 %1316
        %1318 = vrot.lane.b32.xlu0 %v515, 5
        %v1319 = vpop.permute.xlu0 %1318
        %1320 = vrot.lane.b32.xlu0 %v516, 5
        %v1321 = vpop.permute.xlu0 %1320
        %1322 = vrot.lane.b32.xlu0 %v517, 5
        %v1323 = vpop.permute.xlu0 %1322
        %1324 = vrot.lane.b32.xlu0 %v518, 5
        %v1325 = vpop.permute.xlu0 %1324
        %1326 = vrot.lane.b32.xlu0 %v519, 5
        %v1327 = vpop.permute.xlu0 %1326
        %1328 = vrot.lane.b32.xlu0 %v520, 5
        %v1329 = vpop.permute.xlu0 %1328
        %1330 = vrot.lane.b32.xlu0 %v521, 5
        %v1331 = vpop.permute.xlu0 %1330
        %1332 = vrot.lane.b32.xlu0 %v522, 5
        %v1333 = vpop.permute.xlu0 %1332
        %1334 = vrot.lane.b32.xlu0 %v523, 5
        %v1335 = vpop.permute.xlu0 %1334
        %1336 = vrot.lane.b32.xlu0 %v524, 5
        %v1337 = vpop.permute.xlu0 %1336
        %1338 = vrot.lane.b32.xlu0 %v525, 5
        %v1339 = vpop.permute.xlu0 %1338
        %1340 = vrot.lane.b32.xlu0 %v526, 5
        %v1341 = vpop.permute.xlu0 %1340
        %1342 = vrot.lane.b32.xlu0 %v527, 5
        %v1343 = vpop.permute.xlu0 %1342
        %1344 = vrot.lane.b32.xlu0 %v528, 5
        %v1345 = vpop.permute.xlu0 %1344
        %1346 = vrot.lane.b32.xlu0 %v529, 5
        %v1347 = vpop.permute.xlu0 %1346
        %1348 = vrot.lane.b32.xlu0 %v530, 5
        %v1349 = vpop.permute.xlu0 %1348
        %1350 = vrot.lane.b32.xlu0 %v531, 5
        %v1351 = vpop.permute.xlu0 %1350
        %1352 = vrot.lane.b32.xlu0 %v532, 5
        %v1353 = vpop.permute.xlu0 %1352
        %1354 = vrot.lane.b32.xlu0 %v533, 5
        %v1355 = vpop.permute.xlu0 %1354
        %1356 = vrot.lane.b32.xlu0 %v534, 5
        %v1357 = vpop.permute.xlu0 %1356
        %1358 = vrot.lane.b32.xlu0 %v535, 5
        %v1359 = vpop.permute.xlu0 %1358
        %1360 = vrot.lane.b32.xlu0 %v536, 5
        %v1361 = vpop.permute.xlu0 %1360
        %1362 = vrot.lane.b32.xlu0 %v537, 5
        %v1363 = vpop.permute.xlu0 %1362
        %1408 = vrot.lane.b32.xlu0 %v499, 6
        %v1409 = vpop.permute.xlu0 %1408
        %1410 = vrot.lane.b32.xlu0 %v500, 6
        %v1411 = vpop.permute.xlu0 %1410
        %1412 = vrot.lane.b32.xlu0 %v501, 6
        %v1413 = vpop.permute.xlu0 %1412
        %1414 = vrot.lane.b32.xlu0 %v502, 6
        %v1415 = vpop.permute.xlu0 %1414
        %1416 = vrot.lane.b32.xlu0 %v503, 6
        %v1417 = vpop.permute.xlu0 %1416
        %1418 = vrot.lane.b32.xlu0 %v504, 6
        %v1419 = vpop.permute.xlu0 %1418
        %1420 = vrot.lane.b32.xlu0 %v505, 6
        %v1421 = vpop.permute.xlu0 %1420
        %1422 = vrot.lane.b32.xlu0 %v506, 6
        %v1423 = vpop.permute.xlu0 %1422
        %1424 = vrot.lane.b32.xlu0 %v507, 6
        %v1425 = vpop.permute.xlu0 %1424
        %1426 = vrot.lane.b32.xlu0 %v508, 6
        %v1427 = vpop.permute.xlu0 %1426
        %1428 = vrot.lane.b32.xlu0 %v509, 6
        %v1429 = vpop.permute.xlu0 %1428
        %1430 = vrot.lane.b32.xlu0 %v510, 6
        %v1431 = vpop.permute.xlu0 %1430
        %1432 = vrot.lane.b32.xlu0 %v511, 6
        %v1433 = vpop.permute.xlu0 %1432
        %1434 = vrot.lane.b32.xlu0 %v512, 6
        %v1435 = vpop.permute.xlu0 %1434
        %1436 = vrot.lane.b32.xlu0 %v513, 6
        %v1437 = vpop.permute.xlu0 %1436
        %1438 = vrot.lane.b32.xlu0 %v514, 6
        %v1439 = vpop.permute.xlu0 %1438
        %1440 = vrot.lane.b32.xlu0 %v515, 6
        %v1441 = vpop.permute.xlu0 %1440
        %1442 = vrot.lane.b32.xlu0 %v516, 6
        %v1443 = vpop.permute.xlu0 %1442
        %1444 = vrot.lane.b32.xlu0 %v517, 6
        %v1445 = vpop.permute.xlu0 %1444
        %1446 = vrot.lane.b32.xlu0 %v518, 6
        %v1447 = vpop.permute.xlu0 %1446
        %1448 = vrot.lane.b32.xlu0 %v519, 6
        %v1449 = vpop.permute.xlu0 %1448
        %1450 = vrot.lane.b32.xlu0 %v520, 6
        %v1451 = vpop.permute.xlu0 %1450
        %1452 = vrot.lane.b32.xlu0 %v521, 6
        %v1453 = vpop.permute.xlu0 %1452
        %1454 = vrot.lane.b32.xlu0 %v522, 6
        %v1455 = vpop.permute.xlu0 %1454
        %1456 = vrot.lane.b32.xlu0 %v523, 6
        %v1457 = vpop.permute.xlu0 %1456
        %1458 = vrot.lane.b32.xlu0 %v524, 6
        %v1459 = vpop.permute.xlu0 %1458
        %1460 = vrot.lane.b32.xlu0 %v525, 6
        %v1461 = vpop.permute.xlu0 %1460
        %1462 = vrot.lane.b32.xlu0 %v526, 6
        %v1463 = vpop.permute.xlu0 %1462
        %1464 = vrot.lane.b32.xlu0 %v527, 6
        %v1465 = vpop.permute.xlu0 %1464
        %1466 = vrot.lane.b32.xlu0 %v528, 6
        %v1467 = vpop.permute.xlu0 %1466
        %1468 = vrot.lane.b32.xlu0 %v529, 6
        %v1469 = vpop.permute.xlu0 %1468
        %1470 = vrot.lane.b32.xlu0 %v530, 6
        %v1471 = vpop.permute.xlu0 %1470
        %1472 = vrot.lane.b32.xlu0 %v531, 6
        %v1473 = vpop.permute.xlu0 %1472
        %1474 = vrot.lane.b32.xlu0 %v532, 6
        %v1475 = vpop.permute.xlu0 %1474
        %1476 = vrot.lane.b32.xlu0 %v533, 6
        %v1477 = vpop.permute.xlu0 %1476
        %1478 = vrot.lane.b32.xlu0 %v534, 6
        %v1479 = vpop.permute.xlu0 %1478
        %1480 = vrot.lane.b32.xlu0 %v535, 6
        %v1481 = vpop.permute.xlu0 %1480
        %1482 = vrot.lane.b32.xlu0 %v536, 6
        %v1483 = vpop.permute.xlu0 %1482
        %1484 = vrot.lane.b32.xlu0 %v538, 6
        %v1485 = vpop.permute.xlu0 %1484
        %1486 = vrot.lane.b32.xlu0 %v539, 6
        %v1487 = vpop.permute.xlu0 %1486
        %1488 = vrot.lane.b32.xlu0 %v540, 6
        %v1489 = vpop.permute.xlu0 %1488
        %1572 = vrot.lane.b32.xlu0 %v541, 7
        %v1573 = vpop.permute.xlu0 %1572
        %1574 = vrot.lane.b32.xlu0 %v542, 7
        %v1575 = vpop.permute.xlu0 %1574
        %1576 = vrot.lane.b32.xlu0 %v543, 7
        %v1577 = vpop.permute.xlu0 %1576
        %1578 = vrot.lane.b32.xlu0 %v544, 7
        %v1579 = vpop.permute.xlu0 %1578
        %1580 = vrot.lane.b32.xlu0 %v545, 7
        %v1581 = vpop.permute.xlu0 %1580
        %1582 = vrot.lane.b32.xlu0 %v546, 7
        %v1583 = vpop.permute.xlu0 %1582
        %1584 = vrot.lane.b32.xlu0 %v547, 7
        %v1585 = vpop.permute.xlu0 %1584
        %1586 = vrot.lane.b32.xlu0 %v548, 7
        %v1587 = vpop.permute.xlu0 %1586
        %1588 = vrot.lane.b32.xlu0 %v549, 7
        %v1589 = vpop.permute.xlu0 %1588
        %1590 = vrot.lane.b32.xlu0 %v550, 7
        %v1591 = vpop.permute.xlu0 %1590
        %1592 = vrot.lane.b32.xlu0 %v551, 7
        %v1593 = vpop.permute.xlu0 %1592
        %1594 = vrot.lane.b32.xlu0 %v552, 7
        %v1595 = vpop.permute.xlu0 %1594
        %1596 = vrot.lane.b32.xlu0 %v553, 7
        %v1597 = vpop.permute.xlu0 %1596
        %1598 = vrot.lane.b32.xlu0 %v554, 7
        %v1599 = vpop.permute.xlu0 %1598
        %1600 = vrot.lane.b32.xlu0 %v555, 7
        %v1601 = vpop.permute.xlu0 %1600
        %1602 = vrot.lane.b32.xlu0 %v556, 7
        %v1603 = vpop.permute.xlu0 %1602
        %1604 = vrot.lane.b32.xlu0 %v557, 7
        %v1605 = vpop.permute.xlu0 %1604
        %1606 = vrot.lane.b32.xlu0 %v558, 7
        %v1607 = vpop.permute.xlu0 %1606
        %1608 = vrot.lane.b32.xlu0 %v559, 7
        %v1609 = vpop.permute.xlu0 %1608
        %1610 = vrot.lane.b32.xlu0 %v560, 7
        %v1611 = vpop.permute.xlu0 %1610
        %1612 = vrot.lane.b32.xlu0 %v561, 7
        %v1613 = vpop.permute.xlu0 %1612
        %1614 = vrot.lane.b32.xlu0 %v562, 7
        %v1615 = vpop.permute.xlu0 %1614
        %1616 = vrot.lane.b32.xlu0 %v563, 7
        %v1617 = vpop.permute.xlu0 %1616
        %1618 = vrot.lane.b32.xlu0 %v564, 7
        %v1619 = vpop.permute.xlu0 %1618
        %1620 = vrot.lane.b32.xlu0 %v565, 7
        %v1621 = vpop.permute.xlu0 %1620
        %1622 = vrot.lane.b32.xlu0 %v566, 7
        %v1623 = vpop.permute.xlu0 %1622
        %1624 = vrot.lane.b32.xlu0 %v567, 7
        %v1625 = vpop.permute.xlu0 %1624
        %1626 = vrot.lane.b32.xlu0 %v568, 7
        %v1627 = vpop.permute.xlu0 %1626
        %1628 = vrot.lane.b32.xlu0 %v569, 7
        %v1629 = vpop.permute.xlu0 %1628
        %1630 = vrot.lane.b32.xlu0 %v570, 7
        %v1631 = vpop.permute.xlu0 %1630
        %1632 = vrot.lane.b32.xlu0 %v571, 7
        %v1633 = vpop.permute.xlu0 %1632
        %1634 = vrot.lane.b32.xlu0 %v572, 7
        %v1635 = vpop.permute.xlu0 %1634
        %1636 = vrot.lane.b32.xlu0 %v573, 7
        %v1637 = vpop.permute.xlu0 %1636
        %1638 = vrot.lane.b32.xlu0 %v574, 7
        %v1639 = vpop.permute.xlu0 %1638
        %1640 = vrot.lane.b32.xlu0 %v575, 7
        %v1641 = vpop.permute.xlu0 %1640
        %1642 = vrot.lane.b32.xlu0 %v576, 7
        %v1643 = vpop.permute.xlu0 %1642
        %1644 = vrot.lane.b32.xlu0 %v577, 7
        %v1645 = vpop.permute.xlu0 %1644
        %1646 = vrot.lane.b32.xlu0 %v578, 7
        %v1647 = vpop.permute.xlu0 %1646
        %1648 = vrot.lane.b32.xlu0 %v579, 7
        %v1649 = vpop.permute.xlu0 %1648
        %1650 = vrot.lane.b32.xlu0 %v580, 7
        %v1651 = vpop.permute.xlu0 %1650
        %1652 = vrot.lane.b32.xlu0 %v581, 7
        %v1653 = vpop.permute.xlu0 %1652
        %1736 = vrot.lane.b32.xlu0 %v582, 8
        %v1737 = vpop.permute.xlu0 %1736
        %1738 = vrot.lane.b32.xlu0 %v583, 8
        %v1739 = vpop.permute.xlu0 %1738
        %1740 = vrot.lane.b32.xlu0 %v584, 8
        %v1741 = vpop.permute.xlu0 %1740
        %1742 = vrot.lane.b32.xlu0 %v585, 8
        %v1743 = vpop.permute.xlu0 %1742
        %1744 = vrot.lane.b32.xlu0 %v586, 8
        %v1745 = vpop.permute.xlu0 %1744
        %1746 = vrot.lane.b32.xlu0 %v587, 8
        %v1747 = vpop.permute.xlu0 %1746
        %1748 = vrot.lane.b32.xlu0 %v588, 8
        %v1749 = vpop.permute.xlu0 %1748
        %1750 = vrot.lane.b32.xlu0 %v589, 8
        %v1751 = vpop.permute.xlu0 %1750
        %1752 = vrot.lane.b32.xlu0 %v590, 8
        %v1753 = vpop.permute.xlu0 %1752
        %1754 = vrot.lane.b32.xlu0 %v591, 8
        %v1755 = vpop.permute.xlu0 %1754
        %1756 = vrot.lane.b32.xlu0 %v592, 8
        %v1757 = vpop.permute.xlu0 %1756
        %1758 = vrot.lane.b32.xlu0 %v593, 8
        %v1759 = vpop.permute.xlu0 %1758
        %1760 = vrot.lane.b32.xlu0 %v594, 8
        %v1761 = vpop.permute.xlu0 %1760
        %1762 = vrot.lane.b32.xlu0 %v595, 8
        %v1763 = vpop.permute.xlu0 %1762
        %1764 = vrot.lane.b32.xlu0 %v596, 8
        %v1765 = vpop.permute.xlu0 %1764
        %1766 = vrot.lane.b32.xlu0 %v597, 8
        %v1767 = vpop.permute.xlu0 %1766
        %1768 = vrot.lane.b32.xlu0 %v598, 8
        %v1769 = vpop.permute.xlu0 %1768
        %1770 = vrot.lane.b32.xlu0 %v599, 8
        %v1771 = vpop.permute.xlu0 %1770
        %1772 = vrot.lane.b32.xlu0 %v600, 8
        %v1773 = vpop.permute.xlu0 %1772
        %1774 = vrot.lane.b32.xlu0 %v601, 8
        %v1775 = vpop.permute.xlu0 %1774
        %1776 = vrot.lane.b32.xlu0 %v602, 8
        %v1777 = vpop.permute.xlu0 %1776
        %1778 = vrot.lane.b32.xlu0 %v603, 8
        %v1779 = vpop.permute.xlu0 %1778
        %1780 = vrot.lane.b32.xlu0 %v604, 8
        %v1781 = vpop.permute.xlu0 %1780
        %1782 = vrot.lane.b32.xlu0 %v605, 8
        %v1783 = vpop.permute.xlu0 %1782
        %1784 = vrot.lane.b32.xlu0 %v606, 8
        %v1785 = vpop.permute.xlu0 %1784
        %1786 = vrot.lane.b32.xlu0 %v607, 8
        %v1787 = vpop.permute.xlu0 %1786
        %1788 = vrot.lane.b32.xlu0 %v608, 8
        %v1789 = vpop.permute.xlu0 %1788
        %1790 = vrot.lane.b32.xlu0 %v609, 8
        %v1791 = vpop.permute.xlu0 %1790
        %1792 = vrot.lane.b32.xlu0 %v610, 8
        %v1793 = vpop.permute.xlu0 %1792
        %1794 = vrot.lane.b32.xlu0 %v611, 8
        %v1795 = vpop.permute.xlu0 %1794
        %1796 = vrot.lane.b32.xlu0 %v612, 8
        %v1797 = vpop.permute.xlu0 %1796
        %1798 = vrot.lane.b32.xlu0 %v613, 8
        %v1799 = vpop.permute.xlu0 %1798
        %1800 = vrot.lane.b32.xlu0 %v614, 8
        %v1801 = vpop.permute.xlu0 %1800
        %1802 = vrot.lane.b32.xlu0 %v615, 8
        %v1803 = vpop.permute.xlu0 %1802
        %1804 = vrot.lane.b32.xlu0 %v616, 8
        %v1805 = vpop.permute.xlu0 %1804
        %1806 = vrot.lane.b32.xlu0 %v617, 8
        %v1807 = vpop.permute.xlu0 %1806
        %1808 = vrot.lane.b32.xlu0 %v618, 8
        %v1809 = vpop.permute.xlu0 %1808
        %1810 = vrot.lane.b32.xlu0 %v619, 8
        %v1811 = vpop.permute.xlu0 %1810
        %1812 = vrot.lane.b32.xlu0 %v620, 8
        %v1813 = vpop.permute.xlu0 %1812
        %1814 = vrot.lane.b32.xlu0 %v621, 8
        %v1815 = vpop.permute.xlu0 %1814
        %1816 = vrot.lane.b32.xlu0 %v622, 8
        %v1817 = vpop.permute.xlu0 %1816
        %vm1859 = vcmask 7168
        %v1860 = vsel %vm1859, %v330, %v665
        %v1861 = vsel %vm1859, %v331, %v667
        %v1862 = vsel %vm1859, %v332, %v669
        %v1863 = vsel %vm1859, %v333, %v671
        %v1864 = vsel %vm1859, %v334, %v673
        %v1865 = vsel %vm1859, %v335, %v675
        %v1866 = vsel %vm1859, %v336, %v677
        %v1867 = vsel %vm1859, %v337, %v679
        %v1868 = vsel %vm1859, %v338, %v681
        %v1869 = vsel %vm1859, %v339, %v683
        %v1870 = vsel %vm1859, %v340, %v685
        %v1871 = vsel %vm1859, %v341, %v687
        %v1872 = vsel %vm1859, %v342, %v689
        %v1873 = vsel %vm1859, %v343, %v691
        %v1874 = vsel %vm1859, %v344, %v693
        %v1875 = vsel %vm1859, %v345, %v695
        %v1876 = vsel %vm1859, %v346, %v697
        %v1877 = vsel %vm1859, %v347, %v699
        %v1878 = vsel %vm1859, %v348, %v701
        %v1879 = vsel %vm1859, %v349, %v703
        %v1880 = vsel %vm1859, %v350, %v705
        %v1881 = vsel %vm1859, %v351, %v707
        %v1882 = vsel %vm1859, %v352, %v709
        %v1883 = vsel %vm1859, %v353, %v711
        %v1884 = vsel %vm1859, %v354, %v713
        %v1885 = vsel %vm1859, %v355, %v715
        %v1886 = vsel %vm1859, %v356, %v717
        %v1887 = vsel %vm1859, %v357, %v719
        %v1888 = vsel %vm1859, %v358, %v721
        %v1889 = vsel %vm1859, %v359, %v723
        %v1890 = vsel %vm1859, %v360, %v725
        %v1891 = vsel %vm1859, %v361, %v727
        %v1892 = vsel %vm1859, %v362, %v729
        %v1893 = vsel %vm1859, %v363, %v731
        %v1894 = vsel %vm1859, %v364, %v733
        %v1895 = vsel %vm1859, %v365, %v735
        %v1896 = vsel %vm1859, %v366, %v737
        %v1897 = vsel %vm1859, %v367, %v739
        %v1898 = vsel %vm1859, %v368, %v741
        %v1899 = vsel %vm1859, %v369, %v743
        %v1900 = vsel %vm1859, %v370, %v745
        %vm1901 = vcmask 15360
        %v1902 = vsel %vm1901, %v1860, %v829
        %v1903 = vsel %vm1901, %v1861, %v831
        %v1904 = vsel %vm1901, %v1862, %v833
        %v1905 = vsel %vm1901, %v1863, %v835
        %v1906 = vsel %vm1901, %v1864, %v837
        %v1907 = vsel %vm1901, %v1865, %v839
        %v1908 = vsel %vm1901, %v1866, %v841
        %v1909 = vsel %vm1901, %v1867, %v843
        %v1910 = vsel %vm1901, %v1868, %v845
        %v1911 = vsel %vm1901, %v1869, %v847
        %v1912 = vsel %vm1901, %v1870, %v849
        %v1913 = vsel %vm1901, %v1871, %v851
        %v1914 = vsel %vm1901, %v1872, %v853
        %v1915 = vsel %vm1901, %v1873, %v855
        %v1916 = vsel %vm1901, %v1874, %v857
        %v1917 = vsel %vm1901, %v1875, %v859
        %v1918 = vsel %vm1901, %v1876, %v861
        %v1919 = vsel %vm1901, %v1877, %v863
        %v1920 = vsel %vm1901, %v1878, %v865
        %v1921 = vsel %vm1901, %v1879, %v867
        %v1922 = vsel %vm1901, %v1880, %v869
        %v1923 = vsel %vm1901, %v1881, %v871
        %v1924 = vsel %vm1901, %v1882, %v873
        %v1925 = vsel %vm1901, %v1883, %v875
        %v1926 = vsel %vm1901, %v1884, %v877
        %v1927 = vsel %vm1901, %v1885, %v879
        %v1928 = vsel %vm1901, %v1886, %v881
        %v1929 = vsel %vm1901, %v1887, %v883
        %v1930 = vsel %vm1901, %v1888, %v885
        %v1931 = vsel %vm1901, %v1889, %v887
        %v1932 = vsel %vm1901, %v1890, %v889
        %v1933 = vsel %vm1901, %v1891, %v891
        %v1934 = vsel %vm1901, %v1892, %v893
        %v1935 = vsel %vm1901, %v1893, %v895
        %v1936 = vsel %vm1901, %v1894, %v897
        %v1937 = vsel %vm1901, %v1895, %v899
        %v1938 = vsel %vm1901, %v1896, %v901
        %v1939 = vsel %vm1901, %v1897, %v903
        %v1940 = vsel %vm1901, %v1898, %v905
        %v1941 = vsel %vm1901, %v1899, %v907
        %v1942 = vsel %vm1901, %v1900, %v909
        %vm1943 = vcmask 23552
        %v1944 = vsel %vm1943, %v1902, %v955
        %v1945 = vsel %vm1943, %v1903, %v957
        %v1946 = vsel %vm1943, %v1904, %v959
        %v1947 = vsel %vm1943, %v1905, %v961
        %v1948 = vsel %vm1943, %v1906, %v963
        %v1949 = vsel %vm1943, %v1907, %v965
        %v1950 = vsel %vm1943, %v1908, %v967
        %v1951 = vsel %vm1943, %v1909, %v969
        %v1952 = vsel %vm1943, %v1910, %v971
        %v1953 = vsel %vm1943, %v1911, %v973
        %v1954 = vsel %vm1943, %v1912, %v975
        %v1955 = vsel %vm1943, %v1913, %v977
        %v1956 = vsel %vm1943, %v1914, %v979
        %v1957 = vsel %vm1943, %v1915, %v981
        %v1958 = vsel %vm1943, %v1916, %v983
        %v1959 = vsel %vm1943, %v1917, %v985
        %v1960 = vsel %vm1943, %v1918, %v987
        %v1961 = vsel %vm1943, %v1919, %v989
        %v1962 = vsel %vm1943, %v1920, %v991
        %v1963 = vsel %vm1943, %v1921, %v993
        %v1964 = vsel %vm1943, %v1922, %v995
        %v1965 = vsel %vm1943, %v1923, %v997
        %v1966 = vsel %vm1943, %v1924, %v999
        %v1967 = vsel %vm1943, %v1925, %v1001
        %v1968 = vsel %vm1943, %v1926, %v1003
        %v1969 = vsel %vm1943, %v1927, %v1005
        %v1970 = vsel %vm1943, %v1928, %v1007
        %v1971 = vsel %vm1943, %v1929, %v1009
        %v1972 = vsel %vm1943, %v1930, %v1011
        %v1973 = vsel %vm1943, %v1931, %v1013
        %v1974 = vsel %vm1943, %v1932, %v1015
        %v1975 = vsel %vm1943, %v1933, %v1017
        %v1976 = vsel %vm1943, %v1934, %v1019
        %v1977 = vsel %vm1943, %v1935, %v1021
        %v1978 = vsel %vm1943, %v1936, %v1023
        %v1979 = vsel %vm1943, %v1937, %v1025
        %v1980 = vsel %vm1943, %v1938, %v1027
        %v1981 = vsel %vm1943, %v1939, %v1029
        %v1982 = vsel %vm1943, %v1940, %v1031
        %v1983 = vsel %vm1943, %v1941, %v1033
        %v1984 = vsel %vm1943, %v1942, %v1035
        %vm1985 = vcmask 31744
        %v1986 = vsel %vm1985, %v1944, %v1119
        %v1987 = vsel %vm1985, %v1945, %v1121
        %v1988 = vsel %vm1985, %v1946, %v1123
        %v1989 = vsel %vm1985, %v1947, %v1125
        %v1990 = vsel %vm1985, %v1948, %v1127
        %v1991 = vsel %vm1985, %v1949, %v1129
        %v1992 = vsel %vm1985, %v1950, %v1131
        %v1993 = vsel %vm1985, %v1951, %v1133
        %v1994 = vsel %vm1985, %v1952, %v1135
        %v1995 = vsel %vm1985, %v1953, %v1137
        %v1996 = vsel %vm1985, %v1954, %v1139
        %v1997 = vsel %vm1985, %v1955, %v1141
        %v1998 = vsel %vm1985, %v1956, %v1143
        %v1999 = vsel %vm1985, %v1957, %v1145
        %v2000 = vsel %vm1985, %v1958, %v1147
        %v2001 = vsel %vm1985, %v1959, %v1149
        %v2002 = vsel %vm1985, %v1960, %v1151
        %v2003 = vsel %vm1985, %v1961, %v1153
        %v2004 = vsel %vm1985, %v1962, %v1155
        %v2005 = vsel %vm1985, %v1963, %v1157
        %v2006 = vsel %vm1985, %v1964, %v1159
        %v2007 = vsel %vm1985, %v1965, %v1161
        %v2008 = vsel %vm1985, %v1966, %v1163
        %v2009 = vsel %vm1985, %v1967, %v1165
        %v2010 = vsel %vm1985, %v1968, %v1167
        %v2011 = vsel %vm1985, %v1969, %v1169
        %v2012 = vsel %vm1985, %v1970, %v1171
        %v2013 = vsel %vm1985, %v1971, %v1173
        %v2014 = vsel %vm1985, %v1972, %v1175
        %v2015 = vsel %vm1985, %v1973, %v1177
        %v2016 = vsel %vm1985, %v1974, %v1179
        %v2017 = vsel %vm1985, %v1975, %v1181
        %v2018 = vsel %vm1985, %v1976, %v1183
        %v2019 = vsel %vm1985, %v1977, %v1185
        %v2020 = vsel %vm1985, %v1978, %v1187
        %v2021 = vsel %vm1985, %v1979, %v1189
        %v2022 = vsel %vm1985, %v1980, %v1191
        %v2023 = vsel %vm1985, %v1981, %v1193
        %v2024 = vsel %vm1985, %v1982, %v1195
        %v2025 = vsel %vm1985, %v1983, %v1197
        %v2026 = vsel %vm1985, %v1984, %v1199
        %vm2027 = vcmask 39936
        %v2028 = vsel %vm2027, %v1986, %v1283
        %v2029 = vsel %vm2027, %v1987, %v1285
        %v2030 = vsel %vm2027, %v1988, %v1287
        %v2031 = vsel %vm2027, %v1989, %v1289
        %v2032 = vsel %vm2027, %v1990, %v1291
        %v2033 = vsel %vm2027, %v1991, %v1293
        %v2034 = vsel %vm2027, %v1992, %v1295
        %v2035 = vsel %vm2027, %v1993, %v1297
        %v2036 = vsel %vm2027, %v1994, %v1299
        %v2037 = vsel %vm2027, %v1995, %v1301
        %v2038 = vsel %vm2027, %v1996, %v1303
        %v2039 = vsel %vm2027, %v1997, %v1305
        %v2040 = vsel %vm2027, %v1998, %v1307
        %v2041 = vsel %vm2027, %v1999, %v1309
        %v2042 = vsel %vm2027, %v2000, %v1311
        %v2043 = vsel %vm2027, %v2001, %v1313
        %v2044 = vsel %vm2027, %v2002, %v1315
        %v2045 = vsel %vm2027, %v2003, %v1317
        %v2046 = vsel %vm2027, %v2004, %v1319
        %v2047 = vsel %vm2027, %v2005, %v1321
        %v2048 = vsel %vm2027, %v2006, %v1323
        %v2049 = vsel %vm2027, %v2007, %v1325
        %v2050 = vsel %vm2027, %v2008, %v1327
        %v2051 = vsel %vm2027, %v2009, %v1329
        %v2052 = vsel %vm2027, %v2010, %v1331
        %v2053 = vsel %vm2027, %v2011, %v1333
        %v2054 = vsel %vm2027, %v2012, %v1335
        %v2055 = vsel %vm2027, %v2013, %v1337
        %v2056 = vsel %vm2027, %v2014, %v1339
        %v2057 = vsel %vm2027, %v2015, %v1341
        %v2058 = vsel %vm2027, %v2016, %v1343
        %v2059 = vsel %vm2027, %v2017, %v1345
        %v2060 = vsel %vm2027, %v2018, %v1347
        %v2061 = vsel %vm2027, %v2019, %v1349
        %v2062 = vsel %vm2027, %v2020, %v1351
        %v2063 = vsel %vm2027, %v2021, %v1353
        %v2064 = vsel %vm2027, %v2022, %v1355
        %v2065 = vsel %vm2027, %v2023, %v1357
        %v2066 = vsel %vm2027, %v2024, %v1359
        %v2067 = vsel %vm2027, %v2025, %v1361
        %v2068 = vsel %vm2027, %v2026, %v1363
        %vm2069 = vcmask 48128
        %v2070 = vsel %vm2069, %v2028, %v1409
        %v2071 = vsel %vm2069, %v2029, %v1411
        %v2072 = vsel %vm2069, %v2030, %v1413
        %v2073 = vsel %vm2069, %v2031, %v1415
        %v2074 = vsel %vm2069, %v2032, %v1417
        %v2075 = vsel %vm2069, %v2033, %v1419
        %v2076 = vsel %vm2069, %v2034, %v1421
        %v2077 = vsel %vm2069, %v2035, %v1423
        %v2078 = vsel %vm2069, %v2036, %v1425
        %v2079 = vsel %vm2069, %v2037, %v1427
        %v2080 = vsel %vm2069, %v2038, %v1429
        %v2081 = vsel %vm2069, %v2039, %v1431
        %v2082 = vsel %vm2069, %v2040, %v1433
        %v2083 = vsel %vm2069, %v2041, %v1435
        %v2084 = vsel %vm2069, %v2042, %v1437
        %v2085 = vsel %vm2069, %v2043, %v1439
        %v2086 = vsel %vm2069, %v2044, %v1441
        %v2087 = vsel %vm2069, %v2045, %v1443
        %v2088 = vsel %vm2069, %v2046, %v1445
        %v2089 = vsel %vm2069, %v2047, %v1447
        %v2090 = vsel %vm2069, %v2048, %v1449
        %v2091 = vsel %vm2069, %v2049, %v1451
        %v2092 = vsel %vm2069, %v2050, %v1453
        %v2093 = vsel %vm2069, %v2051, %v1455
        %v2094 = vsel %vm2069, %v2052, %v1457
        %v2095 = vsel %vm2069, %v2053, %v1459
        %v2096 = vsel %vm2069, %v2054, %v1461
        %v2097 = vsel %vm2069, %v2055, %v1463
        %v2098 = vsel %vm2069, %v2056, %v1465
        %v2099 = vsel %vm2069, %v2057, %v1467
        %v2100 = vsel %vm2069, %v2058, %v1469
        %v2101 = vsel %vm2069, %v2059, %v1471
        %v2102 = vsel %vm2069, %v2060, %v1473
        %v2103 = vsel %vm2069, %v2061, %v1475
        %v2104 = vsel %vm2069, %v2062, %v1477
        %v2105 = vsel %vm2069, %v2063, %v1479
        %v2106 = vsel %vm2069, %v2064, %v1481
        %v2107 = vsel %vm2069, %v2065, %v1483
        %v2108 = vsel %vm2069, %v2066, %v1485
        %v2109 = vsel %vm2069, %v2067, %v1487
        %v2110 = vsel %vm2069, %v2068, %v1489
        %vm2111 = vcmask 56320
        %v2112 = vsel %vm2111, %v2070, %v1573
        %v2113 = vsel %vm2111, %v2071, %v1575
        %v2114 = vsel %vm2111, %v2072, %v1577
        %v2115 = vsel %vm2111, %v2073, %v1579
        %v2116 = vsel %vm2111, %v2074, %v1581
        %v2117 = vsel %vm2111, %v2075, %v1583
        %v2118 = vsel %vm2111, %v2076, %v1585
        %v2119 = vsel %vm2111, %v2077, %v1587
        %v2120 = vsel %vm2111, %v2078, %v1589
        %v2121 = vsel %vm2111, %v2079, %v1591
        %v2122 = vsel %vm2111, %v2080, %v1593
        %v2123 = vsel %vm2111, %v2081, %v1595
        %v2124 = vsel %vm2111, %v2082, %v1597
        %v2125 = vsel %vm2111, %v2083, %v1599
        %v2126 = vsel %vm2111, %v2084, %v1601
        %v2127 = vsel %vm2111, %v2085, %v1603
        %v2128 = vsel %vm2111, %v2086, %v1605
        %v2129 = vsel %vm2111, %v2087, %v1607
        %v2130 = vsel %vm2111, %v2088, %v1609
        %v2131 = vsel %vm2111, %v2089, %v1611
        %v2132 = vsel %vm2111, %v2090, %v1613
        %v2133 = vsel %vm2111, %v2091, %v1615
        %v2134 = vsel %vm2111, %v2092, %v1617
        %v2135 = vsel %vm2111, %v2093, %v1619
        %v2136 = vsel %vm2111, %v2094, %v1621
        %v2137 = vsel %vm2111, %v2095, %v1623
        %v2138 = vsel %vm2111, %v2096, %v1625
        %v2139 = vsel %vm2111, %v2097, %v1627
        %v2140 = vsel %vm2111, %v2098, %v1629
        %v2141 = vsel %vm2111, %v2099, %v1631
        %v2142 = vsel %vm2111, %v2100, %v1633
        %v2143 = vsel %vm2111, %v2101, %v1635
        %v2144 = vsel %vm2111, %v2102, %v1637
        %v2145 = vsel %vm2111, %v2103, %v1639
        %v2146 = vsel %vm2111, %v2104, %v1641
        %v2147 = vsel %vm2111, %v2105, %v1643
        %v2148 = vsel %vm2111, %v2106, %v1645
        %v2149 = vsel %vm2111, %v2107, %v1647
        %v2150 = vsel %vm2111, %v2108, %v1649
        %v2151 = vsel %vm2111, %v2109, %v1651
        %v2152 = vsel %vm2111, %v2110, %v1653
        %vm2153 = vcmask 64512
        %v2154 = vsel %vm2153, %v2112, %v1737
        %v2155 = vsel %vm2153, %v2113, %v1739
        %v2156 = vsel %vm2153, %v2114, %v1741
        %v2157 = vsel %vm2153, %v2115, %v1743
        %v2158 = vsel %vm2153, %v2116, %v1745
        %v2159 = vsel %vm2153, %v2117, %v1747
        %v2160 = vsel %vm2153, %v2118, %v1749
        %v2161 = vsel %vm2153, %v2119, %v1751
        %v2162 = vsel %vm2153, %v2120, %v1753
        %v2163 = vsel %vm2153, %v2121, %v1755
        %v2164 = vsel %vm2153, %v2122, %v1757
        %v2165 = vsel %vm2153, %v2123, %v1759
        %v2166 = vsel %vm2153, %v2124, %v1761
        %v2167 = vsel %vm2153, %v2125, %v1763
        %v2168 = vsel %vm2153, %v2126, %v1765
        %v2169 = vsel %vm2153, %v2127, %v1767
        %v2170 = vsel %vm2153, %v2128, %v1769
        %v2171 = vsel %vm2153, %v2129, %v1771
        %v2172 = vsel %vm2153, %v2130, %v1773
        %v2173 = vsel %vm2153, %v2131, %v1775
        %v2174 = vsel %vm2153, %v2132, %v1777
        %v2175 = vsel %vm2153, %v2133, %v1779
        %v2176 = vsel %vm2153, %v2134, %v1781
        %v2177 = vsel %vm2153, %v2135, %v1783
        %v2178 = vsel %vm2153, %v2136, %v1785
        %v2179 = vsel %vm2153, %v2137, %v1787
        %v2180 = vsel %vm2153, %v2138, %v1789
        %v2181 = vsel %vm2153, %v2139, %v1791
        %v2182 = vsel %vm2153, %v2140, %v1793
        %v2183 = vsel %vm2153, %v2141, %v1795
        %v2184 = vsel %vm2153, %v2142, %v1797
        %v2185 = vsel %vm2153, %v2143, %v1799
        %v2186 = vsel %vm2153, %v2144, %v1801
        %v2187 = vsel %vm2153, %v2145, %v1803
        %v2188 = vsel %vm2153, %v2146, %v1805
        %v2189 = vsel %vm2153, %v2147, %v1807
        %v2190 = vsel %vm2153, %v2148, %v1809
        %v2191 = vsel %vm2153, %v2149, %v1811
        %v2192 = vsel %vm2153, %v2150, %v1813
        %v2193 = vsel %vm2153, %v2151, %v1815
        %v2194 = vsel %vm2153, %v2152, %v1817
        %v2195 = vld [vmem:[%s1] sm:$0xff]
        %v2196 = vld [vmem:[%s1 + $0x8] sm:$0x1]
        %vm2197 = vcmask 72704
        %v2199 = vsel %vm2197, %v2154, 0
        %v2202 = vsel %vm2197, %v2155, 0
        %v2205 = vsel %vm2197, %v2156, 0
        %v2208 = vsel %vm2197, %v2157, 0
        %v2211 = vsel %vm2197, %v2158, 0
        %v2214 = vsel %vm2197, %v2159, 0
        %v2217 = vsel %vm2197, %v2160, 0
        %v2220 = vsel %vm2197, %v2161, 0
        %v2223 = vsel %vm2197, %v2162, 0
        %v2226 = vsel %vm2197, %v2163, 0
        %v2229 = vsel %vm2197, %v2164, 0
        %v2232 = vsel %vm2197, %v2165, 0
        %v2235 = vsel %vm2197, %v2166, 0
        %v2238 = vsel %vm2197, %v2167, 0
        %v2241 = vsel %vm2197, %v2168, 0
        %v2244 = vsel %vm2197, %v2169, 0
        %v2247 = vsel %vm2197, %v2170, 0
        %v2250 = vsel %vm2197, %v2171, 0
        %v2253 = vsel %vm2197, %v2172, 0
        %v2256 = vsel %vm2197, %v2173, 0
        %v2259 = vsel %vm2197, %v2174, 0
        %v2262 = vsel %vm2197, %v2175, 0
        %v2265 = vsel %vm2197, %v2176, 0
        %v2268 = vsel %vm2197, %v2177, 0
        %v2271 = vsel %vm2197, %v2178, 0
        %v2274 = vsel %vm2197, %v2179, 0
        %v2277 = vsel %vm2197, %v2180, 0
        %v2280 = vsel %vm2197, %v2181, 0
        %v2283 = vsel %vm2197, %v2182, 0
        %v2286 = vsel %vm2197, %v2183, 0
        %v2289 = vsel %vm2197, %v2184, 0
        %v2292 = vsel %vm2197, %v2185, 0
        %v2295 = vsel %vm2197, %v2186, 0
        %v2298 = vsel %vm2197, %v2187, 0
        %v2301 = vsel %vm2197, %v2188, 0
        %v2304 = vsel %vm2197, %v2189, 0
        %v2307 = vsel %vm2197, %v2190, 0
        %v2310 = vsel %vm2197, %v2191, 0
        %v2313 = vsel %vm2197, %v2192, 0
        %v2316 = vsel %vm2197, %v2193, 0
        %v2319 = vsel %vm2197, %v2194, 0
        %vm2321 = vcmask 1040384
        %v2323 = vsel %vm2321, %v2196, 0
        %2325 = vmatprep.subr.mxu0 0.0
        %2326 = vmatpush1.msra.mxu0 %v2195
        %2327 = vmatprep.subr.mxu0 0.0
        %2328 = vmatpush1.msra.mxu0 %v2323
        %2329 = vmatprep.subr.mxu0 0.0
        %2330 = vmatpush1.msra.mxu0 0.0
        %2331 = vmatprep.subr.mxu0 0.0
        %2332 = vmatpush1.msra.mxu0 0.0
        %2333 = vmatprep.subr.mxu0 0.0
        %2334 = vmatpush1.msra.mxu0 0.0
        %2335 = vmatprep.subr.mxu0 0.0
        %2336 = vmatpush1.msra.mxu0 0.0
        %2337 = vmatprep.subr.mxu0 0.0
        %2338 = vmatpush1.msra.mxu0 0.0
        %2339 = vmatprep.subr.mxu0 0.0
        %2340 = vmatpush1.msra.mxu0 0.0
        %2341 = vmatprep.subr.mxu0 0.0
        %2342 = vmatpush1.msra.mxu0 0.0
        %2343 = vmatprep.subr.mxu0 0.0
        %2344 = vmatpush1.msra.mxu0 0.0
        %2345 = vmatprep.subr.mxu0 0.0
        %2346 = vmatpush1.msra.mxu0 0.0
        %2347 = vmatprep.subr.mxu0 0.0
        %2348 = vmatpush1.msra.mxu0 0.0
        %2349 = vmatprep.subr.mxu0 0.0
        %2350 = vmatpush1.msra.mxu0 0.0
        %2351 = vmatprep.subr.mxu0 0.0
        %2352 = vmatpush1.msra.mxu0 0.0
        %2353 = vmatprep.subr.mxu0 0.0
        %2354 = vmatpush1.msra.mxu0 0.0
        %2355 = vmatprep.subr.mxu0 0.0
        %2356 = vmatpush1.msra.mxu0 0.0
        %2357 = vmatprep.subr.mxu0 0.0
        %2358 = vmatpush1.msra.mxu0 0.0
        %2359 = vmatprep.subr.mxu0 0.0
        %2360 = vmatpush1.msra.mxu0 0.0
        %2361 = vmatprep.subr.mxu0 0.0
        %2362 = vmatpush1.msra.mxu0 0.0
        %2363 = vmatprep.subr.mxu0 0.0
        %2364 = vmatpush1.msra.mxu0 0.0
        %2365 = vmatprep.subr.mxu0 0.0
        %2366 = vmatpush1.msra.mxu0 0.0
        %2367 = vmatprep.subr.mxu0 0.0
        %2368 = vmatpush1.msra.mxu0 0.0
        %2369 = vmatprep.subr.mxu0 0.0
        %2370 = vmatpush1.msra.mxu0 0.0
        %2371 = vmatprep.subr.mxu0 0.0
        %2372 = vmatpush1.msra.mxu0 0.0
        %2373 = vmatprep.subr.mxu0 0.0
        %2374 = vmatpush1.msra.mxu0 0.0
        %2375 = vmatprep.subr.mxu0 0.0
        %2376 = vmatpush1.msra.mxu0 0.0
        %2377 = vmatprep.subr.mxu0 0.0
        %2378 = vmatpush1.msra.mxu0 0.0
        %2379 = vmatprep.subr.mxu0 0.0
        %2380 = vmatpush1.msra.mxu0 0.0
        %2381 = vmatprep.subr.mxu0 0.0
        %2382 = vmatpush1.msra.mxu0 0.0
        %2383 = vmatprep.subr.mxu0 0.0
        %2384 = vmatpush1.msra.mxu0 0.0
        %2385 = vmatprep.subr.mxu0 0.0
        %2386 = vmatpush1.msra.mxu0 0.0
        %2387 = vmatprep.subr.mxu0 0.0
        %2388 = vmatpush1.msra.mxu0 0.0
        %2389 = vmatprep.mubr.f32.mxu0 0.0
        %2390 = vmatmul.mubr.f32.gmra.mrb[0].mxu0 %v2199
        %v2391 = vpop.f32.mrb[0].mxu0
        %v2392 = vadd.f32 0.0, %v2391
        %v2393 = vpop.f32.mrb[0].mxu0
        %2394 = vmatprep.mubr.f32.mxu0 0.0
        %2395 = vmatmul.mubr.f32.gmra.mrb[0].mxu0 %v2202
        %v2396 = vpop.f32.mrb[0].mxu0
        %v2397 = vadd.f32 0.0, %v2396
        %v2398 = vpop.f32.mrb[0].mxu0
        %2399 = vmatprep.mubr.f32.mxu0 0.0
        %2400 = vmatmul.mubr.f32.gmra.mrb[0].mxu0 %v2205
        %v2401 = vpop.f32.mrb[0].mxu0
        %v2402 = vadd.f32 0.0, %v2401
        %v2403 = vpop.f32.mrb[0].mxu0
        %2404 = vmatprep.mubr.f32.mxu0 0.0
        %2405 = vmatmul.mubr.f32.gmra.mrb[0].mxu0 %v2208
        %v2406 = vpop.f32.mrb[0].mxu0
        %v2407 = vadd.f32 0.0, %v2406
        %v2408 = vpop.f32.mrb[0].mxu0
        %2409 = vmatprep.mubr.f32.mxu0 0.0
        %2410 = vmatmul.mubr.f32.gmra.mrb[0].mxu0 %v2211
        %v2411 = vpop.f32.mrb[0].mxu0
        %v2412 = vadd.f32 0.0, %v2411
        %v2413 = vpop.f32.mrb[0].mxu0
        %2414 = vmatprep.mubr.f32.mxu0 0.0
        %2415 = vmatmul.mubr.f32.gmra.mrb[0].mxu0 %v2214
        %v2416 = vpop.f32.mrb[0].mxu0
        %v2417 = vadd.f32 0.0, %v2416
        %v2418 = vpop.f32.mrb[0].mxu0
        %2419 = vmatprep.mubr.f32.mxu0 0.0
        %2420 = vmatmul.mubr.f32.gmra.mrb[0].mxu0 %v2217
        %v2421 = vpop.f32.mrb[0].mxu0
        %v2422 = vadd.f32 0.0, %v2421
        %v2423 = vpop.f32.mrb[0].mxu0
        %2424 = vmatprep.mubr.f32.mxu0 0.0
        %2425 = vmatmul.mubr.f32.gmra.mrb[0].mxu0 %v2220
        %v2426 = vpop.f32.mrb[0].mxu0
        %v2427 = vadd.f32 0.0, %v2426
        %v2428 = vpop.f32.mrb[0].mxu0
        %2429 = vmatprep.mubr.f32.mxu0 0.0
        %2430 = vmatmul.mubr.f32.gmra.mrb[0].mxu0 %v2223
        %v2431 = vpop.f32.mrb[0].mxu0
        %v2432 = vadd.f32 0.0, %v2431
        %v2433 = vpop.f32.mrb[0].mxu0
        %2434 = vmatprep.mubr.f32.mxu0 0.0
        %2435 = vmatmul.mubr.f32.gmra.mrb[0].mxu0 %v2226
        %v2436 = vpop.f32.mrb[0].mxu0
        %v2437 = vadd.f32 0.0, %v2436
        %v2438 = vpop.f32.mrb[0].mxu0
        %2439 = vmatprep.mubr.f32.mxu0 0.0
        %2440 = vmatmul.mubr.f32.gmra.mrb[0].mxu0 %v2229
        %v2441 = vpop.f32.mrb[0].mxu0
        %v2442 = vadd.f32 0.0, %v2441
        %v2443 = vpop.f32.mrb[0].mxu0
        %2444 = vmatprep.mubr.f32.mxu0 0.0
        %2445 = vmatmul.mubr.f32.gmra.mrb[0].mxu0 %v2232
        %v2446 = vpop.f32.mrb[0].mxu0
        %v2447 = vadd.f32 0.0, %v2446
        %v2448 = vpop.f32.mrb[0].mxu0
        %2449 = vmatprep.mubr.f32.mxu0 0.0
        %2450 = vmatmul.mubr.f32.gmra.mrb[0].mxu0 %v2235
        %v2451 = vpop.f32.mrb[0].mxu0
        %v2452 = vadd.f32 0.0, %v2451
        %v2453 = vpop.f32.mrb[0].mxu0
        %2454 = vmatprep.mubr.f32.mxu0 0.0
        %2455 = vmatmul.mubr.f32.gmra.mrb[0].mxu0 %v2238
        %v2456 = vpop.f32.mrb[0].mxu0
        %v2457 = vadd.f32 0.0, %v2456
        %v2458 = vpop.f32.mrb[0].mxu0
        %2459 = vmatprep.mubr.f32.mxu0 0.0
        %2460 = vmatmul.mubr.f32.gmra.mrb[0].mxu0 %v2241
        %v2461 = vpop.f32.mrb[0].mxu0
        %v2462 = vadd.f32 0.0, %v2461
        %v2463 = vpop.f32.mrb[0].mxu0
        %2464 = vmatprep.mubr.f32.mxu0 0.0
        %2465 = vmatmul.mubr.f32.gmra.mrb[0].mxu0 %v2244
        %v2466 = vpop.f32.mrb[0].mxu0
        %v2467 = vadd.f32 0.0, %v2466
        %v2468 = vpop.f32.mrb[0].mxu0
        %2469 = vmatprep.mubr.f32.mxu0 0.0
        %2470 = vmatmul.mubr.f32.gmra.mrb[0].mxu0 %v2247
        %v2471 = vpop.f32.mrb[0].mxu0
        %v2472 = vadd.f32 0.0, %v2471
        %v2473 = vpop.f32.mrb[0].mxu0
        %2474 = vmatprep.mubr.f32.mxu0 0.0
        %2475 = vmatmul.mubr.f32.gmra.mrb[0].mxu0 %v2250
        %v2476 = vpop.f32.mrb[0].mxu0
        %v2477 = vadd.f32 0.0, %v2476
        %v2478 = vpop.f32.mrb[0].mxu0
        %2479 = vmatprep.mubr.f32.mxu0 0.0
        %2480 = vmatmul.mubr.f32.gmra.mrb[0].mxu0 %v2253
        %v2481 = vpop.f32.mrb[0].mxu0
        %v2482 = vadd.f32 0.0, %v2481
        %v2483 = vpop.f32.mrb[0].mxu0
        %2484 = vmatprep.mubr.f32.mxu0 0.0
        %2485 = vmatmul.mubr.f32.gmra.mrb[0].mxu0 %v2256
        %v2486 = vpop.f32.mrb[0].mxu0
        %v2487 = vadd.f32 0.0, %v2486
        %v2488 = vpop.f32.mrb[0].mxu0
        %2489 = vmatprep.mubr.f32.mxu0 0.0
        %2490 = vmatmul.mubr.f32.gmra.mrb[0].mxu0 %v2259
        %v2491 = vpop.f32.mrb[0].mxu0
        %v2492 = vadd.f32 0.0, %v2491
        %v2493 = vpop.f32.mrb[0].mxu0
        %2494 = vmatprep.mubr.f32.mxu0 0.0
        %2495 = vmatmul.mubr.f32.gmra.mrb[0].mxu0 %v2262
        %v2496 = vpop.f32.mrb[0].mxu0
        %v2497 = vadd.f32 0.0, %v2496
        %v2498 = vpop.f32.mrb[0].mxu0
        %2499 = vmatprep.mubr.f32.mxu0 0.0
        %2500 = vmatmul.mubr.f32.gmra.mrb[0].mxu0 %v2265
        %v2501 = vpop.f32.mrb[0].mxu0
        %v2502 = vadd.f32 0.0, %v2501
        %v2503 = vpop.f32.mrb[0].mxu0
        %2504 = vmatprep.mubr.f32.mxu0 0.0
        %2505 = vmatmul.mubr.f32.gmra.mrb[0].mxu0 %v2268
        %v2506 = vpop.f32.mrb[0].mxu0
        %v2507 = vadd.f32 0.0, %v2506
        %v2508 = vpop.f32.mrb[0].mxu0
        %2509 = vmatprep.mubr.f32.mxu0 0.0
        %2510 = vmatmul.mubr.f32.gmra.mrb[0].mxu0 %v2271
        %v2511 = vpop.f32.mrb[0].mxu0
        %v2512 = vadd.f32 0.0, %v2511
        %v2513 = vpop.f32.mrb[0].mxu0
        %2514 = vmatprep.mubr.f32.mxu0 0.0
        %2515 = vmatmul.mubr.f32.gmra.mrb[0].mxu0 %v2274
        %v2516 = vpop.f32.mrb[0].mxu0
        %v2517 = vadd.f32 0.0, %v2516
        %v2518 = vpop.f32.mrb[0].mxu0
        %2519 = vmatprep.mubr.f32.mxu0 0.0
        %2520 = vmatmul.mubr.f32.gmra.mrb[0].mxu0 %v2277
        %v2521 = vpop.f32.mrb[0].mxu0
        %v2522 = vadd.f32 0.0, %v2521
        %v2523 = vpop.f32.mrb[0].mxu0
        %2524 = vmatprep.mubr.f32.mxu0 0.0
        %2525 = vmatmul.mubr.f32.gmra.mrb[0].mxu0 %v2280
        %v2526 = vpop.f32.mrb[0].mxu0
        %v2527 = vadd.f32 0.0, %v2526
        %v2528 = vpop.f32.mrb[0].mxu0
        %2529 = vmatprep.mubr.f32.mxu0 0.0
        %2530 = vmatmul.mubr.f32.gmra.mrb[0].mxu0 %v2283
        %v2531 = vpop.f32.mrb[0].mxu0
        %v2532 = vadd.f32 0.0, %v2531
        %v2533 = vpop.f32.mrb[0].mxu0
        %2534 = vmatprep.mubr.f32.mxu0 0.0
        %2535 = vmatmul.mubr.f32.gmra.mrb[0].mxu0 %v2286
        %v2536 = vpop.f32.mrb[0].mxu0
        %v2537 = vadd.f32 0.0, %v2536
        %v2538 = vpop.f32.mrb[0].mxu0
        %2539 = vmatprep.mubr.f32.mxu0 0.0
        %2540 = vmatmul.mubr.f32.gmra.mrb[0].mxu0 %v2289
        %v2541 = vpop.f32.mrb[0].mxu0
        %v2542 = vadd.f32 0.0, %v2541
        %v2543 = vpop.f32.mrb[0].mxu0
        %2544 = vmatprep.mubr.f32.mxu0 0.0
        %2545 = vmatmul.mubr.f32.gmra.mrb[0].mxu0 %v2292
        %v2546 = vpop.f32.mrb[0].mxu0
        %v2547 = vadd.f32 0.0, %v2546
        %v2548 = vpop.f32.mrb[0].mxu0
        %2549 = vmatprep.mubr.f32.mxu0 0.0
        %2550 = vmatmul.mubr.f32.gmra.mrb[0].mxu0 %v2295
        %v2551 = vpop.f32.mrb[0].mxu0
        %v2552 = vadd.f32 0.0, %v2551
        %v2553 = vpop.f32.mrb[0].mxu0
        %2554 = vmatprep.mubr.f32.mxu0 0.0
        %2555 = vmatmul.mubr.f32.gmra.mrb[0].mxu0 %v2298
        %v2556 = vpop.f32.mrb[0].mxu0
        %v2557 = vadd.f32 0.0, %v2556
        %v2558 = vpop.f32.mrb[0].mxu0
        %2559 = vmatprep.mubr.f32.mxu0 0.0
        %2560 = vmatmul.mubr.f32.gmra.mrb[0].mxu0 %v2301
        %v2561 = vpop.f32.mrb[0].mxu0
        %v2562 = vadd.f32 0.0, %v2561
        %v2563 = vpop.f32.mrb[0].mxu0
        %2564 = vmatprep.mubr.f32.mxu0 0.0
        %2565 = vmatmul.mubr.f32.gmra.mrb[0].mxu0 %v2304
        %v2566 = vpop.f32.mrb[0].mxu0
        %v2567 = vadd.f32 0.0, %v2566
        %v2568 = vpop.f32.mrb[0].mxu0
        %2569 = vmatprep.mubr.f32.mxu0 0.0
        %2570 = vmatmul.mubr.f32.gmra.mrb[0].mxu0 %v2307
        %v2571 = vpop.f32.mrb[0].mxu0
        %v2572 = vadd.f32 0.0, %v2571
        %v2573 = vpop.f32.mrb[0].mxu0
        %2574 = vmatprep.mubr.f32.mxu0 0.0
        %2575 = vmatmul.mubr.f32.gmra.mrb[0].mxu0 %v2310
        %v2576 = vpop.f32.mrb[0].mxu0
        %v2577 = vadd.f32 0.0, %v2576
        %v2578 = vpop.f32.mrb[0].mxu0
        %2579 = vmatprep.mubr.f32.mxu0 0.0
        %2580 = vmatmul.mubr.f32.gmra.mrb[0].mxu0 %v2313
        %v2581 = vpop.f32.mrb[0].mxu0
        %v2582 = vadd.f32 0.0, %v2581
        %v2583 = vpop.f32.mrb[0].mxu0
        %2584 = vmatprep.mubr.f32.mxu0 0.0
        %2585 = vmatmul.mubr.f32.gmra.mrb[0].mxu0 %v2316
        %v2586 = vpop.f32.mrb[0].mxu0
        %v2587 = vadd.f32 0.0, %v2586
        %v2588 = vpop.f32.mrb[0].mxu0
        %2589 = vmatprep.mubr.f32.mxu0 0.0
        %2590 = vmatmul.mubr.f32.gmra.mrb[0].mxu0 %v2319
        %v2591 = vpop.f32.mrb[0].mxu0
        %v2592 = vadd.f32 0.0, %v2591
        %v2593 = vpop.f32.mrb[0].mxu0
        %2594 = vdwg.mxu0
        %vm2595 = vcmask 130048
        %2596 = vst.msk [vmem:[#allocation2] sm:$0xff] %vm2595, %v2392
        %2597 = vst.msk [vmem:[#allocation2 + $0x8] sm:$0xff] %vm2595, %v2397
        %2598 = vst.msk [vmem:[#allocation2 + $0x10] sm:$0xff] %vm2595, %v2402
        %2599 = vst.msk [vmem:[#allocation2 + $0x18] sm:$0xff] %vm2595, %v2407
        %2600 = vst.msk [vmem:[#allocation2 + $0x20] sm:$0xff] %vm2595, %v2412
        %2601 = vst.msk [vmem:[#allocation2 + $0x28] sm:$0xff] %vm2595, %v2417
        %2602 = vst.msk [vmem:[#allocation2 + $0x30] sm:$0xff] %vm2595, %v2422
        %2603 = vst.msk [vmem:[#allocation2 + $0x38] sm:$0xff] %vm2595, %v2427
        %2604 = vst.msk [vmem:[#allocation2 + $0x40] sm:$0xff] %vm2595, %v2432
        %2605 = vst.msk [vmem:[#allocation2 + $0x48] sm:$0xff] %vm2595, %v2437
        %2606 = vst.msk [vmem:[#allocation2 + $0x50] sm:$0xff] %vm2595, %v2442
        %2607 = vst.msk [vmem:[#allocation2 + $0x58] sm:$0xff] %vm2595, %v2447
        %2608 = vst.msk [vmem:[#allocation2 + $0x60] sm:$0xff] %vm2595, %v2452
        %2609 = vst.msk [vmem:[#allocation2 + $0x68] sm:$0xff] %vm2595, %v2457
        %2610 = vst.msk [vmem:[#allocation2 + $0x70] sm:$0xff] %vm2595, %v2462
        %2611 = vst.msk [vmem:[#allocation2 + $0x78] sm:$0xff] %vm2595, %v2467
        %2612 = vst.msk [vmem:[#allocation2 + $0x80] sm:$0xff] %vm2595, %v2472
        %2613 = vst.msk [vmem:[#allocation2 + $0x88] sm:$0xff] %vm2595, %v2477
        %2614 = vst.msk [vmem:[#allocation2 + $0x90] sm:$0xff] %vm2595, %v2482
        %2615 = vst.msk [vmem:[#allocation2 + $0x98] sm:$0xff] %vm2595, %v2487
        %2616 = vst.msk [vmem:[#allocation2 + $0xa0] sm:$0xff] %vm2595, %v2492
        %2617 = vst.msk [vmem:[#allocation2 + $0xa8] sm:$0xff] %vm2595, %v2497
        %2618 = vst.msk [vmem:[#allocation2 + $0xb0] sm:$0xff] %vm2595, %v2502
        %2619 = vst.msk [vmem:[#allocation2 + $0xb8] sm:$0xff] %vm2595, %v2507
        %2620 = vst.msk [vmem:[#allocation2 + $0xc0] sm:$0xff] %vm2595, %v2512
        %2621 = vst.msk [vmem:[#allocation2 + $0xc8] sm:$0xff] %vm2595, %v2517
        %2622 = vst.msk [vmem:[#allocation2 + $0xd0] sm:$0xff] %vm2595, %v2522
        %2623 = vst.msk [vmem:[#allocation2 + $0xd8] sm:$0xff] %vm2595, %v2527
        %2624 = vst.msk [vmem:[#allocation2 + $0xe0] sm:$0xff] %vm2595, %v2532
        %2625 = vst.msk [vmem:[#allocation2 + $0xe8] sm:$0xff] %vm2595, %v2537
        %2626 = vst.msk [vmem:[#allocation2 + $0xf0] sm:$0xff] %vm2595, %v2542
        %2627 = vst.msk [vmem:[#allocation2 + $0xf8] sm:$0xff] %vm2595, %v2547
        %2628 = vst.msk [vmem:[#allocation2 + $0x100] sm:$0xff] %vm2595, %v2552
        %2629 = vst.msk [vmem:[#allocation2 + $0x108] sm:$0xff] %vm2595, %v2557
        %2630 = vst.msk [vmem:[#allocation2 + $0x110] sm:$0xff] %vm2595, %v2562
        %2631 = vst.msk [vmem:[#allocation2 + $0x118] sm:$0xff] %vm2595, %v2567
        %2632 = vst.msk [vmem:[#allocation2 + $0x120] sm:$0xff] %vm2595, %v2572
        %2633 = vst.msk [vmem:[#allocation2 + $0x128] sm:$0xff] %vm2595, %v2577
        %2634 = vst.msk [vmem:[#allocation2 + $0x130] sm:$0xff] %vm2595, %v2582
        %2635 = vst.msk [vmem:[#allocation2 + $0x138] sm:$0xff] %vm2595, %v2587
        %vm2636 = vcmask 125952
        %2637 = vst.msk [vmem:[#allocation2 + $0x140] sm:$0xf] %vm2636, %v2592
        %2638 = vst.msk [vmem:[#allocation3] sm:$0xff] %vm2595, 0.0
        %2639 = vst.msk [vmem:[#allocation3 + $0x8] sm:$0xff] %vm2595, 0.0
        %2640 = vst.msk [vmem:[#allocation3 + $0x10] sm:$0xff] %vm2595, 0.0
        %2641 = vst.msk [vmem:[#allocation3 + $0x18] sm:$0xff] %vm2595, 0.0
        %2642 = vst.msk [vmem:[#allocation3 + $0x20] sm:$0xff] %vm2595, 0.0
        %2643 = vst.msk [vmem:[#allocation3 + $0x28] sm:$0xff] %vm2595, 0.0
        %2644 = vst.msk [vmem:[#allocation3 + $0x30] sm:$0xff] %vm2595, 0.0
        %2645 = vst.msk [vmem:[#allocation3 + $0x38] sm:$0xff] %vm2595, 0.0
        %2646 = vst.msk [vmem:[#allocation3 + $0x40] sm:$0xff] %vm2595, 0.0
        %2647 = vst.msk [vmem:[#allocation3 + $0x48] sm:$0xff] %vm2595, 0.0
        %2648 = vst.msk [vmem:[#allocation3 + $0x50] sm:$0xff] %vm2595, 0.0
        %2649 = vst.msk [vmem:[#allocation3 + $0x58] sm:$0xff] %vm2595, 0.0
        %2650 = vst.msk [vmem:[#allocation3 + $0x60] sm:$0xff] %vm2595, 0.0
        %2651 = vst.msk [vmem:[#allocation3 + $0x68] sm:$0xff] %vm2595, 0.0
        %2652 = vst.msk [vmem:[#allocation3 + $0x70] sm:$0xff] %vm2595, 0.0
        %vm2653 = vcmask 123904
        %2654 = vst.msk [vmem:[#allocation3 + $0x78] sm:$0x3] %vm2653, 0.0
        %v2655 = vld [vmem:[%s2] sm:$0x1]
        %s2656 = scalar_lea.vmem [#allocation2], 19
        %v2657 = vld [vmem:[%s2656] ss:$2 sm:$0xff]
        %s2658 = scalar_lea.vmem [#allocation2], 20
        %v2659 = vld [vmem:[%s2658] ss:$2 sm:$0xff]
        %s2660 = scalar_lea.vmem [#allocation2], 37
        %v2661 = vld [vmem:[%s2660] ss:$2 sm:$0xff]
        %s2662 = scalar_lea.vmem [#allocation2], 38
        %v2663 = vld [vmem:[%s2662] ss:$2 sm:$0xff]
        %v2664 = vmax.f32 %v2657, %v2659
        %v2665 = vmax.f32 %v2661, %v2663
        %v2666 = vmax.f32 %v2664, %v2665
        %v2668 = vlaneseq
        %v2669 = vshrl.u32 %v2668, 7
        %v2670 = vsub.s32 0, %v2669
        %v2671 = vrot.slane %v2655, %v2670
        %v2673 = vadd.f32 %v2666, %v2671
        %v2674 = vmax.f32 %v2673, 0.0
        %2675 = vst.msk [vmem:[#allocation3 + $0x16] sm:$0xff] %vm2595, %v2674
        %s2676 = scalar_lea.vmem [#allocation2], 55
        %v2677 = vld [vmem:[%s2676] ss:$2 sm:$0xff]
        %s2678 = scalar_lea.vmem [#allocation2], 56
        %v2679 = vld [vmem:[%s2678] ss:$2 sm:$0xff]
        %s2680 = scalar_lea.vmem [#allocation2], 73
        %v2681 = vld [vmem:[%s2680] ss:$2 sm:$0xff]
        %s2682 = scalar_lea.vmem [#allocation2], 74
        %v2683 = vld [vmem:[%s2682] ss:$2 sm:$0xff]
        %v2684 = vmax.f32 %v2677, %v2679
        %v2685 = vmax.f32 %v2681, %v2683
        %v2686 = vmax.f32 %v2684, %v2685
        %v2687 = vadd.f32 %v2686, %v2671
        %v2688 = vmax.f32 %v2687, 0.0
        %2689 = vst.msk [vmem:[#allocation3 + $0x20] sm:$0xff] %vm2595, %v2688
        %s2690 = scalar_lea.vmem [#allocation2], 91
        %v2691 = vld [vmem:[%s2690] ss:$2 sm:$0xff]
        %s2692 = scalar_lea.vmem [#allocation2], 92
        %v2693 = vld [vmem:[%s2692] ss:$2 sm:$0xff]
        %s2694 = scalar_lea.vmem [#allocation2], 109
        %v2695 = vld [vmem:[%s2694] ss:$2 sm:$0xff]
        %s2696 = scalar_lea.vmem [#allocation2], 110
        %v2697 = vld [vmem:[%s2696] ss:$2 sm:$0xff]
        %v2698 = vmax.f32 %v2691, %v2693
        %v2699 = vmax.f32 %v2695, %v2697
        %v2700 = vmax.f32 %v2698, %v2699
        %v2701 = vadd.f32 %v2700, %v2671
        %v2702 = vmax.f32 %v2701, 0.0
        %2703 = vst.msk [vmem:[#allocation3 + $0x2a] sm:$0xff] %vm2595, %v2702
        %s2704 = scalar_lea.vmem [#allocation2], 127
        %v2705 = vld [vmem:[%s2704] ss:$2 sm:$0xff]
        %s2706 = scalar_lea.vmem [#allocation2], 128
        %v2707 = vld [vmem:[%s2706] ss:$2 sm:$0xff]
        %s2708 = scalar_lea.vmem [#allocation2], 145
        %v2709 = vld [vmem:[%s2708] ss:$2 sm:$0xff]
        %s2710 = scalar_lea.vmem [#allocation2], 146
        %v2711 = vld [vmem:[%s2710] ss:$2 sm:$0xff]
        %v2712 = vmax.f32 %v2705, %v2707
        %v2713 = vmax.f32 %v2709, %v2711
        %v2714 = vmax.f32 %v2712, %v2713
        %v2715 = vadd.f32 %v2714, %v2671
        %v2716 = vmax.f32 %v2715, 0.0
        %2717 = vst.msk [vmem:[#allocation3 + $0x34] sm:$0xff] %vm2595, %v2716
        %s2718 = scalar_lea.vmem [#allocation2], 163
        %v2719 = vld [vmem:[%s2718] ss:$2 sm:$0xff]
        %s2720 = scalar_lea.vmem [#allocation2], 164
        %v2721 = vld [vmem:[%s2720] ss:$2 sm:$0xff]
        %s2722 = scalar_lea.vmem [#allocation2], 181
        %v2723 = vld [vmem:[%s2722] ss:$2 sm:$0xff]
        %s2724 = scalar_lea.vmem [#allocation2], 182
        %v2725 = vld [vmem:[%s2724] ss:$2 sm:$0xff]
        %v2726 = vmax.f32 %v2719, %v2721
        %v2727 = vmax.f32 %v2723, %v2725
        %v2728 = vmax.f32 %v2726, %v2727
        %v2729 = vadd.f32 %v2728, %v2671
        %v2730 = vmax.f32 %v2729, 0.0
        %2731 = vst.msk [vmem:[#allocation3 + $0x3e] sm:$0xff] %vm2595, %v2730
        %s2732 = scalar_lea.vmem [#allocation2], 199
        %v2733 = vld [vmem:[%s2732] ss:$2 sm:$0xff]
        %s2734 = scalar_lea.vmem [#allocation2], 200
        %v2735 = vld [vmem:[%s2734] ss:$2 sm:$0xff]
        %s2736 = scalar_lea.vmem [#allocation2], 217
        %v2737 = vld [vmem:[%s2736] ss:$2 sm:$0xff]
        %s2738 = scalar_lea.vmem [#allocation2], 218
        %v2739 = vld [vmem:[%s2738] ss:$2 sm:$0xff]
        %v2740 = vmax.f32 %v2733, %v2735
        %v2741 = vmax.f32 %v2737, %v2739
        %v2742 = vmax.f32 %v2740, %v2741
        %v2743 = vadd.f32 %v2742, %v2671
        %v2744 = vmax.f32 %v2743, 0.0
        %2745 = vst.msk [vmem:[#allocation3 + $0x48] sm:$0xff] %vm2595, %v2744
        %s2746 = scalar_lea.vmem [#allocation2], 235
        %v2747 = vld [vmem:[%s2746] ss:$2 sm:$0xff]
        %s2748 = scalar_lea.vmem [#allocation2], 236
        %v2749 = vld [vmem:[%s2748] ss:$2 sm:$0xff]
        %s2750 = scalar_lea.vmem [#allocation2], 253
        %v2751 = vld [vmem:[%s2750] ss:$2 sm:$0xff]
        %s2752 = scalar_lea.vmem [#allocation2], 254
        %v2753 = vld [vmem:[%s2752] ss:$2 sm:$0xff]
        %v2754 = vmax.f32 %v2747, %v2749
        %v2755 = vmax.f32 %v2751, %v2753
        %v2756 = vmax.f32 %v2754, %v2755
        %v2757 = vadd.f32 %v2756, %v2671
        %v2758 = vmax.f32 %v2757, 0.0
        %2759 = vst.msk [vmem:[#allocation3 + $0x52] sm:$0xff] %vm2595, %v2758
        %s2760 = scalar_lea.vmem [#allocation2], 271
        %v2761 = vld [vmem:[%s2760] ss:$2 sm:$0xff]
        %s2762 = scalar_lea.vmem [#allocation2], 272
        %v2763 = vld [vmem:[%s2762] ss:$2 sm:$0xff]
        %s2764 = scalar_lea.vmem [#allocation2], 289
        %v2765 = vld [vmem:[%s2764] ss:$2 sm:$0xff]
        %s2766 = scalar_lea.vmem [#allocation2], 290
        %v2767 = vld [vmem:[%s2766] ss:$2 sm:$0xff]
        %v2768 = vmax.f32 %v2761, %v2763
        %v2769 = vmax.f32 %v2765, %v2767
        %v2770 = vmax.f32 %v2768, %v2769
        %v2771 = vadd.f32 %v2770, %v2671
        %v2772 = vmax.f32 %v2771, 0.0
        %2773 = vst.msk [vmem:[#allocation3 + $0x5c] sm:$0xff] %vm2595, %v2772
        %v2774 = vld [vmem:[#allocation3] sm:$0xff]
        %v2775 = vld [vmem:[#allocation3 + $0x8] sm:$0xff]
        %v2776 = vld [vmem:[#allocation3 + $0x10] sm:$0xff]
        %v2777 = vld [vmem:[#allocation3 + $0x18] sm:$0xff]
        %v2778 = vld [vmem:[#allocation3 + $0x20] sm:$0xff]
        %v2779 = vld [vmem:[#allocation3 + $0x28] sm:$0xff]
        %v2780 = vld [vmem:[#allocation3 + $0x30] sm:$0xff]
        %v2781 = vld [vmem:[#allocation3 + $0x38] sm:$0xff]
        %v2782 = vld [vmem:[#allocation3 + $0x40] sm:$0xff]
        %v2783 = vld [vmem:[#allocation3 + $0x48] sm:$0xff]
        %v2784 = vld [vmem:[#allocation3 + $0x50] sm:$0xff]
        %v2785 = vld [vmem:[#allocation3 + $0x58] sm:$0xff]
        %v2786 = vld [vmem:[#allocation3 + $0x60] sm:$0xf]
        %v2787 = vld [vmem:[#allocation3 + $0x1] sm:$0xff]
        %v2788 = vld [vmem:[#allocation3 + $0x9] sm:$0xff]
        %v2789 = vld [vmem:[#allocation3 + $0x11] sm:$0xff]
        %v2790 = vld [vmem:[#allocation3 + $0x19] sm:$0xff]
        %v2791 = vld [vmem:[#allocation3 + $0x21] sm:$0xff]
        %v2792 = vld [vmem:[#allocation3 + $0x29] sm:$0xff]
        %v2793 = vld [vmem:[#allocation3 + $0x31] sm:$0xff]
        %v2794 = vld [vmem:[#allocation3 + $0x39] sm:$0xff]
        %v2795 = vld [vmem:[#allocation3 + $0x41] sm:$0xff]
        %v2796 = vld [vmem:[#allocation3 + $0x49] sm:$0xff]
        %v2797 = vld [vmem:[#allocation3 + $0x51] sm:$0xff]
        %v2798 = vld [vmem:[#allocation3 + $0x59] sm:$0xff]
        %v2799 = vld [vmem:[#allocation3 + $0x61] sm:$0xf]
        %v2800 = vld [vmem:[#allocation3 + $0x2] sm:$0xff]
        %v2801 = vld [vmem:[#allocation3 + $0xa] sm:$0xff]
        %v2802 = vld [vmem:[#allocation3 + $0x12] sm:$0xff]
        %v2803 = vld [vmem:[#allocation3 + $0x1a] sm:$0xff]
        %v2804 = vld [vmem:[#allocation3 + $0x22] sm:$0xff]
        %v2805 = vld [vmem:[#allocation3 + $0x2a] sm:$0xff]
        %v2806 = vld [vmem:[#allocation3 + $0x32] sm:$0xff]
        %v2807 = vld [vmem:[#allocation3 + $0x3a] sm:$0xff]
        %v2808 = vld [vmem:[#allocation3 + $0x42] sm:$0xff]
        %v2809 = vld [vmem:[#allocation3 + $0x4a] sm:$0xff]
        %v2810 = vld [vmem:[#allocation3 + $0x52] sm:$0xff]
        %v2811 = vld [vmem:[#allocation3 + $0x5a] sm:$0xff]
        %v2812 = vld [vmem:[#allocation3 + $0x62] sm:$0xf]
        %v2813 = vld [vmem:[#allocation3 + $0x62] sm:$0xff]
        %v2814 = vld [vmem:[#allocation3 + $0x6a] sm:$0xf]
        %v2815 = vld [vmem:[#allocation3 + $0xb] sm:$0xff]
        %v2816 = vld [vmem:[#allocation3 + $0x13] sm:$0xff]
        %v2817 = vld [vmem:[#allocation3 + $0x1b] sm:$0xff]
        %v2818 = vld [vmem:[#allocation3 + $0x23] sm:$0xff]
        %v2819 = vld [vmem:[#allocation3 + $0x2b] sm:$0xff]
        %v2820 = vld [vmem:[#allocation3 + $0x33] sm:$0xff]
        %v2821 = vld [vmem:[#allocation3 + $0x3b] sm:$0xff]
        %v2822 = vld [vmem:[#allocation3 + $0x43] sm:$0xff]
        %v2823 = vld [vmem:[#allocation3 + $0x4b] sm:$0xff]
        %v2824 = vld [vmem:[#allocation3 + $0x53] sm:$0xff]
        %v2825 = vld [vmem:[#allocation3 + $0x5b] sm:$0xff]
        %v2826 = vld [vmem:[#allocation3 + $0x63] sm:$0xff]
        %v2827 = vld [vmem:[#allocation3 + $0x6b] sm:$0xf]
        %v2828 = vld [vmem:[#allocation3 + $0xc] sm:$0xff]
        %v2829 = vld [vmem:[#allocation3 + $0x14] sm:$0xff]
        %v2830 = vld [vmem:[#allocation3 + $0x1c] sm:$0xff]
        %v2831 = vld [vmem:[#allocation3 + $0x24] sm:$0xff]
        %v2832 = vld [vmem:[#allocation3 + $0x2c] sm:$0xff]
        %v2833 = vld [vmem:[#allocation3 + $0x34] sm:$0xff]
        %v2834 = vld [vmem:[#allocation3 + $0x3c] sm:$0xff]
        %v2835 = vld [vmem:[#allocation3 + $0x44] sm:$0xff]
        %v2836 = vld [vmem:[#allocation3 + $0x4c] sm:$0xff]
        %v2837 = vld [vmem:[#allocation3 + $0x54] sm:$0xff]
        %v2838 = vld [vmem:[#allocation3 + $0x5c] sm:$0xff]
        %v2839 = vld [vmem:[#allocation3 + $0x64] sm:$0xff]
        %v2840 = vld [vmem:[#allocation3 + $0x6c] sm:$0xf]
        %v2841 = vld [vmem:[#allocation3 + $0x6c] sm:$0xff]
        %v2842 = vld [vmem:[#allocation3 + $0x74] sm:$0xf]
        %v2843 = vld [vmem:[#allocation3 + $0x15] sm:$0xff]
        %v2844 = vld [vmem:[#allocation3 + $0x1d] sm:$0xff]
        %v2845 = vld [vmem:[#allocation3 + $0x25] sm:$0xff]
        %v2846 = vld [vmem:[#allocation3 + $0x2d] sm:$0xff]
        %v2847 = vld [vmem:[#allocation3 + $0x35] sm:$0xff]
        %v2848 = vld [vmem:[#allocation3 + $0x3d] sm:$0xff]
        %v2849 = vld [vmem:[#allocation3 + $0x45] sm:$0xff]
        %v2850 = vld [vmem:[#allocation3 + $0x4d] sm:$0xff]
        %v2851 = vld [vmem:[#allocation3 + $0x55] sm:$0xff]
        %v2852 = vld [vmem:[#allocation3 + $0x5d] sm:$0xff]
        %v2853 = vld [vmem:[#allocation3 + $0x65] sm:$0xff]
        %v2854 = vld [vmem:[#allocation3 + $0x6d] sm:$0xff]
        %v2855 = vld [vmem:[#allocation3 + $0x75] sm:$0xf]
        %v2856 = vld [vmem:[#allocation3 + $0x16] sm:$0xff]
        %v2857 = vld [vmem:[#allocation3 + $0x1e] sm:$0xff]
        %v2858 = vld [vmem:[#allocation3 + $0x26] sm:$0xff]
        %v2859 = vld [vmem:[#allocation3 + $0x2e] sm:$0xff]
        %v2860 = vld [vmem:[#allocation3 + $0x36] sm:$0xff]
        %v2861 = vld [vmem:[#allocation3 + $0x3e] sm:$0xff]
        %v2862 = vld [vmem:[#allocation3 + $0x46] sm:$0xff]
        %v2863 = vld [vmem:[#allocation3 + $0x4e] sm:$0xff]
        %v2864 = vld [vmem:[#allocation3 + $0x56] sm:$0xff]
        %v2865 = vld [vmem:[#allocation3 + $0x5e] sm:$0xff]
        %v2866 = vld [vmem:[#allocation3 + $0x66] sm:$0xff]
        %v2867 = vld [vmem:[#allocation3 + $0x6e] sm:$0xff]
        %v2868 = vld [vmem:[#allocation3 + $0x76] sm:$0xf]
        %2882 = vrot.lane.b32.xlu0 %v2787, 16
        %v2883 = vpop.permute.xlu0 %2882
        %2884 = vrot.lane.b32.xlu0 %v2788, 16
        %v2885 = vpop.permute.xlu0 %2884
        %2886 = vrot.lane.b32.xlu0 %v2789, 16
        %v2887 = vpop.permute.xlu0 %2886
        %2888 = vrot.lane.b32.xlu0 %v2790, 16
        %v2889 = vpop.permute.xlu0 %2888
        %2890 = vrot.lane.b32.xlu0 %v2791, 16
        %v2891 = vpop.permute.xlu0 %2890
        %2892 = vrot.lane.b32.xlu0 %v2792, 16
        %v2893 = vpop.permute.xlu0 %2892
        %2894 = vrot.lane.b32.xlu0 %v2793, 16
        %v2895 = vpop.permute.xlu0 %2894
        %2896 = vrot.lane.b32.xlu0 %v2794, 16
        %v2897 = vpop.permute.xlu0 %2896
        %2898 = vrot.lane.b32.xlu0 %v2795, 16
        %v2899 = vpop.permute.xlu0 %2898
        %2900 = vrot.lane.b32.xlu0 %v2796, 16
        %v2901 = vpop.permute.xlu0 %2900
        %2902 = vrot.lane.b32.xlu0 %v2797, 16
        %v2903 = vpop.permute.xlu0 %2902
        %2904 = vrot.lane.b32.xlu0 %v2798, 16
        %v2905 = vpop.permute.xlu0 %2904
        %2906 = vrot.lane.b32.xlu0 %v2799, 16
        %v2907 = vpop.permute.xlu0 %2906
        %2934 = vrot.lane.b32.xlu0 %v2800, 32
        %v2935 = vpop.permute.xlu0 %2934
        %2936 = vrot.lane.b32.xlu0 %v2801, 32
        %v2937 = vpop.permute.xlu0 %2936
        %2938 = vrot.lane.b32.xlu0 %v2802, 32
        %v2939 = vpop.permute.xlu0 %2938
        %2940 = vrot.lane.b32.xlu0 %v2803, 32
        %v2941 = vpop.permute.xlu0 %2940
        %2942 = vrot.lane.b32.xlu0 %v2804, 32
        %v2943 = vpop.permute.xlu0 %2942
        %2944 = vrot.lane.b32.xlu0 %v2805, 32
        %v2945 = vpop.permute.xlu0 %2944
        %2946 = vrot.lane.b32.xlu0 %v2806, 32
        %v2947 = vpop.permute.xlu0 %2946
        %2948 = vrot.lane.b32.xlu0 %v2807, 32
        %v2949 = vpop.permute.xlu0 %2948
        %2950 = vrot.lane.b32.xlu0 %v2808, 32
        %v2951 = vpop.permute.xlu0 %2950
        %2952 = vrot.lane.b32.xlu0 %v2809, 32
        %v2953 = vpop.permute.xlu0 %2952
        %2954 = vrot.lane.b32.xlu0 %v2810, 32
        %v2955 = vpop.permute.xlu0 %2954
        %2956 = vrot.lane.b32.xlu0 %v2811, 32
        %v2957 = vpop.permute.xlu0 %2956
        %2958 = vrot.lane.b32.xlu0 %v2812, 32
        %v2959 = vpop.permute.xlu0 %2958
        %2975 = vrot.lane.b32.xlu0 %v2801, 48
        %v2976 = vpop.permute.xlu0 %2975
        %2977 = vrot.lane.b32.xlu0 %v2802, 48
        %v2978 = vpop.permute.xlu0 %2977
        %2979 = vrot.lane.b32.xlu0 %v2803, 48
        %v2980 = vpop.permute.xlu0 %2979
        %2981 = vrot.lane.b32.xlu0 %v2804, 48
        %v2982 = vpop.permute.xlu0 %2981
        %2983 = vrot.lane.b32.xlu0 %v2805, 48
        %v2984 = vpop.permute.xlu0 %2983
        %2985 = vrot.lane.b32.xlu0 %v2806, 48
        %v2986 = vpop.permute.xlu0 %2985
        %2987 = vrot.lane.b32.xlu0 %v2807, 48
        %v2988 = vpop.permute.xlu0 %2987
        %2989 = vrot.lane.b32.xlu0 %v2808, 48
        %v2990 = vpop.permute.xlu0 %2989
        %2991 = vrot.lane.b32.xlu0 %v2809, 48
        %v2992 = vpop.permute.xlu0 %2991
        %2993 = vrot.lane.b32.xlu0 %v2810, 48
        %v2994 = vpop.permute.xlu0 %2993
        %2995 = vrot.lane.b32.xlu0 %v2811, 48
        %v2996 = vpop.permute.xlu0 %2995
        %2997 = vrot.lane.b32.xlu0 %v2813, 48
        %v2998 = vpop.permute.xlu0 %2997
        %2999 = vrot.lane.b32.xlu0 %v2814, 48
        %v3000 = vpop.permute.xlu0 %2999
        %3027 = vrot.lane.b32.xlu0 %v2815, 64
        %v3028 = vpop.permute.xlu0 %3027
        %3029 = vrot.lane.b32.xlu0 %v2816, 64
        %v3030 = vpop.permute.xlu0 %3029
        %3031 = vrot.lane.b32.xlu0 %v2817, 64
        %v3032 = vpop.permute.xlu0 %3031
        %3033 = vrot.lane.b32.xlu0 %v2818, 64
        %v3034 = vpop.permute.xlu0 %3033
        %3035 = vrot.lane.b32.xlu0 %v2819, 64
        %v3036 = vpop.permute.xlu0 %3035
        %3037 = vrot.lane.b32.xlu0 %v2820, 64
        %v3038 = vpop.permute.xlu0 %3037
        %3039 = vrot.lane.b32.xlu0 %v2821, 64
        %v3040 = vpop.permute.xlu0 %3039
        %3041 = vrot.lane.b32.xlu0 %v2822, 64
        %v3042 = vpop.permute.xlu0 %3041
        %3043 = vrot.lane.b32.xlu0 %v2823, 64
        %v3044 = vpop.permute.xlu0 %3043
        %3045 = vrot.lane.b32.xlu0 %v2824, 64
        %v3046 = vpop.permute.xlu0 %3045
        %3047 = vrot.lane.b32.xlu0 %v2825, 64
        %v3048 = vpop.permute.xlu0 %3047
        %3049 = vrot.lane.b32.xlu0 %v2826, 64
        %v3050 = vpop.permute.xlu0 %3049
        %3051 = vrot.lane.b32.xlu0 %v2827, 64
        %v3052 = vpop.permute.xlu0 %3051
        %3079 = vrot.lane.b32.xlu0 %v2828, 80
        %v3080 = vpop.permute.xlu0 %3079
        %3081 = vrot.lane.b32.xlu0 %v2829, 80
        %v3082 = vpop.permute.xlu0 %3081
        %3083 = vrot.lane.b32.xlu0 %v2830, 80
        %v3084 = vpop.permute.xlu0 %3083
        %3085 = vrot.lane.b32.xlu0 %v2831, 80
        %v3086 = vpop.permute.xlu0 %3085
        %3087 = vrot.lane.b32.xlu0 %v2832, 80
        %v3088 = vpop.permute.xlu0 %3087
        %3089 = vrot.lane.b32.xlu0 %v2833, 80
        %v3090 = vpop.permute.xlu0 %3089
        %3091 = vrot.lane.b32.xlu0 %v2834, 80
        %v3092 = vpop.permute.xlu0 %3091
        %3093 = vrot.lane.b32.xlu0 %v2835, 80
        %v3094 = vpop.permute.xlu0 %3093
        %3095 = vrot.lane.b32.xlu0 %v2836, 80
        %v3096 = vpop.permute.xlu0 %3095
        %3097 = vrot.lane.b32.xlu0 %v2837, 80
        %v3098 = vpop.permute.xlu0 %3097
        %3099 = vrot.lane.b32.xlu0 %v2838, 80
        %v3100 = vpop.permute.xlu0 %3099
        %3101 = vrot.lane.b32.xlu0 %v2839, 80
        %v3102 = vpop.permute.xlu0 %3101
        %3103 = vrot.lane.b32.xlu0 %v2840, 80
        %v3104 = vpop.permute.xlu0 %3103
        %3120 = vrot.lane.b32.xlu0 %v2829, 96
        %v3121 = vpop.permute.xlu0 %3120
        %3122 = vrot.lane.b32.xlu0 %v2830, 96
        %v3123 = vpop.permute.xlu0 %3122
        %3124 = vrot.lane.b32.xlu0 %v2831, 96
        %v3125 = vpop.permute.xlu0 %3124
        %3126 = vrot.lane.b32.xlu0 %v2832, 96
        %v3127 = vpop.permute.xlu0 %3126
        %3128 = vrot.lane.b32.xlu0 %v2833, 96
        %v3129 = vpop.permute.xlu0 %3128
        %3130 = vrot.lane.b32.xlu0 %v2834, 96
        %v3131 = vpop.permute.xlu0 %3130
        %3132 = vrot.lane.b32.xlu0 %v2835, 96
        %v3133 = vpop.permute.xlu0 %3132
        %3134 = vrot.lane.b32.xlu0 %v2836, 96
        %v3135 = vpop.permute.xlu0 %3134
        %3136 = vrot.lane.b32.xlu0 %v2837, 96
        %v3137 = vpop.permute.xlu0 %3136
        %3138 = vrot.lane.b32.xlu0 %v2838, 96
        %v3139 = vpop.permute.xlu0 %3138
        %3140 = vrot.lane.b32.xlu0 %v2839, 96
        %v3141 = vpop.permute.xlu0 %3140
        %3142 = vrot.lane.b32.xlu0 %v2841, 96
        %v3143 = vpop.permute.xlu0 %3142
        %3144 = vrot.lane.b32.xlu0 %v2842, 96
        %v3145 = vpop.permute.xlu0 %3144
        %3172 = vrot.lane.b32.xlu0 %v2843, 112
        %v3173 = vpop.permute.xlu0 %3172
        %3174 = vrot.lane.b32.xlu0 %v2844, 112
        %v3175 = vpop.permute.xlu0 %3174
        %3176 = vrot.lane.b32.xlu0 %v2845, 112
        %v3177 = vpop.permute.xlu0 %3176
        %3178 = vrot.lane.b32.xlu0 %v2846, 112
        %v3179 = vpop.permute.xlu0 %3178
        %3180 = vrot.lane.b32.xlu0 %v2847, 112
        %v3181 = vpop.permute.xlu0 %3180
        %3182 = vrot.lane.b32.xlu0 %v2848, 112
        %v3183 = vpop.permute.xlu0 %3182
        %3184 = vrot.lane.b32.xlu0 %v2849, 112
        %v3185 = vpop.permute.xlu0 %3184
        %3186 = vrot.lane.b32.xlu0 %v2850, 112
        %v3187 = vpop.permute.xlu0 %3186
        %3188 = vrot.lane.b32.xlu0 %v2851, 112
        %v3189 = vpop.permute.xlu0 %3188
        %3190 = vrot.lane.b32.xlu0 %v2852, 112
        %v3191 = vpop.permute.xlu0 %3190
        %3192 = vrot.lane.b32.xlu0 %v2853, 112
        %v3193 = vpop.permute.xlu0 %3192
        %3194 = vrot.lane.b32.xlu0 %v2854, 112
        %v3195 = vpop.permute.xlu0 %3194
        %3196 = vrot.lane.b32.xlu0 %v2855, 112
        %v3197 = vpop.permute.xlu0 %3196
        %v3211 = vsel %vm2595, %v2774, %v2883
        %v3212 = vsel %vm2595, %v2775, %v2885
        %v3213 = vsel %vm2595, %v2776, %v2887
        %v3214 = vsel %vm2595, %v2777, %v2889
        %v3215 = vsel %vm2595, %v2778, %v2891
        %v3216 = vsel %vm2595, %v2779, %v2893
        %v3217 = vsel %vm2595, %v2780, %v2895
        %v3218 = vsel %vm2595, %v2781, %v2897
        %v3219 = vsel %vm2595, %v2782, %v2899
        %v3220 = vsel %vm2595, %v2783, %v2901
        %v3221 = vsel %vm2595, %v2784, %v2903
        %v3222 = vsel %vm2595, %v2785, %v2905
        %v3223 = vsel %vm2595, %v2786, %v2907
        %vm3224 = vcmask 261120
        %v3225 = vsel %vm3224, %v3211, %v2935
        %v3226 = vsel %vm3224, %v3212, %v2937
        %v3227 = vsel %vm3224, %v3213, %v2939
        %v3228 = vsel %vm3224, %v3214, %v2941
        %v3229 = vsel %vm3224, %v3215, %v2943
        %v3230 = vsel %vm3224, %v3216, %v2945
        %v3231 = vsel %vm3224, %v3217, %v2947
        %v3232 = vsel %vm3224, %v3218, %v2949
        %v3233 = vsel %vm3224, %v3219, %v2951
        %v3234 = vsel %vm3224, %v3220, %v2953
        %v3235 = vsel %vm3224, %v3221, %v2955
        %v3236 = vsel %vm3224, %v3222, %v2957
        %v3237 = vsel %vm3224, %v3223, %v2959
        %vm3238 = vcmask 392192
        %v3239 = vsel %vm3238, %v3225, %v2976
        %v3240 = vsel %vm3238, %v3226, %v2978
        %v3241 = vsel %vm3238, %v3227, %v2980
        %v3242 = vsel %vm3238, %v3228, %v2982
        %v3243 = vsel %vm3238, %v3229, %v2984
        %v3244 = vsel %vm3238, %v3230, %v2986
        %v3245 = vsel %vm3238, %v3231, %v2988
        %v3246 = vsel %vm3238, %v3232, %v2990
        %v3247 = vsel %vm3238, %v3233, %v2992
        %v3248 = vsel %vm3238, %v3234, %v2994
        %v3249 = vsel %vm3238, %v3235, %v2996
        %v3250 = vsel %vm3238, %v3236, %v2998
        %v3251 = vsel %vm3238, %v3237, %v3000
        %vm3252 = vcmask 523264
        %v3253 = vsel %vm3252, %v3239, %v3028
        %v3254 = vsel %vm3252, %v3240, %v3030
        %v3255 = vsel %vm3252, %v3241, %v3032
        %v3256 = vsel %vm3252, %v3242, %v3034
        %v3257 = vsel %vm3252, %v3243, %v3036
        %v3258 = vsel %vm3252, %v3244, %v3038
        %v3259 = vsel %vm3252, %v3245, %v3040
        %v3260 = vsel %vm3252, %v3246, %v3042
        %v3261 = vsel %vm3252, %v3247, %v3044
        %v3262 = vsel %vm3252, %v3248, %v3046
        %v3263 = vsel %vm3252, %v3249, %v3048
        %v3264 = vsel %vm3252, %v3250, %v3050
        %v3265 = vsel %vm3252, %v3251, %v3052
        %vm3266 = vcmask 654336
        %v3267 = vsel %vm3266, %v3253, %v3080
        %v3268 = vsel %vm3266, %v3254, %v3082
        %v3269 = vsel %vm3266, %v3255, %v3084
        %v3270 = vsel %vm3266, %v3256, %v3086
        %v3271 = vsel %vm3266, %v3257, %v3088
        %v3272 = vsel %vm3266, %v3258, %v3090
        %v3273 = vsel %vm3266, %v3259, %v3092
        %v3274 = vsel %vm3266, %v3260, %v3094
        %v3275 = vsel %vm3266, %v3261, %v3096
        %v3276 = vsel %vm3266, %v3262, %v3098
        %v3277 = vsel %vm3266, %v3263, %v3100
        %v3278 = vsel %vm3266, %v3264, %v3102
        %v3279 = vsel %vm3266, %v3265, %v3104
        %vm3280 = vcmask 785408
        %v3281 = vsel %vm3280, %v3267, %v3121
        %v3282 = vsel %vm3280, %v3268, %v3123
        %v3283 = vsel %vm3280, %v3269, %v3125
        %v3284 = vsel %vm3280, %v3270, %v3127
        %v3285 = vsel %vm3280, %v3271, %v3129
        %v3286 = vsel %vm3280, %v3272, %v3131
        %v3287 = vsel %vm3280, %v3273, %v3133
        %v3288 = vsel %vm3280, %v3274, %v3135
        %v3289 = vsel %vm3280, %v3275, %v3137
        %v3290 = vsel %vm3280, %v3276, %v3139
        %v3291 = vsel %vm3280, %v3277, %v3141
        %v3292 = vsel %vm3280, %v3278, %v3143
        %v3293 = vsel %vm3280, %v3279, %v3145
        %vm3294 = vcmask 916480
        %v3295 = vsel %vm3294, %v3281, %v3173
        %v3296 = vsel %vm3294, %v3282, %v3175
        %v3297 = vsel %vm3294, %v3283, %v3177
        %v3298 = vsel %vm3294, %v3284, %v3179
        %v3299 = vsel %vm3294, %v3285, %v3181
        %v3300 = vsel %vm3294, %v3286, %v3183
        %v3301 = vsel %vm3294, %v3287, %v3185
        %v3302 = vsel %vm3294, %v3288, %v3187
        %v3303 = vsel %vm3294, %v3289, %v3189
        %v3304 = vsel %vm3294, %v3290, %v3191
        %v3305 = vsel %vm3294, %v3291, %v3193
        %v3306 = vsel %vm3294, %v3292, %v3195
        %v3307 = vsel %vm3294, %v3293, %v3197
        %v3308 = vld [vmem:[%s3] sm:$0xff]
        %v3309 = vld [vmem:[%s3 + $0x8] sm:$0xff]
        %v3310 = vld [vmem:[%s3 + $0x10] sm:$0xff]
        %v3311 = vld [vmem:[%s3 + $0x18] sm:$0xff]
        %v3312 = vld [vmem:[%s3 + $0x20] sm:$0xff]
        %v3313 = vld [vmem:[%s3 + $0x28] sm:$0xff]
        %v3314 = vld [vmem:[%s3 + $0x30] sm:$0xff]
        %v3315 = vld [vmem:[%s3 + $0x38] sm:$0xff]
        %v3316 = vld [vmem:[%s3 + $0x40] sm:$0xff]
        %v3317 = vld [vmem:[%s3 + $0x48] sm:$0xff]
        %v3318 = vld [vmem:[%s3 + $0x50] sm:$0xff]
        %v3319 = vld [vmem:[%s3 + $0x58] sm:$0xff]
        %v3320 = vld [vmem:[%s3 + $0x60] sm:$0xff]
        %v3321 = vld [vmem:[%s3 + $0x68] sm:$0xff]
        %v3322 = vld [vmem:[%s3 + $0x70] sm:$0xff]
        %v3323 = vld [vmem:[%s3 + $0x78] sm:$0xff]
        %v3324 = vld [vmem:[%s3 + $0x80] sm:$0xff]
        %v3325 = vld [vmem:[%s3 + $0x88] sm:$0xff]
        %v3327 = vsel %vm2595, %v2856, 0
        %v3330 = vsel %vm2595, %v2857, 0
        %v3333 = vsel %vm2595, %v2858, 0
        %v3336 = vsel %vm2595, %v2859, 0
        %v3339 = vsel %vm2595, %v2860, 0
        %v3342 = vsel %vm2595, %v2861, 0
        %v3345 = vsel %vm2595, %v2862, 0
        %v3348 = vsel %vm2595, %v2863, 0
        %v3351 = vsel %vm2595, %v2864, 0
        %v3354 = vsel %vm2595, %v2865, 0
        %v3357 = vsel %vm2595, %v2866, 0
        %v3360 = vsel %vm2595, %v2867, 0
        %v3363 = vsel %vm2595, %v2868, 0
        %3365 = vmatprep.subr.mxu0 0.0
        %3366 = vmatpush1.msra.mxu0 %v3308
        %3367 = vmatprep.subr.mxu0 0.0
        %3368 = vmatpush1.msra.mxu0 %v3309
        %3369 = vmatprep.subr.mxu0 0.0
        %3370 = vmatpush1.msra.mxu0 %v3310
        %3371 = vmatprep.subr.mxu0 0.0
        %3372 = vmatpush1.msra.mxu0 %v3311
        %3373 = vmatprep.subr.mxu0 0.0
        %3374 = vmatpush1.msra.mxu0 %v3312
        %3375 = vmatprep.subr.mxu0 0.0
        %3376 = vmatpush1.msra.mxu0 %v3313
        %3377 = vmatprep.subr.mxu0 0.0
        %3378 = vmatpush1.msra.mxu0 %v3314
        %3379 = vmatprep.subr.mxu0 0.0
        %3380 = vmatpush1.msra.mxu0 %v3315
        %3381 = vmatprep.subr.mxu0 0.0
        %3382 = vmatpush1.msra.mxu0 %v3316
        %3383 = vmatprep.subr.mxu0 0.0
        %3384 = vmatpush1.msra.mxu0 %v3317
        %3385 = vmatprep.subr.mxu0 0.0
        %3386 = vmatpush1.msra.mxu0 %v3318
        %3387 = vmatprep.subr.mxu0 0.0
        %3388 = vmatpush1.msra.mxu0 %v3319
        %3389 = vmatprep.subr.mxu0 0.0
        %3390 = vmatpush1.msra.mxu0 %v3320
        %3391 = vmatprep.subr.mxu0 0.0
        %3392 = vmatpush1.msra.mxu0 %v3321
        %3393 = vmatprep.subr.mxu0 0.0
        %3394 = vmatpush1.msra.mxu0 %v3322
        %3395 = vmatprep.subr.mxu0 0.0
        %3396 = vmatpush1.msra.mxu0 %v3323
        %3397 = vmatprep.subr.mxu0 0.0
        %3398 = vmatpush1.msra.mxu0 %v3324
        %3399 = vmatprep.subr.mxu0 0.0
        %3400 = vmatpush1.msra.mxu0 %v3325
        %3401 = vmatprep.subr.mxu0 0.0
        %3402 = vmatpush1.msra.mxu0 0.0
        %3403 = vmatprep.subr.mxu0 0.0
        %3404 = vmatpush1.msra.mxu0 0.0
        %3405 = vmatprep.subr.mxu0 0.0
        %3406 = vmatpush1.msra.mxu0 0.0
        %3407 = vmatprep.subr.mxu0 0.0
        %3408 = vmatpush1.msra.mxu0 0.0
        %3409 = vmatprep.subr.mxu0 0.0
        %3410 = vmatpush1.msra.mxu0 0.0
        %3411 = vmatprep.subr.mxu0 0.0
        %3412 = vmatpush1.msra.mxu0 0.0
        %3413 = vmatprep.subr.mxu0 0.0
        %3414 = vmatpush1.msra.mxu0 0.0
        %3415 = vmatprep.subr.mxu0 0.0
        %3416 = vmatpush1.msra.mxu0 0.0
        %3417 = vmatprep.subr.mxu0 0.0
        %3418 = vmatpush1.msra.mxu0 0.0
        %3419 = vmatprep.subr.mxu0 0.0
        %3420 = vmatpush1.msra.mxu0 0.0
        %3421 = vmatprep.subr.mxu0 0.0
        %3422 = vmatpush1.msra.mxu0 0.0
        %3423 = vmatprep.subr.mxu0 0.0
        %3424 = vmatpush1.msra.mxu0 0.0
        %3425 = vmatprep.subr.mxu0 0.0
        %3426 = vmatpush1.msra.mxu0 0.0
        %3427 = vmatprep.subr.mxu0 0.0
        %3428 = vmatpush1.msra.mxu0 0.0
        %3429 = vmatprep.mubr.f32.mxu0 %v3327
        %3430 = vmatmul.mubr.f32.gmra.mrb[0].mxu0 %v3295
        %v3431 = vpop.f32.mrb[0].mxu0
        %v3432 = vadd.f32 0.0, %v3431
        %v3433 = vpop.f32.mrb[0].mxu0
        %3434 = vmatprep.mubr.f32.mxu0 %v3330
        %3435 = vmatmul.mubr.f32.gmra.mrb[0].mxu0 %v3296
        %v3436 = vpop.f32.mrb[0].mxu0
        %v3437 = vadd.f32 0.0, %v3436
        %v3438 = vpop.f32.mrb[0].mxu0
        %3439 = vmatprep.mubr.f32.mxu0 %v3333
        %3440 = vmatmul.mubr.f32.gmra.mrb[0].mxu0 %v3297
        %v3441 = vpop.f32.mrb[0].mxu0
        %v3442 = vadd.f32 0.0, %v3441
        %v3443 = vpop.f32.mrb[0].mxu0
        %3444 = vmatprep.mubr.f32.mxu0 %v3336
        %3445 = vmatmul.mubr.f32.gmra.mrb[0].mxu0 %v3298
        %v3446 = vpop.f32.mrb[0].mxu0
        %v3447 = vadd.f32 0.0, %v3446
        %v3448 = vpop.f32.mrb[0].mxu0
        %3449 = vmatprep.mubr.f32.mxu0 %v3339
        %3450 = vmatmul.mubr.f32.gmra.mrb[0].mxu0 %v3299
        %v3451 = vpop.f32.mrb[0].mxu0
        %v3452 = vadd.f32 0.0, %v3451
        %v3453 = vpop.f32.mrb[0].mxu0
        %3454 = vmatprep.mubr.f32.mxu0 %v3342
        %3455 = vmatmul.mubr.f32.gmra.mrb[0].mxu0 %v3300
        %v3456 = vpop.f32.mrb[0].mxu0
        %v3457 = vadd.f32 0.0, %v3456
        %v3458 = vpop.f32.mrb[0].mxu0
        %3459 = vmatprep.mubr.f32.mxu0 %v3345
        %3460 = vmatmul.mubr.f32.gmra.mrb[0].mxu0 %v3301
        %v3461 = vpop.f32.mrb[0].mxu0
        %v3462 = vadd.f32 0.0, %v3461
        %v3463 = vpop.f32.mrb[0].mxu0
        %3464 = vmatprep.mubr.f32.mxu0 %v3348
        %3465 = vmatmul.mubr.f32.gmra.mrb[0].mxu0 %v3302
        %v3466 = vpop.f32.mrb[0].mxu0
        %v3467 = vadd.f32 0.0, %v3466
        %v3468 = vpop.f32.mrb[0].mxu0
        %3469 = vmatprep.mubr.f32.mxu0 %v3351
        %3470 = vmatmul.mubr.f32.gmra.mrb[0].mxu0 %v3303
        %v3471 = vpop.f32.mrb[0].mxu0
        %v3472 = vadd.f32 0.0, %v3471
        %v3473 = vpop.f32.mrb[0].mxu0
        %3474 = vmatprep.mubr.f32.mxu0 %v3354
        %3475 = vmatmul.mubr.f32.gmra.mrb[0].mxu0 %v3304
        %v3476 = vpop.f32.mrb[0].mxu0
        %v3477 = vadd.f32 0.0, %v3476
        %v3478 = vpop.f32.mrb[0].mxu0
        %3479 = vmatprep.mubr.f32.mxu0 %v3357
        %3480 = vmatmul.mubr.f32.gmra.mrb[0].mxu0 %v3305
        %v3481 = vpop.f32.mrb[0].mxu0
        %v3482 = vadd.f32 0.0, %v3481
        %v3483 = vpop.f32.mrb[0].mxu0
        %3484 = vmatprep.mubr.f32.mxu0 %v3360
        %3485 = vmatmul.mubr.f32.gmra.mrb[0].mxu0 %v3306
        %v3486 = vpop.f32.mrb[0].mxu0
        %v3487 = vadd.f32 0.0, %v3486
        %v3488 = vpop.f32.mrb[0].mxu0
        %3489 = vmatprep.mubr.f32.mxu0 %v3363
        %3490 = vmatmul.mubr.f32.gmra.mrb[0].mxu0 %v3307
        %v3491 = vpop.f32.mrb[0].mxu0
        %v3492 = vadd.f32 0.0, %v3491
        %v3493 = vpop.f32.mrb[0].mxu0
        %3494 = vdwg.mxu0
        %3495 = vst.msk [vmem:[#allocation4] sm:$0xff] %vm3224, %v3432
        %3496 = vst.msk [vmem:[#allocation4 + $0x8] sm:$0xff] %vm3224, %v3437
        %3497 = vst.msk [vmem:[#allocation4 + $0x10] sm:$0xff] %vm3224, %v3442
        %3498 = vst.msk [vmem:[#allocation4 + $0x18] sm:$0xff] %vm3224, %v3447
        %3499 = vst.msk [vmem:[#allocation4 + $0x20] sm:$0xff] %vm3224, %v3452
        %3500 = vst.msk [vmem:[#allocation4 + $0x28] sm:$0xff] %vm3224, %v3457
        %3501 = vst.msk [vmem:[#allocation4 + $0x30] sm:$0xff] %vm3224, %v3462
        %3502 = vst.msk [vmem:[#allocation4 + $0x38] sm:$0xff] %vm3224, %v3467
        %3503 = vst.msk [vmem:[#allocation4 + $0x40] sm:$0xff] %vm3224, %v3472
        %3504 = vst.msk [vmem:[#allocation4 + $0x48] sm:$0xff] %vm3224, %v3477
        %3505 = vst.msk [vmem:[#allocation4 + $0x50] sm:$0xff] %vm3224, %v3482
        %3506 = vst.msk [vmem:[#allocation4 + $0x58] sm:$0xff] %vm3224, %v3487
        %vm3507 = vcmask 257024
        %3508 = vst.msk [vmem:[#allocation4 + $0x60] sm:$0xf] %vm3507, %v3492
        %3509 = vst.msk [vmem:[#allocation5] sm:$0xff] %vm3224, 0.0
        %3510 = vst.msk [vmem:[#allocation5 + $0x8] sm:$0xff] %vm3224, 0.0
        %3511 = vst.msk [vmem:[#allocation5 + $0x10] sm:$0xff] %vm3224, 0.0
        %3512 = vst.msk [vmem:[#allocation5 + $0x18] sm:$0xff] %vm3224, 0.0
        %3513 = vst.msk [vmem:[#allocation5 + $0x20] sm:$0xff] %vm3224, 0.0
        %3514 = vst.msk [vmem:[#allocation5 + $0x28] sm:$0xff] %vm3224, 0.0
        %vm3515 = vcmask 254976
        %3516 = vst.msk [vmem:[#allocation5 + $0x30] sm:$0x3] %vm3515, 0.0
        %v3517 = vld [vmem:[%s4] sm:$0x1]
        %s3518 = scalar_lea.vmem [#allocation4], 11
        %v3519 = vld [vmem:[%s3518] ss:$2 sm:$0xf]
        %s3520 = scalar_lea.vmem [#allocation4], 12
        %v3521 = vld [vmem:[%s3520] ss:$2 sm:$0xf]
        %s3522 = scalar_lea.vmem [#allocation4], 21
        %v3523 = vld [vmem:[%s3522] ss:$2 sm:$0xf]
        %s3524 = scalar_lea.vmem [#allocation4], 22
        %v3525 = vld [vmem:[%s3524] ss:$2 sm:$0xf]
        %v3526 = vmax.f32 %v3519, %v3521
        %v3527 = vmax.f32 %v3523, %v3525
        %v3528 = vmax.f32 %v3526, %v3527
        %v3530 = vlaneseq
        %v3531 = vshrl.u32 %v3530, 7
        %v3532 = vsub.s32 0, %v3531
        %v3533 = vrot.slane %v3517, %v3532
        %v3535 = vadd.f32 %v3528, %v3533
        %v3536 = vmax.f32 %v3535, 0.0
        %3537 = vst.msk [vmem:[#allocation5 + $0xe] sm:$0xf] %vm3507, %v3536
        %s3538 = scalar_lea.vmem [#allocation4], 31
        %v3539 = vld [vmem:[%s3538] ss:$2 sm:$0xf]
        %s3540 = scalar_lea.vmem [#allocation4], 32
        %v3541 = vld [vmem:[%s3540] ss:$2 sm:$0xf]
        %s3542 = scalar_lea.vmem [#allocation4], 41
        %v3543 = vld [vmem:[%s3542] ss:$2 sm:$0xf]
        %s3544 = scalar_lea.vmem [#allocation4], 42
        %v3545 = vld [vmem:[%s3544] ss:$2 sm:$0xf]
        %v3546 = vmax.f32 %v3539, %v3541
        %v3547 = vmax.f32 %v3543, %v3545
        %v3548 = vmax.f32 %v3546, %v3547
        %v3549 = vadd.f32 %v3548, %v3533
        %v3550 = vmax.f32 %v3549, 0.0
        %3551 = vst.msk [vmem:[#allocation5 + $0x14] sm:$0xf] %vm3507, %v3550
        %s3552 = scalar_lea.vmem [#allocation4], 51
        %v3553 = vld [vmem:[%s3552] ss:$2 sm:$0xf]
        %s3554 = scalar_lea.vmem [#allocation4], 52
        %v3555 = vld [vmem:[%s3554] ss:$2 sm:$0xf]
        %s3556 = scalar_lea.vmem [#allocation4], 61
        %v3557 = vld [vmem:[%s3556] ss:$2 sm:$0xf]
        %s3558 = scalar_lea.vmem [#allocation4], 62
        %v3559 = vld [vmem:[%s3558] ss:$2 sm:$0xf]
        %v3560 = vmax.f32 %v3553, %v3555
        %v3561 = vmax.f32 %v3557, %v3559
        %v3562 = vmax.f32 %v3560, %v3561
        %v3563 = vadd.f32 %v3562, %v3533
        %v3564 = vmax.f32 %v3563, 0.0
        %3565 = vst.msk [vmem:[#allocation5 + $0x1a] sm:$0xf] %vm3507, %v3564
        %s3566 = scalar_lea.vmem [#allocation4], 71
        %v3567 = vld [vmem:[%s3566] ss:$2 sm:$0xf]
        %s3568 = scalar_lea.vmem [#allocation4], 72
        %v3569 = vld [vmem:[%s3568] ss:$2 sm:$0xf]
        %s3570 = scalar_lea.vmem [#allocation4], 81
        %v3571 = vld [vmem:[%s3570] ss:$2 sm:$0xf]
        %s3572 = scalar_lea.vmem [#allocation4], 82
        %v3573 = vld [vmem:[%s3572] ss:$2 sm:$0xf]
        %v3574 = vmax.f32 %v3567, %v3569
        %v3575 = vmax.f32 %v3571, %v3573
        %v3576 = vmax.f32 %v3574, %v3575
        %v3577 = vadd.f32 %v3576, %v3533
        %v3578 = vmax.f32 %v3577, 0.0
        %3579 = vst.msk [vmem:[#allocation5 + $0x20] sm:$0xf] %vm3507, %v3578
        %v3580 = vld [vmem:[#allocation5] sm:$0xff]
        %v3581 = vld [vmem:[#allocation5 + $0x8] sm:$0xff]
        %v3582 = vld [vmem:[#allocation5 + $0x10] sm:$0xff]
        %v3583 = vld [vmem:[#allocation5 + $0x18] sm:$0xff]
        %v3584 = vld [vmem:[#allocation5 + $0x20] sm:$0xf]
        %v3585 = vld [vmem:[#allocation5 + $0x1] sm:$0xff]
        %v3586 = vld [vmem:[#allocation5 + $0x9] sm:$0xff]
        %v3587 = vld [vmem:[#allocation5 + $0x11] sm:$0xff]
        %v3588 = vld [vmem:[#allocation5 + $0x19] sm:$0xff]
        %v3589 = vld [vmem:[#allocation5 + $0x21] sm:$0xf]
        %v3590 = vld [vmem:[#allocation5 + $0x2] sm:$0xff]
        %v3591 = vld [vmem:[#allocation5 + $0xa] sm:$0xff]
        %v3592 = vld [vmem:[#allocation5 + $0x12] sm:$0xff]
        %v3593 = vld [vmem:[#allocation5 + $0x1a] sm:$0xff]
        %v3594 = vld [vmem:[#allocation5 + $0x22] sm:$0xf]
        %v3595 = vld [vmem:[#allocation5 + $0x6] sm:$0xff]
        %v3596 = vld [vmem:[#allocation5 + $0xe] sm:$0xff]
        %v3597 = vld [vmem:[#allocation5 + $0x16] sm:$0xff]
        %v3598 = vld [vmem:[#allocation5 + $0x1e] sm:$0xff]
        %v3599 = vld [vmem:[#allocation5 + $0x26] sm:$0xf]
        %v3600 = vld [vmem:[#allocation5 + $0x7] sm:$0xff]
        %v3601 = vld [vmem:[#allocation5 + $0xf] sm:$0xff]
        %v3602 = vld [vmem:[#allocation5 + $0x17] sm:$0xff]
        %v3603 = vld [vmem:[#allocation5 + $0x1f] sm:$0xff]
        %v3604 = vld [vmem:[#allocation5 + $0x27] sm:$0xf]
        %v3605 = vld [vmem:[#allocation5 + $0x20] sm:$0xff]
        %v3606 = vld [vmem:[#allocation5 + $0x28] sm:$0xf]
        %v3607 = vld [vmem:[#allocation5 + $0xc] sm:$0xff]
        %v3608 = vld [vmem:[#allocation5 + $0x14] sm:$0xff]
        %v3609 = vld [vmem:[#allocation5 + $0x1c] sm:$0xff]
        %v3610 = vld [vmem:[#allocation5 + $0x24] sm:$0xff]
        %v3611 = vld [vmem:[#allocation5 + $0x2c] sm:$0xf]
        %v3612 = vld [vmem:[#allocation5 + $0xd] sm:$0xff]
        %v3613 = vld [vmem:[#allocation5 + $0x15] sm:$0xff]
        %v3614 = vld [vmem:[#allocation5 + $0x1d] sm:$0xff]
        %v3615 = vld [vmem:[#allocation5 + $0x25] sm:$0xff]
        %v3616 = vld [vmem:[#allocation5 + $0x2d] sm:$0xf]
        %v3617 = vld [vmem:[#allocation5 + $0x26] sm:$0xff]
        %v3618 = vld [vmem:[#allocation5 + $0x2e] sm:$0xf]
        %3624 = vrot.lane.b32.xlu0 %v3585, 32
        %v3625 = vpop.permute.xlu0 %3624
        %3626 = vrot.lane.b32.xlu0 %v3586, 32
        %v3627 = vpop.permute.xlu0 %3626
        %3628 = vrot.lane.b32.xlu0 %v3587, 32
        %v3629 = vpop.permute.xlu0 %3628
        %3630 = vrot.lane.b32.xlu0 %v3588, 32
        %v3631 = vpop.permute.xlu0 %3630
        %3632 = vrot.lane.b32.xlu0 %v3589, 32
        %v3633 = vpop.permute.xlu0 %3632
        %3644 = vrot.lane.b32.xlu0 %v3590, 64
        %v3645 = vpop.permute.xlu0 %3644
        %3646 = vrot.lane.b32.xlu0 %v3591, 64
        %v3647 = vpop.permute.xlu0 %3646
        %3648 = vrot.lane.b32.xlu0 %v3592, 64
        %v3649 = vpop.permute.xlu0 %3648
        %3650 = vrot.lane.b32.xlu0 %v3593, 64
        %v3651 = vpop.permute.xlu0 %3650
        %3652 = vrot.lane.b32.xlu0 %v3594, 64
        %v3653 = vpop.permute.xlu0 %3652
        %3664 = vrot.lane.b32.xlu0 %v3595, 96
        %v3665 = vpop.permute.xlu0 %3664
        %3666 = vrot.lane.b32.xlu0 %v3596, 96
        %v3667 = vpop.permute.xlu0 %3666
        %3668 = vrot.lane.b32.xlu0 %v3597, 96
        %v3669 = vpop.permute.xlu0 %3668
        %3670 = vrot.lane.b32.xlu0 %v3598, 96
        %v3671 = vpop.permute.xlu0 %3670
        %3672 = vrot.lane.b32.xlu0 %v3599, 96
        %v3673 = vpop.permute.xlu0 %3672
        %3684 = vrot.lane.b32.xlu0 %v3581, 32
        %v3685 = vpop.permute.xlu0 %3684
        %3686 = vrot.lane.b32.xlu0 %v3582, 32
        %v3687 = vpop.permute.xlu0 %3686
        %3688 = vrot.lane.b32.xlu0 %v3583, 32
        %v3689 = vpop.permute.xlu0 %3688
        %3690 = vrot.lane.b32.xlu0 %v3605, 32
        %v3691 = vpop.permute.xlu0 %3690
        %3692 = vrot.lane.b32.xlu0 %v3606, 32
        %v3693 = vpop.permute.xlu0 %3692
        %3704 = vrot.lane.b32.xlu0 %v3607, 64
        %v3705 = vpop.permute.xlu0 %3704
        %3706 = vrot.lane.b32.xlu0 %v3608, 64
        %v3707 = vpop.permute.xlu0 %3706
        %3708 = vrot.lane.b32.xlu0 %v3609, 64
        %v3709 = vpop.permute.xlu0 %3708
        %3710 = vrot.lane.b32.xlu0 %v3610, 64
        %v3711 = vpop.permute.xlu0 %3710
        %3712 = vrot.lane.b32.xlu0 %v3611, 64
        %v3713 = vpop.permute.xlu0 %3712
        %3724 = vrot.lane.b32.xlu0 %v3612, 96
        %v3725 = vpop.permute.xlu0 %3724
        %3726 = vrot.lane.b32.xlu0 %v3613, 96
        %v3727 = vpop.permute.xlu0 %3726
        %3728 = vrot.lane.b32.xlu0 %v3614, 96
        %v3729 = vpop.permute.xlu0 %3728
        %3730 = vrot.lane.b32.xlu0 %v3615, 96
        %v3731 = vpop.permute.xlu0 %3730
        %3732 = vrot.lane.b32.xlu0 %v3616, 96
        %v3733 = vpop.permute.xlu0 %3732
        %v3739 = vsel %vm3224, %v3580, %v3625
        %v3740 = vsel %vm3224, %v3581, %v3627
        %v3741 = vsel %vm3224, %v3582, %v3629
        %v3742 = vsel %vm3224, %v3583, %v3631
        %v3743 = vsel %vm3224, %v3584, %v3633
        %v3744 = vsel %vm3252, %v3739, %v3645
        %v3745 = vsel %vm3252, %v3740, %v3647
        %v3746 = vsel %vm3252, %v3741, %v3649
        %v3747 = vsel %vm3252, %v3742, %v3651
        %v3748 = vsel %vm3252, %v3743, %v3653
        %v3749 = vsel %vm3280, %v3744, %v3665
        %v3750 = vsel %vm3280, %v3745, %v3667
        %v3751 = vsel %vm3280, %v3746, %v3669
        %v3752 = vsel %vm3280, %v3747, %v3671
        %v3753 = vsel %vm3280, %v3748, %v3673
        %v3754 = vsel %vm3224, %v3600, %v3685
        %v3755 = vsel %vm3224, %v3601, %v3687
        %v3756 = vsel %vm3224, %v3602, %v3689
        %v3757 = vsel %vm3224, %v3603, %v3691
        %v3758 = vsel %vm3224, %v3604, %v3693
        %v3759 = vsel %vm3252, %v3754, %v3705
        %v3760 = vsel %vm3252, %v3755, %v3707
        %v3761 = vsel %vm3252, %v3756, %v3709
        %v3762 = vsel %vm3252, %v3757, %v3711
        %v3763 = vsel %vm3252, %v3758, %v3713
        %v3764 = vsel %vm3280, %v3759, %v3725
        %v3765 = vsel %vm3280, %v3760, %v3727
        %v3766 = vsel %vm3280, %v3761, %v3729
        %v3767 = vsel %vm3280, %v3762, %v3731
        %v3768 = vsel %vm3280, %v3763, %v3733
        %v3769 = vld [vmem:[%s5] sm:$0xff]
        %v3770 = vld [vmem:[%s5 + $0x8] sm:$0xff]
        %v3771 = vld [vmem:[%s5 + $0x10] sm:$0xff]
        %v3772 = vld [vmem:[%s5 + $0x18] sm:$0xff]
        %v3773 = vld [vmem:[%s5 + $0x20] sm:$0xff]
        %v3774 = vld [vmem:[%s5 + $0x28] sm:$0xff]
        %v3775 = vld [vmem:[%s5 + $0x30] sm:$0xff]
        %v3776 = vld [vmem:[%s5 + $0x38] sm:$0xff]
        %v3777 = vld [vmem:[%s5 + $0x40] sm:$0xff]
        %v3778 = vld [vmem:[%s5 + $0x48] sm:$0xff]
        %v3779 = vld [vmem:[%s5 + $0x50] sm:$0xff]
        %v3780 = vld [vmem:[%s5 + $0x58] sm:$0xff]
        %v3781 = vld [vmem:[%s5 + $0x60] sm:$0xff]
        %v3782 = vld [vmem:[%s5 + $0x68] sm:$0xff]
        %v3783 = vld [vmem:[%s5 + $0x70] sm:$0xff]
        %v3784 = vld [vmem:[%s5 + $0x78] sm:$0xff]
        %v3785 = vld [vmem:[%s5 + $0x80] sm:$0xff]
        %v3786 = vld [vmem:[%s5 + $0x88] sm:$0xff]
        %v3787 = vld [vmem:[%s5 + $0x90] sm:$0xff]
        %v3788 = vld [vmem:[%s5 + $0x98] sm:$0xff]
        %v3789 = vld [vmem:[%s5 + $0xa0] sm:$0xff]
        %v3790 = vld [vmem:[%s5 + $0xa8] sm:$0xff]
        %v3791 = vld [vmem:[%s5 + $0xb0] sm:$0xff]
        %v3792 = vld [vmem:[%s5 + $0xb8] sm:$0xff]
        %v3793 = vld [vmem:[%s5 + $0xc0] sm:$0xff]
        %v3794 = vld [vmem:[%s5 + $0xc8] sm:$0xff]
        %v3795 = vld [vmem:[%s5 + $0xd0] sm:$0xff]
        %v3796 = vld [vmem:[%s5 + $0xd8] sm:$0xff]
        %v3797 = vld [vmem:[%s5 + $0xe0] sm:$0xff]
        %v3798 = vld [vmem:[%s5 + $0xe8] sm:$0xff]
        %v3799 = vld [vmem:[%s5 + $0xf0] sm:$0xff]
        %v3800 = vld [vmem:[%s5 + $0xf8] sm:$0xff]
        %v3801 = vld [vmem:[%s5 + $0x100] sm:$0xff]
        %v3802 = vld [vmem:[%s5 + $0x108] sm:$0xff]
        %v3803 = vld [vmem:[%s5 + $0x110] sm:$0xff]
        %v3804 = vld [vmem:[%s5 + $0x118] sm:$0xff]
        %v3805 = vsel %vm3224, %v3596, 0
        %v3807 = vsel %vm3224, %v3597, 0
        %v3809 = vsel %vm3224, %v3598, 0
        %v3812 = vsel %vm3224, %v3617, 0
        %v3815 = vsel %vm3224, %v3618, 0
        %3817 = vmatprep.subr.mxu0 0.0
        %3818 = vmatpush1.msra.mxu0 %v3769
        %3819 = vmatprep.subr.mxu0 0.0
        %3820 = vmatpush1.msra.mxu0 %v3770
        %3821 = vmatprep.subr.mxu0 0.0
        %3822 = vmatpush1.msra.mxu0 %v3771
        %3823 = vmatprep.subr.mxu0 0.0
        %3824 = vmatpush1.msra.mxu0 %v3772
        %3825 = vmatprep.subr.mxu0 0.0
        %3826 = vmatpush1.msra.mxu0 %v3773
        %3827 = vmatprep.subr.mxu0 0.0
        %3828 = vmatpush1.msra.mxu0 %v3774
        %3829 = vmatprep.subr.mxu0 0.0
        %3830 = vmatpush1.msra.mxu0 %v3775
        %3831 = vmatprep.subr.mxu0 0.0
        %3832 = vmatpush1.msra.mxu0 %v3776
        %3833 = vmatprep.subr.mxu0 0.0
        %3834 = vmatpush1.msra.mxu0 %v3777
        %3835 = vmatprep.subr.mxu0 0.0
        %3836 = vmatpush1.msra.mxu0 %v3778
        %3837 = vmatprep.subr.mxu0 0.0
        %3838 = vmatpush1.msra.mxu0 %v3779
        %3839 = vmatprep.subr.mxu0 0.0
        %3840 = vmatpush1.msra.mxu0 %v3780
        %3841 = vmatprep.subr.mxu0 0.0
        %3842 = vmatpush1.msra.mxu0 %v3781
        %3843 = vmatprep.subr.mxu0 0.0
        %3844 = vmatpush1.msra.mxu0 %v3782
        %3845 = vmatprep.subr.mxu0 0.0
        %3846 = vmatpush1.msra.mxu0 %v3783
        %3847 = vmatprep.subr.mxu0 0.0
        %3848 = vmatpush1.msra.mxu0 %v3784
        %3849 = vmatprep.subr.mxu0 0.0
        %3850 = vmatpush1.msra.mxu0 %v3785
        %3851 = vmatprep.subr.mxu0 0.0
        %3852 = vmatpush1.msra.mxu0 %v3786
        %3853 = vmatprep.subr.mxu0 0.0
        %3854 = vmatpush1.msra.mxu0 %v3787
        %3855 = vmatprep.subr.mxu0 0.0
        %3856 = vmatpush1.msra.mxu0 %v3788
        %3857 = vmatprep.subr.mxu0 0.0
        %3858 = vmatpush1.msra.mxu0 %v3789
        %3859 = vmatprep.subr.mxu0 0.0
        %3860 = vmatpush1.msra.mxu0 %v3790
        %3861 = vmatprep.subr.mxu0 0.0
        %3862 = vmatpush1.msra.mxu0 %v3791
        %3863 = vmatprep.subr.mxu0 0.0
        %3864 = vmatpush1.msra.mxu0 %v3792
        %3865 = vmatprep.subr.mxu0 0.0
        %3866 = vmatpush1.msra.mxu0 %v3793
        %3867 = vmatprep.subr.mxu0 0.0
        %3868 = vmatpush1.msra.mxu0 %v3794
        %3869 = vmatprep.subr.mxu0 0.0
        %3870 = vmatpush1.msra.mxu0 %v3795
        %3871 = vmatprep.subr.mxu0 0.0
        %3872 = vmatpush1.msra.mxu0 %v3796
        %3873 = vmatprep.subr.mxu0 0.0
        %3874 = vmatpush1.msra.mxu0 %v3797
        %3875 = vmatprep.subr.mxu0 0.0
        %3876 = vmatpush1.msra.mxu0 %v3798
        %3877 = vmatprep.subr.mxu0 0.0
        %3878 = vmatpush1.msra.mxu0 %v3799
        %3879 = vmatprep.subr.mxu0 0.0
        %3880 = vmatpush1.msra.mxu0 %v3800
        %3881 = vmatprep.mubr.f32.mxu0 %v3764
        %3882 = vmatmul.mubr.f32.gmra.mrb[0].mxu0 %v3749
        %v3883 = vpop.f32.mrb[0].mxu0
        %v3884 = vadd.f32 0.0, %v3883
        %v3885 = vpop.f32.mrb[0].mxu0
        %3886 = vmatprep.mubr.f32.mxu0 %v3765
        %3887 = vmatmul.mubr.f32.gmra.mrb[0].mxu0 %v3750
        %v3888 = vpop.f32.mrb[0].mxu0
        %v3889 = vadd.f32 0.0, %v3888
        %v3890 = vpop.f32.mrb[0].mxu0
        %3891 = vmatprep.mubr.f32.mxu0 %v3766
        %3892 = vmatmul.mubr.f32.gmra.mrb[0].mxu0 %v3751
        %v3893 = vpop.f32.mrb[0].mxu0
        %v3894 = vadd.f32 0.0, %v3893
        %v3895 = vpop.f32.mrb[0].mxu0
        %3896 = vmatprep.mubr.f32.mxu0 %v3767
        %3897 = vmatmul.mubr.f32.gmra.mrb[0].mxu0 %v3752
        %v3898 = vpop.f32.mrb[0].mxu0
        %v3899 = vadd.f32 0.0, %v3898
        %v3900 = vpop.f32.mrb[0].mxu0
        %3901 = vmatprep.mubr.f32.mxu0 %v3768
        %3902 = vmatmul.mubr.f32.gmra.mrb[0].mxu0 %v3753
        %v3903 = vpop.f32.mrb[0].mxu0
        %v3904 = vadd.f32 0.0, %v3903
        %v3905 = vpop.f32.mrb[0].mxu0
        %3906 = vdwg.mxu0
        %3907 = vmatprep.subr.mxu0 0.0
        %3908 = vmatpush1.msra.mxu0 %v3801
        %3909 = vmatprep.subr.mxu0 0.0
        %3910 = vmatpush1.msra.mxu0 %v3802
        %3911 = vmatprep.subr.mxu0 0.0
        %3912 = vmatpush1.msra.mxu0 %v3803
        %3913 = vmatprep.subr.mxu0 0.0
        %3914 = vmatpush1.msra.mxu0 %v3804
        %3915 = vmatprep.subr.mxu0 0.0
        %3916 = vmatpush1.msra.mxu0 0.0
        %3917 = vmatprep.subr.mxu0 0.0
        %3918 = vmatpush1.msra.mxu0 0.0
        %3919 = vmatprep.subr.mxu0 0.0
        %3920 = vmatpush1.msra.mxu0 0.0
        %3921 = vmatprep.subr.mxu0 0.0
        %3922 = vmatpush1.msra.mxu0 0.0
        %3923 = vmatprep.subr.mxu0 0.0
        %3924 = vmatpush1.msra.mxu0 0.0
        %3925 = vmatprep.subr.mxu0 0.0
        %3926 = vmatpush1.msra.mxu0 0.0
        %3927 = vmatprep.subr.mxu0 0.0
        %3928 = vmatpush1.msra.mxu0 0.0
        %3929 = vmatprep.subr.mxu0 0.0
        %3930 = vmatpush1.msra.mxu0 0.0
        %3931 = vmatprep.subr.mxu0 0.0
        %3932 = vmatpush1.msra.mxu0 0.0
        %3933 = vmatprep.subr.mxu0 0.0
        %3934 = vmatpush1.msra.mxu0 0.0
        %3935 = vmatprep.subr.mxu0 0.0
        %3936 = vmatpush1.msra.mxu0 0.0
        %3937 = vmatprep.subr.mxu0 0.0
        %3938 = vmatpush1.msra.mxu0 0.0
        %3939 = vmatprep.subr.mxu0 0.0
        %3940 = vmatpush1.msra.mxu0 0.0
        %3941 = vmatprep.subr.mxu0 0.0
        %3942 = vmatpush1.msra.mxu0 0.0
        %3943 = vmatprep.subr.mxu0 0.0
        %3944 = vmatpush1.msra.mxu0 0.0
        %3945 = vmatprep.subr.mxu0 0.0
        %3946 = vmatpush1.msra.mxu0 0.0
        %3947 = vmatprep.subr.mxu0 0.0
        %3948 = vmatpush1.msra.mxu0 0.0
        %3949 = vmatprep.subr.mxu0 0.0
        %3950 = vmatpush1.msra.mxu0 0.0
        %3951 = vmatprep.subr.mxu0 0.0
        %3952 = vmatpush1.msra.mxu0 0.0
        %3953 = vmatprep.subr.mxu0 0.0
        %3954 = vmatpush1.msra.mxu0 0.0
        %3955 = vmatprep.subr.mxu0 0.0
        %3956 = vmatpush1.msra.mxu0 0.0
        %3957 = vmatprep.subr.mxu0 0.0
        %3958 = vmatpush1.msra.mxu0 0.0
        %3959 = vmatprep.subr.mxu0 0.0
        %3960 = vmatpush1.msra.mxu0 0.0
        %3961 = vmatprep.subr.mxu0 0.0
        %3962 = vmatpush1.msra.mxu0 0.0
        %3963 = vmatprep.subr.mxu0 0.0
        %3964 = vmatpush1.msra.mxu0 0.0
        %3965 = vmatprep.subr.mxu0 0.0
        %3966 = vmatpush1.msra.mxu0 0.0
        %3967 = vmatprep.subr.mxu0 0.0
        %3968 = vmatpush1.msra.mxu0 0.0
        %3969 = vmatprep.subr.mxu0 0.0
        %3970 = vmatpush1.msra.mxu0 0.0
        %3971 = vmatprep.mubr.f32.mxu0 0.0
        %3972 = vmatmul.mubr.f32.gmra.mrb[0].mxu0 %v3805
        %v3973 = vpop.f32.mrb[0].mxu0
        %v3974 = vadd.f32 %v3884, %v3973
        %v3975 = vpop.f32.mrb[0].mxu0
        %3976 = vmatprep.mubr.f32.mxu0 0.0
        %3977 = vmatmul.mubr.f32.gmra.mrb[0].mxu0 %v3807
        %v3978 = vpop.f32.mrb[0].mxu0
        %v3979 = vadd.f32 %v3889, %v3978
        %v3980 = vpop.f32.mrb[0].mxu0
        %3981 = vmatprep.mubr.f32.mxu0 0.0
        %3982 = vmatmul.mubr.f32.gmra.mrb[0].mxu0 %v3809
        %v3983 = vpop.f32.mrb[0].mxu0
        %v3984 = vadd.f32 %v3894, %v3983
        %v3985 = vpop.f32.mrb[0].mxu0
        %3986 = vmatprep.mubr.f32.mxu0 0.0
        %3987 = vmatmul.mubr.f32.gmra.mrb[0].mxu0 %v3812
        %v3988 = vpop.f32.mrb[0].mxu0
        %v3989 = vadd.f32 %v3899, %v3988
        %v3990 = vpop.f32.mrb[0].mxu0
        %3991 = vmatprep.mubr.f32.mxu0 0.0
        %3992 = vmatmul.mubr.f32.gmra.mrb[0].mxu0 %v3815
        %v3993 = vpop.f32.mrb[0].mxu0
        %v3994 = vadd.f32 %v3904, %v3993
        %v3995 = vpop.f32.mrb[0].mxu0
        %3996 = vdwg.mxu0
        %3997 = vst.msk [vmem:[#allocation6] sm:$0xff] %vm2595, %v3974
        %3998 = vst.msk [vmem:[#allocation6 + $0x8] sm:$0xff] %vm2595, %v3979
        %3999 = vst.msk [vmem:[#allocation6 + $0x10] sm:$0xff] %vm2595, %v3984
        %4000 = vst.msk [vmem:[#allocation6 + $0x18] sm:$0xff] %vm2595, %v3989
        %4001 = vst.msk [vmem:[#allocation6 + $0x20] sm:$0xf] %vm2636, %v3994
        %v4002 = vld [vmem:[#allocation6 + $0x7] sm:$0xf]
        %v4003 = vld [vmem:[#allocation6 + $0xd] sm:$0xf]
        %v4004 = vmax.f32 %v4002, %v4003
        %v4005 = vld [vmem:[#allocation6 + $0x13] sm:$0xf]
        %v4006 = vmax.f32 %v4004, %v4005
        %v4007 = vld [vmem:[#allocation6 + $0x19] sm:$0xf]
        %v4008 = vmax.f32 %v4006, %v4007
        %v4009 = vsel %vm2636, %v4008, -inf
        %v4010 = vrot.slane %v4009, 4
        %v4011 = vmax.f32 %v4009, %v4010
        %v4012 = vrot.slane %v4011, 2
        %v4013 = vmax.f32 %v4011, %v4012
        %v4014 = vrot.slane %v4013, 1
        %v4015 = vmax.f32 %v4013, %v4014
        %vm4016 = vcmask 122880
        %4017 = vst.msk [vmem:[#allocation7] sm:$0x1] %vm4016, %v4015
        %v4018 = vld [vmem:[#allocation7] sm:$0x1]
        %v4019 = vld [vmem:[%s6] sm:$0x1]
        %v4020 = vadd.f32 %v4018, %v4019
        %v4021 = vmax.f32 %v4020, 0.0
        %v4022 = vld [vmem:[%s7] sm:$0xff]
        %v4023 = vld [vmem:[%s7 + $0x8] sm:$0xff]
        %v4024 = vld [vmem:[%s8] sm:$0x1]
        %v4026 = vsel %vm2595, %v4021, 0
        %4028 = vmatprep.subr.mxu0 0.0
        %4029 = vmatpush1.msra.mxu0 %v4022
        %4030 = vmatprep.subr.mxu0 0.0
        %4031 = vmatpush1.msra.mxu0 %v4023
        %4032 = vmatprep.subr.mxu0 0.0
        %4033 = vmatpush1.msra.mxu0 0.0
        %4034 = vmatprep.subr.mxu0 0.0
        %4035 = vmatpush1.msra.mxu0 0.0
        %4036 = vmatprep.subr.mxu0 0.0
        %4037 = vmatpush1.msra.mxu0 0.0
        %4038 = vmatprep.subr.mxu0 0.0
        %4039 = vmatpush1.msra.mxu0 0.0
        %4040 = vmatprep.subr.mxu0 0.0
        %4041 = vmatpush1.msra.mxu0 0.0
        %4042 = vmatprep.subr.mxu0 0.0
        %4043 = vmatpush1.msra.mxu0 0.0
        %4044 = vmatprep.subr.mxu0 0.0
        %4045 = vmatpush1.msra.mxu0 0.0
        %4046 = vmatprep.subr.mxu0 0.0
        %4047 = vmatpush1.msra.mxu0 0.0
        %4048 = vmatprep.subr.mxu0 0.0
        %4049 = vmatpush1.msra.mxu0 0.0
        %4050 = vmatprep.subr.mxu0 0.0
        %4051 = vmatpush1.msra.mxu0 0.0
        %4052 = vmatprep.subr.mxu0 0.0
        %4053 = vmatpush1.msra.mxu0 0.0
        %4054 = vmatprep.subr.mxu0 0.0
        %4055 = vmatpush1.msra.mxu0 0.0
        %4056 = vmatprep.subr.mxu0 0.0
        %4057 = vmatpush1.msra.mxu0 0.0
        %4058 = vmatprep.subr.mxu0 0.0
        %4059 = vmatpush1.msra.mxu0 0.0
        %4060 = vmatprep.subr.mxu0 0.0
        %4061 = vmatpush1.msra.mxu0 0.0
        %4062 = vmatprep.subr.mxu0 0.0
        %4063 = vmatpush1.msra.mxu0 0.0
        %4064 = vmatprep.subr.mxu0 0.0
        %4065 = vmatpush1.msra.mxu0 0.0
        %4066 = vmatprep.subr.mxu0 0.0
        %4067 = vmatpush1.msra.mxu0 0.0
        %4068 = vmatprep.subr.mxu0 0.0
        %4069 = vmatpush1.msra.mxu0 0.0
        %4070 = vmatprep.subr.mxu0 0.0
        %4071 = vmatpush1.msra.mxu0 0.0
        %4072 = vmatprep.subr.mxu0 0.0
        %4073 = vmatpush1.msra.mxu0 0.0
        %4074 = vmatprep.subr.mxu0 0.0
        %4075 = vmatpush1.msra.mxu0 0.0
        %4076 = vmatprep.subr.mxu0 0.0
        %4077 = vmatpush1.msra.mxu0 0.0
        %4078 = vmatprep.subr.mxu0 0.0
        %4079 = vmatpush1.msra.mxu0 0.0
        %4080 = vmatprep.subr.mxu0 0.0
        %4081 = vmatpush1.msra.mxu0 0.0
        %4082 = vmatprep.subr.mxu0 0.0
        %4083 = vmatpush1.msra.mxu0 0.0
        %4084 = vmatprep.subr.mxu0 0.0
        %4085 = vmatpush1.msra.mxu0 0.0
        %4086 = vmatprep.subr.mxu0 0.0
        %4087 = vmatpush1.msra.mxu0 0.0
        %4088 = vmatprep.subr.mxu0 0.0
        %4089 = vmatpush1.msra.mxu0 0.0
        %4090 = vmatprep.subr.mxu0 0.0
        %4091 = vmatpush1.msra.mxu0 0.0
        %4092 = vmatprep.mubr.f32.mxu0 0.0
        %4093 = vmatmul.mubr.f32.gmra.mrb[0].mxu0 %v4026
        %v4094 = vpop.f32.mrb[0].mxu0
        %v4095 = vadd.f32 %v4024, %v4094
        %v4096 = vpop.f32.mrb[0].mxu0
        %4097 = vdwg.mxu0
        %vm4098 = vcmask 73728
        %4099 = vst.msk [vmem:[%s324] sm:$0x1] %vm4098, %v4095
        %s4100 = sand.u32 %s225, 1
        %s4101 = scalar_lea.sflag [#allocation9], %s4100
        %s4102 = sand.u32 %s225, 1
        %s4103 = scalar_lea.vmem [#allocation8], %s4102
        // Predicated region
        $region57: #{adaptive_convnet_forward.1} parent=55 // pred_check
          %p4104 = pneg %p235
        $region58: #{adaptive_convnet_forward.1} parent=55 // pred_check_branch
          %4106 = sbr.rel (%p4104) target = $region60
        $region59: #{adaptive_convnet_forward.1} parent=55 // pred_region
          %s4108 = ssub.s32 16, 16
          %4109 = vsyncadd %s4101, %s4108
          %s4110 = smul.addr %s23, 16
          %s4111 = scalar_lea.hbm %s9, %s4110
          %s4113 = sshll.u32 %s4103, 4
          %s4114 = int_to_ptr.vmem [resolvable:$true] %s4113
          %4116 = dma.vmem_to_hbm [thread:$0]  %s4114, 16, %s4111, %s4101
        $region60: #{adaptive_convnet_forward.1} parent=55 // pred_fallthru
          _
      $region56: #{adaptive_convnet_forward.1} parent=5 // pred_fallthru
        _
      %p4117 = scmp.le.s32.totalorder 2, %s18
      // Predicated region
      $region61: #{adaptive_convnet_forward.1} parent=5 // pred_check
        %p4118 = pneg %p4117
      $region62: #{adaptive_convnet_forward.1} parent=5 // pred_check_branch
        %4120 = sbr.rel (%p4118) target = $region64
      $region63: #{adaptive_convnet_forward.1} parent=5 // pred_region
        %s4121 = ssub.s32 %s18, 2
        // Predicated region
        $region65: #{adaptive_convnet_forward.1} parent=63 // pred_check
          %p4122 = pneg %p241
        $region66: #{adaptive_convnet_forward.1} parent=63 // pred_check_branch
          %4124 = sbr.rel (%p4122) target = $region68
        $region67: #{adaptive_convnet_forward.1} parent=63 // pred_region
          %s4125 = sand.u32 %s226, 1
          %s4126 = scalar_lea.sflag [#allocation9], %s4125
          %s4127 = sand.u32 %s226, 1
          %s4128 = scalar_lea.vmem [#allocation8], %s4127
          %4129 = dma.done %s4126, 16
        $region68: #{adaptive_convnet_forward.1} parent=63 // pred_fallthru
          _
      $region64: #{adaptive_convnet_forward.1} parent=5 // pred_fallthru
        _
    $region6: #{adaptive_convnet_forward.1} parent=1 // loop_footer
      %s22 = sadd.s32 1, %s18
    $region7: #{adaptive_convnet_forward.1} parent=1 // loop_footer_branch
      %17 = sbr.rel target = $region3
    $region8: #{adaptive_convnet_forward.1} parent=1 // loop_exit
      _
    %4130 = vsyncpa [#allocation9], 1
    %s4131 = scalar_lea.sflag [#allocation9], 1
    %4132 = vsyncpa %s4131, 1

// kernel: _lambda_.1
$region0: #{_lambda_.1}
  #allocation0 [shape = 'u32[]', space=smem, size = 0x4, offset = 0x4, fixed_abs, tag = 'smem constant byte address 0x4 - core index']
  #allocation1 [shape = 'u32[144,128]{1,0:T(1,128)}', space=vmem, size = 0x12000, scoped, tag = 'internal scratch']
  #allocation2 [shape = 'f32[324,16]{1,0:T(8,128)}', space=vmem, size = 0x29000, scoped, tag = 'scratch operand']
  #allocation3 [shape = 'f32[122,16]{1,0:T(8,128)}', space=vmem, size = 0x10000, scoped, tag = 'scratch operand']
  #allocation4 [shape = 'f32[100,32]{1,0:T(8,128)}', space=vmem, size = 0xd000, scoped, tag = 'scratch operand']
  #allocation5 [shape = 'f32[50,32]{1,0:T(8,128)}', space=vmem, size = 0x7000, scoped, tag = 'scratch operand']
  #allocation6 [shape = 'f32[36,16]{1,0:T(8,128)}', space=vmem, size = 0x5000, scoped, tag = 'scratch operand']
  #allocation7 [shape = 'f32[1,16]{1,0:T(1,128)}', space=vmem, size = 0x200, scoped, tag = 'scratch operand']
  %s0 = inlined_call_operand.vmem [shape: f32[2,362,1], index: 0, kind: input, shape index: {}]
  %s1 = inlined_call_operand.vmem [shape: f32[9,16], index: 1, kind: input, shape index: {}]
  %s2 = inlined_call_operand.vmem [shape: f32[1,16], index: 2, kind: input, shape index: {}]
  %s3 = inlined_call_operand.vmem [shape: f32[144,32], index: 3, kind: input, shape index: {}]
  %s4 = inlined_call_operand.vmem [shape: f32[1,32], index: 4, kind: input, shape index: {}]
  %s5 = inlined_call_operand.vmem [shape: f32[288,16], index: 5, kind: input, shape index: {}]
  %s6 = inlined_call_operand.vmem [shape: f32[1,16], index: 6, kind: input, shape index: {}]
  %s7 = inlined_call_operand.vmem [shape: f32[16,10], index: 7, kind: input, shape index: {}]
  %s8 = inlined_call_operand.vmem [shape: f32[1,10], index: 8, kind: input, shape index: {}]
  %s9 = inlined_call_operand.hbm [shape: f32[2,1,10], index: 9, kind: output, shape index: {}]
  %s10 = sld [smem:[#allocation0]]
  $region69: #{_lambda_.1} parent=0
    _
  %s12 = ssub.s32 1, %s10
  %s13 = scalar_select 0, %s12, %s10
  $region1: #{_lambda_.1} parent=0
    #allocation8 [shape = 'u8[1024]{0}', space=vmem, size = 0x400, scoped, tag = 'output window, operand 0']
    #allocation9 [shape = 's32[2]{0}', space=sflag, size = 0x8, scoped, tag = 'scoped memory for _lambda_.1']
    %14 = vsyncpa [#allocation9], 0
    %s15 = scalar_lea.sflag [#allocation9], 1
    %16 = vsyncpa %s15, 0
    loop: start=0, step=1, limit=4
    $region2: #{_lambda_.1} parent=1 // loop_pre_header
      _
    $region3: #{_lambda_.1} parent=1 // loop_header
      %s18 = sphi 0, %s22
      %p19 = scmp.ge.s32.totalorder %s18, 4
      %s28 = sphi 0, %s30
      %s31 = sphi 0, %s28
      %s32 = sphi 0, %s31
      %s48 = sphi 0, %s32
      %s52 = sphi 0, %s52
      %s54 = sphi 0, %s52
      %s55 = sphi 0, %s54
      %s69 = sphi 0, %s55
      %s73 = sphi 0, %s73
      %s75 = sphi 0, %s73
      %s76 = sphi 0, %s75
      %s90 = sphi 0, %s76
      %s94 = sphi 0, %s94
      %s96 = sphi 0, %s94
      %s97 = sphi 0, %s96
      %s111 = sphi 0, %s97
      %s115 = sphi 0, %s115
      %s117 = sphi 0, %s115
      %s118 = sphi 0, %s117
      %s132 = sphi 0, %s118
      %s136 = sphi 0, %s136
      %s138 = sphi 0, %s136
      %s139 = sphi 0, %s138
      %s153 = sphi 0, %s139
      %s157 = sphi 0, %s157
      %s159 = sphi 0, %s157
      %s160 = sphi 0, %s159
      %s174 = sphi 0, %s160
      %s178 = sphi 0, %s178
      %s180 = sphi 0, %s178
      %s181 = sphi 0, %s180
      %s195 = sphi 0, %s181
      %s199 = sphi 0, %s199
      %s201 = sphi 0, %s199
      %s202 = sphi 0, %s201
      %s216 = sphi 0, %s202
      %s222 = sphi 0, %s224
      %s225 = sphi 0, %s222
      %s226 = sphi 0, %s225
      %s242 = sphi 0, %s226
    $region4: #{_lambda_.1} parent=1 // loop_header_branch
      %21 = sbr.rel (%p19) target = $region8
    $region5: #{_lambda_.1} parent=1 // loop_body
      %s23 = ssub.s32 %s18, 1
      %s24 = ssub.s32 %s18, 2
      %s25 = sadd.s32 %s18, 1
      %s26 = ssub.s32 %s18, %s25
      %p27 = scmp.eq.s32.totalorder %s26, 0
      %s29 = sadd.s32 %s28, 1
      %s30 = scalar_select %p27, %s28, %s29
      %p33 = pneg %p27
      %p34 = scmp.eq.s32.totalorder %s18, 1
      %p35 = por %p33, %p34
      %p36 = scmp.ne.s32.totalorder %s28, %s31
      %p37 = scmp.eq.s32.totalorder %s18, 0
      %p38 = por %p36, %p37
      %p39 = scmp.ne.s32.totalorder %s28, %s31
      %p40 = scmp.eq.s32.totalorder %s23, 1
      %p41 = por %p39, %p40
      %p42 = scmp.ne.s32.totalorder %s31, %s32
      %p43 = scmp.eq.s32.totalorder %s23, 0
      %p44 = por %p42, %p43
      %p45 = scmp.ne.s32.totalorder %s31, %s32
      %p46 = scmp.eq.s32.totalorder %s24, 1
      %p47 = por %p45, %p46
      %p49 = scmp.ne.s32.totalorder %s32, %s48
      %p50 = scmp.eq.s32.totalorder %s24, 0
      %p51 = por %p49, %p50
      %s53 = sadd.s32 %s52, 1
      %p56 = scmp.eq.s32.totalorder %s18, 1
      %p57 = scmp.ne.s32.totalorder %s52, %s54
      %p58 = scmp.eq.s32.totalorder %s18, 0
      %p59 = por %p57, %p58
      %p60 = scmp.ne.s32.totalorder %s52, %s54
      %p61 = scmp.eq.s32.totalorder %s23, 1
      %p62 = por %p60, %p61
      %p63 = scmp.ne.s32.totalorder %s54, %s55
      %p64 = scmp.eq.s32.totalorder %s23, 0
      %p65 = por %p63, %p64
      %p66 = scmp.ne.s32.totalorder %s54, %s55
      %p67 = scmp.eq.s32.totalorder %s24, 1
      %p68 = por %p66, %p67
      %p70 = scmp.ne.s32.totalorder %s55, %s69
      %p71 = scmp.eq.s32.totalorder %s24, 0
      %p72 = por %p70, %p71
      %s74 = sadd.s32 %s73, 1
      %p77 = scmp.eq.s32.totalorder %s18, 1
      %p78 = scmp.ne.s32.totalorder %s73, %s75
      %p79 = scmp.eq.s32.totalorder %s18, 0
      %p80 = por %p78, %p79
      %p81 = scmp.ne.s32.totalorder %s73, %s75
      %p82 = scmp.eq.s32.totalorder %s23, 1
      %p83 = por %p81, %p82
      %p84 = scmp.ne.s32.totalorder %s75, %s76
      %p85 = scmp.eq.s32.totalorder %s23, 0
      %p86 = por %p84, %p85
      %p87 = scmp.ne.s32.totalorder %s75, %s76
      %p88 = scmp.eq.s32.totalorder %s24, 1
      %p89 = por %p87, %p88
      %p91 = scmp.ne.s32.totalorder %s76, %s90
      %p92 = scmp.eq.s32.totalorder %s24, 0
      %p93 = por %p91, %p92
      %s95 = sadd.s32 %s94, 1
      %p98 = scmp.eq.s32.totalorder %s18, 1
      %p99 = scmp.ne.s32.totalorder %s94, %s96
      %p100 = scmp.eq.s32.totalorder %s18, 0
      %p101 = por %p99, %p100
      %p102 = scmp.ne.s32.totalorder %s94, %s96
      %p103 = scmp.eq.s32.totalorder %s23, 1
      %p104 = por %p102, %p103
      %p105 = scmp.ne.s32.totalorder %s96, %s97
      %p106 = scmp.eq.s32.totalorder %s23, 0
      %p107 = por %p105, %p106
      %p108 = scmp.ne.s32.totalorder %s96, %s97
      %p109 = scmp.eq.s32.totalorder %s24, 1
      %p110 = por %p108, %p109
      %p112 = scmp.ne.s32.totalorder %s97, %s111
      %p113 = scmp.eq.s32.totalorder %s24, 0
      %p114 = por %p112, %p113
      %s116 = sadd.s32 %s115, 1
      %p119 = scmp.eq.s32.totalorder %s18, 1
      %p120 = scmp.ne.s32.totalorder %s115, %s117
      %p121 = scmp.eq.s32.totalorder %s18, 0
      %p122 = por %p120, %p121
      %p123 = scmp.ne.s32.totalorder %s115, %s117
      %p124 = scmp.eq.s32.totalorder %s23, 1
      %p125 = por %p123, %p124
      %p126 = scmp.ne.s32.totalorder %s117, %s118
      %p127 = scmp.eq.s32.totalorder %s23, 0
      %p128 = por %p126, %p127
      %p129 = scmp.ne.s32.totalorder %s117, %s118
      %p130 = scmp.eq.s32.totalorder %s24, 1
      %p131 = por %p129, %p130
      %p133 = scmp.ne.s32.totalorder %s118, %s132
      %p134 = scmp.eq.s32.totalorder %s24, 0
      %p135 = por %p133, %p134
      %s137 = sadd.s32 %s136, 1
      %p140 = scmp.eq.s32.totalorder %s18, 1
      %p141 = scmp.ne.s32.totalorder %s136, %s138
      %p142 = scmp.eq.s32.totalorder %s18, 0
      %p143 = por %p141, %p142
      %p144 = scmp.ne.s32.totalorder %s136, %s138
      %p145 = scmp.eq.s32.totalorder %s23, 1
      %p146 = por %p144, %p145
      %p147 = scmp.ne.s32.totalorder %s138, %s139
      %p148 = scmp.eq.s32.totalorder %s23, 0
      %p149 = por %p147, %p148
      %p150 = scmp.ne.s32.totalorder %s138, %s139
      %p151 = scmp.eq.s32.totalorder %s24, 1
      %p152 = por %p150, %p151
      %p154 = scmp.ne.s32.totalorder %s139, %s153
      %p155 = scmp.eq.s32.totalorder %s24, 0
      %p156 = por %p154, %p155
      %s158 = sadd.s32 %s157, 1
      %p161 = scmp.eq.s32.totalorder %s18, 1
      %p162 = scmp.ne.s32.totalorder %s157, %s159
      %p163 = scmp.eq.s32.totalorder %s18, 0
      %p164 = por %p162, %p163
      %p165 = scmp.ne.s32.totalorder %s157, %s159
      %p166 = scmp.eq.s32.totalorder %s23, 1
      %p167 = por %p165, %p166
      %p168 = scmp.ne.s32.totalorder %s159, %s160
      %p169 = scmp.eq.s32.totalorder %s23, 0
      %p170 = por %p168, %p169
      %p171 = scmp.ne.s32.totalorder %s159, %s160
      %p172 = scmp.eq.s32.totalorder %s24, 1
      %p173 = por %p171, %p172
      %p175 = scmp.ne.s32.totalorder %s160, %s174
      %p176 = scmp.eq.s32.totalorder %s24, 0
      %p177 = por %p175, %p176
      %s179 = sadd.s32 %s178, 1
      %p182 = scmp.eq.s32.totalorder %s18, 1
      %p183 = scmp.ne.s32.totalorder %s178, %s180
      %p184 = scmp.eq.s32.totalorder %s18, 0
      %p185 = por %p183, %p184
      %p186 = scmp.ne.s32.totalorder %s178, %s180
      %p187 = scmp.eq.s32.totalorder %s23, 1
      %p188 = por %p186, %p187
      %p189 = scmp.ne.s32.totalorder %s180, %s181
      %p190 = scmp.eq.s32.totalorder %s23, 0
      %p191 = por %p189, %p190
      %p192 = scmp.ne.s32.totalorder %s180, %s181
      %p193 = scmp.eq.s32.totalorder %s24, 1
      %p194 = por %p192, %p193
      %p196 = scmp.ne.s32.totalorder %s181, %s195
      %p197 = scmp.eq.s32.totalorder %s24, 0
      %p198 = por %p196, %p197
      %s200 = sadd.s32 %s199, 1
      %p203 = scmp.eq.s32.totalorder %s18, 1
      %p204 = scmp.ne.s32.totalorder %s199, %s201
      %p205 = scmp.eq.s32.totalorder %s18, 0
      %p206 = por %p204, %p205
      %p207 = scmp.ne.s32.totalorder %s199, %s201
      %p208 = scmp.eq.s32.totalorder %s23, 1
      %p209 = por %p207, %p208
      %p210 = scmp.ne.s32.totalorder %s201, %s202
      %p211 = scmp.eq.s32.totalorder %s23, 0
      %p212 = por %p210, %p211
      %p213 = scmp.ne.s32.totalorder %s201, %s202
      %p214 = scmp.eq.s32.totalorder %s24, 1
      %p215 = por %p213, %p214
      %p217 = scmp.ne.s32.totalorder %s202, %s216
      %p218 = scmp.eq.s32.totalorder %s24, 0
      %p219 = por %p217, %p218
      %s220 = ssub.s32 %s18, %s25
      %p221 = scmp.eq.s32.totalorder %s220, 0
      %s223 = sadd.s32 %s222, 1
      %s224 = scalar_select %p221, %s222, %s223
      %p227 = pneg %p221
      %p228 = scmp.eq.s32.totalorder %s18, 1
      %p229 = por %p227, %p228
      %p230 = scmp.ne.s32.totalorder %s222, %s225
      %p231 = scmp.eq.s32.totalorder %s18, 0
      %p232 = por %p230, %p231
      %p233 = scmp.ne.s32.totalorder %s222, %s225
      %p234 = scmp.eq.s32.totalorder %s23, 1
      %p235 = por %p233, %p234
      %p236 = scmp.ne.s32.totalorder %s225, %s226
      %p237 = scmp.eq.s32.totalorder %s23, 0
      %p238 = por %p236, %p237
      %p239 = scmp.ne.s32.totalorder %s225, %s226
      %p240 = scmp.eq.s32.totalorder %s24, 1
      %p241 = por %p239, %p240
      %p243 = scmp.ne.s32.totalorder %s226, %s242
      %p244 = scmp.eq.s32.totalorder %s24, 0
      %p245 = por %p243, %p244
      %p246 = scmp.le.s32.totalorder 1, %s18
      %p247 = scmp.lt.s32.totalorder %s18, 3
      %p248 = pnand %p246, %p247
      %p249 = pneg %p248
      // Predicated region
      $region9: #{_lambda_.1} parent=5 // pred_check
        _
      $region10: #{_lambda_.1} parent=5 // pred_check_branch
        %251 = sbr.rel (%p248) target = $region12
      $region11: #{_lambda_.1} parent=5 // pred_region
        %s252 = ssub.s32 %s18, 1
        // Predicated region
        $region13: #{_lambda_.1} parent=11 // pred_check
          %p253 = pneg %p65
        $region14: #{_lambda_.1} parent=11 // pred_check_branch
          %255 = sbr.rel (%p253) target = $region16
        $region15: #{_lambda_.1} parent=11 // pred_region
          _
        $region16: #{_lambda_.1} parent=11 // pred_fallthru
          _
        // Predicated region
        $region17: #{_lambda_.1} parent=11 // pred_check
          %p256 = pneg %p86
        $region18: #{_lambda_.1} parent=11 // pred_check_branch
          %258 = sbr.rel (%p256) target = $region20
        $region19: #{_lambda_.1} parent=11 // pred_region
          _
        $region20: #{_lambda_.1} parent=11 // pred_fallthru
          _
        // Predicated region
        $region21: #{_lambda_.1} parent=11 // pred_check
          %p259 = pneg %p107
        $region22: #{_lambda_.1} parent=11 // pred_check_branch
          %261 = sbr.rel (%p259) target = $region24
        $region23: #{_lambda_.1} parent=11 // pred_region
          _
        $region24: #{_lambda_.1} parent=11 // pred_fallthru
          _
        // Predicated region
        $region25: #{_lambda_.1} parent=11 // pred_check
          %p262 = pneg %p128
        $region26: #{_lambda_.1} parent=11 // pred_check_branch
          %264 = sbr.rel (%p262) target = $region28
        $region27: #{_lambda_.1} parent=11 // pred_region
          _
        $region28: #{_lambda_.1} parent=11 // pred_fallthru
          _
        // Predicated region
        $region29: #{_lambda_.1} parent=11 // pred_check
          %p265 = pneg %p149
        $region30: #{_lambda_.1} parent=11 // pred_check_branch
          %267 = sbr.rel (%p265) target = $region32
        $region31: #{_lambda_.1} parent=11 // pred_region
          _
        $region32: #{_lambda_.1} parent=11 // pred_fallthru
          _
        // Predicated region
        $region33: #{_lambda_.1} parent=11 // pred_check
          %p268 = pneg %p170
        $region34: #{_lambda_.1} parent=11 // pred_check_branch
          %270 = sbr.rel (%p268) target = $region36
        $region35: #{_lambda_.1} parent=11 // pred_region
          _
        $region36: #{_lambda_.1} parent=11 // pred_fallthru
          _
        // Predicated region
        $region37: #{_lambda_.1} parent=11 // pred_check
          %p271 = pneg %p191
        $region38: #{_lambda_.1} parent=11 // pred_check_branch
          %273 = sbr.rel (%p271) target = $region40
        $region39: #{_lambda_.1} parent=11 // pred_region
          _
        $region40: #{_lambda_.1} parent=11 // pred_fallthru
          _
        // Predicated region
        $region41: #{_lambda_.1} parent=11 // pred_check
          %p274 = pneg %p212
        $region42: #{_lambda_.1} parent=11 // pred_check_branch
          %276 = sbr.rel (%p274) target = $region44
        $region43: #{_lambda_.1} parent=11 // pred_region
          _
        $region44: #{_lambda_.1} parent=11 // pred_fallthru
          _
      $region12: #{_lambda_.1} parent=5 // pred_fallthru
        _
      %p277 = scmp.lt.s32.totalorder %s18, 2
      // Predicated region
      $region45: #{_lambda_.1} parent=5 // pred_check
        %p278 = pneg %p277
      $region46: #{_lambda_.1} parent=5 // pred_check_branch
        %280 = sbr.rel (%p278) target = $region48
      $region47: #{_lambda_.1} parent=5 // pred_region
        // Predicated region
        $region49: #{_lambda_.1} parent=47 // pred_check
          %p281 = pneg %p38
        $region50: #{_lambda_.1} parent=47 // pred_check_branch
          %283 = sbr.rel (%p281) target = $region52
        $region51: #{_lambda_.1} parent=47 // pred_region
          %p284 = scmp.lt.s32.totalorder %s18, 1
          %s285 = scalar_select %p284, %s18, 1
          %s286 = smul.addr %s285, 46
          %s287 = smul.addr %s286, 8
          %s288 = scalar_lea.vmem %s0, %s287
        $region52: #{_lambda_.1} parent=47 // pred_fallthru
          _
      $region48: #{_lambda_.1} parent=5 // pred_fallthru
        _
      %p289 = scmp.le.s32.totalorder 1, %s18
      %p290 = scmp.lt.s32.totalorder %s18, 3
      %p291 = pnand %p289, %p290
      %p292 = pneg %p291
      // Predicated region
      $region53: #{_lambda_.1} parent=5 // pred_check
        _
      $region54: #{_lambda_.1} parent=5 // pred_check_branch
        %294 = sbr.rel (%p291) target = $region56
      $region55: #{_lambda_.1} parent=5 // pred_region
        %s295 = ssub.s32 %s18, 1
        %p296 = scmp.lt.s32.totalorder %s23, 1
        %s297 = scalar_select %p296, %s23, 1
        %s298 = smul.addr %s297, 46
        %s299 = smul.addr %s298, 8
        %s300 = scalar_lea.vmem %s0, %s299
        %p301 = pneg %p44
        %p302 = pneg %p41
        %p303 = pneg %p65
        %p304 = pneg %p62
        %p305 = pneg %p86
        %p306 = pneg %p83
        %p307 = pneg %p107
        %p308 = pneg %p104
        %p309 = pneg %p128
        %p310 = pneg %p125
        %p311 = pneg %p149
        %p312 = pneg %p146
        %p313 = pneg %p170
        %p314 = pneg %p167
        %p315 = pneg %p191
        %p316 = pneg %p188
        %p317 = pneg %p212
        %p318 = pneg %p209
        %p319 = pneg %p238
        %p320 = pneg %p235
        %s321 = sand.u32 %s225, 1
        %s322 = scalar_lea.sflag [#allocation9], %s321
        %s323 = sand.u32 %s225, 1
        %s324 = scalar_lea.vmem [#allocation8], %s323
        %p325 = scmp.lt.s32.totalorder %s23, 1
        %s326 = scalar_select %p325, %s23, 1
        %s327 = smul.addr %s326, 46
        %s328 = smul.addr %s327, 8
        %s329 = scalar_lea.vmem %s0, %s328
        %v330 = vld [vmem:[%s329] sm:$0xff]
        %v331 = vld [vmem:[%s329 + $0x8] sm:$0xff]
        %v332 = vld [vmem:[%s329 + $0x10] sm:$0xff]
        %v333 = vld [vmem:[%s329 + $0x18] sm:$0xff]
        %v334 = vld [vmem:[%s329 + $0x20] sm:$0xff]
        %v335 = vld [vmem:[%s329 + $0x28] sm:$0xff]
        %v336 = vld [vmem:[%s329 + $0x30] sm:$0xff]
        %v337 = vld [vmem:[%s329 + $0x38] sm:$0xff]
        %v338 = vld [vmem:[%s329 + $0x40] sm:$0xff]
        %v339 = vld [vmem:[%s329 + $0x48] sm:$0xff]
        %v340 = vld [vmem:[%s329 + $0x50] sm:$0xff]
        %v341 = vld [vmem:[%s329 + $0x58] sm:$0xff]
        %v342 = vld [vmem:[%s329 + $0x60] sm:$0xff]
        %v343 = vld [vmem:[%s329 + $0x68] sm:$0xff]
        %v344 = vld [vmem:[%s329 + $0x70] sm:$0xff]
        %v345 = vld [vmem:[%s329 + $0x78] sm:$0xff]
        %v346 = vld [vmem:[%s329 + $0x80] sm:$0xff]
        %v347 = vld [vmem:[%s329 + $0x88] sm:$0xff]
        %v348 = vld [vmem:[%s329 + $0x90] sm:$0xff]
        %v349 = vld [vmem:[%s329 + $0x98] sm:$0xff]
        %v350 = vld [vmem:[%s329 + $0xa0] sm:$0xff]
        %v351 = vld [vmem:[%s329 + $0xa8] sm:$0xff]
        %v352 = vld [vmem:[%s329 + $0xb0] sm:$0xff]
        %v353 = vld [vmem:[%s329 + $0xb8] sm:$0xff]
        %v354 = vld [vmem:[%s329 + $0xc0] sm:$0xff]
        %v355 = vld [vmem:[%s329 + $0xc8] sm:$0xff]
        %v356 = vld [vmem:[%s329 + $0xd0] sm:$0xff]
        %v357 = vld [vmem:[%s329 + $0xd8] sm:$0xff]
        %v358 = vld [vmem:[%s329 + $0xe0] sm:$0xff]
        %v359 = vld [vmem:[%s329 + $0xe8] sm:$0xff]
        %v360 = vld [vmem:[%s329 + $0xf0] sm:$0xff]
        %v361 = vld [vmem:[%s329 + $0xf8] sm:$0xff]
        %v362 = vld [vmem:[%s329 + $0x100] sm:$0xff]
        %v363 = vld [vmem:[%s329 + $0x108] sm:$0xff]
        %v364 = vld [vmem:[%s329 + $0x110] sm:$0xff]
        %v365 = vld [vmem:[%s329 + $0x118] sm:$0xff]
        %v366 = vld [vmem:[%s329 + $0x120] sm:$0xff]
        %v367 = vld [vmem:[%s329 + $0x128] sm:$0xff]
        %v368 = vld [vmem:[%s329 + $0x130] sm:$0xff]
        %v369 = vld [vmem:[%s329 + $0x138] sm:$0xff]
        %v370 = vld [vmem:[%s329 + $0x140] sm:$0xf]
        %v371 = vld [vmem:[%s1] sm:$0x1]
        %373 = vset.pattern.permute.xlu0 0
        %374 = vperm.xlu0 %373, %v330
        %v375 = vpop.permute.xlu0 %374
        %378 = vset.pattern.permute.xlu0 0
        %379 = vperm.xlu0 %378, %v331
        %v380 = vpop.permute.xlu0 %379
        %383 = vset.pattern.permute.xlu0 0
        %384 = vperm.xlu0 %383, %v332
        %v385 = vpop.permute.xlu0 %384
        %388 = vset.pattern.permute.xlu0 0
        %389 = vperm.xlu0 %388, %v333
        %v390 = vpop.permute.xlu0 %389
        %393 = vset.pattern.permute.xlu0 0
        %394 = vperm.xlu0 %393, %v334
        %v395 = vpop.permute.xlu0 %394
        %398 = vset.pattern.permute.xlu0 0
        %399 = vperm.xlu0 %398, %v335
        %v400 = vpop.permute.xlu0 %399
        %403 = vset.pattern.permute.xlu0 0
        %404 = vperm.xlu0 %403, %v336
        %v405 = vpop.permute.xlu0 %404
        %408 = vset.pattern.permute.xlu0 0
        %409 = vperm.xlu0 %408, %v337
        %v410 = vpop.permute.xlu0 %409
        %413 = vset.pattern.permute.xlu0 0
        %414 = vperm.xlu0 %413, %v338
        %v415 = vpop.permute.xlu0 %414
        %418 = vset.pattern.permute.xlu0 0
        %419 = vperm.xlu0 %418, %v339
        %v420 = vpop.permute.xlu0 %419
        %423 = vset.pattern.permute.xlu0 0
        %424 = vperm.xlu0 %423, %v340
        %v425 = vpop.permute.xlu0 %424
        %428 = vset.pattern.permute.xlu0 0
        %429 = vperm.xlu0 %428, %v341
        %v430 = vpop.permute.xlu0 %429
        %433 = vset.pattern.permute.xlu0 0
        %434 = vperm.xlu0 %433, %v342
        %v435 = vpop.permute.xlu0 %434
        %438 = vset.pattern.permute.xlu0 0
        %439 = vperm.xlu0 %438, %v343
        %v440 = vpop.permute.xlu0 %439
        %443 = vset.pattern.permute.xlu0 0
        %444 = vperm.xlu0 %443, %v344
        %v445 = vpop.permute.xlu0 %444
        %448 = vset.pattern.permute.xlu0 0
        %449 = vperm.xlu0 %448, %v345
        %v450 = vpop.permute.xlu0 %449
        %453 = vset.pattern.permute.xlu0 0
        %454 = vperm.xlu0 %453, %v346
        %v455 = vpop.permute.xlu0 %454
        %458 = vset.pattern.permute.xlu0 0
        %459 = vperm.xlu0 %458, %v347
        %v460 = vpop.permute.xlu0 %459
        %463 = vset.pattern.permute.xlu0 0
        %464 = vperm.xlu0 %463, %v348
        %v465 = vpop.permute.xlu0 %464
        %468 = vset.pattern.permute.xlu0 0
        %469 = vperm.xlu0 %468, %v349
        %v470 = vpop.permute.xlu0 %469
        %473 = vset.pattern.permute.xlu0 0
        %474 = vperm.xlu0 %473, %v350
        %v475 = vpop.permute.xlu0 %474
        %478 = vset.pattern.permute.xlu0 0
        %479 = vperm.xlu0 %478, %v351
        %v480 = vpop.permute.xlu0 %479
        %483 = vset.pattern.permute.xlu0 0
        %484 = vperm.xlu0 %483, %v352
        %v485 = vpop.permute.xlu0 %484
        %488 = vset.pattern.permute.xlu0 0
        %489 = vperm.xlu0 %488, %v353
        %v490 = vpop.permute.xlu0 %489
        %493 = vset.pattern.permute.xlu0 0
        %494 = vperm.xlu0 %493, %v354
        %v495 = vpop.permute.xlu0 %494
        %498 = vset.pattern.permute.xlu0 0
        %499 = vperm.xlu0 %498, %v355
        %v500 = vpop.permute.xlu0 %499
        %503 = vset.pattern.permute.xlu0 0
        %504 = vperm.xlu0 %503, %v356
        %v505 = vpop.permute.xlu0 %504
        %508 = vset.pattern.permute.xlu0 0
        %509 = vperm.xlu0 %508, %v357
        %v510 = vpop.permute.xlu0 %509
        %513 = vset.pattern.permute.xlu0 0
        %514 = vperm.xlu0 %513, %v358
        %v515 = vpop.permute.xlu0 %514
        %518 = vset.pattern.permute.xlu0 0
        %519 = vperm.xlu0 %518, %v359
        %v520 = vpop.permute.xlu0 %519
        %523 = vset.pattern.permute.xlu0 0
        %524 = vperm.xlu0 %523, %v360
        %v525 = vpop.permute.xlu0 %524
        %528 = vset.pattern.permute.xlu0 0
        %529 = vperm.xlu0 %528, %v361
        %v530 = vpop.permute.xlu0 %529
        %533 = vset.pattern.permute.xlu0 0
        %534 = vperm.xlu0 %533, %v362
        %v535 = vpop.permute.xlu0 %534
        %538 = vset.pattern.permute.xlu0 0
        %539 = vperm.xlu0 %538, %v363
        %v540 = vpop.permute.xlu0 %539
        %543 = vset.pattern.permute.xlu0 0
        %544 = vperm.xlu0 %543, %v364
        %v545 = vpop.permute.xlu0 %544
        %548 = vset.pattern.permute.xlu0 0
        %549 = vperm.xlu0 %548, %v365
        %v550 = vpop.permute.xlu0 %549
        %553 = vset.pattern.permute.xlu0 0
        %554 = vperm.xlu0 %553, %v366
        %v555 = vpop.permute.xlu0 %554
        %558 = vset.pattern.permute.xlu0 0
        %559 = vperm.xlu0 %558, %v367
        %v560 = vpop.permute.xlu0 %559
        %563 = vset.pattern.permute.xlu0 0
        %564 = vperm.xlu0 %563, %v368
        %v565 = vpop.permute.xlu0 %564
        %568 = vset.pattern.permute.xlu0 0
        %569 = vperm.xlu0 %568, %v369
        %v570 = vpop.permute.xlu0 %569
        %573 = vset.pattern.permute.xlu0 0
        %574 = vperm.xlu0 %573, %v370
        %v575 = vpop.permute.xlu0 %574
        %v577 = vlaneseq
        %v578 = vshrl.u32 %v577, 7
        %v579 = vsub.s32 0, %v578
        %v580 = vrot.slane %v371, %v579
        %v581 = vmul.f32 %v375, %v580
        %v582 = vmul.f32 %v380, %v580
        %v583 = vmul.f32 %v385, %v580
        %v584 = vmul.f32 %v390, %v580
        %v585 = vmul.f32 %v395, %v580
        %v586 = vmul.f32 %v400, %v580
        %v587 = vmul.f32 %v405, %v580
        %v588 = vmul.f32 %v410, %v580
        %v589 = vmul.f32 %v415, %v580
        %v590 = vmul.f32 %v420, %v580
        %v591 = vmul.f32 %v425, %v580
        %v592 = vmul.f32 %v430, %v580
        %v593 = vmul.f32 %v435, %v580
        %v594 = vmul.f32 %v440, %v580
        %v595 = vmul.f32 %v445, %v580
        %v596 = vmul.f32 %v450, %v580
        %v597 = vmul.f32 %v455, %v580
        %v598 = vmul.f32 %v460, %v580
        %v599 = vmul.f32 %v465, %v580
        %v600 = vmul.f32 %v470, %v580
        %v601 = vmul.f32 %v475, %v580
        %v602 = vmul.f32 %v480, %v580
        %v603 = vmul.f32 %v485, %v580
        %v604 = vmul.f32 %v490, %v580
        %v605 = vmul.f32 %v495, %v580
        %v606 = vmul.f32 %v500, %v580
        %v607 = vmul.f32 %v505, %v580
        %v608 = vmul.f32 %v510, %v580
        %v609 = vmul.f32 %v515, %v580
        %v610 = vmul.f32 %v520, %v580
        %v611 = vmul.f32 %v525, %v580
        %v612 = vmul.f32 %v530, %v580
        %v613 = vmul.f32 %v535, %v580
        %v614 = vmul.f32 %v540, %v580
        %v615 = vmul.f32 %v545, %v580
        %v616 = vmul.f32 %v550, %v580
        %v617 = vmul.f32 %v555, %v580
        %v618 = vmul.f32 %v560, %v580
        %v619 = vmul.f32 %v565, %v580
        %v620 = vmul.f32 %v570, %v580
        %v621 = vmul.f32 %v575, %v580
        %v622 = vld [vmem:[%s329 + $0x1] sm:$0xff]
        %v623 = vld [vmem:[%s329 + $0x9] sm:$0xff]
        %v624 = vld [vmem:[%s329 + $0x11] sm:$0xff]
        %v625 = vld [vmem:[%s329 + $0x19] sm:$0xff]
        %v626 = vld [vmem:[%s329 + $0x21] sm:$0xff]
        %v627 = vld [vmem:[%s329 + $0x29] sm:$0xff]
        %v628 = vld [vmem:[%s329 + $0x31] sm:$0xff]
        %v629 = vld [vmem:[%s329 + $0x39] sm:$0xff]
        %v630 = vld [vmem:[%s329 + $0x41] sm:$0xff]
        %v631 = vld [vmem:[%s329 + $0x49] sm:$0xff]
        %v632 = vld [vmem:[%s329 + $0x51] sm:$0xff]
        %v633 = vld [vmem:[%s329 + $0x59] sm:$0xff]
        %v634 = vld [vmem:[%s329 + $0x61] sm:$0xff]
        %v635 = vld [vmem:[%s329 + $0x69] sm:$0xff]
        %v636 = vld [vmem:[%s329 + $0x71] sm:$0xff]
        %v637 = vld [vmem:[%s329 + $0x79] sm:$0xff]
        %v638 = vld [vmem:[%s329 + $0x81] sm:$0xff]
        %v639 = vld [vmem:[%s329 + $0x89] sm:$0xff]
        %v640 = vld [vmem:[%s329 + $0x91] sm:$0xff]
        %v641 = vld [vmem:[%s329 + $0x99] sm:$0xff]
        %v642 = vld [vmem:[%s329 + $0xa1] sm:$0xff]
        %v643 = vld [vmem:[%s329 + $0xa9] sm:$0xff]
        %v644 = vld [vmem:[%s329 + $0xb1] sm:$0xff]
        %v645 = vld [vmem:[%s329 + $0xb9] sm:$0xff]
        %v646 = vld [vmem:[%s329 + $0xc1] sm:$0xff]
        %v647 = vld [vmem:[%s329 + $0xc9] sm:$0xff]
        %v648 = vld [vmem:[%s329 + $0xd1] sm:$0xff]
        %v649 = vld [vmem:[%s329 + $0xd9] sm:$0xff]
        %v650 = vld [vmem:[%s329 + $0xe1] sm:$0xff]
        %v651 = vld [vmem:[%s329 + $0xe9] sm:$0xff]
        %v652 = vld [vmem:[%s329 + $0xf1] sm:$0xff]
        %v653 = vld [vmem:[%s329 + $0xf9] sm:$0xff]
        %v654 = vld [vmem:[%s329 + $0x101] sm:$0xff]
        %v655 = vld [vmem:[%s329 + $0x109] sm:$0xff]
        %v656 = vld [vmem:[%s329 + $0x111] sm:$0xff]
        %v657 = vld [vmem:[%s329 + $0x119] sm:$0xff]
        %v658 = vld [vmem:[%s329 + $0x121] sm:$0xff]
        %v659 = vld [vmem:[%s329 + $0x129] sm:$0xff]
        %v660 = vld [vmem:[%s329 + $0x131] sm:$0xff]
        %v661 = vld [vmem:[%s329 + $0x139] sm:$0xff]
        %v662 = vld [vmem:[%s329 + $0x141] sm:$0xf]
        %v663 = vld [vmem:[%s1 + $0x1] sm:$0x1]
        %665 = vset.pattern.permute.xlu0 0
        %666 = vperm.xlu0 %665, %v622
        %v667 = vpop.permute.xlu0 %666
        %670 = vset.pattern.permute.xlu0 0
        %671 = vperm.xlu0 %670, %v623
        %v672 = vpop.permute.xlu0 %671
        %675 = vset.pattern.permute.xlu0 0
        %676 = vperm.xlu0 %675, %v624
        %v677 = vpop.permute.xlu0 %676
        %680 = vset.pattern.permute.xlu0 0
        %681 = vperm.xlu0 %680, %v625
        %v682 = vpop.permute.xlu0 %681
        %685 = vset.pattern.permute.xlu0 0
        %686 = vperm.xlu0 %685, %v626
        %v687 = vpop.permute.xlu0 %686
        %690 = vset.pattern.permute.xlu0 0
        %691 = vperm.xlu0 %690, %v627
        %v692 = vpop.permute.xlu0 %691
        %695 = vset.pattern.permute.xlu0 0
        %696 = vperm.xlu0 %695, %v628
        %v697 = vpop.permute.xlu0 %696
        %700 = vset.pattern.permute.xlu0 0
        %701 = vperm.xlu0 %700, %v629
        %v702 = vpop.permute.xlu0 %701
        %705 = vset.pattern.permute.xlu0 0
        %706 = vperm.xlu0 %705, %v630
        %v707 = vpop.permute.xlu0 %706
        %710 = vset.pattern.permute.xlu0 0
        %711 = vperm.xlu0 %710, %v631
        %v712 = vpop.permute.xlu0 %711
        %715 = vset.pattern.permute.xlu0 0
        %716 = vperm.xlu0 %715, %v632
        %v717 = vpop.permute.xlu0 %716
        %720 = vset.pattern.permute.xlu0 0
        %721 = vperm.xlu0 %720, %v633
        %v722 = vpop.permute.xlu0 %721
        %725 = vset.pattern.permute.xlu0 0
        %726 = vperm.xlu0 %725, %v634
        %v727 = vpop.permute.xlu0 %726
        %730 = vset.pattern.permute.xlu0 0
        %731 = vperm.xlu0 %730, %v635
        %v732 = vpop.permute.xlu0 %731
        %735 = vset.pattern.permute.xlu0 0
        %736 = vperm.xlu0 %735, %v636
        %v737 = vpop.permute.xlu0 %736
        %740 = vset.pattern.permute.xlu0 0
        %741 = vperm.xlu0 %740, %v637
        %v742 = vpop.permute.xlu0 %741
        %745 = vset.pattern.permute.xlu0 0
        %746 = vperm.xlu0 %745, %v638
        %v747 = vpop.permute.xlu0 %746
        %750 = vset.pattern.permute.xlu0 0
        %751 = vperm.xlu0 %750, %v639
        %v752 = vpop.permute.xlu0 %751
        %755 = vset.pattern.permute.xlu0 0
        %756 = vperm.xlu0 %755, %v640
        %v757 = vpop.permute.xlu0 %756
        %760 = vset.pattern.permute.xlu0 0
        %761 = vperm.xlu0 %760, %v641
        %v762 = vpop.permute.xlu0 %761
        %765 = vset.pattern.permute.xlu0 0
        %766 = vperm.xlu0 %765, %v642
        %v767 = vpop.permute.xlu0 %766
        %770 = vset.pattern.permute.xlu0 0
        %771 = vperm.xlu0 %770, %v643
        %v772 = vpop.permute.xlu0 %771
        %775 = vset.pattern.permute.xlu0 0
        %776 = vperm.xlu0 %775, %v644
        %v777 = vpop.permute.xlu0 %776
        %780 = vset.pattern.permute.xlu0 0
        %781 = vperm.xlu0 %780, %v645
        %v782 = vpop.permute.xlu0 %781
        %785 = vset.pattern.permute.xlu0 0
        %786 = vperm.xlu0 %785, %v646
        %v787 = vpop.permute.xlu0 %786
        %790 = vset.pattern.permute.xlu0 0
        %791 = vperm.xlu0 %790, %v647
        %v792 = vpop.permute.xlu0 %791
        %795 = vset.pattern.permute.xlu0 0
        %796 = vperm.xlu0 %795, %v648
        %v797 = vpop.permute.xlu0 %796
        %800 = vset.pattern.permute.xlu0 0
        %801 = vperm.xlu0 %800, %v649
        %v802 = vpop.permute.xlu0 %801
        %805 = vset.pattern.permute.xlu0 0
        %806 = vperm.xlu0 %805, %v650
        %v807 = vpop.permute.xlu0 %806
        %810 = vset.pattern.permute.xlu0 0
        %811 = vperm.xlu0 %810, %v651
        %v812 = vpop.permute.xlu0 %811
        %815 = vset.pattern.permute.xlu0 0
        %816 = vperm.xlu0 %815, %v652
        %v817 = vpop.permute.xlu0 %816
        %820 = vset.pattern.permute.xlu0 0
        %821 = vperm.xlu0 %820, %v653
        %v822 = vpop.permute.xlu0 %821
        %825 = vset.pattern.permute.xlu0 0
        %826 = vperm.xlu0 %825, %v654
        %v827 = vpop.permute.xlu0 %826
        %830 = vset.pattern.permute.xlu0 0
        %831 = vperm.xlu0 %830, %v655
        %v832 = vpop.permute.xlu0 %831
        %835 = vset.pattern.permute.xlu0 0
        %836 = vperm.xlu0 %835, %v656
        %v837 = vpop.permute.xlu0 %836
        %840 = vset.pattern.permute.xlu0 0
        %841 = vperm.xlu0 %840, %v657
        %v842 = vpop.permute.xlu0 %841
        %845 = vset.pattern.permute.xlu0 0
        %846 = vperm.xlu0 %845, %v658
        %v847 = vpop.permute.xlu0 %846
        %850 = vset.pattern.permute.xlu0 0
        %851 = vperm.xlu0 %850, %v659
        %v852 = vpop.permute.xlu0 %851
        %855 = vset.pattern.permute.xlu0 0
        %856 = vperm.xlu0 %855, %v660
        %v857 = vpop.permute.xlu0 %856
        %860 = vset.pattern.permute.xlu0 0
        %861 = vperm.xlu0 %860, %v661
        %v862 = vpop.permute.xlu0 %861
        %865 = vset.pattern.permute.xlu0 0
        %866 = vperm.xlu0 %865, %v662
        %v867 = vpop.permute.xlu0 %866
        %v869 = vlaneseq
        %v870 = vshrl.u32 %v869, 7
        %v871 = vsub.s32 0, %v870
        %v872 = vrot.slane %v663, %v871
        %v873 = vmul.f32 %v667, %v872
        %v874 = vmul.f32 %v672, %v872
        %v875 = vmul.f32 %v677, %v872
        %v876 = vmul.f32 %v682, %v872
        %v877 = vmul.f32 %v687, %v872
        %v878 = vmul.f32 %v692, %v872
        %v879 = vmul.f32 %v697, %v872
        %v880 = vmul.f32 %v702, %v872
        %v881 = vmul.f32 %v707, %v872
        %v882 = vmul.f32 %v712, %v872
        %v883 = vmul.f32 %v717, %v872
        %v884 = vmul.f32 %v722, %v872
        %v885 = vmul.f32 %v727, %v872
        %v886 = vmul.f32 %v732, %v872
        %v887 = vmul.f32 %v737, %v872
        %v888 = vmul.f32 %v742, %v872
        %v889 = vmul.f32 %v747, %v872
        %v890 = vmul.f32 %v752, %v872
        %v891 = vmul.f32 %v757, %v872
        %v892 = vmul.f32 %v762, %v872
        %v893 = vmul.f32 %v767, %v872
        %v894 = vmul.f32 %v772, %v872
        %v895 = vmul.f32 %v777, %v872
        %v896 = vmul.f32 %v782, %v872
        %v897 = vmul.f32 %v787, %v872
        %v898 = vmul.f32 %v792, %v872
        %v899 = vmul.f32 %v797, %v872
        %v900 = vmul.f32 %v802, %v872
        %v901 = vmul.f32 %v807, %v872
        %v902 = vmul.f32 %v812, %v872
        %v903 = vmul.f32 %v817, %v872
        %v904 = vmul.f32 %v822, %v872
        %v905 = vmul.f32 %v827, %v872
        %v906 = vmul.f32 %v832, %v872
        %v907 = vmul.f32 %v837, %v872
        %v908 = vmul.f32 %v842, %v872
        %v909 = vmul.f32 %v847, %v872
        %v910 = vmul.f32 %v852, %v872
        %v911 = vmul.f32 %v857, %v872
        %v912 = vmul.f32 %v862, %v872
        %v913 = vmul.f32 %v867, %v872
        %v914 = vadd.f32 %v581, %v873
        %v915 = vadd.f32 %v582, %v874
        %v916 = vadd.f32 %v583, %v875
        %v917 = vadd.f32 %v584, %v876
        %v918 = vadd.f32 %v585, %v877
        %v919 = vadd.f32 %v586, %v878
        %v920 = vadd.f32 %v587, %v879
        %v921 = vadd.f32 %v588, %v880
        %v922 = vadd.f32 %v589, %v881
        %v923 = vadd.f32 %v590, %v882
        %v924 = vadd.f32 %v591, %v883
        %v925 = vadd.f32 %v592, %v884
        %v926 = vadd.f32 %v593, %v885
        %v927 = vadd.f32 %v594, %v886
        %v928 = vadd.f32 %v595, %v887
        %v929 = vadd.f32 %v596, %v888
        %v930 = vadd.f32 %v597, %v889
        %v931 = vadd.f32 %v598, %v890
        %v932 = vadd.f32 %v599, %v891
        %v933 = vadd.f32 %v600, %v892
        %v934 = vadd.f32 %v601, %v893
        %v935 = vadd.f32 %v602, %v894
        %v936 = vadd.f32 %v603, %v895
        %v937 = vadd.f32 %v604, %v896
        %v938 = vadd.f32 %v605, %v897
        %v939 = vadd.f32 %v606, %v898
        %v940 = vadd.f32 %v607, %v899
        %v941 = vadd.f32 %v608, %v900
        %v942 = vadd.f32 %v609, %v901
        %v943 = vadd.f32 %v610, %v902
        %v944 = vadd.f32 %v611, %v903
        %v945 = vadd.f32 %v612, %v904
        %v946 = vadd.f32 %v613, %v905
        %v947 = vadd.f32 %v614, %v906
        %v948 = vadd.f32 %v615, %v907
        %v949 = vadd.f32 %v616, %v908
        %v950 = vadd.f32 %v617, %v909
        %v951 = vadd.f32 %v618, %v910
        %v952 = vadd.f32 %v619, %v911
        %v953 = vadd.f32 %v620, %v912
        %v954 = vadd.f32 %v621, %v913
        %v955 = vld [vmem:[%s329 + $0x2] sm:$0xff]
        %v956 = vld [vmem:[%s329 + $0xa] sm:$0xff]
        %v957 = vld [vmem:[%s329 + $0x12] sm:$0xff]
        %v958 = vld [vmem:[%s329 + $0x1a] sm:$0xff]
        %v959 = vld [vmem:[%s329 + $0x22] sm:$0xff]
        %v960 = vld [vmem:[%s329 + $0x2a] sm:$0xff]
        %v961 = vld [vmem:[%s329 + $0x32] sm:$0xff]
        %v962 = vld [vmem:[%s329 + $0x3a] sm:$0xff]
        %v963 = vld [vmem:[%s329 + $0x42] sm:$0xff]
        %v964 = vld [vmem:[%s329 + $0x4a] sm:$0xff]
        %v965 = vld [vmem:[%s329 + $0x52] sm:$0xff]
        %v966 = vld [vmem:[%s329 + $0x5a] sm:$0xff]
        %v967 = vld [vmem:[%s329 + $0x62] sm:$0xff]
        %v968 = vld [vmem:[%s329 + $0x6a] sm:$0xff]
        %v969 = vld [vmem:[%s329 + $0x72] sm:$0xff]
        %v970 = vld [vmem:[%s329 + $0x7a] sm:$0xff]
        %v971 = vld [vmem:[%s329 + $0x82] sm:$0xff]
        %v972 = vld [vmem:[%s329 + $0x8a] sm:$0xff]
        %v973 = vld [vmem:[%s329 + $0x92] sm:$0xff]
        %v974 = vld [vmem:[%s329 + $0x9a] sm:$0xff]
        %v975 = vld [vmem:[%s329 + $0xa2] sm:$0xff]
        %v976 = vld [vmem:[%s329 + $0xaa] sm:$0xff]
        %v977 = vld [vmem:[%s329 + $0xb2] sm:$0xff]
        %v978 = vld [vmem:[%s329 + $0xba] sm:$0xff]
        %v979 = vld [vmem:[%s329 + $0xc2] sm:$0xff]
        %v980 = vld [vmem:[%s329 + $0xca] sm:$0xff]
        %v981 = vld [vmem:[%s329 + $0xd2] sm:$0xff]
        %v982 = vld [vmem:[%s329 + $0xda] sm:$0xff]
        %v983 = vld [vmem:[%s329 + $0xe2] sm:$0xff]
        %v984 = vld [vmem:[%s329 + $0xea] sm:$0xff]
        %v985 = vld [vmem:[%s329 + $0xf2] sm:$0xff]
        %v986 = vld [vmem:[%s329 + $0xfa] sm:$0xff]
        %v987 = vld [vmem:[%s329 + $0x102] sm:$0xff]
        %v988 = vld [vmem:[%s329 + $0x10a] sm:$0xff]
        %v989 = vld [vmem:[%s329 + $0x112] sm:$0xff]
        %v990 = vld [vmem:[%s329 + $0x11a] sm:$0xff]
        %v991 = vld [vmem:[%s329 + $0x122] sm:$0xff]
        %v992 = vld [vmem:[%s329 + $0x12a] sm:$0xff]
        %v993 = vld [vmem:[%s329 + $0x132] sm:$0xff]
        %v994 = vld [vmem:[%s329 + $0x13a] sm:$0xff]
        %v995 = vld [vmem:[%s329 + $0x142] sm:$0xf]
        %v996 = vld [vmem:[%s1 + $0x2] sm:$0x1]
        %998 = vset.pattern.permute.xlu0 0
        %999 = vperm.xlu0 %998, %v955
        %v1000 = vpop.permute.xlu0 %999
        %1003 = vset.pattern.permute.xlu0 0
        %1004 = vperm.xlu0 %1003, %v956
        %v1005 = vpop.permute.xlu0 %1004
        %1008 = vset.pattern.permute.xlu0 0
        %1009 = vperm.xlu0 %1008, %v957
        %v1010 = vpop.permute.xlu0 %1009
        %1013 = vset.pattern.permute.xlu0 0
        %1014 = vperm.xlu0 %1013, %v958
        %v1015 = vpop.permute.xlu0 %1014
        %1018 = vset.pattern.permute.xlu0 0
        %1019 = vperm.xlu0 %1018, %v959
        %v1020 = vpop.permute.xlu0 %1019
        %1023 = vset.pattern.permute.xlu0 0
        %1024 = vperm.xlu0 %1023, %v960
        %v1025 = vpop.permute.xlu0 %1024
        %1028 = vset.pattern.permute.xlu0 0
        %1029 = vperm.xlu0 %1028, %v961
        %v1030 = vpop.permute.xlu0 %1029
        %1033 = vset.pattern.permute.xlu0 0
        %1034 = vperm.xlu0 %1033, %v962
        %v1035 = vpop.permute.xlu0 %1034
        %1038 = vset.pattern.permute.xlu0 0
        %1039 = vperm.xlu0 %1038, %v963
        %v1040 = vpop.permute.xlu0 %1039
        %1043 = vset.pattern.permute.xlu0 0
        %1044 = vperm.xlu0 %1043, %v964
        %v1045 = vpop.permute.xlu0 %1044
        %1048 = vset.pattern.permute.xlu0 0
        %1049 = vperm.xlu0 %1048, %v965
        %v1050 = vpop.permute.xlu0 %1049
        %1053 = vset.pattern.permute.xlu0 0
        %1054 = vperm.xlu0 %1053, %v966
        %v1055 = vpop.permute.xlu0 %1054
        %1058 = vset.pattern.permute.xlu0 0
        %1059 = vperm.xlu0 %1058, %v967
        %v1060 = vpop.permute.xlu0 %1059
        %1063 = vset.pattern.permute.xlu0 0
        %1064 = vperm.xlu0 %1063, %v968
        %v1065 = vpop.permute.xlu0 %1064
        %1068 = vset.pattern.permute.xlu0 0
        %1069 = vperm.xlu0 %1068, %v969
        %v1070 = vpop.permute.xlu0 %1069
        %1073 = vset.pattern.permute.xlu0 0
        %1074 = vperm.xlu0 %1073, %v970
        %v1075 = vpop.permute.xlu0 %1074
        %1078 = vset.pattern.permute.xlu0 0
        %1079 = vperm.xlu0 %1078, %v971
        %v1080 = vpop.permute.xlu0 %1079
        %1083 = vset.pattern.permute.xlu0 0
        %1084 = vperm.xlu0 %1083, %v972
        %v1085 = vpop.permute.xlu0 %1084
        %1088 = vset.pattern.permute.xlu0 0
        %1089 = vperm.xlu0 %1088, %v973
        %v1090 = vpop.permute.xlu0 %1089
        %1093 = vset.pattern.permute.xlu0 0
        %1094 = vperm.xlu0 %1093, %v974
        %v1095 = vpop.permute.xlu0 %1094
        %1098 = vset.pattern.permute.xlu0 0
        %1099 = vperm.xlu0 %1098, %v975
        %v1100 = vpop.permute.xlu0 %1099
        %1103 = vset.pattern.permute.xlu0 0
        %1104 = vperm.xlu0 %1103, %v976
        %v1105 = vpop.permute.xlu0 %1104
        %1108 = vset.pattern.permute.xlu0 0
        %1109 = vperm.xlu0 %1108, %v977
        %v1110 = vpop.permute.xlu0 %1109
        %1113 = vset.pattern.permute.xlu0 0
        %1114 = vperm.xlu0 %1113, %v978
        %v1115 = vpop.permute.xlu0 %1114
        %1118 = vset.pattern.permute.xlu0 0
        %1119 = vperm.xlu0 %1118, %v979
        %v1120 = vpop.permute.xlu0 %1119
        %1123 = vset.pattern.permute.xlu0 0
        %1124 = vperm.xlu0 %1123, %v980
        %v1125 = vpop.permute.xlu0 %1124
        %1128 = vset.pattern.permute.xlu0 0
        %1129 = vperm.xlu0 %1128, %v981
        %v1130 = vpop.permute.xlu0 %1129
        %1133 = vset.pattern.permute.xlu0 0
        %1134 = vperm.xlu0 %1133, %v982
        %v1135 = vpop.permute.xlu0 %1134
        %1138 = vset.pattern.permute.xlu0 0
        %1139 = vperm.xlu0 %1138, %v983
        %v1140 = vpop.permute.xlu0 %1139
        %1143 = vset.pattern.permute.xlu0 0
        %1144 = vperm.xlu0 %1143, %v984
        %v1145 = vpop.permute.xlu0 %1144
        %1148 = vset.pattern.permute.xlu0 0
        %1149 = vperm.xlu0 %1148, %v985
        %v1150 = vpop.permute.xlu0 %1149
        %1153 = vset.pattern.permute.xlu0 0
        %1154 = vperm.xlu0 %1153, %v986
        %v1155 = vpop.permute.xlu0 %1154
        %1158 = vset.pattern.permute.xlu0 0
        %1159 = vperm.xlu0 %1158, %v987
        %v1160 = vpop.permute.xlu0 %1159
        %1163 = vset.pattern.permute.xlu0 0
        %1164 = vperm.xlu0 %1163, %v988
        %v1165 = vpop.permute.xlu0 %1164
        %1168 = vset.pattern.permute.xlu0 0
        %1169 = vperm.xlu0 %1168, %v989
        %v1170 = vpop.permute.xlu0 %1169
        %1173 = vset.pattern.permute.xlu0 0
        %1174 = vperm.xlu0 %1173, %v990
        %v1175 = vpop.permute.xlu0 %1174
        %1178 = vset.pattern.permute.xlu0 0
        %1179 = vperm.xlu0 %1178, %v991
        %v1180 = vpop.permute.xlu0 %1179
        %1183 = vset.pattern.permute.xlu0 0
        %1184 = vperm.xlu0 %1183, %v992
        %v1185 = vpop.permute.xlu0 %1184
        %1188 = vset.pattern.permute.xlu0 0
        %1189 = vperm.xlu0 %1188, %v993
        %v1190 = vpop.permute.xlu0 %1189
        %1193 = vset.pattern.permute.xlu0 0
        %1194 = vperm.xlu0 %1193, %v994
        %v1195 = vpop.permute.xlu0 %1194
        %1198 = vset.pattern.permute.xlu0 0
        %1199 = vperm.xlu0 %1198, %v995
        %v1200 = vpop.permute.xlu0 %1199
        %v1202 = vlaneseq
        %v1203 = vshrl.u32 %v1202, 7
        %v1204 = vsub.s32 0, %v1203
        %v1205 = vrot.slane %v996, %v1204
        %v1206 = vmul.f32 %v1000, %v1205
        %v1207 = vmul.f32 %v1005, %v1205
        %v1208 = vmul.f32 %v1010, %v1205
        %v1209 = vmul.f32 %v1015, %v1205
        %v1210 = vmul.f32 %v1020, %v1205
        %v1211 = vmul.f32 %v1025, %v1205
        %v1212 = vmul.f32 %v1030, %v1205
        %v1213 = vmul.f32 %v1035, %v1205
        %v1214 = vmul.f32 %v1040, %v1205
        %v1215 = vmul.f32 %v1045, %v1205
        %v1216 = vmul.f32 %v1050, %v1205
        %v1217 = vmul.f32 %v1055, %v1205
        %v1218 = vmul.f32 %v1060, %v1205
        %v1219 = vmul.f32 %v1065, %v1205
        %v1220 = vmul.f32 %v1070, %v1205
        %v1221 = vmul.f32 %v1075, %v1205
        %v1222 = vmul.f32 %v1080, %v1205
        %v1223 = vmul.f32 %v1085, %v1205
        %v1224 = vmul.f32 %v1090, %v1205
        %v1225 = vmul.f32 %v1095, %v1205
        %v1226 = vmul.f32 %v1100, %v1205
        %v1227 = vmul.f32 %v1105, %v1205
        %v1228 = vmul.f32 %v1110, %v1205
        %v1229 = vmul.f32 %v1115, %v1205
        %v1230 = vmul.f32 %v1120, %v1205
        %v1231 = vmul.f32 %v1125, %v1205
        %v1232 = vmul.f32 %v1130, %v1205
        %v1233 = vmul.f32 %v1135, %v1205
        %v1234 = vmul.f32 %v1140, %v1205
        %v1235 = vmul.f32 %v1145, %v1205
        %v1236 = vmul.f32 %v1150, %v1205
        %v1237 = vmul.f32 %v1155, %v1205
        %v1238 = vmul.f32 %v1160, %v1205
        %v1239 = vmul.f32 %v1165, %v1205
        %v1240 = vmul.f32 %v1170, %v1205
        %v1241 = vmul.f32 %v1175, %v1205
        %v1242 = vmul.f32 %v1180, %v1205
        %v1243 = vmul.f32 %v1185, %v1205
        %v1244 = vmul.f32 %v1190, %v1205
        %v1245 = vmul.f32 %v1195, %v1205
        %v1246 = vmul.f32 %v1200, %v1205
        %v1247 = vadd.f32 %v914, %v1206
        %v1248 = vadd.f32 %v915, %v1207
        %v1249 = vadd.f32 %v916, %v1208
        %v1250 = vadd.f32 %v917, %v1209
        %v1251 = vadd.f32 %v918, %v1210
        %v1252 = vadd.f32 %v919, %v1211
        %v1253 = vadd.f32 %v920, %v1212
        %v1254 = vadd.f32 %v921, %v1213
        %v1255 = vadd.f32 %v922, %v1214
        %v1256 = vadd.f32 %v923, %v1215
        %v1257 = vadd.f32 %v924, %v1216
        %v1258 = vadd.f32 %v925, %v1217
        %v1259 = vadd.f32 %v926, %v1218
        %v1260 = vadd.f32 %v927, %v1219
        %v1261 = vadd.f32 %v928, %v1220
        %v1262 = vadd.f32 %v929, %v1221
        %v1263 = vadd.f32 %v930, %v1222
        %v1264 = vadd.f32 %v931, %v1223
        %v1265 = vadd.f32 %v932, %v1224
        %v1266 = vadd.f32 %v933, %v1225
        %v1267 = vadd.f32 %v934, %v1226
        %v1268 = vadd.f32 %v935, %v1227
        %v1269 = vadd.f32 %v936, %v1228
        %v1270 = vadd.f32 %v937, %v1229
        %v1271 = vadd.f32 %v938, %v1230
        %v1272 = vadd.f32 %v939, %v1231
        %v1273 = vadd.f32 %v940, %v1232
        %v1274 = vadd.f32 %v941, %v1233
        %v1275 = vadd.f32 %v942, %v1234
        %v1276 = vadd.f32 %v943, %v1235
        %v1277 = vadd.f32 %v944, %v1236
        %v1278 = vadd.f32 %v945, %v1237
        %v1279 = vadd.f32 %v946, %v1238
        %v1280 = vadd.f32 %v947, %v1239
        %v1281 = vadd.f32 %v948, %v1240
        %v1282 = vadd.f32 %v949, %v1241
        %v1283 = vadd.f32 %v950, %v1242
        %v1284 = vadd.f32 %v951, %v1243
        %v1285 = vadd.f32 %v952, %v1244
        %v1286 = vadd.f32 %v953, %v1245
        %v1287 = vadd.f32 %v954, %v1246
        %v1288 = vld [vmem:[%s329 + $0x12] sm:$0xff]
        %v1289 = vld [vmem:[%s329 + $0x1a] sm:$0xff]
        %v1290 = vld [vmem:[%s329 + $0x22] sm:$0xff]
        %v1291 = vld [vmem:[%s329 + $0x2a] sm:$0xff]
        %v1292 = vld [vmem:[%s329 + $0x32] sm:$0xff]
        %v1293 = vld [vmem:[%s329 + $0x3a] sm:$0xff]
        %v1294 = vld [vmem:[%s329 + $0x42] sm:$0xff]
        %v1295 = vld [vmem:[%s329 + $0x4a] sm:$0xff]
        %v1296 = vld [vmem:[%s329 + $0x52] sm:$0xff]
        %v1297 = vld [vmem:[%s329 + $0x5a] sm:$0xff]
        %v1298 = vld [vmem:[%s329 + $0x62] sm:$0xff]
        %v1299 = vld [vmem:[%s329 + $0x6a] sm:$0xff]
        %v1300 = vld [vmem:[%s329 + $0x72] sm:$0xff]
        %v1301 = vld [vmem:[%s329 + $0x7a] sm:$0xff]
        %v1302 = vld [vmem:[%s329 + $0x82] sm:$0xff]
        %v1303 = vld [vmem:[%s329 + $0x8a] sm:$0xff]
        %v1304 = vld [vmem:[%s329 + $0x92] sm:$0xff]
        %v1305 = vld [vmem:[%s329 + $0x9a] sm:$0xff]
        %v1306 = vld [vmem:[%s329 + $0xa2] sm:$0xff]
        %v1307 = vld [vmem:[%s329 + $0xaa] sm:$0xff]
        %v1308 = vld [vmem:[%s329 + $0xb2] sm:$0xff]
        %v1309 = vld [vmem:[%s329 + $0xba] sm:$0xff]
        %v1310 = vld [vmem:[%s329 + $0xc2] sm:$0xff]
        %v1311 = vld [vmem:[%s329 + $0xca] sm:$0xff]
        %v1312 = vld [vmem:[%s329 + $0xd2] sm:$0xff]
        %v1313 = vld [vmem:[%s329 + $0xda] sm:$0xff]
        %v1314 = vld [vmem:[%s329 + $0xe2] sm:$0xff]
        %v1315 = vld [vmem:[%s329 + $0xea] sm:$0xff]
        %v1316 = vld [vmem:[%s329 + $0xf2] sm:$0xff]
        %v1317 = vld [vmem:[%s329 + $0xfa] sm:$0xff]
        %v1318 = vld [vmem:[%s329 + $0x102] sm:$0xff]
        %v1319 = vld [vmem:[%s329 + $0x10a] sm:$0xff]
        %v1320 = vld [vmem:[%s329 + $0x112] sm:$0xff]
        %v1321 = vld [vmem:[%s329 + $0x11a] sm:$0xff]
        %v1322 = vld [vmem:[%s329 + $0x122] sm:$0xff]
        %v1323 = vld [vmem:[%s329 + $0x12a] sm:$0xff]
        %v1324 = vld [vmem:[%s329 + $0x132] sm:$0xff]
        %v1325 = vld [vmem:[%s329 + $0x13a] sm:$0xff]
        %v1326 = vld [vmem:[%s329 + $0x142] sm:$0xff]
        %v1327 = vld [vmem:[%s329 + $0x14a] sm:$0xff]
        %v1328 = vld [vmem:[%s329 + $0x152] sm:$0xf]
        %v1329 = vld [vmem:[%s1 + $0x3] sm:$0x1]
        %1331 = vset.pattern.permute.xlu0 0
        %1332 = vperm.xlu0 %1331, %v1288
        %v1333 = vpop.permute.xlu0 %1332
        %1336 = vset.pattern.permute.xlu0 0
        %1337 = vperm.xlu0 %1336, %v1289
        %v1338 = vpop.permute.xlu0 %1337
        %1341 = vset.pattern.permute.xlu0 0
        %1342 = vperm.xlu0 %1341, %v1290
        %v1343 = vpop.permute.xlu0 %1342
        %1346 = vset.pattern.permute.xlu0 0
        %1347 = vperm.xlu0 %1346, %v1291
        %v1348 = vpop.permute.xlu0 %1347
        %1351 = vset.pattern.permute.xlu0 0
        %1352 = vperm.xlu0 %1351, %v1292
        %v1353 = vpop.permute.xlu0 %1352
        %1356 = vset.pattern.permute.xlu0 0
        %1357 = vperm.xlu0 %1356, %v1293
        %v1358 = vpop.permute.xlu0 %1357
        %1361 = vset.pattern.permute.xlu0 0
        %1362 = vperm.xlu0 %1361, %v1294
        %v1363 = vpop.permute.xlu0 %1362
        %1366 = vset.pattern.permute.xlu0 0
        %1367 = vperm.xlu0 %1366, %v1295
        %v1368 = vpop.permute.xlu0 %1367
        %1371 = vset.pattern.permute.xlu0 0
        %1372 = vperm.xlu0 %1371, %v1296
        %v1373 = vpop.permute.xlu0 %1372
        %1376 = vset.pattern.permute.xlu0 0
        %1377 = vperm.xlu0 %1376, %v1297
        %v1378 = vpop.permute.xlu0 %1377
        %1381 = vset.pattern.permute.xlu0 0
        %1382 = vperm.xlu0 %1381, %v1298
        %v1383 = vpop.permute.xlu0 %1382
        %1386 = vset.pattern.permute.xlu0 0
        %1387 = vperm.xlu0 %1386, %v1299
        %v1388 = vpop.permute.xlu0 %1387
        %1391 = vset.pattern.permute.xlu0 0
        %1392 = vperm.xlu0 %1391, %v1300
        %v1393 = vpop.permute.xlu0 %1392
        %1396 = vset.pattern.permute.xlu0 0
        %1397 = vperm.xlu0 %1396, %v1301
        %v1398 = vpop.permute.xlu0 %1397
        %1401 = vset.pattern.permute.xlu0 0
        %1402 = vperm.xlu0 %1401, %v1302
        %v1403 = vpop.permute.xlu0 %1402
        %1406 = vset.pattern.permute.xlu0 0
        %1407 = vperm.xlu0 %1406, %v1303
        %v1408 = vpop.permute.xlu0 %1407
        %1411 = vset.pattern.permute.xlu0 0
        %1412 = vperm.xlu0 %1411, %v1304
        %v1413 = vpop.permute.xlu0 %1412
        %1416 = vset.pattern.permute.xlu0 0
        %1417 = vperm.xlu0 %1416, %v1305
        %v1418 = vpop.permute.xlu0 %1417
        %1421 = vset.pattern.permute.xlu0 0
        %1422 = vperm.xlu0 %1421, %v1306
        %v1423 = vpop.permute.xlu0 %1422
        %1426 = vset.pattern.permute.xlu0 0
        %1427 = vperm.xlu0 %1426, %v1307
        %v1428 = vpop.permute.xlu0 %1427
        %1431 = vset.pattern.permute.xlu0 0
        %1432 = vperm.xlu0 %1431, %v1308
        %v1433 = vpop.permute.xlu0 %1432
        %1436 = vset.pattern.permute.xlu0 0
        %1437 = vperm.xlu0 %1436, %v1309
        %v1438 = vpop.permute.xlu0 %1437
        %1441 = vset.pattern.permute.xlu0 0
        %1442 = vperm.xlu0 %1441, %v1310
        %v1443 = vpop.permute.xlu0 %1442
        %1446 = vset.pattern.permute.xlu0 0
        %1447 = vperm.xlu0 %1446, %v1311
        %v1448 = vpop.permute.xlu0 %1447
        %1451 = vset.pattern.permute.xlu0 0
        %1452 = vperm.xlu0 %1451, %v1312
        %v1453 = vpop.permute.xlu0 %1452
        %1456 = vset.pattern.permute.xlu0 0
        %1457 = vperm.xlu0 %1456, %v1313
        %v1458 = vpop.permute.xlu0 %1457
        %1461 = vset.pattern.permute.xlu0 0
        %1462 = vperm.xlu0 %1461, %v1314
        %v1463 = vpop.permute.xlu0 %1462
        %1466 = vset.pattern.permute.xlu0 0
        %1467 = vperm.xlu0 %1466, %v1315
        %v1468 = vpop.permute.xlu0 %1467
        %1471 = vset.pattern.permute.xlu0 0
        %1472 = vperm.xlu0 %1471, %v1316
        %v1473 = vpop.permute.xlu0 %1472
        %1476 = vset.pattern.permute.xlu0 0
        %1477 = vperm.xlu0 %1476, %v1317
        %v1478 = vpop.permute.xlu0 %1477
        %1481 = vset.pattern.permute.xlu0 0
        %1482 = vperm.xlu0 %1481, %v1318
        %v1483 = vpop.permute.xlu0 %1482
        %1486 = vset.pattern.permute.xlu0 0
        %1487 = vperm.xlu0 %1486, %v1319
        %v1488 = vpop.permute.xlu0 %1487
        %1491 = vset.pattern.permute.xlu0 0
        %1492 = vperm.xlu0 %1491, %v1320
        %v1493 = vpop.permute.xlu0 %1492
        %1496 = vset.pattern.permute.xlu0 0
        %1497 = vperm.xlu0 %1496, %v1321
        %v1498 = vpop.permute.xlu0 %1497
        %1501 = vset.pattern.permute.xlu0 0
        %1502 = vperm.xlu0 %1501, %v1322
        %v1503 = vpop.permute.xlu0 %1502
        %1506 = vset.pattern.permute.xlu0 0
        %1507 = vperm.xlu0 %1506, %v1323
        %v1508 = vpop.permute.xlu0 %1507
        %1511 = vset.pattern.permute.xlu0 0
        %1512 = vperm.xlu0 %1511, %v1324
        %v1513 = vpop.permute.xlu0 %1512
        %1516 = vset.pattern.permute.xlu0 0
        %1517 = vperm.xlu0 %1516, %v1325
        %v1518 = vpop.permute.xlu0 %1517
        %1521 = vset.pattern.permute.xlu0 0
        %1522 = vperm.xlu0 %1521, %v1326
        %v1523 = vpop.permute.xlu0 %1522
        %1526 = vset.pattern.permute.xlu0 0
        %1527 = vperm.xlu0 %1526, %v1327
        %v1528 = vpop.permute.xlu0 %1527
        %1531 = vset.pattern.permute.xlu0 0
        %1532 = vperm.xlu0 %1531, %v1328
        %v1533 = vpop.permute.xlu0 %1532
        %v1535 = vlaneseq
        %v1536 = vshrl.u32 %v1535, 7
        %v1537 = vsub.s32 0, %v1536
        %v1538 = vrot.slane %v1329, %v1537
        %v1539 = vmul.f32 %v1333, %v1538
        %v1540 = vmul.f32 %v1338, %v1538
        %v1541 = vmul.f32 %v1343, %v1538
        %v1542 = vmul.f32 %v1348, %v1538
        %v1543 = vmul.f32 %v1353, %v1538
        %v1544 = vmul.f32 %v1358, %v1538
        %v1545 = vmul.f32 %v1363, %v1538
        %v1546 = vmul.f32 %v1368, %v1538
        %v1547 = vmul.f32 %v1373, %v1538
        %v1548 = vmul.f32 %v1378, %v1538
        %v1549 = vmul.f32 %v1383, %v1538
        %v1550 = vmul.f32 %v1388, %v1538
        %v1551 = vmul.f32 %v1393, %v1538
        %v1552 = vmul.f32 %v1398, %v1538
        %v1553 = vmul.f32 %v1403, %v1538
        %v1554 = vmul.f32 %v1408, %v1538
        %v1555 = vmul.f32 %v1413, %v1538
        %v1556 = vmul.f32 %v1418, %v1538
        %v1557 = vmul.f32 %v1423, %v1538
        %v1558 = vmul.f32 %v1428, %v1538
        %v1559 = vmul.f32 %v1433, %v1538
        %v1560 = vmul.f32 %v1438, %v1538
        %v1561 = vmul.f32 %v1443, %v1538
        %v1562 = vmul.f32 %v1448, %v1538
        %v1563 = vmul.f32 %v1453, %v1538
        %v1564 = vmul.f32 %v1458, %v1538
        %v1565 = vmul.f32 %v1463, %v1538
        %v1566 = vmul.f32 %v1468, %v1538
        %v1567 = vmul.f32 %v1473, %v1538
        %v1568 = vmul.f32 %v1478, %v1538
        %v1569 = vmul.f32 %v1483, %v1538
        %v1570 = vmul.f32 %v1488, %v1538
        %v1571 = vmul.f32 %v1493, %v1538
        %v1572 = vmul.f32 %v1498, %v1538
        %v1573 = vmul.f32 %v1503, %v1538
        %v1574 = vmul.f32 %v1508, %v1538
        %v1575 = vmul.f32 %v1513, %v1538
        %v1576 = vmul.f32 %v1518, %v1538
        %v1577 = vmul.f32 %v1523, %v1538
        %v1578 = vmul.f32 %v1528, %v1538
        %v1579 = vmul.f32 %v1533, %v1538
        %v1580 = vadd.f32 %v1247, %v1539
        %v1581 = vadd.f32 %v1248, %v1540
        %v1582 = vadd.f32 %v1249, %v1541
        %v1583 = vadd.f32 %v1250, %v1542
        %v1584 = vadd.f32 %v1251, %v1543
        %v1585 = vadd.f32 %v1252, %v1544
        %v1586 = vadd.f32 %v1253, %v1545
        %v1587 = vadd.f32 %v1254, %v1546
        %v1588 = vadd.f32 %v1255, %v1547
        %v1589 = vadd.f32 %v1256, %v1548
        %v1590 = vadd.f32 %v1257, %v1549
        %v1591 = vadd.f32 %v1258, %v1550
        %v1592 = vadd.f32 %v1259, %v1551
        %v1593 = vadd.f32 %v1260, %v1552
        %v1594 = vadd.f32 %v1261, %v1553
        %v1595 = vadd.f32 %v1262, %v1554
        %v1596 = vadd.f32 %v1263, %v1555
        %v1597 = vadd.f32 %v1264, %v1556
        %v1598 = vadd.f32 %v1265, %v1557
        %v1599 = vadd.f32 %v1266, %v1558
        %v1600 = vadd.f32 %v1267, %v1559
        %v1601 = vadd.f32 %v1268, %v1560
        %v1602 = vadd.f32 %v1269, %v1561
        %v1603 = vadd.f32 %v1270, %v1562
        %v1604 = vadd.f32 %v1271, %v1563
        %v1605 = vadd.f32 %v1272, %v1564
        %v1606 = vadd.f32 %v1273, %v1565
        %v1607 = vadd.f32 %v1274, %v1566
        %v1608 = vadd.f32 %v1275, %v1567
        %v1609 = vadd.f32 %v1276, %v1568
        %v1610 = vadd.f32 %v1277, %v1569
        %v1611 = vadd.f32 %v1278, %v1570
        %v1612 = vadd.f32 %v1279, %v1571
        %v1613 = vadd.f32 %v1280, %v1572
        %v1614 = vadd.f32 %v1281, %v1573
        %v1615 = vadd.f32 %v1282, %v1574
        %v1616 = vadd.f32 %v1283, %v1575
        %v1617 = vadd.f32 %v1284, %v1576
        %v1618 = vadd.f32 %v1285, %v1577
        %v1619 = vadd.f32 %v1286, %v1578
        %v1620 = vadd.f32 %v1287, %v1579
        %v1621 = vld [vmem:[%s329 + $0x13] sm:$0xff]
        %v1622 = vld [vmem:[%s329 + $0x1b] sm:$0xff]
        %v1623 = vld [vmem:[%s329 + $0x23] sm:$0xff]
        %v1624 = vld [vmem:[%s329 + $0x2b] sm:$0xff]
        %v1625 = vld [vmem:[%s329 + $0x33] sm:$0xff]
        %v1626 = vld [vmem:[%s329 + $0x3b] sm:$0xff]
        %v1627 = vld [vmem:[%s329 + $0x43] sm:$0xff]
        %v1628 = vld [vmem:[%s329 + $0x4b] sm:$0xff]
        %v1629 = vld [vmem:[%s329 + $0x53] sm:$0xff]
        %v1630 = vld [vmem:[%s329 + $0x5b] sm:$0xff]
        %v1631 = vld [vmem:[%s329 + $0x63] sm:$0xff]
        %v1632 = vld [vmem:[%s329 + $0x6b] sm:$0xff]
        %v1633 = vld [vmem:[%s329 + $0x73] sm:$0xff]
        %v1634 = vld [vmem:[%s329 + $0x7b] sm:$0xff]
        %v1635 = vld [vmem:[%s329 + $0x83] sm:$0xff]
        %v1636 = vld [vmem:[%s329 + $0x8b] sm:$0xff]
        %v1637 = vld [vmem:[%s329 + $0x93] sm:$0xff]
        %v1638 = vld [vmem:[%s329 + $0x9b] sm:$0xff]
        %v1639 = vld [vmem:[%s329 + $0xa3] sm:$0xff]
        %v1640 = vld [vmem:[%s329 + $0xab] sm:$0xff]
        %v1641 = vld [vmem:[%s329 + $0xb3] sm:$0xff]
        %v1642 = vld [vmem:[%s329 + $0xbb] sm:$0xff]
        %v1643 = vld [vmem:[%s329 + $0xc3] sm:$0xff]
        %v1644 = vld [vmem:[%s329 + $0xcb] sm:$0xff]
        %v1645 = vld [vmem:[%s329 + $0xd3] sm:$0xff]
        %v1646 = vld [vmem:[%s329 + $0xdb] sm:$0xff]
        %v1647 = vld [vmem:[%s329 + $0xe3] sm:$0xff]
        %v1648 = vld [vmem:[%s329 + $0xeb] sm:$0xff]
        %v1649 = vld [vmem:[%s329 + $0xf3] sm:$0xff]
        %v1650 = vld [vmem:[%s329 + $0xfb] sm:$0xff]
        %v1651 = vld [vmem:[%s329 + $0x103] sm:$0xff]
        %v1652 = vld [vmem:[%s329 + $0x10b] sm:$0xff]
        %v1653 = vld [vmem:[%s329 + $0x113] sm:$0xff]
        %v1654 = vld [vmem:[%s329 + $0x11b] sm:$0xff]
        %v1655 = vld [vmem:[%s329 + $0x123] sm:$0xff]
        %v1656 = vld [vmem:[%s329 + $0x12b] sm:$0xff]
        %v1657 = vld [vmem:[%s329 + $0x133] sm:$0xff]
        %v1658 = vld [vmem:[%s329 + $0x13b] sm:$0xff]
        %v1659 = vld [vmem:[%s329 + $0x143] sm:$0xff]
        %v1660 = vld [vmem:[%s329 + $0x14b] sm:$0xff]
        %v1661 = vld [vmem:[%s329 + $0x153] sm:$0xf]
        %v1662 = vld [vmem:[%s1 + $0x4] sm:$0x1]
        %1664 = vset.pattern.permute.xlu0 0
        %1665 = vperm.xlu0 %1664, %v1621
        %v1666 = vpop.permute.xlu0 %1665
        %1669 = vset.pattern.permute.xlu0 0
        %1670 = vperm.xlu0 %1669, %v1622
        %v1671 = vpop.permute.xlu0 %1670
        %1674 = vset.pattern.permute.xlu0 0
        %1675 = vperm.xlu0 %1674, %v1623
        %v1676 = vpop.permute.xlu0 %1675
        %1679 = vset.pattern.permute.xlu0 0
        %1680 = vperm.xlu0 %1679, %v1624
        %v1681 = vpop.permute.xlu0 %1680
        %1684 = vset.pattern.permute.xlu0 0
        %1685 = vperm.xlu0 %1684, %v1625
        %v1686 = vpop.permute.xlu0 %1685
        %1689 = vset.pattern.permute.xlu0 0
        %1690 = vperm.xlu0 %1689, %v1626
        %v1691 = vpop.permute.xlu0 %1690
        %1694 = vset.pattern.permute.xlu0 0
        %1695 = vperm.xlu0 %1694, %v1627
        %v1696 = vpop.permute.xlu0 %1695
        %1699 = vset.pattern.permute.xlu0 0
        %1700 = vperm.xlu0 %1699, %v1628
        %v1701 = vpop.permute.xlu0 %1700
        %1704 = vset.pattern.permute.xlu0 0
        %1705 = vperm.xlu0 %1704, %v1629
        %v1706 = vpop.permute.xlu0 %1705
        %1709 = vset.pattern.permute.xlu0 0
        %1710 = vperm.xlu0 %1709, %v1630
        %v1711 = vpop.permute.xlu0 %1710
        %1714 = vset.pattern.permute.xlu0 0
        %1715 = vperm.xlu0 %1714, %v1631
        %v1716 = vpop.permute.xlu0 %1715
        %1719 = vset.pattern.permute.xlu0 0
        %1720 = vperm.xlu0 %1719, %v1632
        %v1721 = vpop.permute.xlu0 %1720
        %1724 = vset.pattern.permute.xlu0 0
        %1725 = vperm.xlu0 %1724, %v1633
        %v1726 = vpop.permute.xlu0 %1725
        %1729 = vset.pattern.permute.xlu0 0
        %1730 = vperm.xlu0 %1729, %v1634
        %v1731 = vpop.permute.xlu0 %1730
        %1734 = vset.pattern.permute.xlu0 0
        %1735 = vperm.xlu0 %1734, %v1635
        %v1736 = vpop.permute.xlu0 %1735
        %1739 = vset.pattern.permute.xlu0 0
        %1740 = vperm.xlu0 %1739, %v1636
        %v1741 = vpop.permute.xlu0 %1740
        %1744 = vset.pattern.permute.xlu0 0
        %1745 = vperm.xlu0 %1744, %v1637
        %v1746 = vpop.permute.xlu0 %1745
        %1749 = vset.pattern.permute.xlu0 0
        %1750 = vperm.xlu0 %1749, %v1638
        %v1751 = vpop.permute.xlu0 %1750
        %1754 = vset.pattern.permute.xlu0 0
        %1755 = vperm.xlu0 %1754, %v1639
        %v1756 = vpop.permute.xlu0 %1755
        %1759 = vset.pattern.permute.xlu0 0
        %1760 = vperm.xlu0 %1759, %v1640
        %v1761 = vpop.permute.xlu0 %1760
        %1764 = vset.pattern.permute.xlu0 0
        %1765 = vperm.xlu0 %1764, %v1641
        %v1766 = vpop.permute.xlu0 %1765
        %1769 = vset.pattern.permute.xlu0 0
        %1770 = vperm.xlu0 %1769, %v1642
        %v1771 = vpop.permute.xlu0 %1770
        %1774 = vset.pattern.permute.xlu0 0
        %1775 = vperm.xlu0 %1774, %v1643
        %v1776 = vpop.permute.xlu0 %1775
        %1779 = vset.pattern.permute.xlu0 0
        %1780 = vperm.xlu0 %1779, %v1644
        %v1781 = vpop.permute.xlu0 %1780
        %1784 = vset.pattern.permute.xlu0 0
        %1785 = vperm.xlu0 %1784, %v1645
        %v1786 = vpop.permute.xlu0 %1785
        %1789 = vset.pattern.permute.xlu0 0
        %1790 = vperm.xlu0 %1789, %v1646
        %v1791 = vpop.permute.xlu0 %1790
        %1794 = vset.pattern.permute.xlu0 0
        %1795 = vperm.xlu0 %1794, %v1647
        %v1796 = vpop.permute.xlu0 %1795
        %1799 = vset.pattern.permute.xlu0 0
        %1800 = vperm.xlu0 %1799, %v1648
        %v1801 = vpop.permute.xlu0 %1800
        %1804 = vset.pattern.permute.xlu0 0
        %1805 = vperm.xlu0 %1804, %v1649
        %v1806 = vpop.permute.xlu0 %1805
        %1809 = vset.pattern.permute.xlu0 0
        %1810 = vperm.xlu0 %1809, %v1650
        %v1811 = vpop.permute.xlu0 %1810
        %1814 = vset.pattern.permute.xlu0 0
        %1815 = vperm.xlu0 %1814, %v1651
        %v1816 = vpop.permute.xlu0 %1815
        %1819 = vset.pattern.permute.xlu0 0
        %1820 = vperm.xlu0 %1819, %v1652
        %v1821 = vpop.permute.xlu0 %1820
        %1824 = vset.pattern.permute.xlu0 0
        %1825 = vperm.xlu0 %1824, %v1653
        %v1826 = vpop.permute.xlu0 %1825
        %1829 = vset.pattern.permute.xlu0 0
        %1830 = vperm.xlu0 %1829, %v1654
        %v1831 = vpop.permute.xlu0 %1830
        %1834 = vset.pattern.permute.xlu0 0
        %1835 = vperm.xlu0 %1834, %v1655
        %v1836 = vpop.permute.xlu0 %1835
        %1839 = vset.pattern.permute.xlu0 0
        %1840 = vperm.xlu0 %1839, %v1656
        %v1841 = vpop.permute.xlu0 %1840
        %1844 = vset.pattern.permute.xlu0 0
        %1845 = vperm.xlu0 %1844, %v1657
        %v1846 = vpop.permute.xlu0 %1845
        %1849 = vset.pattern.permute.xlu0 0
        %1850 = vperm.xlu0 %1849, %v1658
        %v1851 = vpop.permute.xlu0 %1850
        %1854 = vset.pattern.permute.xlu0 0
        %1855 = vperm.xlu0 %1854, %v1659
        %v1856 = vpop.permute.xlu0 %1855
        %1859 = vset.pattern.permute.xlu0 0
        %1860 = vperm.xlu0 %1859, %v1660
        %v1861 = vpop.permute.xlu0 %1860
        %1864 = vset.pattern.permute.xlu0 0
        %1865 = vperm.xlu0 %1864, %v1661
        %v1866 = vpop.permute.xlu0 %1865
        %v1868 = vlaneseq
        %v1869 = vshrl.u32 %v1868, 7
        %v1870 = vsub.s32 0, %v1869
        %v1871 = vrot.slane %v1662, %v1870
        %v1872 = vmul.f32 %v1666, %v1871
        %v1873 = vmul.f32 %v1671, %v1871
        %v1874 = vmul.f32 %v1676, %v1871
        %v1875 = vmul.f32 %v1681, %v1871
        %v1876 = vmul.f32 %v1686, %v1871
        %v1877 = vmul.f32 %v1691, %v1871
        %v1878 = vmul.f32 %v1696, %v1871
        %v1879 = vmul.f32 %v1701, %v1871
        %v1880 = vmul.f32 %v1706, %v1871
        %v1881 = vmul.f32 %v1711, %v1871
        %v1882 = vmul.f32 %v1716, %v1871
        %v1883 = vmul.f32 %v1721, %v1871
        %v1884 = vmul.f32 %v1726, %v1871
        %v1885 = vmul.f32 %v1731, %v1871
        %v1886 = vmul.f32 %v1736, %v1871
        %v1887 = vmul.f32 %v1741, %v1871
        %v1888 = vmul.f32 %v1746, %v1871
        %v1889 = vmul.f32 %v1751, %v1871
        %v1890 = vmul.f32 %v1756, %v1871
        %v1891 = vmul.f32 %v1761, %v1871
        %v1892 = vmul.f32 %v1766, %v1871
        %v1893 = vmul.f32 %v1771, %v1871
        %v1894 = vmul.f32 %v1776, %v1871
        %v1895 = vmul.f32 %v1781, %v1871
        %v1896 = vmul.f32 %v1786, %v1871
        %v1897 = vmul.f32 %v1791, %v1871
        %v1898 = vmul.f32 %v1796, %v1871
        %v1899 = vmul.f32 %v1801, %v1871
        %v1900 = vmul.f32 %v1806, %v1871
        %v1901 = vmul.f32 %v1811, %v1871
        %v1902 = vmul.f32 %v1816, %v1871
        %v1903 = vmul.f32 %v1821, %v1871
        %v1904 = vmul.f32 %v1826, %v1871
        %v1905 = vmul.f32 %v1831, %v1871
        %v1906 = vmul.f32 %v1836, %v1871
        %v1907 = vmul.f32 %v1841, %v1871
        %v1908 = vmul.f32 %v1846, %v1871
        %v1909 = vmul.f32 %v1851, %v1871
        %v1910 = vmul.f32 %v1856, %v1871
        %v1911 = vmul.f32 %v1861, %v1871
        %v1912 = vmul.f32 %v1866, %v1871
        %v1913 = vadd.f32 %v1580, %v1872
        %v1914 = vadd.f32 %v1581, %v1873
        %v1915 = vadd.f32 %v1582, %v1874
        %v1916 = vadd.f32 %v1583, %v1875
        %v1917 = vadd.f32 %v1584, %v1876
        %v1918 = vadd.f32 %v1585, %v1877
        %v1919 = vadd.f32 %v1586, %v1878
        %v1920 = vadd.f32 %v1587, %v1879
        %v1921 = vadd.f32 %v1588, %v1880
        %v1922 = vadd.f32 %v1589, %v1881
        %v1923 = vadd.f32 %v1590, %v1882
        %v1924 = vadd.f32 %v1591, %v1883
        %v1925 = vadd.f32 %v1592, %v1884
        %v1926 = vadd.f32 %v1593, %v1885
        %v1927 = vadd.f32 %v1594, %v1886
        %v1928 = vadd.f32 %v1595, %v1887
        %v1929 = vadd.f32 %v1596, %v1888
        %v1930 = vadd.f32 %v1597, %v1889
        %v1931 = vadd.f32 %v1598, %v1890
        %v1932 = vadd.f32 %v1599, %v1891
        %v1933 = vadd.f32 %v1600, %v1892
        %v1934 = vadd.f32 %v1601, %v1893
        %v1935 = vadd.f32 %v1602, %v1894
        %v1936 = vadd.f32 %v1603, %v1895
        %v1937 = vadd.f32 %v1604, %v1896
        %v1938 = vadd.f32 %v1605, %v1897
        %v1939 = vadd.f32 %v1606, %v1898
        %v1940 = vadd.f32 %v1607, %v1899
        %v1941 = vadd.f32 %v1608, %v1900
        %v1942 = vadd.f32 %v1609, %v1901
        %v1943 = vadd.f32 %v1610, %v1902
        %v1944 = vadd.f32 %v1611, %v1903
        %v1945 = vadd.f32 %v1612, %v1904
        %v1946 = vadd.f32 %v1613, %v1905
        %v1947 = vadd.f32 %v1614, %v1906
        %v1948 = vadd.f32 %v1615, %v1907
        %v1949 = vadd.f32 %v1616, %v1908
        %v1950 = vadd.f32 %v1617, %v1909
        %v1951 = vadd.f32 %v1618, %v1910
        %v1952 = vadd.f32 %v1619, %v1911
        %v1953 = vadd.f32 %v1620, %v1912
        %v1954 = vld [vmem:[%s329 + $0x14] sm:$0xff]
        %v1955 = vld [vmem:[%s329 + $0x1c] sm:$0xff]
        %v1956 = vld [vmem:[%s329 + $0x24] sm:$0xff]
        %v1957 = vld [vmem:[%s329 + $0x2c] sm:$0xff]
        %v1958 = vld [vmem:[%s329 + $0x34] sm:$0xff]
        %v1959 = vld [vmem:[%s329 + $0x3c] sm:$0xff]
        %v1960 = vld [vmem:[%s329 + $0x44] sm:$0xff]
        %v1961 = vld [vmem:[%s329 + $0x4c] sm:$0xff]
        %v1962 = vld [vmem:[%s329 + $0x54] sm:$0xff]
        %v1963 = vld [vmem:[%s329 + $0x5c] sm:$0xff]
        %v1964 = vld [vmem:[%s329 + $0x64] sm:$0xff]
        %v1965 = vld [vmem:[%s329 + $0x6c] sm:$0xff]
        %v1966 = vld [vmem:[%s329 + $0x74] sm:$0xff]
        %v1967 = vld [vmem:[%s329 + $0x7c] sm:$0xff]
        %v1968 = vld [vmem:[%s329 + $0x84] sm:$0xff]
        %v1969 = vld [vmem:[%s329 + $0x8c] sm:$0xff]
        %v1970 = vld [vmem:[%s329 + $0x94] sm:$0xff]
        %v1971 = vld [vmem:[%s329 + $0x9c] sm:$0xff]
        %v1972 = vld [vmem:[%s329 + $0xa4] sm:$0xff]
        %v1973 = vld [vmem:[%s329 + $0xac] sm:$0xff]
        %v1974 = vld [vmem:[%s329 + $0xb4] sm:$0xff]
        %v1975 = vld [vmem:[%s329 + $0xbc] sm:$0xff]
        %v1976 = vld [vmem:[%s329 + $0xc4] sm:$0xff]
        %v1977 = vld [vmem:[%s329 + $0xcc] sm:$0xff]
        %v1978 = vld [vmem:[%s329 + $0xd4] sm:$0xff]
        %v1979 = vld [vmem:[%s329 + $0xdc] sm:$0xff]
        %v1980 = vld [vmem:[%s329 + $0xe4] sm:$0xff]
        %v1981 = vld [vmem:[%s329 + $0xec] sm:$0xff]
        %v1982 = vld [vmem:[%s329 + $0xf4] sm:$0xff]
        %v1983 = vld [vmem:[%s329 + $0xfc] sm:$0xff]
        %v1984 = vld [vmem:[%s329 + $0x104] sm:$0xff]
        %v1985 = vld [vmem:[%s329 + $0x10c] sm:$0xff]
        %v1986 = vld [vmem:[%s329 + $0x114] sm:$0xff]
        %v1987 = vld [vmem:[%s329 + $0x11c] sm:$0xff]
        %v1988 = vld [vmem:[%s329 + $0x124] sm:$0xff]
        %v1989 = vld [vmem:[%s329 + $0x12c] sm:$0xff]
        %v1990 = vld [vmem:[%s329 + $0x134] sm:$0xff]
        %v1991 = vld [vmem:[%s329 + $0x13c] sm:$0xff]
        %v1992 = vld [vmem:[%s329 + $0x144] sm:$0xff]
        %v1993 = vld [vmem:[%s329 + $0x14c] sm:$0xff]
        %v1994 = vld [vmem:[%s329 + $0x154] sm:$0xf]
        %v1995 = vld [vmem:[%s1 + $0x5] sm:$0x1]
        %1997 = vset.pattern.permute.xlu0 0
        %1998 = vperm.xlu0 %1997, %v1954
        %v1999 = vpop.permute.xlu0 %1998
        %2002 = vset.pattern.permute.xlu0 0
        %2003 = vperm.xlu0 %2002, %v1955
        %v2004 = vpop.permute.xlu0 %2003
        %2007 = vset.pattern.permute.xlu0 0
        %2008 = vperm.xlu0 %2007, %v1956
        %v2009 = vpop.permute.xlu0 %2008
        %2012 = vset.pattern.permute.xlu0 0
        %2013 = vperm.xlu0 %2012, %v1957
        %v2014 = vpop.permute.xlu0 %2013
        %2017 = vset.pattern.permute.xlu0 0
        %2018 = vperm.xlu0 %2017, %v1958
        %v2019 = vpop.permute.xlu0 %2018
        %2022 = vset.pattern.permute.xlu0 0
        %2023 = vperm.xlu0 %2022, %v1959
        %v2024 = vpop.permute.xlu0 %2023
        %2027 = vset.pattern.permute.xlu0 0
        %2028 = vperm.xlu0 %2027, %v1960
        %v2029 = vpop.permute.xlu0 %2028
        %2032 = vset.pattern.permute.xlu0 0
        %2033 = vperm.xlu0 %2032, %v1961
        %v2034 = vpop.permute.xlu0 %2033
        %2037 = vset.pattern.permute.xlu0 0
        %2038 = vperm.xlu0 %2037, %v1962
        %v2039 = vpop.permute.xlu0 %2038
        %2042 = vset.pattern.permute.xlu0 0
        %2043 = vperm.xlu0 %2042, %v1963
        %v2044 = vpop.permute.xlu0 %2043
        %2047 = vset.pattern.permute.xlu0 0
        %2048 = vperm.xlu0 %2047, %v1964
        %v2049 = vpop.permute.xlu0 %2048
        %2052 = vset.pattern.permute.xlu0 0
        %2053 = vperm.xlu0 %2052, %v1965
        %v2054 = vpop.permute.xlu0 %2053
        %2057 = vset.pattern.permute.xlu0 0
        %2058 = vperm.xlu0 %2057, %v1966
        %v2059 = vpop.permute.xlu0 %2058
        %2062 = vset.pattern.permute.xlu0 0
        %2063 = vperm.xlu0 %2062, %v1967
        %v2064 = vpop.permute.xlu0 %2063
        %2067 = vset.pattern.permute.xlu0 0
        %2068 = vperm.xlu0 %2067, %v1968
        %v2069 = vpop.permute.xlu0 %2068
        %2072 = vset.pattern.permute.xlu0 0
        %2073 = vperm.xlu0 %2072, %v1969
        %v2074 = vpop.permute.xlu0 %2073
        %2077 = vset.pattern.permute.xlu0 0
        %2078 = vperm.xlu0 %2077, %v1970
        %v2079 = vpop.permute.xlu0 %2078
        %2082 = vset.pattern.permute.xlu0 0
        %2083 = vperm.xlu0 %2082, %v1971
        %v2084 = vpop.permute.xlu0 %2083
        %2087 = vset.pattern.permute.xlu0 0
        %2088 = vperm.xlu0 %2087, %v1972
        %v2089 = vpop.permute.xlu0 %2088
        %2092 = vset.pattern.permute.xlu0 0
        %2093 = vperm.xlu0 %2092, %v1973
        %v2094 = vpop.permute.xlu0 %2093
        %2097 = vset.pattern.permute.xlu0 0
        %2098 = vperm.xlu0 %2097, %v1974
        %v2099 = vpop.permute.xlu0 %2098
        %2102 = vset.pattern.permute.xlu0 0
        %2103 = vperm.xlu0 %2102, %v1975
        %v2104 = vpop.permute.xlu0 %2103
        %2107 = vset.pattern.permute.xlu0 0
        %2108 = vperm.xlu0 %2107, %v1976
        %v2109 = vpop.permute.xlu0 %2108
        %2112 = vset.pattern.permute.xlu0 0
        %2113 = vperm.xlu0 %2112, %v1977
        %v2114 = vpop.permute.xlu0 %2113
        %2117 = vset.pattern.permute.xlu0 0
        %2118 = vperm.xlu0 %2117, %v1978
        %v2119 = vpop.permute.xlu0 %2118
        %2122 = vset.pattern.permute.xlu0 0
        %2123 = vperm.xlu0 %2122, %v1979
        %v2124 = vpop.permute.xlu0 %2123
        %2127 = vset.pattern.permute.xlu0 0
        %2128 = vperm.xlu0 %2127, %v1980
        %v2129 = vpop.permute.xlu0 %2128
        %2132 = vset.pattern.permute.xlu0 0
        %2133 = vperm.xlu0 %2132, %v1981
        %v2134 = vpop.permute.xlu0 %2133
        %2137 = vset.pattern.permute.xlu0 0
        %2138 = vperm.xlu0 %2137, %v1982
        %v2139 = vpop.permute.xlu0 %2138
        %2142 = vset.pattern.permute.xlu0 0
        %2143 = vperm.xlu0 %2142, %v1983
        %v2144 = vpop.permute.xlu0 %2143
        %2147 = vset.pattern.permute.xlu0 0
        %2148 = vperm.xlu0 %2147, %v1984
        %v2149 = vpop.permute.xlu0 %2148
        %2152 = vset.pattern.permute.xlu0 0
        %2153 = vperm.xlu0 %2152, %v1985
        %v2154 = vpop.permute.xlu0 %2153
        %2157 = vset.pattern.permute.xlu0 0
        %2158 = vperm.xlu0 %2157, %v1986
        %v2159 = vpop.permute.xlu0 %2158
        %2162 = vset.pattern.permute.xlu0 0
        %2163 = vperm.xlu0 %2162, %v1987
        %v2164 = vpop.permute.xlu0 %2163
        %2167 = vset.pattern.permute.xlu0 0
        %2168 = vperm.xlu0 %2167, %v1988
        %v2169 = vpop.permute.xlu0 %2168
        %2172 = vset.pattern.permute.xlu0 0
        %2173 = vperm.xlu0 %2172, %v1989
        %v2174 = vpop.permute.xlu0 %2173
        %2177 = vset.pattern.permute.xlu0 0
        %2178 = vperm.xlu0 %2177, %v1990
        %v2179 = vpop.permute.xlu0 %2178
        %2182 = vset.pattern.permute.xlu0 0
        %2183 = vperm.xlu0 %2182, %v1991
        %v2184 = vpop.permute.xlu0 %2183
        %2187 = vset.pattern.permute.xlu0 0
        %2188 = vperm.xlu0 %2187, %v1992
        %v2189 = vpop.permute.xlu0 %2188
        %2192 = vset.pattern.permute.xlu0 0
        %2193 = vperm.xlu0 %2192, %v1993
        %v2194 = vpop.permute.xlu0 %2193
        %2197 = vset.pattern.permute.xlu0 0
        %2198 = vperm.xlu0 %2197, %v1994
        %v2199 = vpop.permute.xlu0 %2198
        %v2201 = vlaneseq
        %v2202 = vshrl.u32 %v2201, 7
        %v2203 = vsub.s32 0, %v2202
        %v2204 = vrot.slane %v1995, %v2203
        %v2205 = vmul.f32 %v1999, %v2204
        %v2206 = vmul.f32 %v2004, %v2204
        %v2207 = vmul.f32 %v2009, %v2204
        %v2208 = vmul.f32 %v2014, %v2204
        %v2209 = vmul.f32 %v2019, %v2204
        %v2210 = vmul.f32 %v2024, %v2204
        %v2211 = vmul.f32 %v2029, %v2204
        %v2212 = vmul.f32 %v2034, %v2204
        %v2213 = vmul.f32 %v2039, %v2204
        %v2214 = vmul.f32 %v2044, %v2204
        %v2215 = vmul.f32 %v2049, %v2204
        %v2216 = vmul.f32 %v2054, %v2204
        %v2217 = vmul.f32 %v2059, %v2204
        %v2218 = vmul.f32 %v2064, %v2204
        %v2219 = vmul.f32 %v2069, %v2204
        %v2220 = vmul.f32 %v2074, %v2204
        %v2221 = vmul.f32 %v2079, %v2204
        %v2222 = vmul.f32 %v2084, %v2204
        %v2223 = vmul.f32 %v2089, %v2204
        %v2224 = vmul.f32 %v2094, %v2204
        %v2225 = vmul.f32 %v2099, %v2204
        %v2226 = vmul.f32 %v2104, %v2204
        %v2227 = vmul.f32 %v2109, %v2204
        %v2228 = vmul.f32 %v2114, %v2204
        %v2229 = vmul.f32 %v2119, %v2204
        %v2230 = vmul.f32 %v2124, %v2204
        %v2231 = vmul.f32 %v2129, %v2204
        %v2232 = vmul.f32 %v2134, %v2204
        %v2233 = vmul.f32 %v2139, %v2204
        %v2234 = vmul.f32 %v2144, %v2204
        %v2235 = vmul.f32 %v2149, %v2204
        %v2236 = vmul.f32 %v2154, %v2204
        %v2237 = vmul.f32 %v2159, %v2204
        %v2238 = vmul.f32 %v2164, %v2204
        %v2239 = vmul.f32 %v2169, %v2204
        %v2240 = vmul.f32 %v2174, %v2204
        %v2241 = vmul.f32 %v2179, %v2204
        %v2242 = vmul.f32 %v2184, %v2204
        %v2243 = vmul.f32 %v2189, %v2204
        %v2244 = vmul.f32 %v2194, %v2204
        %v2245 = vmul.f32 %v2199, %v2204
        %v2246 = vadd.f32 %v1913, %v2205
        %v2247 = vadd.f32 %v1914, %v2206
        %v2248 = vadd.f32 %v1915, %v2207
        %v2249 = vadd.f32 %v1916, %v2208
        %v2250 = vadd.f32 %v1917, %v2209
        %v2251 = vadd.f32 %v1918, %v2210
        %v2252 = vadd.f32 %v1919, %v2211
        %v2253 = vadd.f32 %v1920, %v2212
        %v2254 = vadd.f32 %v1921, %v2213
        %v2255 = vadd.f32 %v1922, %v2214
        %v2256 = vadd.f32 %v1923, %v2215
        %v2257 = vadd.f32 %v1924, %v2216
        %v2258 = vadd.f32 %v1925, %v2217
        %v2259 = vadd.f32 %v1926, %v2218
        %v2260 = vadd.f32 %v1927, %v2219
        %v2261 = vadd.f32 %v1928, %v2220
        %v2262 = vadd.f32 %v1929, %v2221
        %v2263 = vadd.f32 %v1930, %v2222
        %v2264 = vadd.f32 %v1931, %v2223
        %v2265 = vadd.f32 %v1932, %v2224
        %v2266 = vadd.f32 %v1933, %v2225
        %v2267 = vadd.f32 %v1934, %v2226
        %v2268 = vadd.f32 %v1935, %v2227
        %v2269 = vadd.f32 %v1936, %v2228
        %v2270 = vadd.f32 %v1937, %v2229
        %v2271 = vadd.f32 %v1938, %v2230
        %v2272 = vadd.f32 %v1939, %v2231
        %v2273 = vadd.f32 %v1940, %v2232
        %v2274 = vadd.f32 %v1941, %v2233
        %v2275 = vadd.f32 %v1942, %v2234
        %v2276 = vadd.f32 %v1943, %v2235
        %v2277 = vadd.f32 %v1944, %v2236
        %v2278 = vadd.f32 %v1945, %v2237
        %v2279 = vadd.f32 %v1946, %v2238
        %v2280 = vadd.f32 %v1947, %v2239
        %v2281 = vadd.f32 %v1948, %v2240
        %v2282 = vadd.f32 %v1949, %v2241
        %v2283 = vadd.f32 %v1950, %v2242
        %v2284 = vadd.f32 %v1951, %v2243
        %v2285 = vadd.f32 %v1952, %v2244
        %v2286 = vadd.f32 %v1953, %v2245
        %v2287 = vld [vmem:[%s329 + $0x24] sm:$0xff]
        %v2288 = vld [vmem:[%s329 + $0x2c] sm:$0xff]
        %v2289 = vld [vmem:[%s329 + $0x34] sm:$0xff]
        %v2290 = vld [vmem:[%s329 + $0x3c] sm:$0xff]
        %v2291 = vld [vmem:[%s329 + $0x44] sm:$0xff]
        %v2292 = vld [vmem:[%s329 + $0x4c] sm:$0xff]
        %v2293 = vld [vmem:[%s329 + $0x54] sm:$0xff]
        %v2294 = vld [vmem:[%s329 + $0x5c] sm:$0xff]
        %v2295 = vld [vmem:[%s329 + $0x64] sm:$0xff]
        %v2296 = vld [vmem:[%s329 + $0x6c] sm:$0xff]
        %v2297 = vld [vmem:[%s329 + $0x74] sm:$0xff]
        %v2298 = vld [vmem:[%s329 + $0x7c] sm:$0xff]
        %v2299 = vld [vmem:[%s329 + $0x84] sm:$0xff]
        %v2300 = vld [vmem:[%s329 + $0x8c] sm:$0xff]
        %v2301 = vld [vmem:[%s329 + $0x94] sm:$0xff]
        %v2302 = vld [vmem:[%s329 + $0x9c] sm:$0xff]
        %v2303 = vld [vmem:[%s329 + $0xa4] sm:$0xff]
        %v2304 = vld [vmem:[%s329 + $0xac] sm:$0xff]
        %v2305 = vld [vmem:[%s329 + $0xb4] sm:$0xff]
        %v2306 = vld [vmem:[%s329 + $0xbc] sm:$0xff]
        %v2307 = vld [vmem:[%s329 + $0xc4] sm:$0xff]
        %v2308 = vld [vmem:[%s329 + $0xcc] sm:$0xff]
        %v2309 = vld [vmem:[%s329 + $0xd4] sm:$0xff]
        %v2310 = vld [vmem:[%s329 + $0xdc] sm:$0xff]
        %v2311 = vld [vmem:[%s329 + $0xe4] sm:$0xff]
        %v2312 = vld [vmem:[%s329 + $0xec] sm:$0xff]
        %v2313 = vld [vmem:[%s329 + $0xf4] sm:$0xff]
        %v2314 = vld [vmem:[%s329 + $0xfc] sm:$0xff]
        %v2315 = vld [vmem:[%s329 + $0x104] sm:$0xff]
        %v2316 = vld [vmem:[%s329 + $0x10c] sm:$0xff]
        %v2317 = vld [vmem:[%s329 + $0x114] sm:$0xff]
        %v2318 = vld [vmem:[%s329 + $0x11c] sm:$0xff]
        %v2319 = vld [vmem:[%s329 + $0x124] sm:$0xff]
        %v2320 = vld [vmem:[%s329 + $0x12c] sm:$0xff]
        %v2321 = vld [vmem:[%s329 + $0x134] sm:$0xff]
        %v2322 = vld [vmem:[%s329 + $0x13c] sm:$0xff]
        %v2323 = vld [vmem:[%s329 + $0x144] sm:$0xff]
        %v2324 = vld [vmem:[%s329 + $0x14c] sm:$0xff]
        %v2325 = vld [vmem:[%s329 + $0x154] sm:$0xff]
        %v2326 = vld [vmem:[%s329 + $0x15c] sm:$0xff]
        %v2327 = vld [vmem:[%s329 + $0x164] sm:$0xf]
        %v2328 = vld [vmem:[%s1 + $0x6] sm:$0x1]
        %2330 = vset.pattern.permute.xlu0 0
        %2331 = vperm.xlu0 %2330, %v2287
        %v2332 = vpop.permute.xlu0 %2331
        %2335 = vset.pattern.permute.xlu0 0
        %2336 = vperm.xlu0 %2335, %v2288
        %v2337 = vpop.permute.xlu0 %2336
        %2340 = vset.pattern.permute.xlu0 0
        %2341 = vperm.xlu0 %2340, %v2289
        %v2342 = vpop.permute.xlu0 %2341
        %2345 = vset.pattern.permute.xlu0 0
        %2346 = vperm.xlu0 %2345, %v2290
        %v2347 = vpop.permute.xlu0 %2346
        %2350 = vset.pattern.permute.xlu0 0
        %2351 = vperm.xlu0 %2350, %v2291
        %v2352 = vpop.permute.xlu0 %2351
        %2355 = vset.pattern.permute.xlu0 0
        %2356 = vperm.xlu0 %2355, %v2292
        %v2357 = vpop.permute.xlu0 %2356
        %2360 = vset.pattern.permute.xlu0 0
        %2361 = vperm.xlu0 %2360, %v2293
        %v2362 = vpop.permute.xlu0 %2361
        %2365 = vset.pattern.permute.xlu0 0
        %2366 = vperm.xlu0 %2365, %v2294
        %v2367 = vpop.permute.xlu0 %2366
        %2370 = vset.pattern.permute.xlu0 0
        %2371 = vperm.xlu0 %2370, %v2295
        %v2372 = vpop.permute.xlu0 %2371
        %2375 = vset.pattern.permute.xlu0 0
        %2376 = vperm.xlu0 %2375, %v2296
        %v2377 = vpop.permute.xlu0 %2376
        %2380 = vset.pattern.permute.xlu0 0
        %2381 = vperm.xlu0 %2380, %v2297
        %v2382 = vpop.permute.xlu0 %2381
        %2385 = vset.pattern.permute.xlu0 0
        %2386 = vperm.xlu0 %2385, %v2298
        %v2387 = vpop.permute.xlu0 %2386
        %2390 = vset.pattern.permute.xlu0 0
        %2391 = vperm.xlu0 %2390, %v2299
        %v2392 = vpop.permute.xlu0 %2391
        %2395 = vset.pattern.permute.xlu0 0
        %2396 = vperm.xlu0 %2395, %v2300
        %v2397 = vpop.permute.xlu0 %2396
        %2400 = vset.pattern.permute.xlu0 0
        %2401 = vperm.xlu0 %2400, %v2301
        %v2402 = vpop.permute.xlu0 %2401
        %2405 = vset.pattern.permute.xlu0 0
        %2406 = vperm.xlu0 %2405, %v2302
        %v2407 = vpop.permute.xlu0 %2406
        %2410 = vset.pattern.permute.xlu0 0
        %2411 = vperm.xlu0 %2410, %v2303
        %v2412 = vpop.permute.xlu0 %2411
        %2415 = vset.pattern.permute.xlu0 0
        %2416 = vperm.xlu0 %2415, %v2304
        %v2417 = vpop.permute.xlu0 %2416
        %2420 = vset.pattern.permute.xlu0 0
        %2421 = vperm.xlu0 %2420, %v2305
        %v2422 = vpop.permute.xlu0 %2421
        %2425 = vset.pattern.permute.xlu0 0
        %2426 = vperm.xlu0 %2425, %v2306
        %v2427 = vpop.permute.xlu0 %2426
        %2430 = vset.pattern.permute.xlu0 0
        %2431 = vperm.xlu0 %2430, %v2307
        %v2432 = vpop.permute.xlu0 %2431
        %2435 = vset.pattern.permute.xlu0 0
        %2436 = vperm.xlu0 %2435, %v2308
        %v2437 = vpop.permute.xlu0 %2436
        %2440 = vset.pattern.permute.xlu0 0
        %2441 = vperm.xlu0 %2440, %v2309
        %v2442 = vpop.permute.xlu0 %2441
        %2445 = vset.pattern.permute.xlu0 0
        %2446 = vperm.xlu0 %2445, %v2310
        %v2447 = vpop.permute.xlu0 %2446
        %2450 = vset.pattern.permute.xlu0 0
        %2451 = vperm.xlu0 %2450, %v2311
        %v2452 = vpop.permute.xlu0 %2451
        %2455 = vset.pattern.permute.xlu0 0
        %2456 = vperm.xlu0 %2455, %v2312
        %v2457 = vpop.permute.xlu0 %2456
        %2460 = vset.pattern.permute.xlu0 0
        %2461 = vperm.xlu0 %2460, %v2313
        %v2462 = vpop.permute.xlu0 %2461
        %2465 = vset.pattern.permute.xlu0 0
        %2466 = vperm.xlu0 %2465, %v2314
        %v2467 = vpop.permute.xlu0 %2466
        %2470 = vset.pattern.permute.xlu0 0
        %2471 = vperm.xlu0 %2470, %v2315
        %v2472 = vpop.permute.xlu0 %2471
        %2475 = vset.pattern.permute.xlu0 0
        %2476 = vperm.xlu0 %2475, %v2316
        %v2477 = vpop.permute.xlu0 %2476
        %2480 = vset.pattern.permute.xlu0 0
        %2481 = vperm.xlu0 %2480, %v2317
        %v2482 = vpop.permute.xlu0 %2481
        %2485 = vset.pattern.permute.xlu0 0
        %2486 = vperm.xlu0 %2485, %v2318
        %v2487 = vpop.permute.xlu0 %2486
        %2490 = vset.pattern.permute.xlu0 0
        %2491 = vperm.xlu0 %2490, %v2319
        %v2492 = vpop.permute.xlu0 %2491
        %2495 = vset.pattern.permute.xlu0 0
        %2496 = vperm.xlu0 %2495, %v2320
        %v2497 = vpop.permute.xlu0 %2496
        %2500 = vset.pattern.permute.xlu0 0
        %2501 = vperm.xlu0 %2500, %v2321
        %v2502 = vpop.permute.xlu0 %2501
        %2505 = vset.pattern.permute.xlu0 0
        %2506 = vperm.xlu0 %2505, %v2322
        %v2507 = vpop.permute.xlu0 %2506
        %2510 = vset.pattern.permute.xlu0 0
        %2511 = vperm.xlu0 %2510, %v2323
        %v2512 = vpop.permute.xlu0 %2511
        %2515 = vset.pattern.permute.xlu0 0
        %2516 = vperm.xlu0 %2515, %v2324
        %v2517 = vpop.permute.xlu0 %2516
        %2520 = vset.pattern.permute.xlu0 0
        %2521 = vperm.xlu0 %2520, %v2325
        %v2522 = vpop.permute.xlu0 %2521
        %2525 = vset.pattern.permute.xlu0 0
        %2526 = vperm.xlu0 %2525, %v2326
        %v2527 = vpop.permute.xlu0 %2526
        %2530 = vset.pattern.permute.xlu0 0
        %2531 = vperm.xlu0 %2530, %v2327
        %v2532 = vpop.permute.xlu0 %2531
        %v2534 = vlaneseq
        %v2535 = vshrl.u32 %v2534, 7
        %v2536 = vsub.s32 0, %v2535
        %v2537 = vrot.slane %v2328, %v2536
        %v2538 = vmul.f32 %v2332, %v2537
        %v2539 = vmul.f32 %v2337, %v2537
        %v2540 = vmul.f32 %v2342, %v2537
        %v2541 = vmul.f32 %v2347, %v2537
        %v2542 = vmul.f32 %v2352, %v2537
        %v2543 = vmul.f32 %v2357, %v2537
        %v2544 = vmul.f32 %v2362, %v2537
        %v2545 = vmul.f32 %v2367, %v2537
        %v2546 = vmul.f32 %v2372, %v2537
        %v2547 = vmul.f32 %v2377, %v2537
        %v2548 = vmul.f32 %v2382, %v2537
        %v2549 = vmul.f32 %v2387, %v2537
        %v2550 = vmul.f32 %v2392, %v2537
        %v2551 = vmul.f32 %v2397, %v2537
        %v2552 = vmul.f32 %v2402, %v2537
        %v2553 = vmul.f32 %v2407, %v2537
        %v2554 = vmul.f32 %v2412, %v2537
        %v2555 = vmul.f32 %v2417, %v2537
        %v2556 = vmul.f32 %v2422, %v2537
        %v2557 = vmul.f32 %v2427, %v2537
        %v2558 = vmul.f32 %v2432, %v2537
        %v2559 = vmul.f32 %v2437, %v2537
        %v2560 = vmul.f32 %v2442, %v2537
        %v2561 = vmul.f32 %v2447, %v2537
        %v2562 = vmul.f32 %v2452, %v2537
        %v2563 = vmul.f32 %v2457, %v2537
        %v2564 = vmul.f32 %v2462, %v2537
        %v2565 = vmul.f32 %v2467, %v2537
        %v2566 = vmul.f32 %v2472, %v2537
        %v2567 = vmul.f32 %v2477, %v2537
        %v2568 = vmul.f32 %v2482, %v2537
        %v2569 = vmul.f32 %v2487, %v2537
        %v2570 = vmul.f32 %v2492, %v2537
        %v2571 = vmul.f32 %v2497, %v2537
        %v2572 = vmul.f32 %v2502, %v2537
        %v2573 = vmul.f32 %v2507, %v2537
        %v2574 = vmul.f32 %v2512, %v2537
        %v2575 = vmul.f32 %v2517, %v2537
        %v2576 = vmul.f32 %v2522, %v2537
        %v2577 = vmul.f32 %v2527, %v2537
        %v2578 = vmul.f32 %v2532, %v2537
        %v2579 = vadd.f32 %v2246, %v2538
        %v2580 = vadd.f32 %v2247, %v2539
        %v2581 = vadd.f32 %v2248, %v2540
        %v2582 = vadd.f32 %v2249, %v2541
        %v2583 = vadd.f32 %v2250, %v2542
        %v2584 = vadd.f32 %v2251, %v2543
        %v2585 = vadd.f32 %v2252, %v2544
        %v2586 = vadd.f32 %v2253, %v2545
        %v2587 = vadd.f32 %v2254, %v2546
        %v2588 = vadd.f32 %v2255, %v2547
        %v2589 = vadd.f32 %v2256, %v2548
        %v2590 = vadd.f32 %v2257, %v2549
        %v2591 = vadd.f32 %v2258, %v2550
        %v2592 = vadd.f32 %v2259, %v2551
        %v2593 = vadd.f32 %v2260, %v2552
        %v2594 = vadd.f32 %v2261, %v2553
        %v2595 = vadd.f32 %v2262, %v2554
        %v2596 = vadd.f32 %v2263, %v2555
        %v2597 = vadd.f32 %v2264, %v2556
        %v2598 = vadd.f32 %v2265, %v2557
        %v2599 = vadd.f32 %v2266, %v2558
        %v2600 = vadd.f32 %v2267, %v2559
        %v2601 = vadd.f32 %v2268, %v2560
        %v2602 = vadd.f32 %v2269, %v2561
        %v2603 = vadd.f32 %v2270, %v2562
        %v2604 = vadd.f32 %v2271, %v2563
        %v2605 = vadd.f32 %v2272, %v2564
        %v2606 = vadd.f32 %v2273, %v2565
        %v2607 = vadd.f32 %v2274, %v2566
        %v2608 = vadd.f32 %v2275, %v2567
        %v2609 = vadd.f32 %v2276, %v2568
        %v2610 = vadd.f32 %v2277, %v2569
        %v2611 = vadd.f32 %v2278, %v2570
        %v2612 = vadd.f32 %v2279, %v2571
        %v2613 = vadd.f32 %v2280, %v2572
        %v2614 = vadd.f32 %v2281, %v2573
        %v2615 = vadd.f32 %v2282, %v2574
        %v2616 = vadd.f32 %v2283, %v2575
        %v2617 = vadd.f32 %v2284, %v2576
        %v2618 = vadd.f32 %v2285, %v2577
        %v2619 = vadd.f32 %v2286, %v2578
        %v2620 = vld [vmem:[%s329 + $0x25] sm:$0xff]
        %v2621 = vld [vmem:[%s329 + $0x2d] sm:$0xff]
        %v2622 = vld [vmem:[%s329 + $0x35] sm:$0xff]
        %v2623 = vld [vmem:[%s329 + $0x3d] sm:$0xff]
        %v2624 = vld [vmem:[%s329 + $0x45] sm:$0xff]
        %v2625 = vld [vmem:[%s329 + $0x4d] sm:$0xff]
        %v2626 = vld [vmem:[%s329 + $0x55] sm:$0xff]
        %v2627 = vld [vmem:[%s329 + $0x5d] sm:$0xff]
        %v2628 = vld [vmem:[%s329 + $0x65] sm:$0xff]
        %v2629 = vld [vmem:[%s329 + $0x6d] sm:$0xff]
        %v2630 = vld [vmem:[%s329 + $0x75] sm:$0xff]
        %v2631 = vld [vmem:[%s329 + $0x7d] sm:$0xff]
        %v2632 = vld [vmem:[%s329 + $0x85] sm:$0xff]
        %v2633 = vld [vmem:[%s329 + $0x8d] sm:$0xff]
        %v2634 = vld [vmem:[%s329 + $0x95] sm:$0xff]
        %v2635 = vld [vmem:[%s329 + $0x9d] sm:$0xff]
        %v2636 = vld [vmem:[%s329 + $0xa5] sm:$0xff]
        %v2637 = vld [vmem:[%s329 + $0xad] sm:$0xff]
        %v2638 = vld [vmem:[%s329 + $0xb5] sm:$0xff]
        %v2639 = vld [vmem:[%s329 + $0xbd] sm:$0xff]
        %v2640 = vld [vmem:[%s329 + $0xc5] sm:$0xff]
        %v2641 = vld [vmem:[%s329 + $0xcd] sm:$0xff]
        %v2642 = vld [vmem:[%s329 + $0xd5] sm:$0xff]
        %v2643 = vld [vmem:[%s329 + $0xdd] sm:$0xff]
        %v2644 = vld [vmem:[%s329 + $0xe5] sm:$0xff]
        %v2645 = vld [vmem:[%s329 + $0xed] sm:$0xff]
        %v2646 = vld [vmem:[%s329 + $0xf5] sm:$0xff]
        %v2647 = vld [vmem:[%s329 + $0xfd] sm:$0xff]
        %v2648 = vld [vmem:[%s329 + $0x105] sm:$0xff]
        %v2649 = vld [vmem:[%s329 + $0x10d] sm:$0xff]
        %v2650 = vld [vmem:[%s329 + $0x115] sm:$0xff]
        %v2651 = vld [vmem:[%s329 + $0x11d] sm:$0xff]
        %v2652 = vld [vmem:[%s329 + $0x125] sm:$0xff]
        %v2653 = vld [vmem:[%s329 + $0x12d] sm:$0xff]
        %v2654 = vld [vmem:[%s329 + $0x135] sm:$0xff]
        %v2655 = vld [vmem:[%s329 + $0x13d] sm:$0xff]
        %v2656 = vld [vmem:[%s329 + $0x145] sm:$0xff]
        %v2657 = vld [vmem:[%s329 + $0x14d] sm:$0xff]
        %v2658 = vld [vmem:[%s329 + $0x155] sm:$0xff]
        %v2659 = vld [vmem:[%s329 + $0x15d] sm:$0xff]
        %v2660 = vld [vmem:[%s329 + $0x165] sm:$0xf]
        %v2661 = vld [vmem:[%s1 + $0x7] sm:$0x1]
        %2663 = vset.pattern.permute.xlu0 0
        %2664 = vperm.xlu0 %2663, %v2620
        %v2665 = vpop.permute.xlu0 %2664
        %2668 = vset.pattern.permute.xlu0 0
        %2669 = vperm.xlu0 %2668, %v2621
        %v2670 = vpop.permute.xlu0 %2669
        %2673 = vset.pattern.permute.xlu0 0
        %2674 = vperm.xlu0 %2673, %v2622
        %v2675 = vpop.permute.xlu0 %2674
        %2678 = vset.pattern.permute.xlu0 0
        %2679 = vperm.xlu0 %2678, %v2623
        %v2680 = vpop.permute.xlu0 %2679
        %2683 = vset.pattern.permute.xlu0 0
        %2684 = vperm.xlu0 %2683, %v2624
        %v2685 = vpop.permute.xlu0 %2684
        %2688 = vset.pattern.permute.xlu0 0
        %2689 = vperm.xlu0 %2688, %v2625
        %v2690 = vpop.permute.xlu0 %2689
        %2693 = vset.pattern.permute.xlu0 0
        %2694 = vperm.xlu0 %2693, %v2626
        %v2695 = vpop.permute.xlu0 %2694
        %2698 = vset.pattern.permute.xlu0 0
        %2699 = vperm.xlu0 %2698, %v2627
        %v2700 = vpop.permute.xlu0 %2699
        %2703 = vset.pattern.permute.xlu0 0
        %2704 = vperm.xlu0 %2703, %v2628
        %v2705 = vpop.permute.xlu0 %2704
        %2708 = vset.pattern.permute.xlu0 0
        %2709 = vperm.xlu0 %2708, %v2629
        %v2710 = vpop.permute.xlu0 %2709
        %2713 = vset.pattern.permute.xlu0 0
        %2714 = vperm.xlu0 %2713, %v2630
        %v2715 = vpop.permute.xlu0 %2714
        %2718 = vset.pattern.permute.xlu0 0
        %2719 = vperm.xlu0 %2718, %v2631
        %v2720 = vpop.permute.xlu0 %2719
        %2723 = vset.pattern.permute.xlu0 0
        %2724 = vperm.xlu0 %2723, %v2632
        %v2725 = vpop.permute.xlu0 %2724
        %2728 = vset.pattern.permute.xlu0 0
        %2729 = vperm.xlu0 %2728, %v2633
        %v2730 = vpop.permute.xlu0 %2729
        %2733 = vset.pattern.permute.xlu0 0
        %2734 = vperm.xlu0 %2733, %v2634
        %v2735 = vpop.permute.xlu0 %2734
        %2738 = vset.pattern.permute.xlu0 0
        %2739 = vperm.xlu0 %2738, %v2635
        %v2740 = vpop.permute.xlu0 %2739
        %2743 = vset.pattern.permute.xlu0 0
        %2744 = vperm.xlu0 %2743, %v2636
        %v2745 = vpop.permute.xlu0 %2744
        %2748 = vset.pattern.permute.xlu0 0
        %2749 = vperm.xlu0 %2748, %v2637
        %v2750 = vpop.permute.xlu0 %2749
        %2753 = vset.pattern.permute.xlu0 0
        %2754 = vperm.xlu0 %2753, %v2638
        %v2755 = vpop.permute.xlu0 %2754
        %2758 = vset.pattern.permute.xlu0 0
        %2759 = vperm.xlu0 %2758, %v2639
        %v2760 = vpop.permute.xlu0 %2759
        %2763 = vset.pattern.permute.xlu0 0
        %2764 = vperm.xlu0 %2763, %v2640
        %v2765 = vpop.permute.xlu0 %2764
        %2768 = vset.pattern.permute.xlu0 0
        %2769 = vperm.xlu0 %2768, %v2641
        %v2770 = vpop.permute.xlu0 %2769
        %2773 = vset.pattern.permute.xlu0 0
        %2774 = vperm.xlu0 %2773, %v2642
        %v2775 = vpop.permute.xlu0 %2774
        %2778 = vset.pattern.permute.xlu0 0
        %2779 = vperm.xlu0 %2778, %v2643
        %v2780 = vpop.permute.xlu0 %2779
        %2783 = vset.pattern.permute.xlu0 0
        %2784 = vperm.xlu0 %2783, %v2644
        %v2785 = vpop.permute.xlu0 %2784
        %2788 = vset.pattern.permute.xlu0 0
        %2789 = vperm.xlu0 %2788, %v2645
        %v2790 = vpop.permute.xlu0 %2789
        %2793 = vset.pattern.permute.xlu0 0
        %2794 = vperm.xlu0 %2793, %v2646
        %v2795 = vpop.permute.xlu0 %2794
        %2798 = vset.pattern.permute.xlu0 0
        %2799 = vperm.xlu0 %2798, %v2647
        %v2800 = vpop.permute.xlu0 %2799
        %2803 = vset.pattern.permute.xlu0 0
        %2804 = vperm.xlu0 %2803, %v2648
        %v2805 = vpop.permute.xlu0 %2804
        %2808 = vset.pattern.permute.xlu0 0
        %2809 = vperm.xlu0 %2808, %v2649
        %v2810 = vpop.permute.xlu0 %2809
        %2813 = vset.pattern.permute.xlu0 0
        %2814 = vperm.xlu0 %2813, %v2650
        %v2815 = vpop.permute.xlu0 %2814
        %2818 = vset.pattern.permute.xlu0 0
        %2819 = vperm.xlu0 %2818, %v2651
        %v2820 = vpop.permute.xlu0 %2819
        %2823 = vset.pattern.permute.xlu0 0
        %2824 = vperm.xlu0 %2823, %v2652
        %v2825 = vpop.permute.xlu0 %2824
        %2828 = vset.pattern.permute.xlu0 0
        %2829 = vperm.xlu0 %2828, %v2653
        %v2830 = vpop.permute.xlu0 %2829
        %2833 = vset.pattern.permute.xlu0 0
        %2834 = vperm.xlu0 %2833, %v2654
        %v2835 = vpop.permute.xlu0 %2834
        %2838 = vset.pattern.permute.xlu0 0
        %2839 = vperm.xlu0 %2838, %v2655
        %v2840 = vpop.permute.xlu0 %2839
        %2843 = vset.pattern.permute.xlu0 0
        %2844 = vperm.xlu0 %2843, %v2656
        %v2845 = vpop.permute.xlu0 %2844
        %2848 = vset.pattern.permute.xlu0 0
        %2849 = vperm.xlu0 %2848, %v2657
        %v2850 = vpop.permute.xlu0 %2849
        %2853 = vset.pattern.permute.xlu0 0
        %2854 = vperm.xlu0 %2853, %v2658
        %v2855 = vpop.permute.xlu0 %2854
        %2858 = vset.pattern.permute.xlu0 0
        %2859 = vperm.xlu0 %2858, %v2659
        %v2860 = vpop.permute.xlu0 %2859
        %2863 = vset.pattern.permute.xlu0 0
        %2864 = vperm.xlu0 %2863, %v2660
        %v2865 = vpop.permute.xlu0 %2864
        %v2867 = vlaneseq
        %v2868 = vshrl.u32 %v2867, 7
        %v2869 = vsub.s32 0, %v2868
        %v2870 = vrot.slane %v2661, %v2869
        %v2871 = vmul.f32 %v2665, %v2870
        %v2872 = vmul.f32 %v2670, %v2870
        %v2873 = vmul.f32 %v2675, %v2870
        %v2874 = vmul.f32 %v2680, %v2870
        %v2875 = vmul.f32 %v2685, %v2870
        %v2876 = vmul.f32 %v2690, %v2870
        %v2877 = vmul.f32 %v2695, %v2870
        %v2878 = vmul.f32 %v2700, %v2870
        %v2879 = vmul.f32 %v2705, %v2870
        %v2880 = vmul.f32 %v2710, %v2870
        %v2881 = vmul.f32 %v2715, %v2870
        %v2882 = vmul.f32 %v2720, %v2870
        %v2883 = vmul.f32 %v2725, %v2870
        %v2884 = vmul.f32 %v2730, %v2870
        %v2885 = vmul.f32 %v2735, %v2870
        %v2886 = vmul.f32 %v2740, %v2870
        %v2887 = vmul.f32 %v2745, %v2870
        %v2888 = vmul.f32 %v2750, %v2870
        %v2889 = vmul.f32 %v2755, %v2870
        %v2890 = vmul.f32 %v2760, %v2870
        %v2891 = vmul.f32 %v2765, %v2870
        %v2892 = vmul.f32 %v2770, %v2870
        %v2893 = vmul.f32 %v2775, %v2870
        %v2894 = vmul.f32 %v2780, %v2870
        %v2895 = vmul.f32 %v2785, %v2870
        %v2896 = vmul.f32 %v2790, %v2870
        %v2897 = vmul.f32 %v2795, %v2870
        %v2898 = vmul.f32 %v2800, %v2870
        %v2899 = vmul.f32 %v2805, %v2870
        %v2900 = vmul.f32 %v2810, %v2870
        %v2901 = vmul.f32 %v2815, %v2870
        %v2902 = vmul.f32 %v2820, %v2870
        %v2903 = vmul.f32 %v2825, %v2870
        %v2904 = vmul.f32 %v2830, %v2870
        %v2905 = vmul.f32 %v2835, %v2870
        %v2906 = vmul.f32 %v2840, %v2870
        %v2907 = vmul.f32 %v2845, %v2870
        %v2908 = vmul.f32 %v2850, %v2870
        %v2909 = vmul.f32 %v2855, %v2870
        %v2910 = vmul.f32 %v2860, %v2870
        %v2911 = vmul.f32 %v2865, %v2870
        %v2912 = vadd.f32 %v2579, %v2871
        %v2913 = vadd.f32 %v2580, %v2872
        %v2914 = vadd.f32 %v2581, %v2873
        %v2915 = vadd.f32 %v2582, %v2874
        %v2916 = vadd.f32 %v2583, %v2875
        %v2917 = vadd.f32 %v2584, %v2876
        %v2918 = vadd.f32 %v2585, %v2877
        %v2919 = vadd.f32 %v2586, %v2878
        %v2920 = vadd.f32 %v2587, %v2879
        %v2921 = vadd.f32 %v2588, %v2880
        %v2922 = vadd.f32 %v2589, %v2881
        %v2923 = vadd.f32 %v2590, %v2882
        %v2924 = vadd.f32 %v2591, %v2883
        %v2925 = vadd.f32 %v2592, %v2884
        %v2926 = vadd.f32 %v2593, %v2885
        %v2927 = vadd.f32 %v2594, %v2886
        %v2928 = vadd.f32 %v2595, %v2887
        %v2929 = vadd.f32 %v2596, %v2888
        %v2930 = vadd.f32 %v2597, %v2889
        %v2931 = vadd.f32 %v2598, %v2890
        %v2932 = vadd.f32 %v2599, %v2891
        %v2933 = vadd.f32 %v2600, %v2892
        %v2934 = vadd.f32 %v2601, %v2893
        %v2935 = vadd.f32 %v2602, %v2894
        %v2936 = vadd.f32 %v2603, %v2895
        %v2937 = vadd.f32 %v2604, %v2896
        %v2938 = vadd.f32 %v2605, %v2897
        %v2939 = vadd.f32 %v2606, %v2898
        %v2940 = vadd.f32 %v2607, %v2899
        %v2941 = vadd.f32 %v2608, %v2900
        %v2942 = vadd.f32 %v2609, %v2901
        %v2943 = vadd.f32 %v2610, %v2902
        %v2944 = vadd.f32 %v2611, %v2903
        %v2945 = vadd.f32 %v2612, %v2904
        %v2946 = vadd.f32 %v2613, %v2905
        %v2947 = vadd.f32 %v2614, %v2906
        %v2948 = vadd.f32 %v2615, %v2907
        %v2949 = vadd.f32 %v2616, %v2908
        %v2950 = vadd.f32 %v2617, %v2909
        %v2951 = vadd.f32 %v2618, %v2910
        %v2952 = vadd.f32 %v2619, %v2911
        %v2953 = vld [vmem:[%s329 + $0x26] sm:$0xff]
        %v2954 = vld [vmem:[%s329 + $0x2e] sm:$0xff]
        %v2955 = vld [vmem:[%s329 + $0x36] sm:$0xff]
        %v2956 = vld [vmem:[%s329 + $0x3e] sm:$0xff]
        %v2957 = vld [vmem:[%s329 + $0x46] sm:$0xff]
        %v2958 = vld [vmem:[%s329 + $0x4e] sm:$0xff]
        %v2959 = vld [vmem:[%s329 + $0x56] sm:$0xff]
        %v2960 = vld [vmem:[%s329 + $0x5e] sm:$0xff]
        %v2961 = vld [vmem:[%s329 + $0x66] sm:$0xff]
        %v2962 = vld [vmem:[%s329 + $0x6e] sm:$0xff]
        %v2963 = vld [vmem:[%s329 + $0x76] sm:$0xff]
        %v2964 = vld [vmem:[%s329 + $0x7e] sm:$0xff]
        %v2965 = vld [vmem:[%s329 + $0x86] sm:$0xff]
        %v2966 = vld [vmem:[%s329 + $0x8e] sm:$0xff]
        %v2967 = vld [vmem:[%s329 + $0x96] sm:$0xff]
        %v2968 = vld [vmem:[%s329 + $0x9e] sm:$0xff]
        %v2969 = vld [vmem:[%s329 + $0xa6] sm:$0xff]
        %v2970 = vld [vmem:[%s329 + $0xae] sm:$0xff]
        %v2971 = vld [vmem:[%s329 + $0xb6] sm:$0xff]
        %v2972 = vld [vmem:[%s329 + $0xbe] sm:$0xff]
        %v2973 = vld [vmem:[%s329 + $0xc6] sm:$0xff]
        %v2974 = vld [vmem:[%s329 + $0xce] sm:$0xff]
        %v2975 = vld [vmem:[%s329 + $0xd6] sm:$0xff]
        %v2976 = vld [vmem:[%s329 + $0xde] sm:$0xff]
        %v2977 = vld [vmem:[%s329 + $0xe6] sm:$0xff]
        %v2978 = vld [vmem:[%s329 + $0xee] sm:$0xff]
        %v2979 = vld [vmem:[%s329 + $0xf6] sm:$0xff]
        %v2980 = vld [vmem:[%s329 + $0xfe] sm:$0xff]
        %v2981 = vld [vmem:[%s329 + $0x106] sm:$0xff]
        %v2982 = vld [vmem:[%s329 + $0x10e] sm:$0xff]
        %v2983 = vld [vmem:[%s329 + $0x116] sm:$0xff]
        %v2984 = vld [vmem:[%s329 + $0x11e] sm:$0xff]
        %v2985 = vld [vmem:[%s329 + $0x126] sm:$0xff]
        %v2986 = vld [vmem:[%s329 + $0x12e] sm:$0xff]
        %v2987 = vld [vmem:[%s329 + $0x136] sm:$0xff]
        %v2988 = vld [vmem:[%s329 + $0x13e] sm:$0xff]
        %v2989 = vld [vmem:[%s329 + $0x146] sm:$0xff]
        %v2990 = vld [vmem:[%s329 + $0x14e] sm:$0xff]
        %v2991 = vld [vmem:[%s329 + $0x156] sm:$0xff]
        %v2992 = vld [vmem:[%s329 + $0x15e] sm:$0xff]
        %v2993 = vld [vmem:[%s329 + $0x166] sm:$0xf]
        %v2994 = vld [vmem:[%s1 + $0x8] sm:$0x1]
        %2996 = vset.pattern.permute.xlu0 0
        %2997 = vperm.xlu0 %2996, %v2953
        %v2998 = vpop.permute.xlu0 %2997
        %3001 = vset.pattern.permute.xlu0 0
        %3002 = vperm.xlu0 %3001, %v2954
        %v3003 = vpop.permute.xlu0 %3002
        %3006 = vset.pattern.permute.xlu0 0
        %3007 = vperm.xlu0 %3006, %v2955
        %v3008 = vpop.permute.xlu0 %3007
        %3011 = vset.pattern.permute.xlu0 0
        %3012 = vperm.xlu0 %3011, %v2956
        %v3013 = vpop.permute.xlu0 %3012
        %3016 = vset.pattern.permute.xlu0 0
        %3017 = vperm.xlu0 %3016, %v2957
        %v3018 = vpop.permute.xlu0 %3017
        %3021 = vset.pattern.permute.xlu0 0
        %3022 = vperm.xlu0 %3021, %v2958
        %v3023 = vpop.permute.xlu0 %3022
        %3026 = vset.pattern.permute.xlu0 0
        %3027 = vperm.xlu0 %3026, %v2959
        %v3028 = vpop.permute.xlu0 %3027
        %3031 = vset.pattern.permute.xlu0 0
        %3032 = vperm.xlu0 %3031, %v2960
        %v3033 = vpop.permute.xlu0 %3032
        %3036 = vset.pattern.permute.xlu0 0
        %3037 = vperm.xlu0 %3036, %v2961
        %v3038 = vpop.permute.xlu0 %3037
        %3041 = vset.pattern.permute.xlu0 0
        %3042 = vperm.xlu0 %3041, %v2962
        %v3043 = vpop.permute.xlu0 %3042
        %3046 = vset.pattern.permute.xlu0 0
        %3047 = vperm.xlu0 %3046, %v2963
        %v3048 = vpop.permute.xlu0 %3047
        %3051 = vset.pattern.permute.xlu0 0
        %3052 = vperm.xlu0 %3051, %v2964
        %v3053 = vpop.permute.xlu0 %3052
        %3056 = vset.pattern.permute.xlu0 0
        %3057 = vperm.xlu0 %3056, %v2965
        %v3058 = vpop.permute.xlu0 %3057
        %3061 = vset.pattern.permute.xlu0 0
        %3062 = vperm.xlu0 %3061, %v2966
        %v3063 = vpop.permute.xlu0 %3062
        %3066 = vset.pattern.permute.xlu0 0
        %3067 = vperm.xlu0 %3066, %v2967
        %v3068 = vpop.permute.xlu0 %3067
        %3071 = vset.pattern.permute.xlu0 0
        %3072 = vperm.xlu0 %3071, %v2968
        %v3073 = vpop.permute.xlu0 %3072
        %3076 = vset.pattern.permute.xlu0 0
        %3077 = vperm.xlu0 %3076, %v2969
        %v3078 = vpop.permute.xlu0 %3077
        %3081 = vset.pattern.permute.xlu0 0
        %3082 = vperm.xlu0 %3081, %v2970
        %v3083 = vpop.permute.xlu0 %3082
        %3086 = vset.pattern.permute.xlu0 0
        %3087 = vperm.xlu0 %3086, %v2971
        %v3088 = vpop.permute.xlu0 %3087
        %3091 = vset.pattern.permute.xlu0 0
        %3092 = vperm.xlu0 %3091, %v2972
        %v3093 = vpop.permute.xlu0 %3092
        %3096 = vset.pattern.permute.xlu0 0
        %3097 = vperm.xlu0 %3096, %v2973
        %v3098 = vpop.permute.xlu0 %3097
        %3101 = vset.pattern.permute.xlu0 0
        %3102 = vperm.xlu0 %3101, %v2974
        %v3103 = vpop.permute.xlu0 %3102
        %3106 = vset.pattern.permute.xlu0 0
        %3107 = vperm.xlu0 %3106, %v2975
        %v3108 = vpop.permute.xlu0 %3107
        %3111 = vset.pattern.permute.xlu0 0
        %3112 = vperm.xlu0 %3111, %v2976
        %v3113 = vpop.permute.xlu0 %3112
        %3116 = vset.pattern.permute.xlu0 0
        %3117 = vperm.xlu0 %3116, %v2977
        %v3118 = vpop.permute.xlu0 %3117
        %3121 = vset.pattern.permute.xlu0 0
        %3122 = vperm.xlu0 %3121, %v2978
        %v3123 = vpop.permute.xlu0 %3122
        %3126 = vset.pattern.permute.xlu0 0
        %3127 = vperm.xlu0 %3126, %v2979
        %v3128 = vpop.permute.xlu0 %3127
        %3131 = vset.pattern.permute.xlu0 0
        %3132 = vperm.xlu0 %3131, %v2980
        %v3133 = vpop.permute.xlu0 %3132
        %3136 = vset.pattern.permute.xlu0 0
        %3137 = vperm.xlu0 %3136, %v2981
        %v3138 = vpop.permute.xlu0 %3137
        %3141 = vset.pattern.permute.xlu0 0
        %3142 = vperm.xlu0 %3141, %v2982
        %v3143 = vpop.permute.xlu0 %3142
        %3146 = vset.pattern.permute.xlu0 0
        %3147 = vperm.xlu0 %3146, %v2983
        %v3148 = vpop.permute.xlu0 %3147
        %3151 = vset.pattern.permute.xlu0 0
        %3152 = vperm.xlu0 %3151, %v2984
        %v3153 = vpop.permute.xlu0 %3152
        %3156 = vset.pattern.permute.xlu0 0
        %3157 = vperm.xlu0 %3156, %v2985
        %v3158 = vpop.permute.xlu0 %3157
        %3161 = vset.pattern.permute.xlu0 0
        %3162 = vperm.xlu0 %3161, %v2986
        %v3163 = vpop.permute.xlu0 %3162
        %3166 = vset.pattern.permute.xlu0 0
        %3167 = vperm.xlu0 %3166, %v2987
        %v3168 = vpop.permute.xlu0 %3167
        %3171 = vset.pattern.permute.xlu0 0
        %3172 = vperm.xlu0 %3171, %v2988
        %v3173 = vpop.permute.xlu0 %3172
        %3176 = vset.pattern.permute.xlu0 0
        %3177 = vperm.xlu0 %3176, %v2989
        %v3178 = vpop.permute.xlu0 %3177
        %3181 = vset.pattern.permute.xlu0 0
        %3182 = vperm.xlu0 %3181, %v2990
        %v3183 = vpop.permute.xlu0 %3182
        %3186 = vset.pattern.permute.xlu0 0
        %3187 = vperm.xlu0 %3186, %v2991
        %v3188 = vpop.permute.xlu0 %3187
        %3191 = vset.pattern.permute.xlu0 0
        %3192 = vperm.xlu0 %3191, %v2992
        %v3193 = vpop.permute.xlu0 %3192
        %3196 = vset.pattern.permute.xlu0 0
        %3197 = vperm.xlu0 %3196, %v2993
        %v3198 = vpop.permute.xlu0 %3197
        %v3200 = vlaneseq
        %v3201 = vshrl.u32 %v3200, 7
        %v3202 = vsub.s32 0, %v3201
        %v3203 = vrot.slane %v2994, %v3202
        %v3204 = vmul.f32 %v2998, %v3203
        %v3205 = vmul.f32 %v3003, %v3203
        %v3206 = vmul.f32 %v3008, %v3203
        %v3207 = vmul.f32 %v3013, %v3203
        %v3208 = vmul.f32 %v3018, %v3203
        %v3209 = vmul.f32 %v3023, %v3203
        %v3210 = vmul.f32 %v3028, %v3203
        %v3211 = vmul.f32 %v3033, %v3203
        %v3212 = vmul.f32 %v3038, %v3203
        %v3213 = vmul.f32 %v3043, %v3203
        %v3214 = vmul.f32 %v3048, %v3203
        %v3215 = vmul.f32 %v3053, %v3203
        %v3216 = vmul.f32 %v3058, %v3203
        %v3217 = vmul.f32 %v3063, %v3203
        %v3218 = vmul.f32 %v3068, %v3203
        %v3219 = vmul.f32 %v3073, %v3203
        %v3220 = vmul.f32 %v3078, %v3203
        %v3221 = vmul.f32 %v3083, %v3203
        %v3222 = vmul.f32 %v3088, %v3203
        %v3223 = vmul.f32 %v3093, %v3203
        %v3224 = vmul.f32 %v3098, %v3203
        %v3225 = vmul.f32 %v3103, %v3203
        %v3226 = vmul.f32 %v3108, %v3203
        %v3227 = vmul.f32 %v3113, %v3203
        %v3228 = vmul.f32 %v3118, %v3203
        %v3229 = vmul.f32 %v3123, %v3203
        %v3230 = vmul.f32 %v3128, %v3203
        %v3231 = vmul.f32 %v3133, %v3203
        %v3232 = vmul.f32 %v3138, %v3203
        %v3233 = vmul.f32 %v3143, %v3203
        %v3234 = vmul.f32 %v3148, %v3203
        %v3235 = vmul.f32 %v3153, %v3203
        %v3236 = vmul.f32 %v3158, %v3203
        %v3237 = vmul.f32 %v3163, %v3203
        %v3238 = vmul.f32 %v3168, %v3203
        %v3239 = vmul.f32 %v3173, %v3203
        %v3240 = vmul.f32 %v3178, %v3203
        %v3241 = vmul.f32 %v3183, %v3203
        %v3242 = vmul.f32 %v3188, %v3203
        %v3243 = vmul.f32 %v3193, %v3203
        %v3244 = vmul.f32 %v3198, %v3203
        %v3245 = vadd.f32 %v2912, %v3204
        %v3246 = vadd.f32 %v2913, %v3205
        %v3247 = vadd.f32 %v2914, %v3206
        %v3248 = vadd.f32 %v2915, %v3207
        %v3249 = vadd.f32 %v2916, %v3208
        %v3250 = vadd.f32 %v2917, %v3209
        %v3251 = vadd.f32 %v2918, %v3210
        %v3252 = vadd.f32 %v2919, %v3211
        %v3253 = vadd.f32 %v2920, %v3212
        %v3254 = vadd.f32 %v2921, %v3213
        %v3255 = vadd.f32 %v2922, %v3214
        %v3256 = vadd.f32 %v2923, %v3215
        %v3257 = vadd.f32 %v2924, %v3216
        %v3258 = vadd.f32 %v2925, %v3217
        %v3259 = vadd.f32 %v2926, %v3218
        %v3260 = vadd.f32 %v2927, %v3219
        %v3261 = vadd.f32 %v2928, %v3220
        %v3262 = vadd.f32 %v2929, %v3221
        %v3263 = vadd.f32 %v2930, %v3222
        %v3264 = vadd.f32 %v2931, %v3223
        %v3265 = vadd.f32 %v2932, %v3224
        %v3266 = vadd.f32 %v2933, %v3225
        %v3267 = vadd.f32 %v2934, %v3226
        %v3268 = vadd.f32 %v2935, %v3227
        %v3269 = vadd.f32 %v2936, %v3228
        %v3270 = vadd.f32 %v2937, %v3229
        %v3271 = vadd.f32 %v2938, %v3230
        %v3272 = vadd.f32 %v2939, %v3231
        %v3273 = vadd.f32 %v2940, %v3232
        %v3274 = vadd.f32 %v2941, %v3233
        %v3275 = vadd.f32 %v2942, %v3234
        %v3276 = vadd.f32 %v2943, %v3235
        %v3277 = vadd.f32 %v2944, %v3236
        %v3278 = vadd.f32 %v2945, %v3237
        %v3279 = vadd.f32 %v2946, %v3238
        %v3280 = vadd.f32 %v2947, %v3239
        %v3281 = vadd.f32 %v2948, %v3240
        %v3282 = vadd.f32 %v2949, %v3241
        %v3283 = vadd.f32 %v2950, %v3242
        %v3284 = vadd.f32 %v2951, %v3243
        %v3285 = vadd.f32 %v2952, %v3244
        %vm3286 = vcmask 130048
        %3287 = vst.msk [vmem:[#allocation2] sm:$0xff] %vm3286, %v3245
        %3288 = vst.msk [vmem:[#allocation2 + $0x8] sm:$0xff] %vm3286, %v3246
        %3289 = vst.msk [vmem:[#allocation2 + $0x10] sm:$0xff] %vm3286, %v3247
        %3290 = vst.msk [vmem:[#allocation2 + $0x18] sm:$0xff] %vm3286, %v3248
        %3291 = vst.msk [vmem:[#allocation2 + $0x20] sm:$0xff] %vm3286, %v3249
        %3292 = vst.msk [vmem:[#allocation2 + $0x28] sm:$0xff] %vm3286, %v3250
        %3293 = vst.msk [vmem:[#allocation2 + $0x30] sm:$0xff] %vm3286, %v3251
        %3294 = vst.msk [vmem:[#allocation2 + $0x38] sm:$0xff] %vm3286, %v3252
        %3295 = vst.msk [vmem:[#allocation2 + $0x40] sm:$0xff] %vm3286, %v3253
        %3296 = vst.msk [vmem:[#allocation2 + $0x48] sm:$0xff] %vm3286, %v3254
        %3297 = vst.msk [vmem:[#allocation2 + $0x50] sm:$0xff] %vm3286, %v3255
        %3298 = vst.msk [vmem:[#allocation2 + $0x58] sm:$0xff] %vm3286, %v3256
        %3299 = vst.msk [vmem:[#allocation2 + $0x60] sm:$0xff] %vm3286, %v3257
        %3300 = vst.msk [vmem:[#allocation2 + $0x68] sm:$0xff] %vm3286, %v3258
        %3301 = vst.msk [vmem:[#allocation2 + $0x70] sm:$0xff] %vm3286, %v3259
        %3302 = vst.msk [vmem:[#allocation2 + $0x78] sm:$0xff] %vm3286, %v3260
        %3303 = vst.msk [vmem:[#allocation2 + $0x80] sm:$0xff] %vm3286, %v3261
        %3304 = vst.msk [vmem:[#allocation2 + $0x88] sm:$0xff] %vm3286, %v3262
        %3305 = vst.msk [vmem:[#allocation2 + $0x90] sm:$0xff] %vm3286, %v3263
        %3306 = vst.msk [vmem:[#allocation2 + $0x98] sm:$0xff] %vm3286, %v3264
        %3307 = vst.msk [vmem:[#allocation2 + $0xa0] sm:$0xff] %vm3286, %v3265
        %3308 = vst.msk [vmem:[#allocation2 + $0xa8] sm:$0xff] %vm3286, %v3266
        %3309 = vst.msk [vmem:[#allocation2 + $0xb0] sm:$0xff] %vm3286, %v3267
        %3310 = vst.msk [vmem:[#allocation2 + $0xb8] sm:$0xff] %vm3286, %v3268
        %3311 = vst.msk [vmem:[#allocation2 + $0xc0] sm:$0xff] %vm3286, %v3269
        %3312 = vst.msk [vmem:[#allocation2 + $0xc8] sm:$0xff] %vm3286, %v3270
        %3313 = vst.msk [vmem:[#allocation2 + $0xd0] sm:$0xff] %vm3286, %v3271
        %3314 = vst.msk [vmem:[#allocation2 + $0xd8] sm:$0xff] %vm3286, %v3272
        %3315 = vst.msk [vmem:[#allocation2 + $0xe0] sm:$0xff] %vm3286, %v3273
        %3316 = vst.msk [vmem:[#allocation2 + $0xe8] sm:$0xff] %vm3286, %v3274
        %3317 = vst.msk [vmem:[#allocation2 + $0xf0] sm:$0xff] %vm3286, %v3275
        %3318 = vst.msk [vmem:[#allocation2 + $0xf8] sm:$0xff] %vm3286, %v3276
        %3319 = vst.msk [vmem:[#allocation2 + $0x100] sm:$0xff] %vm3286, %v3277
        %3320 = vst.msk [vmem:[#allocation2 + $0x108] sm:$0xff] %vm3286, %v3278
        %3321 = vst.msk [vmem:[#allocation2 + $0x110] sm:$0xff] %vm3286, %v3279
        %3322 = vst.msk [vmem:[#allocation2 + $0x118] sm:$0xff] %vm3286, %v3280
        %3323 = vst.msk [vmem:[#allocation2 + $0x120] sm:$0xff] %vm3286, %v3281
        %3324 = vst.msk [vmem:[#allocation2 + $0x128] sm:$0xff] %vm3286, %v3282
        %3325 = vst.msk [vmem:[#allocation2 + $0x130] sm:$0xff] %vm3286, %v3283
        %3326 = vst.msk [vmem:[#allocation2 + $0x138] sm:$0xff] %vm3286, %v3284
        %vm3327 = vcmask 125952
        %3328 = vst.msk [vmem:[#allocation2 + $0x140] sm:$0xf] %vm3327, %v3285
        %3329 = vst.msk [vmem:[#allocation3] sm:$0xff] %vm3286, 0.0
        %3330 = vst.msk [vmem:[#allocation3 + $0x8] sm:$0xff] %vm3286, 0.0
        %3331 = vst.msk [vmem:[#allocation3 + $0x10] sm:$0xff] %vm3286, 0.0
        %3332 = vst.msk [vmem:[#allocation3 + $0x18] sm:$0xff] %vm3286, 0.0
        %3333 = vst.msk [vmem:[#allocation3 + $0x20] sm:$0xff] %vm3286, 0.0
        %3334 = vst.msk [vmem:[#allocation3 + $0x28] sm:$0xff] %vm3286, 0.0
        %3335 = vst.msk [vmem:[#allocation3 + $0x30] sm:$0xff] %vm3286, 0.0
        %3336 = vst.msk [vmem:[#allocation3 + $0x38] sm:$0xff] %vm3286, 0.0
        %3337 = vst.msk [vmem:[#allocation3 + $0x40] sm:$0xff] %vm3286, 0.0
        %3338 = vst.msk [vmem:[#allocation3 + $0x48] sm:$0xff] %vm3286, 0.0
        %3339 = vst.msk [vmem:[#allocation3 + $0x50] sm:$0xff] %vm3286, 0.0
        %3340 = vst.msk [vmem:[#allocation3 + $0x58] sm:$0xff] %vm3286, 0.0
        %3341 = vst.msk [vmem:[#allocation3 + $0x60] sm:$0xff] %vm3286, 0.0
        %3342 = vst.msk [vmem:[#allocation3 + $0x68] sm:$0xff] %vm3286, 0.0
        %3343 = vst.msk [vmem:[#allocation3 + $0x70] sm:$0xff] %vm3286, 0.0
        %vm3344 = vcmask 123904
        %3345 = vst.msk [vmem:[#allocation3 + $0x78] sm:$0x3] %vm3344, 0.0
        %v3346 = vld [vmem:[%s2] sm:$0x1]
        %s3347 = scalar_lea.vmem [#allocation2], 19
        %v3348 = vld [vmem:[%s3347] ss:$2 sm:$0xff]
        %s3349 = scalar_lea.vmem [#allocation2], 20
        %v3350 = vld [vmem:[%s3349] ss:$2 sm:$0xff]
        %s3351 = scalar_lea.vmem [#allocation2], 37
        %v3352 = vld [vmem:[%s3351] ss:$2 sm:$0xff]
        %s3353 = scalar_lea.vmem [#allocation2], 38
        %v3354 = vld [vmem:[%s3353] ss:$2 sm:$0xff]
        %v3355 = vmax.f32 %v3348, %v3350
        %v3356 = vmax.f32 %v3352, %v3354
        %v3357 = vmax.f32 %v3355, %v3356
        %v3359 = vlaneseq
        %v3360 = vshrl.u32 %v3359, 7
        %v3361 = vsub.s32 0, %v3360
        %v3362 = vrot.slane %v3346, %v3361
        %v3364 = vadd.f32 %v3357, %v3362
        %v3365 = vmax.f32 %v3364, 0.0
        %3366 = vst.msk [vmem:[#allocation3 + $0x16] sm:$0xff] %vm3286, %v3365
        %s3367 = scalar_lea.vmem [#allocation2], 55
        %v3368 = vld [vmem:[%s3367] ss:$2 sm:$0xff]
        %s3369 = scalar_lea.vmem [#allocation2], 56
        %v3370 = vld [vmem:[%s3369] ss:$2 sm:$0xff]
        %s3371 = scalar_lea.vmem [#allocation2], 73
        %v3372 = vld [vmem:[%s3371] ss:$2 sm:$0xff]
        %s3373 = scalar_lea.vmem [#allocation2], 74
        %v3374 = vld [vmem:[%s3373] ss:$2 sm:$0xff]
        %v3375 = vmax.f32 %v3368, %v3370
        %v3376 = vmax.f32 %v3372, %v3374
        %v3377 = vmax.f32 %v3375, %v3376
        %v3378 = vadd.f32 %v3377, %v3362
        %v3379 = vmax.f32 %v3378, 0.0
        %3380 = vst.msk [vmem:[#allocation3 + $0x20] sm:$0xff] %vm3286, %v3379
        %s3381 = scalar_lea.vmem [#allocation2], 91
        %v3382 = vld [vmem:[%s3381] ss:$2 sm:$0xff]
        %s3383 = scalar_lea.vmem [#allocation2], 92
        %v3384 = vld [vmem:[%s3383] ss:$2 sm:$0xff]
        %s3385 = scalar_lea.vmem [#allocation2], 109
        %v3386 = vld [vmem:[%s3385] ss:$2 sm:$0xff]
        %s3387 = scalar_lea.vmem [#allocation2], 110
        %v3388 = vld [vmem:[%s3387] ss:$2 sm:$0xff]
        %v3389 = vmax.f32 %v3382, %v3384
        %v3390 = vmax.f32 %v3386, %v3388
        %v3391 = vmax.f32 %v3389, %v3390
        %v3392 = vadd.f32 %v3391, %v3362
        %v3393 = vmax.f32 %v3392, 0.0
        %3394 = vst.msk [vmem:[#allocation3 + $0x2a] sm:$0xff] %vm3286, %v3393
        %s3395 = scalar_lea.vmem [#allocation2], 127
        %v3396 = vld [vmem:[%s3395] ss:$2 sm:$0xff]
        %s3397 = scalar_lea.vmem [#allocation2], 128
        %v3398 = vld [vmem:[%s3397] ss:$2 sm:$0xff]
        %s3399 = scalar_lea.vmem [#allocation2], 145
        %v3400 = vld [vmem:[%s3399] ss:$2 sm:$0xff]
        %s3401 = scalar_lea.vmem [#allocation2], 146
        %v3402 = vld [vmem:[%s3401] ss:$2 sm:$0xff]
        %v3403 = vmax.f32 %v3396, %v3398
        %v3404 = vmax.f32 %v3400, %v3402
        %v3405 = vmax.f32 %v3403, %v3404
        %v3406 = vadd.f32 %v3405, %v3362
        %v3407 = vmax.f32 %v3406, 0.0
        %3408 = vst.msk [vmem:[#allocation3 + $0x34] sm:$0xff] %vm3286, %v3407
        %s3409 = scalar_lea.vmem [#allocation2], 163
        %v3410 = vld [vmem:[%s3409] ss:$2 sm:$0xff]
        %s3411 = scalar_lea.vmem [#allocation2], 164
        %v3412 = vld [vmem:[%s3411] ss:$2 sm:$0xff]
        %s3413 = scalar_lea.vmem [#allocation2], 181
        %v3414 = vld [vmem:[%s3413] ss:$2 sm:$0xff]
        %s3415 = scalar_lea.vmem [#allocation2], 182
        %v3416 = vld [vmem:[%s3415] ss:$2 sm:$0xff]
        %v3417 = vmax.f32 %v3410, %v3412
        %v3418 = vmax.f32 %v3414, %v3416
        %v3419 = vmax.f32 %v3417, %v3418
        %v3420 = vadd.f32 %v3419, %v3362
        %v3421 = vmax.f32 %v3420, 0.0
        %3422 = vst.msk [vmem:[#allocation3 + $0x3e] sm:$0xff] %vm3286, %v3421
        %s3423 = scalar_lea.vmem [#allocation2], 199
        %v3424 = vld [vmem:[%s3423] ss:$2 sm:$0xff]
        %s3425 = scalar_lea.vmem [#allocation2], 200
        %v3426 = vld [vmem:[%s3425] ss:$2 sm:$0xff]
        %s3427 = scalar_lea.vmem [#allocation2], 217
        %v3428 = vld [vmem:[%s3427] ss:$2 sm:$0xff]
        %s3429 = scalar_lea.vmem [#allocation2], 218
        %v3430 = vld [vmem:[%s3429] ss:$2 sm:$0xff]
        %v3431 = vmax.f32 %v3424, %v3426
        %v3432 = vmax.f32 %v3428, %v3430
        %v3433 = vmax.f32 %v3431, %v3432
        %v3434 = vadd.f32 %v3433, %v3362
        %v3435 = vmax.f32 %v3434, 0.0
        %3436 = vst.msk [vmem:[#allocation3 + $0x48] sm:$0xff] %vm3286, %v3435
        %s3437 = scalar_lea.vmem [#allocation2], 235
        %v3438 = vld [vmem:[%s3437] ss:$2 sm:$0xff]
        %s3439 = scalar_lea.vmem [#allocation2], 236
        %v3440 = vld [vmem:[%s3439] ss:$2 sm:$0xff]
        %s3441 = scalar_lea.vmem [#allocation2], 253
        %v3442 = vld [vmem:[%s3441] ss:$2 sm:$0xff]
        %s3443 = scalar_lea.vmem [#allocation2], 254
        %v3444 = vld [vmem:[%s3443] ss:$2 sm:$0xff]
        %v3445 = vmax.f32 %v3438, %v3440
        %v3446 = vmax.f32 %v3442, %v3444
        %v3447 = vmax.f32 %v3445, %v3446
        %v3448 = vadd.f32 %v3447, %v3362
        %v3449 = vmax.f32 %v3448, 0.0
        %3450 = vst.msk [vmem:[#allocation3 + $0x52] sm:$0xff] %vm3286, %v3449
        %s3451 = scalar_lea.vmem [#allocation2], 271
        %v3452 = vld [vmem:[%s3451] ss:$2 sm:$0xff]
        %s3453 = scalar_lea.vmem [#allocation2], 272
        %v3454 = vld [vmem:[%s3453] ss:$2 sm:$0xff]
        %s3455 = scalar_lea.vmem [#allocation2], 289
        %v3456 = vld [vmem:[%s3455] ss:$2 sm:$0xff]
        %s3457 = scalar_lea.vmem [#allocation2], 290
        %v3458 = vld [vmem:[%s3457] ss:$2 sm:$0xff]
        %v3459 = vmax.f32 %v3452, %v3454
        %v3460 = vmax.f32 %v3456, %v3458
        %v3461 = vmax.f32 %v3459, %v3460
        %v3462 = vadd.f32 %v3461, %v3362
        %v3463 = vmax.f32 %v3462, 0.0
        %3464 = vst.msk [vmem:[#allocation3 + $0x5c] sm:$0xff] %vm3286, %v3463
        %v3465 = vld [vmem:[#allocation3] sm:$0xff]
        %v3466 = vld [vmem:[#allocation3 + $0x8] sm:$0xff]
        %v3467 = vld [vmem:[#allocation3 + $0x10] sm:$0xff]
        %v3468 = vld [vmem:[#allocation3 + $0x18] sm:$0xff]
        %v3469 = vld [vmem:[#allocation3 + $0x20] sm:$0xff]
        %v3470 = vld [vmem:[#allocation3 + $0x28] sm:$0xff]
        %v3471 = vld [vmem:[#allocation3 + $0x30] sm:$0xff]
        %v3472 = vld [vmem:[#allocation3 + $0x38] sm:$0xff]
        %v3473 = vld [vmem:[#allocation3 + $0x40] sm:$0xff]
        %v3474 = vld [vmem:[#allocation3 + $0x48] sm:$0xff]
        %v3475 = vld [vmem:[#allocation3 + $0x50] sm:$0xff]
        %v3476 = vld [vmem:[#allocation3 + $0x58] sm:$0xff]
        %v3477 = vld [vmem:[#allocation3 + $0x60] sm:$0xf]
        %v3478 = vld [vmem:[%s3] sm:$0xff]
        %v3479 = vld [vmem:[%s3 + $0x8] sm:$0xff]
        %v3480 = vld [vmem:[#allocation3 + $0x1] sm:$0xff]
        %v3481 = vld [vmem:[#allocation3 + $0x9] sm:$0xff]
        %v3482 = vld [vmem:[#allocation3 + $0x11] sm:$0xff]
        %v3483 = vld [vmem:[#allocation3 + $0x19] sm:$0xff]
        %v3484 = vld [vmem:[#allocation3 + $0x21] sm:$0xff]
        %v3485 = vld [vmem:[#allocation3 + $0x29] sm:$0xff]
        %v3486 = vld [vmem:[#allocation3 + $0x31] sm:$0xff]
        %v3487 = vld [vmem:[#allocation3 + $0x39] sm:$0xff]
        %v3488 = vld [vmem:[#allocation3 + $0x41] sm:$0xff]
        %v3489 = vld [vmem:[#allocation3 + $0x49] sm:$0xff]
        %v3490 = vld [vmem:[#allocation3 + $0x51] sm:$0xff]
        %v3491 = vld [vmem:[#allocation3 + $0x59] sm:$0xff]
        %v3492 = vld [vmem:[#allocation3 + $0x61] sm:$0xf]
        %v3493 = vld [vmem:[%s3 + $0x10] sm:$0xff]
        %v3494 = vld [vmem:[%s3 + $0x18] sm:$0xff]
        %v3496 = vsel %vm3286, %v3480, 0
        %v3499 = vsel %vm3286, %v3481, 0
        %v3502 = vsel %vm3286, %v3482, 0
        %v3505 = vsel %vm3286, %v3483, 0
        %v3508 = vsel %vm3286, %v3484, 0
        %v3511 = vsel %vm3286, %v3485, 0
        %v3514 = vsel %vm3286, %v3486, 0
        %v3517 = vsel %vm3286, %v3487, 0
        %v3520 = vsel %vm3286, %v3488, 0
        %v3523 = vsel %vm3286, %v3489, 0
        %v3526 = vsel %vm3286, %v3490, 0
        %v3529 = vsel %vm3286, %v3491, 0
        %v3532 = vsel %vm3286, %v3492, 0
        %3534 = vmatprep.subr.mxu0 0.0
        %3535 = vmatpush1.msra.mxu0 %v3493
        %3536 = vmatprep.subr.mxu0 0.0
        %3537 = vmatpush1.msra.mxu0 %v3494
        %3538 = vmatprep.subr.mxu0 0.0
        %3539 = vmatpush1.msra.mxu0 0.0
        %3540 = vmatprep.subr.mxu0 0.0
        %3541 = vmatpush1.msra.mxu0 0.0
        %3542 = vmatprep.subr.mxu0 0.0
        %3543 = vmatpush1.msra.mxu0 0.0
        %3544 = vmatprep.subr.mxu0 0.0
        %3545 = vmatpush1.msra.mxu0 0.0
        %3546 = vmatprep.subr.mxu0 0.0
        %3547 = vmatpush1.msra.mxu0 0.0
        %3548 = vmatprep.subr.mxu0 0.0
        %3549 = vmatpush1.msra.mxu0 0.0
        %3550 = vmatprep.subr.mxu0 0.0
        %3551 = vmatpush1.msra.mxu0 0.0
        %3552 = vmatprep.subr.mxu0 0.0
        %3553 = vmatpush1.msra.mxu0 0.0
        %3554 = vmatprep.subr.mxu0 0.0
        %3555 = vmatpush1.msra.mxu0 0.0
        %3556 = vmatprep.subr.mxu0 0.0
        %3557 = vmatpush1.msra.mxu0 0.0
        %3558 = vmatprep.subr.mxu0 0.0
        %3559 = vmatpush1.msra.mxu0 0.0
        %3560 = vmatprep.subr.mxu0 0.0
        %3561 = vmatpush1.msra.mxu0 0.0
        %3562 = vmatprep.subr.mxu0 0.0
        %3563 = vmatpush1.msra.mxu0 0.0
        %3564 = vmatprep.subr.mxu0 0.0
        %3565 = vmatpush1.msra.mxu0 0.0
        %3566 = vmatprep.subr.mxu0 0.0
        %3567 = vmatpush1.msra.mxu0 0.0
        %3568 = vmatprep.subr.mxu0 0.0
        %3569 = vmatpush1.msra.mxu0 0.0
        %3570 = vmatprep.subr.mxu0 0.0
        %3571 = vmatpush1.msra.mxu0 0.0
        %3572 = vmatprep.subr.mxu0 0.0
        %3573 = vmatpush1.msra.mxu0 0.0
        %3574 = vmatprep.subr.mxu0 0.0
        %3575 = vmatpush1.msra.mxu0 0.0
        %3576 = vmatprep.subr.mxu0 0.0
        %3577 = vmatpush1.msra.mxu0 0.0
        %3578 = vmatprep.subr.mxu0 0.0
        %3579 = vmatpush1.msra.mxu0 0.0
        %3580 = vmatprep.subr.mxu0 0.0
        %3581 = vmatpush1.msra.mxu0 0.0
        %3582 = vmatprep.subr.mxu0 0.0
        %3583 = vmatpush1.msra.mxu0 0.0
        %3584 = vmatprep.subr.mxu0 0.0
        %3585 = vmatpush1.msra.mxu0 0.0
        %3586 = vmatprep.subr.mxu0 0.0
        %3587 = vmatpush1.msra.mxu0 0.0
        %3588 = vmatprep.subr.mxu0 0.0
        %3589 = vmatpush1.msra.mxu0 0.0
        %3590 = vmatprep.subr.mxu0 0.0
        %3591 = vmatpush1.msra.mxu0 0.0
        %3592 = vmatprep.subr.mxu0 0.0
        %3593 = vmatpush1.msra.mxu0 0.0
        %3594 = vmatprep.subr.mxu0 0.0
        %3595 = vmatpush1.msra.mxu0 0.0
        %3596 = vmatprep.subr.mxu0 0.0
        %3597 = vmatpush1.msra.mxu0 0.0
        %3598 = vmatprep.mubr.f32.mxu0 0.0
        %3599 = vmatmul.mubr.f32.gmra.mrb[0].mxu0 %v3496
        %v3600 = vpop.f32.mrb[0].mxu0
        %v3601 = vadd.f32 0.0, %v3600
        %v3602 = vpop.f32.mrb[0].mxu0
        %3603 = vmatprep.mubr.f32.mxu0 0.0
        %3604 = vmatmul.mubr.f32.gmra.mrb[0].mxu0 %v3499
        %v3605 = vpop.f32.mrb[0].mxu0
        %v3606 = vadd.f32 0.0, %v3605
        %v3607 = vpop.f32.mrb[0].mxu0
        %3608 = vmatprep.mubr.f32.mxu0 0.0
        %3609 = vmatmul.mubr.f32.gmra.mrb[0].mxu0 %v3502
        %v3610 = vpop.f32.mrb[0].mxu0
        %v3611 = vadd.f32 0.0, %v3610
        %v3612 = vpop.f32.mrb[0].mxu0
        %3613 = vmatprep.mubr.f32.mxu0 0.0
        %3614 = vmatmul.mubr.f32.gmra.mrb[0].mxu0 %v3505
        %v3615 = vpop.f32.mrb[0].mxu0
        %v3616 = vadd.f32 0.0, %v3615
        %v3617 = vpop.f32.mrb[0].mxu0
        %3618 = vmatprep.mubr.f32.mxu0 0.0
        %3619 = vmatmul.mubr.f32.gmra.mrb[0].mxu0 %v3508
        %v3620 = vpop.f32.mrb[0].mxu0
        %v3621 = vadd.f32 0.0, %v3620
        %v3622 = vpop.f32.mrb[0].mxu0
        %3623 = vmatprep.mubr.f32.mxu0 0.0
        %3624 = vmatmul.mubr.f32.gmra.mrb[0].mxu0 %v3511
        %v3625 = vpop.f32.mrb[0].mxu0
        %v3626 = vadd.f32 0.0, %v3625
        %v3627 = vpop.f32.mrb[0].mxu0
        %3628 = vmatprep.mubr.f32.mxu0 0.0
        %3629 = vmatmul.mubr.f32.gmra.mrb[0].mxu0 %v3514
        %v3630 = vpop.f32.mrb[0].mxu0
        %v3631 = vadd.f32 0.0, %v3630
        %v3632 = vpop.f32.mrb[0].mxu0
        %3633 = vmatprep.mubr.f32.mxu0 0.0
        %3634 = vmatmul.mubr.f32.gmra.mrb[0].mxu0 %v3517
        %v3635 = vpop.f32.mrb[0].mxu0
        %v3636 = vadd.f32 0.0, %v3635
        %v3637 = vpop.f32.mrb[0].mxu0
        %3638 = vmatprep.mubr.f32.mxu0 0.0
        %3639 = vmatmul.mubr.f32.gmra.mrb[0].mxu0 %v3520
        %v3640 = vpop.f32.mrb[0].mxu0
        %v3641 = vadd.f32 0.0, %v3640
        %v3642 = vpop.f32.mrb[0].mxu0
        %3643 = vmatprep.mubr.f32.mxu0 0.0
        %3644 = vmatmul.mubr.f32.gmra.mrb[0].mxu0 %v3523
        %v3645 = vpop.f32.mrb[0].mxu0
        %v3646 = vadd.f32 0.0, %v3645
        %v3647 = vpop.f32.mrb[0].mxu0
        %3648 = vmatprep.mubr.f32.mxu0 0.0
        %3649 = vmatmul.mubr.f32.gmra.mrb[0].mxu0 %v3526
        %v3650 = vpop.f32.mrb[0].mxu0
        %v3651 = vadd.f32 0.0, %v3650
        %v3652 = vpop.f32.mrb[0].mxu0
        %3653 = vmatprep.mubr.f32.mxu0 0.0
        %3654 = vmatmul.mubr.f32.gmra.mrb[0].mxu0 %v3529
        %v3655 = vpop.f32.mrb[0].mxu0
        %v3656 = vadd.f32 0.0, %v3655
        %v3657 = vpop.f32.mrb[0].mxu0
        %3658 = vmatprep.mubr.f32.mxu0 0.0
        %3659 = vmatmul.mubr.f32.gmra.mrb[0].mxu0 %v3532
        %v3660 = vpop.f32.mrb[0].mxu0
        %v3661 = vadd.f32 0.0, %v3660
        %v3662 = vpop.f32.mrb[0].mxu0
        %3663 = vdwg.mxu0
        %v3665 = vsel %vm3286, %v3465, 0
        %v3668 = vsel %vm3286, %v3466, 0
        %v3671 = vsel %vm3286, %v3467, 0
        %v3674 = vsel %vm3286, %v3468, 0
        %v3677 = vsel %vm3286, %v3469, 0
        %v3680 = vsel %vm3286, %v3470, 0
        %v3683 = vsel %vm3286, %v3471, 0
        %v3686 = vsel %vm3286, %v3472, 0
        %v3689 = vsel %vm3286, %v3473, 0
        %v3692 = vsel %vm3286, %v3474, 0
        %v3695 = vsel %vm3286, %v3475, 0
        %v3698 = vsel %vm3286, %v3476, 0
        %v3701 = vsel %vm3286, %v3477, 0
        %3703 = vmatprep.subr.mxu0 0.0
        %3704 = vmatpush1.msra.mxu0 %v3478
        %3705 = vmatprep.subr.mxu0 0.0
        %3706 = vmatpush1.msra.mxu0 %v3479
        %3707 = vmatprep.subr.mxu0 0.0
        %3708 = vmatpush1.msra.mxu0 0.0
        %3709 = vmatprep.subr.mxu0 0.0
        %3710 = vmatpush1.msra.mxu0 0.0
        %3711 = vmatprep.subr.mxu0 0.0
        %3712 = vmatpush1.msra.mxu0 0.0
        %3713 = vmatprep.subr.mxu0 0.0
        %3714 = vmatpush1.msra.mxu0 0.0
        %3715 = vmatprep.subr.mxu0 0.0
        %3716 = vmatpush1.msra.mxu0 0.0
        %3717 = vmatprep.subr.mxu0 0.0
        %3718 = vmatpush1.msra.mxu0 0.0
        %3719 = vmatprep.subr.mxu0 0.0
        %3720 = vmatpush1.msra.mxu0 0.0
        %3721 = vmatprep.subr.mxu0 0.0
        %3722 = vmatpush1.msra.mxu0 0.0
        %3723 = vmatprep.subr.mxu0 0.0
        %3724 = vmatpush1.msra.mxu0 0.0
        %3725 = vmatprep.subr.mxu0 0.0
        %3726 = vmatpush1.msra.mxu0 0.0
        %3727 = vmatprep.subr.mxu0 0.0
        %3728 = vmatpush1.msra.mxu0 0.0
        %3729 = vmatprep.subr.mxu0 0.0
        %3730 = vmatpush1.msra.mxu0 0.0
        %3731 = vmatprep.subr.mxu0 0.0
        %3732 = vmatpush1.msra.mxu0 0.0
        %3733 = vmatprep.subr.mxu0 0.0
        %3734 = vmatpush1.msra.mxu0 0.0
        %3735 = vmatprep.subr.mxu0 0.0
        %3736 = vmatpush1.msra.mxu0 0.0
        %3737 = vmatprep.subr.mxu0 0.0
        %3738 = vmatpush1.msra.mxu0 0.0
        %3739 = vmatprep.subr.mxu0 0.0
        %3740 = vmatpush1.msra.mxu0 0.0
        %3741 = vmatprep.subr.mxu0 0.0
        %3742 = vmatpush1.msra.mxu0 0.0
        %3743 = vmatprep.subr.mxu0 0.0
        %3744 = vmatpush1.msra.mxu0 0.0
        %3745 = vmatprep.subr.mxu0 0.0
        %3746 = vmatpush1.msra.mxu0 0.0
        %3747 = vmatprep.subr.mxu0 0.0
        %3748 = vmatpush1.msra.mxu0 0.0
        %3749 = vmatprep.subr.mxu0 0.0
        %3750 = vmatpush1.msra.mxu0 0.0
        %3751 = vmatprep.subr.mxu0 0.0
        %3752 = vmatpush1.msra.mxu0 0.0
        %3753 = vmatprep.subr.mxu0 0.0
        %3754 = vmatpush1.msra.mxu0 0.0
        %3755 = vmatprep.subr.mxu0 0.0
        %3756 = vmatpush1.msra.mxu0 0.0
        %3757 = vmatprep.subr.mxu0 0.0
        %3758 = vmatpush1.msra.mxu0 0.0
        %3759 = vmatprep.subr.mxu0 0.0
        %3760 = vmatpush1.msra.mxu0 0.0
        %3761 = vmatprep.subr.mxu0 0.0
        %3762 = vmatpush1.msra.mxu0 0.0
        %3763 = vmatprep.subr.mxu0 0.0
        %3764 = vmatpush1.msra.mxu0 0.0
        %3765 = vmatprep.subr.mxu0 0.0
        %3766 = vmatpush1.msra.mxu0 0.0
        %3767 = vmatprep.mubr.f32.mxu0 0.0
        %3768 = vmatmul.mubr.f32.gmra.mrb[0].mxu0 %v3665
        %v3769 = vpop.f32.mrb[0].mxu0
        %v3770 = vadd.f32 %v3601, %v3769
        %v3771 = vpop.f32.mrb[0].mxu0
        %3772 = vmatprep.mubr.f32.mxu0 0.0
        %3773 = vmatmul.mubr.f32.gmra.mrb[0].mxu0 %v3668
        %v3774 = vpop.f32.mrb[0].mxu0
        %v3775 = vadd.f32 %v3606, %v3774
        %v3776 = vpop.f32.mrb[0].mxu0
        %3777 = vmatprep.mubr.f32.mxu0 0.0
        %3778 = vmatmul.mubr.f32.gmra.mrb[0].mxu0 %v3671
        %v3779 = vpop.f32.mrb[0].mxu0
        %v3780 = vadd.f32 %v3611, %v3779
        %v3781 = vpop.f32.mrb[0].mxu0
        %3782 = vmatprep.mubr.f32.mxu0 0.0
        %3783 = vmatmul.mubr.f32.gmra.mrb[0].mxu0 %v3674
        %v3784 = vpop.f32.mrb[0].mxu0
        %v3785 = vadd.f32 %v3616, %v3784
        %v3786 = vpop.f32.mrb[0].mxu0
        %3787 = vmatprep.mubr.f32.mxu0 0.0
        %3788 = vmatmul.mubr.f32.gmra.mrb[0].mxu0 %v3677
        %v3789 = vpop.f32.mrb[0].mxu0
        %v3790 = vadd.f32 %v3621, %v3789
        %v3791 = vpop.f32.mrb[0].mxu0
        %3792 = vmatprep.mubr.f32.mxu0 0.0
        %3793 = vmatmul.mubr.f32.gmra.mrb[0].mxu0 %v3680
        %v3794 = vpop.f32.mrb[0].mxu0
        %v3795 = vadd.f32 %v3626, %v3794
        %v3796 = vpop.f32.mrb[0].mxu0
        %3797 = vmatprep.mubr.f32.mxu0 0.0
        %3798 = vmatmul.mubr.f32.gmra.mrb[0].mxu0 %v3683
        %v3799 = vpop.f32.mrb[0].mxu0
        %v3800 = vadd.f32 %v3631, %v3799
        %v3801 = vpop.f32.mrb[0].mxu0
        %3802 = vmatprep.mubr.f32.mxu0 0.0
        %3803 = vmatmul.mubr.f32.gmra.mrb[0].mxu0 %v3686
        %v3804 = vpop.f32.mrb[0].mxu0
        %v3805 = vadd.f32 %v3636, %v3804
        %v3806 = vpop.f32.mrb[0].mxu0
        %3807 = vmatprep.mubr.f32.mxu0 0.0
        %3808 = vmatmul.mubr.f32.gmra.mrb[0].mxu0 %v3689
        %v3809 = vpop.f32.mrb[0].mxu0
        %v3810 = vadd.f32 %v3641, %v3809
        %v3811 = vpop.f32.mrb[0].mxu0
        %3812 = vmatprep.mubr.f32.mxu0 0.0
        %3813 = vmatmul.mubr.f32.gmra.mrb[0].mxu0 %v3692
        %v3814 = vpop.f32.mrb[0].mxu0
        %v3815 = vadd.f32 %v3646, %v3814
        %v3816 = vpop.f32.mrb[0].mxu0
        %3817 = vmatprep.mubr.f32.mxu0 0.0
        %3818 = vmatmul.mubr.f32.gmra.mrb[0].mxu0 %v3695
        %v3819 = vpop.f32.mrb[0].mxu0
        %v3820 = vadd.f32 %v3651, %v3819
        %v3821 = vpop.f32.mrb[0].mxu0
        %3822 = vmatprep.mubr.f32.mxu0 0.0
        %3823 = vmatmul.mubr.f32.gmra.mrb[0].mxu0 %v3698
        %v3824 = vpop.f32.mrb[0].mxu0
        %v3825 = vadd.f32 %v3656, %v3824
        %v3826 = vpop.f32.mrb[0].mxu0
        %3827 = vmatprep.mubr.f32.mxu0 0.0
        %3828 = vmatmul.mubr.f32.gmra.mrb[0].mxu0 %v3701
        %v3829 = vpop.f32.mrb[0].mxu0
        %v3830 = vadd.f32 %v3661, %v3829
        %v3831 = vpop.f32.mrb[0].mxu0
        %3832 = vdwg.mxu0
        %v3833 = vld [vmem:[#allocation3 + $0x2] sm:$0xff]
        %v3834 = vld [vmem:[#allocation3 + $0xa] sm:$0xff]
        %v3835 = vld [vmem:[#allocation3 + $0x12] sm:$0xff]
        %v3836 = vld [vmem:[#allocation3 + $0x1a] sm:$0xff]
        %v3837 = vld [vmem:[#allocation3 + $0x22] sm:$0xff]
        %v3838 = vld [vmem:[#allocation3 + $0x2a] sm:$0xff]
        %v3839 = vld [vmem:[#allocation3 + $0x32] sm:$0xff]
        %v3840 = vld [vmem:[#allocation3 + $0x3a] sm:$0xff]
        %v3841 = vld [vmem:[#allocation3 + $0x42] sm:$0xff]
        %v3842 = vld [vmem:[#allocation3 + $0x4a] sm:$0xff]
        %v3843 = vld [vmem:[#allocation3 + $0x52] sm:$0xff]
        %v3844 = vld [vmem:[#allocation3 + $0x5a] sm:$0xff]
        %v3845 = vld [vmem:[#allocation3 + $0x62] sm:$0xf]
        %v3846 = vld [vmem:[%s3 + $0x20] sm:$0xff]
        %v3847 = vld [vmem:[%s3 + $0x28] sm:$0xff]
        %v3849 = vsel %vm3286, %v3833, 0
        %v3852 = vsel %vm3286, %v3834, 0
        %v3855 = vsel %vm3286, %v3835, 0
        %v3858 = vsel %vm3286, %v3836, 0
        %v3861 = vsel %vm3286, %v3837, 0
        %v3864 = vsel %vm3286, %v3838, 0
        %v3867 = vsel %vm3286, %v3839, 0
        %v3870 = vsel %vm3286, %v3840, 0
        %v3873 = vsel %vm3286, %v3841, 0
        %v3876 = vsel %vm3286, %v3842, 0
        %v3879 = vsel %vm3286, %v3843, 0
        %v3882 = vsel %vm3286, %v3844, 0
        %v3885 = vsel %vm3286, %v3845, 0
        %3887 = vmatprep.subr.mxu0 0.0
        %3888 = vmatpush1.msra.mxu0 %v3846
        %3889 = vmatprep.subr.mxu0 0.0
        %3890 = vmatpush1.msra.mxu0 %v3847
        %3891 = vmatprep.subr.mxu0 0.0
        %3892 = vmatpush1.msra.mxu0 0.0
        %3893 = vmatprep.subr.mxu0 0.0
        %3894 = vmatpush1.msra.mxu0 0.0
        %3895 = vmatprep.subr.mxu0 0.0
        %3896 = vmatpush1.msra.mxu0 0.0
        %3897 = vmatprep.subr.mxu0 0.0
        %3898 = vmatpush1.msra.mxu0 0.0
        %3899 = vmatprep.subr.mxu0 0.0
        %3900 = vmatpush1.msra.mxu0 0.0
        %3901 = vmatprep.subr.mxu0 0.0
        %3902 = vmatpush1.msra.mxu0 0.0
        %3903 = vmatprep.subr.mxu0 0.0
        %3904 = vmatpush1.msra.mxu0 0.0
        %3905 = vmatprep.subr.mxu0 0.0
        %3906 = vmatpush1.msra.mxu0 0.0
        %3907 = vmatprep.subr.mxu0 0.0
        %3908 = vmatpush1.msra.mxu0 0.0
        %3909 = vmatprep.subr.mxu0 0.0
        %3910 = vmatpush1.msra.mxu0 0.0
        %3911 = vmatprep.subr.mxu0 0.0
        %3912 = vmatpush1.msra.mxu0 0.0
        %3913 = vmatprep.subr.mxu0 0.0
        %3914 = vmatpush1.msra.mxu0 0.0
        %3915 = vmatprep.subr.mxu0 0.0
        %3916 = vmatpush1.msra.mxu0 0.0
        %3917 = vmatprep.subr.mxu0 0.0
        %3918 = vmatpush1.msra.mxu0 0.0
        %3919 = vmatprep.subr.mxu0 0.0
        %3920 = vmatpush1.msra.mxu0 0.0
        %3921 = vmatprep.subr.mxu0 0.0
        %3922 = vmatpush1.msra.mxu0 0.0
        %3923 = vmatprep.subr.mxu0 0.0
        %3924 = vmatpush1.msra.mxu0 0.0
        %3925 = vmatprep.subr.mxu0 0.0
        %3926 = vmatpush1.msra.mxu0 0.0
        %3927 = vmatprep.subr.mxu0 0.0
        %3928 = vmatpush1.msra.mxu0 0.0
        %3929 = vmatprep.subr.mxu0 0.0
        %3930 = vmatpush1.msra.mxu0 0.0
        %3931 = vmatprep.subr.mxu0 0.0
        %3932 = vmatpush1.msra.mxu0 0.0
        %3933 = vmatprep.subr.mxu0 0.0
        %3934 = vmatpush1.msra.mxu0 0.0
        %3935 = vmatprep.subr.mxu0 0.0
        %3936 = vmatpush1.msra.mxu0 0.0
        %3937 = vmatprep.subr.mxu0 0.0
        %3938 = vmatpush1.msra.mxu0 0.0
        %3939 = vmatprep.subr.mxu0 0.0
        %3940 = vmatpush1.msra.mxu0 0.0
        %3941 = vmatprep.subr.mxu0 0.0
        %3942 = vmatpush1.msra.mxu0 0.0
        %3943 = vmatprep.subr.mxu0 0.0
        %3944 = vmatpush1.msra.mxu0 0.0
        %3945 = vmatprep.subr.mxu0 0.0
        %3946 = vmatpush1.msra.mxu0 0.0
        %3947 = vmatprep.subr.mxu0 0.0
        %3948 = vmatpush1.msra.mxu0 0.0
        %3949 = vmatprep.subr.mxu0 0.0
        %3950 = vmatpush1.msra.mxu0 0.0
        %3951 = vmatprep.mubr.f32.mxu0 0.0
        %3952 = vmatmul.mubr.f32.gmra.mrb[0].mxu0 %v3849
        %v3953 = vpop.f32.mrb[0].mxu0
        %v3954 = vadd.f32 0.0, %v3953
        %v3955 = vpop.f32.mrb[0].mxu0
        %3956 = vmatprep.mubr.f32.mxu0 0.0
        %3957 = vmatmul.mubr.f32.gmra.mrb[0].mxu0 %v3852
        %v3958 = vpop.f32.mrb[0].mxu0
        %v3959 = vadd.f32 0.0, %v3958
        %v3960 = vpop.f32.mrb[0].mxu0
        %3961 = vmatprep.mubr.f32.mxu0 0.0
        %3962 = vmatmul.mubr.f32.gmra.mrb[0].mxu0 %v3855
        %v3963 = vpop.f32.mrb[0].mxu0
        %v3964 = vadd.f32 0.0, %v3963
        %v3965 = vpop.f32.mrb[0].mxu0
        %3966 = vmatprep.mubr.f32.mxu0 0.0
        %3967 = vmatmul.mubr.f32.gmra.mrb[0].mxu0 %v3858
        %v3968 = vpop.f32.mrb[0].mxu0
        %v3969 = vadd.f32 0.0, %v3968
        %v3970 = vpop.f32.mrb[0].mxu0
        %3971 = vmatprep.mubr.f32.mxu0 0.0
        %3972 = vmatmul.mubr.f32.gmra.mrb[0].mxu0 %v3861
        %v3973 = vpop.f32.mrb[0].mxu0
        %v3974 = vadd.f32 0.0, %v3973
        %v3975 = vpop.f32.mrb[0].mxu0
        %3976 = vmatprep.mubr.f32.mxu0 0.0
        %3977 = vmatmul.mubr.f32.gmra.mrb[0].mxu0 %v3864
        %v3978 = vpop.f32.mrb[0].mxu0
        %v3979 = vadd.f32 0.0, %v3978
        %v3980 = vpop.f32.mrb[0].mxu0
        %3981 = vmatprep.mubr.f32.mxu0 0.0
        %3982 = vmatmul.mubr.f32.gmra.mrb[0].mxu0 %v3867
        %v3983 = vpop.f32.mrb[0].mxu0
        %v3984 = vadd.f32 0.0, %v3983
        %v3985 = vpop.f32.mrb[0].mxu0
        %3986 = vmatprep.mubr.f32.mxu0 0.0
        %3987 = vmatmul.mubr.f32.gmra.mrb[0].mxu0 %v3870
        %v3988 = vpop.f32.mrb[0].mxu0
        %v3989 = vadd.f32 0.0, %v3988
        %v3990 = vpop.f32.mrb[0].mxu0
        %3991 = vmatprep.mubr.f32.mxu0 0.0
        %3992 = vmatmul.mubr.f32.gmra.mrb[0].mxu0 %v3873
        %v3993 = vpop.f32.mrb[0].mxu0
        %v3994 = vadd.f32 0.0, %v3993
        %v3995 = vpop.f32.mrb[0].mxu0
        %3996 = vmatprep.mubr.f32.mxu0 0.0
        %3997 = vmatmul.mubr.f32.gmra.mrb[0].mxu0 %v3876
        %v3998 = vpop.f32.mrb[0].mxu0
        %v3999 = vadd.f32 0.0, %v3998
        %v4000 = vpop.f32.mrb[0].mxu0
        %4001 = vmatprep.mubr.f32.mxu0 0.0
        %4002 = vmatmul.mubr.f32.gmra.mrb[0].mxu0 %v3879
        %v4003 = vpop.f32.mrb[0].mxu0
        %v4004 = vadd.f32 0.0, %v4003
        %v4005 = vpop.f32.mrb[0].mxu0
        %4006 = vmatprep.mubr.f32.mxu0 0.0
        %4007 = vmatmul.mubr.f32.gmra.mrb[0].mxu0 %v3882
        %v4008 = vpop.f32.mrb[0].mxu0
        %v4009 = vadd.f32 0.0, %v4008
        %v4010 = vpop.f32.mrb[0].mxu0
        %4011 = vmatprep.mubr.f32.mxu0 0.0
        %4012 = vmatmul.mubr.f32.gmra.mrb[0].mxu0 %v3885
        %v4013 = vpop.f32.mrb[0].mxu0
        %v4014 = vadd.f32 0.0, %v4013
        %v4015 = vpop.f32.mrb[0].mxu0
        %4016 = vdwg.mxu0
        %v4017 = vadd.f32 %v3770, %v3954
        %v4018 = vadd.f32 %v3775, %v3959
        %v4019 = vadd.f32 %v3780, %v3964
        %v4020 = vadd.f32 %v3785, %v3969
        %v4021 = vadd.f32 %v3790, %v3974
        %v4022 = vadd.f32 %v3795, %v3979
        %v4023 = vadd.f32 %v3800, %v3984
        %v4024 = vadd.f32 %v3805, %v3989
        %v4025 = vadd.f32 %v3810, %v3994
        %v4026 = vadd.f32 %v3815, %v3999
        %v4027 = vadd.f32 %v3820, %v4004
        %v4028 = vadd.f32 %v3825, %v4009
        %v4029 = vadd.f32 %v3830, %v4014
        %v4030 = vld [vmem:[#allocation3 + $0xa] sm:$0xff]
        %v4031 = vld [vmem:[#allocation3 + $0x12] sm:$0xff]
        %v4032 = vld [vmem:[#allocation3 + $0x1a] sm:$0xff]
        %v4033 = vld [vmem:[#allocation3 + $0x22] sm:$0xff]
        %v4034 = vld [vmem:[#allocation3 + $0x2a] sm:$0xff]
        %v4035 = vld [vmem:[#allocation3 + $0x32] sm:$0xff]
        %v4036 = vld [vmem:[#allocation3 + $0x3a] sm:$0xff]
        %v4037 = vld [vmem:[#allocation3 + $0x42] sm:$0xff]
        %v4038 = vld [vmem:[#allocation3 + $0x4a] sm:$0xff]
        %v4039 = vld [vmem:[#allocation3 + $0x52] sm:$0xff]
        %v4040 = vld [vmem:[#allocation3 + $0x5a] sm:$0xff]
        %v4041 = vld [vmem:[#allocation3 + $0x62] sm:$0xff]
        %v4042 = vld [vmem:[#allocation3 + $0x6a] sm:$0xf]
        %v4043 = vld [vmem:[%s3 + $0x30] sm:$0xff]
        %v4044 = vld [vmem:[%s3 + $0x38] sm:$0xff]
        %v4046 = vsel %vm3286, %v4030, 0
        %v4049 = vsel %vm3286, %v4031, 0
        %v4052 = vsel %vm3286, %v4032, 0
        %v4055 = vsel %vm3286, %v4033, 0
        %v4058 = vsel %vm3286, %v4034, 0
        %v4061 = vsel %vm3286, %v4035, 0
        %v4064 = vsel %vm3286, %v4036, 0
        %v4067 = vsel %vm3286, %v4037, 0
        %v4070 = vsel %vm3286, %v4038, 0
        %v4073 = vsel %vm3286, %v4039, 0
        %v4076 = vsel %vm3286, %v4040, 0
        %v4079 = vsel %vm3286, %v4041, 0
        %v4082 = vsel %vm3286, %v4042, 0
        %4084 = vmatprep.subr.mxu0 0.0
        %4085 = vmatpush1.msra.mxu0 %v4043
        %4086 = vmatprep.subr.mxu0 0.0
        %4087 = vmatpush1.msra.mxu0 %v4044
        %4088 = vmatprep.subr.mxu0 0.0
        %4089 = vmatpush1.msra.mxu0 0.0
        %4090 = vmatprep.subr.mxu0 0.0
        %4091 = vmatpush1.msra.mxu0 0.0
        %4092 = vmatprep.subr.mxu0 0.0
        %4093 = vmatpush1.msra.mxu0 0.0
        %4094 = vmatprep.subr.mxu0 0.0
        %4095 = vmatpush1.msra.mxu0 0.0
        %4096 = vmatprep.subr.mxu0 0.0
        %4097 = vmatpush1.msra.mxu0 0.0
        %4098 = vmatprep.subr.mxu0 0.0
        %4099 = vmatpush1.msra.mxu0 0.0
        %4100 = vmatprep.subr.mxu0 0.0
        %4101 = vmatpush1.msra.mxu0 0.0
        %4102 = vmatprep.subr.mxu0 0.0
        %4103 = vmatpush1.msra.mxu0 0.0
        %4104 = vmatprep.subr.mxu0 0.0
        %4105 = vmatpush1.msra.mxu0 0.0
        %4106 = vmatprep.subr.mxu0 0.0
        %4107 = vmatpush1.msra.mxu0 0.0
        %4108 = vmatprep.subr.mxu0 0.0
        %4109 = vmatpush1.msra.mxu0 0.0
        %4110 = vmatprep.subr.mxu0 0.0
        %4111 = vmatpush1.msra.mxu0 0.0
        %4112 = vmatprep.subr.mxu0 0.0
        %4113 = vmatpush1.msra.mxu0 0.0
        %4114 = vmatprep.subr.mxu0 0.0
        %4115 = vmatpush1.msra.mxu0 0.0
        %4116 = vmatprep.subr.mxu0 0.0
        %4117 = vmatpush1.msra.mxu0 0.0
        %4118 = vmatprep.subr.mxu0 0.0
        %4119 = vmatpush1.msra.mxu0 0.0
        %4120 = vmatprep.subr.mxu0 0.0
        %4121 = vmatpush1.msra.mxu0 0.0
        %4122 = vmatprep.subr.mxu0 0.0
        %4123 = vmatpush1.msra.mxu0 0.0
        %4124 = vmatprep.subr.mxu0 0.0
        %4125 = vmatpush1.msra.mxu0 0.0
        %4126 = vmatprep.subr.mxu0 0.0
        %4127 = vmatpush1.msra.mxu0 0.0
        %4128 = vmatprep.subr.mxu0 0.0
        %4129 = vmatpush1.msra.mxu0 0.0
        %4130 = vmatprep.subr.mxu0 0.0
        %4131 = vmatpush1.msra.mxu0 0.0
        %4132 = vmatprep.subr.mxu0 0.0
        %4133 = vmatpush1.msra.mxu0 0.0
        %4134 = vmatprep.subr.mxu0 0.0
        %4135 = vmatpush1.msra.mxu0 0.0
        %4136 = vmatprep.subr.mxu0 0.0
        %4137 = vmatpush1.msra.mxu0 0.0
        %4138 = vmatprep.subr.mxu0 0.0
        %4139 = vmatpush1.msra.mxu0 0.0
        %4140 = vmatprep.subr.mxu0 0.0
        %4141 = vmatpush1.msra.mxu0 0.0
        %4142 = vmatprep.subr.mxu0 0.0
        %4143 = vmatpush1.msra.mxu0 0.0
        %4144 = vmatprep.subr.mxu0 0.0
        %4145 = vmatpush1.msra.mxu0 0.0
        %4146 = vmatprep.subr.mxu0 0.0
        %4147 = vmatpush1.msra.mxu0 0.0
        %4148 = vmatprep.mubr.f32.mxu0 0.0
        %4149 = vmatmul.mubr.f32.gmra.mrb[0].mxu0 %v4046
        %v4150 = vpop.f32.mrb[0].mxu0
        %v4151 = vadd.f32 0.0, %v4150
        %v4152 = vpop.f32.mrb[0].mxu0
        %4153 = vmatprep.mubr.f32.mxu0 0.0
        %4154 = vmatmul.mubr.f32.gmra.mrb[0].mxu0 %v4049
        %v4155 = vpop.f32.mrb[0].mxu0
        %v4156 = vadd.f32 0.0, %v4155
        %v4157 = vpop.f32.mrb[0].mxu0
        %4158 = vmatprep.mubr.f32.mxu0 0.0
        %4159 = vmatmul.mubr.f32.gmra.mrb[0].mxu0 %v4052
        %v4160 = vpop.f32.mrb[0].mxu0
        %v4161 = vadd.f32 0.0, %v4160
        %v4162 = vpop.f32.mrb[0].mxu0
        %4163 = vmatprep.mubr.f32.mxu0 0.0
        %4164 = vmatmul.mubr.f32.gmra.mrb[0].mxu0 %v4055
        %v4165 = vpop.f32.mrb[0].mxu0
        %v4166 = vadd.f32 0.0, %v4165
        %v4167 = vpop.f32.mrb[0].mxu0
        %4168 = vmatprep.mubr.f32.mxu0 0.0
        %4169 = vmatmul.mubr.f32.gmra.mrb[0].mxu0 %v4058
        %v4170 = vpop.f32.mrb[0].mxu0
        %v4171 = vadd.f32 0.0, %v4170
        %v4172 = vpop.f32.mrb[0].mxu0
        %4173 = vmatprep.mubr.f32.mxu0 0.0
        %4174 = vmatmul.mubr.f32.gmra.mrb[0].mxu0 %v4061
        %v4175 = vpop.f32.mrb[0].mxu0
        %v4176 = vadd.f32 0.0, %v4175
        %v4177 = vpop.f32.mrb[0].mxu0
        %4178 = vmatprep.mubr.f32.mxu0 0.0
        %4179 = vmatmul.mubr.f32.gmra.mrb[0].mxu0 %v4064
        %v4180 = vpop.f32.mrb[0].mxu0
        %v4181 = vadd.f32 0.0, %v4180
        %v4182 = vpop.f32.mrb[0].mxu0
        %4183 = vmatprep.mubr.f32.mxu0 0.0
        %4184 = vmatmul.mubr.f32.gmra.mrb[0].mxu0 %v4067
        %v4185 = vpop.f32.mrb[0].mxu0
        %v4186 = vadd.f32 0.0, %v4185
        %v4187 = vpop.f32.mrb[0].mxu0
        %4188 = vmatprep.mubr.f32.mxu0 0.0
        %4189 = vmatmul.mubr.f32.gmra.mrb[0].mxu0 %v4070
        %v4190 = vpop.f32.mrb[0].mxu0
        %v4191 = vadd.f32 0.0, %v4190
        %v4192 = vpop.f32.mrb[0].mxu0
        %4193 = vmatprep.mubr.f32.mxu0 0.0
        %4194 = vmatmul.mubr.f32.gmra.mrb[0].mxu0 %v4073
        %v4195 = vpop.f32.mrb[0].mxu0
        %v4196 = vadd.f32 0.0, %v4195
        %v4197 = vpop.f32.mrb[0].mxu0
        %4198 = vmatprep.mubr.f32.mxu0 0.0
        %4199 = vmatmul.mubr.f32.gmra.mrb[0].mxu0 %v4076
        %v4200 = vpop.f32.mrb[0].mxu0
        %v4201 = vadd.f32 0.0, %v4200
        %v4202 = vpop.f32.mrb[0].mxu0
        %4203 = vmatprep.mubr.f32.mxu0 0.0
        %4204 = vmatmul.mubr.f32.gmra.mrb[0].mxu0 %v4079
        %v4205 = vpop.f32.mrb[0].mxu0
        %v4206 = vadd.f32 0.0, %v4205
        %v4207 = vpop.f32.mrb[0].mxu0
        %4208 = vmatprep.mubr.f32.mxu0 0.0
        %4209 = vmatmul.mubr.f32.gmra.mrb[0].mxu0 %v4082
        %v4210 = vpop.f32.mrb[0].mxu0
        %v4211 = vadd.f32 0.0, %v4210
        %v4212 = vpop.f32.mrb[0].mxu0
        %4213 = vdwg.mxu0
        %v4214 = vadd.f32 %v4017, %v4151
        %v4215 = vadd.f32 %v4018, %v4156
        %v4216 = vadd.f32 %v4019, %v4161
        %v4217 = vadd.f32 %v4020, %v4166
        %v4218 = vadd.f32 %v4021, %v4171
        %v4219 = vadd.f32 %v4022, %v4176
        %v4220 = vadd.f32 %v4023, %v4181
        %v4221 = vadd.f32 %v4024, %v4186
        %v4222 = vadd.f32 %v4025, %v4191
        %v4223 = vadd.f32 %v4026, %v4196
        %v4224 = vadd.f32 %v4027, %v4201
        %v4225 = vadd.f32 %v4028, %v4206
        %v4226 = vadd.f32 %v4029, %v4211
        %v4227 = vld [vmem:[#allocation3 + $0xb] sm:$0xff]
        %v4228 = vld [vmem:[#allocation3 + $0x13] sm:$0xff]
        %v4229 = vld [vmem:[#allocation3 + $0x1b] sm:$0xff]
        %v4230 = vld [vmem:[#allocation3 + $0x23] sm:$0xff]
        %v4231 = vld [vmem:[#allocation3 + $0x2b] sm:$0xff]
        %v4232 = vld [vmem:[#allocation3 + $0x33] sm:$0xff]
        %v4233 = vld [vmem:[#allocation3 + $0x3b] sm:$0xff]
        %v4234 = vld [vmem:[#allocation3 + $0x43] sm:$0xff]
        %v4235 = vld [vmem:[#allocation3 + $0x4b] sm:$0xff]
        %v4236 = vld [vmem:[#allocation3 + $0x53] sm:$0xff]
        %v4237 = vld [vmem:[#allocation3 + $0x5b] sm:$0xff]
        %v4238 = vld [vmem:[#allocation3 + $0x63] sm:$0xff]
        %v4239 = vld [vmem:[#allocation3 + $0x6b] sm:$0xf]
        %v4240 = vld [vmem:[%s3 + $0x40] sm:$0xff]
        %v4241 = vld [vmem:[%s3 + $0x48] sm:$0xff]
        %v4243 = vsel %vm3286, %v4227, 0
        %v4246 = vsel %vm3286, %v4228, 0
        %v4249 = vsel %vm3286, %v4229, 0
        %v4252 = vsel %vm3286, %v4230, 0
        %v4255 = vsel %vm3286, %v4231, 0
        %v4258 = vsel %vm3286, %v4232, 0
        %v4261 = vsel %vm3286, %v4233, 0
        %v4264 = vsel %vm3286, %v4234, 0
        %v4267 = vsel %vm3286, %v4235, 0
        %v4270 = vsel %vm3286, %v4236, 0
        %v4273 = vsel %vm3286, %v4237, 0
        %v4276 = vsel %vm3286, %v4238, 0
        %v4279 = vsel %vm3286, %v4239, 0
        %4281 = vmatprep.subr.mxu0 0.0
        %4282 = vmatpush1.msra.mxu0 %v4240
        %4283 = vmatprep.subr.mxu0 0.0
        %4284 = vmatpush1.msra.mxu0 %v4241
        %4285 = vmatprep.subr.mxu0 0.0
        %4286 = vmatpush1.msra.mxu0 0.0
        %4287 = vmatprep.subr.mxu0 0.0
        %4288 = vmatpush1.msra.mxu0 0.0
        %4289 = vmatprep.subr.mxu0 0.0
        %4290 = vmatpush1.msra.mxu0 0.0
        %4291 = vmatprep.subr.mxu0 0.0
        %4292 = vmatpush1.msra.mxu0 0.0
        %4293 = vmatprep.subr.mxu0 0.0
        %4294 = vmatpush1.msra.mxu0 0.0
        %4295 = vmatprep.subr.mxu0 0.0
        %4296 = vmatpush1.msra.mxu0 0.0
        %4297 = vmatprep.subr.mxu0 0.0
        %4298 = vmatpush1.msra.mxu0 0.0
        %4299 = vmatprep.subr.mxu0 0.0
        %4300 = vmatpush1.msra.mxu0 0.0
        %4301 = vmatprep.subr.mxu0 0.0
        %4302 = vmatpush1.msra.mxu0 0.0
        %4303 = vmatprep.subr.mxu0 0.0
        %4304 = vmatpush1.msra.mxu0 0.0
        %4305 = vmatprep.subr.mxu0 0.0
        %4306 = vmatpush1.msra.mxu0 0.0
        %4307 = vmatprep.subr.mxu0 0.0
        %4308 = vmatpush1.msra.mxu0 0.0
        %4309 = vmatprep.subr.mxu0 0.0
        %4310 = vmatpush1.msra.mxu0 0.0
        %4311 = vmatprep.subr.mxu0 0.0
        %4312 = vmatpush1.msra.mxu0 0.0
        %4313 = vmatprep.subr.mxu0 0.0
        %4314 = vmatpush1.msra.mxu0 0.0
        %4315 = vmatprep.subr.mxu0 0.0
        %4316 = vmatpush1.msra.mxu0 0.0
        %4317 = vmatprep.subr.mxu0 0.0
        %4318 = vmatpush1.msra.mxu0 0.0
        %4319 = vmatprep.subr.mxu0 0.0
        %4320 = vmatpush1.msra.mxu0 0.0
        %4321 = vmatprep.subr.mxu0 0.0
        %4322 = vmatpush1.msra.mxu0 0.0
        %4323 = vmatprep.subr.mxu0 0.0
        %4324 = vmatpush1.msra.mxu0 0.0
        %4325 = vmatprep.subr.mxu0 0.0
        %4326 = vmatpush1.msra.mxu0 0.0
        %4327 = vmatprep.subr.mxu0 0.0
        %4328 = vmatpush1.msra.mxu0 0.0
        %4329 = vmatprep.subr.mxu0 0.0
        %4330 = vmatpush1.msra.mxu0 0.0
        %4331 = vmatprep.subr.mxu0 0.0
        %4332 = vmatpush1.msra.mxu0 0.0
        %4333 = vmatprep.subr.mxu0 0.0
        %4334 = vmatpush1.msra.mxu0 0.0
        %4335 = vmatprep.subr.mxu0 0.0
        %4336 = vmatpush1.msra.mxu0 0.0
        %4337 = vmatprep.subr.mxu0 0.0
        %4338 = vmatpush1.msra.mxu0 0.0
        %4339 = vmatprep.subr.mxu0 0.0
        %4340 = vmatpush1.msra.mxu0 0.0
        %4341 = vmatprep.subr.mxu0 0.0
        %4342 = vmatpush1.msra.mxu0 0.0
        %4343 = vmatprep.subr.mxu0 0.0
        %4344 = vmatpush1.msra.mxu0 0.0
        %4345 = vmatprep.mubr.f32.mxu0 0.0
        %4346 = vmatmul.mubr.f32.gmra.mrb[0].mxu0 %v4243
        %v4347 = vpop.f32.mrb[0].mxu0
        %v4348 = vadd.f32 0.0, %v4347
        %v4349 = vpop.f32.mrb[0].mxu0
        %4350 = vmatprep.mubr.f32.mxu0 0.0
        %4351 = vmatmul.mubr.f32.gmra.mrb[0].mxu0 %v4246
        %v4352 = vpop.f32.mrb[0].mxu0
        %v4353 = vadd.f32 0.0, %v4352
        %v4354 = vpop.f32.mrb[0].mxu0
        %4355 = vmatprep.mubr.f32.mxu0 0.0
        %4356 = vmatmul.mubr.f32.gmra.mrb[0].mxu0 %v4249
        %v4357 = vpop.f32.mrb[0].mxu0
        %v4358 = vadd.f32 0.0, %v4357
        %v4359 = vpop.f32.mrb[0].mxu0
        %4360 = vmatprep.mubr.f32.mxu0 0.0
        %4361 = vmatmul.mubr.f32.gmra.mrb[0].mxu0 %v4252
        %v4362 = vpop.f32.mrb[0].mxu0
        %v4363 = vadd.f32 0.0, %v4362
        %v4364 = vpop.f32.mrb[0].mxu0
        %4365 = vmatprep.mubr.f32.mxu0 0.0
        %4366 = vmatmul.mubr.f32.gmra.mrb[0].mxu0 %v4255
        %v4367 = vpop.f32.mrb[0].mxu0
        %v4368 = vadd.f32 0.0, %v4367
        %v4369 = vpop.f32.mrb[0].mxu0
        %4370 = vmatprep.mubr.f32.mxu0 0.0
        %4371 = vmatmul.mubr.f32.gmra.mrb[0].mxu0 %v4258
        %v4372 = vpop.f32.mrb[0].mxu0
        %v4373 = vadd.f32 0.0, %v4372
        %v4374 = vpop.f32.mrb[0].mxu0
        %4375 = vmatprep.mubr.f32.mxu0 0.0
        %4376 = vmatmul.mubr.f32.gmra.mrb[0].mxu0 %v4261
        %v4377 = vpop.f32.mrb[0].mxu0
        %v4378 = vadd.f32 0.0, %v4377
        %v4379 = vpop.f32.mrb[0].mxu0
        %4380 = vmatprep.mubr.f32.mxu0 0.0
        %4381 = vmatmul.mubr.f32.gmra.mrb[0].mxu0 %v4264
        %v4382 = vpop.f32.mrb[0].mxu0
        %v4383 = vadd.f32 0.0, %v4382
        %v4384 = vpop.f32.mrb[0].mxu0
        %4385 = vmatprep.mubr.f32.mxu0 0.0
        %4386 = vmatmul.mubr.f32.gmra.mrb[0].mxu0 %v4267
        %v4387 = vpop.f32.mrb[0].mxu0
        %v4388 = vadd.f32 0.0, %v4387
        %v4389 = vpop.f32.mrb[0].mxu0
        %4390 = vmatprep.mubr.f32.mxu0 0.0
        %4391 = vmatmul.mubr.f32.gmra.mrb[0].mxu0 %v4270
        %v4392 = vpop.f32.mrb[0].mxu0
        %v4393 = vadd.f32 0.0, %v4392
        %v4394 = vpop.f32.mrb[0].mxu0
        %4395 = vmatprep.mubr.f32.mxu0 0.0
        %4396 = vmatmul.mubr.f32.gmra.mrb[0].mxu0 %v4273
        %v4397 = vpop.f32.mrb[0].mxu0
        %v4398 = vadd.f32 0.0, %v4397
        %v4399 = vpop.f32.mrb[0].mxu0
        %4400 = vmatprep.mubr.f32.mxu0 0.0
        %4401 = vmatmul.mubr.f32.gmra.mrb[0].mxu0 %v4276
        %v4402 = vpop.f32.mrb[0].mxu0
        %v4403 = vadd.f32 0.0, %v4402
        %v4404 = vpop.f32.mrb[0].mxu0
        %4405 = vmatprep.mubr.f32.mxu0 0.0
        %4406 = vmatmul.mubr.f32.gmra.mrb[0].mxu0 %v4279
        %v4407 = vpop.f32.mrb[0].mxu0
        %v4408 = vadd.f32 0.0, %v4407
        %v4409 = vpop.f32.mrb[0].mxu0
        %4410 = vdwg.mxu0
        %v4411 = vadd.f32 %v4214, %v4348
        %v4412 = vadd.f32 %v4215, %v4353
        %v4413 = vadd.f32 %v4216, %v4358
        %v4414 = vadd.f32 %v4217, %v4363
        %v4415 = vadd.f32 %v4218, %v4368
        %v4416 = vadd.f32 %v4219, %v4373
        %v4417 = vadd.f32 %v4220, %v4378
        %v4418 = vadd.f32 %v4221, %v4383
        %v4419 = vadd.f32 %v4222, %v4388
        %v4420 = vadd.f32 %v4223, %v4393
        %v4421 = vadd.f32 %v4224, %v4398
        %v4422 = vadd.f32 %v4225, %v4403
        %v4423 = vadd.f32 %v4226, %v4408
        %v4424 = vld [vmem:[#allocation3 + $0xc] sm:$0xff]
        %v4425 = vld [vmem:[#allocation3 + $0x14] sm:$0xff]
        %v4426 = vld [vmem:[#allocation3 + $0x1c] sm:$0xff]
        %v4427 = vld [vmem:[#allocation3 + $0x24] sm:$0xff]
        %v4428 = vld [vmem:[#allocation3 + $0x2c] sm:$0xff]
        %v4429 = vld [vmem:[#allocation3 + $0x34] sm:$0xff]
        %v4430 = vld [vmem:[#allocation3 + $0x3c] sm:$0xff]
        %v4431 = vld [vmem:[#allocation3 + $0x44] sm:$0xff]
        %v4432 = vld [vmem:[#allocation3 + $0x4c] sm:$0xff]
        %v4433 = vld [vmem:[#allocation3 + $0x54] sm:$0xff]
        %v4434 = vld [vmem:[#allocation3 + $0x5c] sm:$0xff]
        %v4435 = vld [vmem:[#allocation3 + $0x64] sm:$0xff]
        %v4436 = vld [vmem:[#allocation3 + $0x6c] sm:$0xf]
        %v4437 = vld [vmem:[%s3 + $0x50] sm:$0xff]
        %v4438 = vld [vmem:[%s3 + $0x58] sm:$0xff]
        %v4440 = vsel %vm3286, %v4424, 0
        %v4443 = vsel %vm3286, %v4425, 0
        %v4446 = vsel %vm3286, %v4426, 0
        %v4449 = vsel %vm3286, %v4427, 0
        %v4452 = vsel %vm3286, %v4428, 0
        %v4455 = vsel %vm3286, %v4429, 0
        %v4458 = vsel %vm3286, %v4430, 0
        %v4461 = vsel %vm3286, %v4431, 0
        %v4464 = vsel %vm3286, %v4432, 0
        %v4467 = vsel %vm3286, %v4433, 0
        %v4470 = vsel %vm3286, %v4434, 0
        %v4473 = vsel %vm3286, %v4435, 0
        %v4476 = vsel %vm3286, %v4436, 0
        %4478 = vmatprep.subr.mxu0 0.0
        %4479 = vmatpush1.msra.mxu0 %v4437
        %4480 = vmatprep.subr.mxu0 0.0
        %4481 = vmatpush1.msra.mxu0 %v4438
        %4482 = vmatprep.subr.mxu0 0.0
        %4483 = vmatpush1.msra.mxu0 0.0
        %4484 = vmatprep.subr.mxu0 0.0
        %4485 = vmatpush1.msra.mxu0 0.0
        %4486 = vmatprep.subr.mxu0 0.0
        %4487 = vmatpush1.msra.mxu0 0.0
        %4488 = vmatprep.subr.mxu0 0.0
        %4489 = vmatpush1.msra.mxu0 0.0
        %4490 = vmatprep.subr.mxu0 0.0
        %4491 = vmatpush1.msra.mxu0 0.0
        %4492 = vmatprep.subr.mxu0 0.0
        %4493 = vmatpush1.msra.mxu0 0.0
        %4494 = vmatprep.subr.mxu0 0.0
        %4495 = vmatpush1.msra.mxu0 0.0
        %4496 = vmatprep.subr.mxu0 0.0
        %4497 = vmatpush1.msra.mxu0 0.0
        %4498 = vmatprep.subr.mxu0 0.0
        %4499 = vmatpush1.msra.mxu0 0.0
        %4500 = vmatprep.subr.mxu0 0.0
        %4501 = vmatpush1.msra.mxu0 0.0
        %4502 = vmatprep.subr.mxu0 0.0
        %4503 = vmatpush1.msra.mxu0 0.0
        %4504 = vmatprep.subr.mxu0 0.0
        %4505 = vmatpush1.msra.mxu0 0.0
        %4506 = vmatprep.subr.mxu0 0.0
        %4507 = vmatpush1.msra.mxu0 0.0
        %4508 = vmatprep.subr.mxu0 0.0
        %4509 = vmatpush1.msra.mxu0 0.0
        %4510 = vmatprep.subr.mxu0 0.0
        %4511 = vmatpush1.msra.mxu0 0.0
        %4512 = vmatprep.subr.mxu0 0.0
        %4513 = vmatpush1.msra.mxu0 0.0
        %4514 = vmatprep.subr.mxu0 0.0
        %4515 = vmatpush1.msra.mxu0 0.0
        %4516 = vmatprep.subr.mxu0 0.0
        %4517 = vmatpush1.msra.mxu0 0.0
        %4518 = vmatprep.subr.mxu0 0.0
        %4519 = vmatpush1.msra.mxu0 0.0
        %4520 = vmatprep.subr.mxu0 0.0
        %4521 = vmatpush1.msra.mxu0 0.0
        %4522 = vmatprep.subr.mxu0 0.0
        %4523 = vmatpush1.msra.mxu0 0.0
        %4524 = vmatprep.subr.mxu0 0.0
        %4525 = vmatpush1.msra.mxu0 0.0
        %4526 = vmatprep.subr.mxu0 0.0
        %4527 = vmatpush1.msra.mxu0 0.0
        %4528 = vmatprep.subr.mxu0 0.0
        %4529 = vmatpush1.msra.mxu0 0.0
        %4530 = vmatprep.subr.mxu0 0.0
        %4531 = vmatpush1.msra.mxu0 0.0
        %4532 = vmatprep.subr.mxu0 0.0
        %4533 = vmatpush1.msra.mxu0 0.0
        %4534 = vmatprep.subr.mxu0 0.0
        %4535 = vmatpush1.msra.mxu0 0.0
        %4536 = vmatprep.subr.mxu0 0.0
        %4537 = vmatpush1.msra.mxu0 0.0
        %4538 = vmatprep.subr.mxu0 0.0
        %4539 = vmatpush1.msra.mxu0 0.0
        %4540 = vmatprep.subr.mxu0 0.0
        %4541 = vmatpush1.msra.mxu0 0.0
        %4542 = vmatprep.mubr.f32.mxu0 0.0
        %4543 = vmatmul.mubr.f32.gmra.mrb[0].mxu0 %v4440
        %v4544 = vpop.f32.mrb[0].mxu0
        %v4545 = vadd.f32 0.0, %v4544
        %v4546 = vpop.f32.mrb[0].mxu0
        %4547 = vmatprep.mubr.f32.mxu0 0.0
        %4548 = vmatmul.mubr.f32.gmra.mrb[0].mxu0 %v4443
        %v4549 = vpop.f32.mrb[0].mxu0
        %v4550 = vadd.f32 0.0, %v4549
        %v4551 = vpop.f32.mrb[0].mxu0
        %4552 = vmatprep.mubr.f32.mxu0 0.0
        %4553 = vmatmul.mubr.f32.gmra.mrb[0].mxu0 %v4446
        %v4554 = vpop.f32.mrb[0].mxu0
        %v4555 = vadd.f32 0.0, %v4554
        %v4556 = vpop.f32.mrb[0].mxu0
        %4557 = vmatprep.mubr.f32.mxu0 0.0
        %4558 = vmatmul.mubr.f32.gmra.mrb[0].mxu0 %v4449
        %v4559 = vpop.f32.mrb[0].mxu0
        %v4560 = vadd.f32 0.0, %v4559
        %v4561 = vpop.f32.mrb[0].mxu0
        %4562 = vmatprep.mubr.f32.mxu0 0.0
        %4563 = vmatmul.mubr.f32.gmra.mrb[0].mxu0 %v4452
        %v4564 = vpop.f32.mrb[0].mxu0
        %v4565 = vadd.f32 0.0, %v4564
        %v4566 = vpop.f32.mrb[0].mxu0
        %4567 = vmatprep.mubr.f32.mxu0 0.0
        %4568 = vmatmul.mubr.f32.gmra.mrb[0].mxu0 %v4455
        %v4569 = vpop.f32.mrb[0].mxu0
        %v4570 = vadd.f32 0.0, %v4569
        %v4571 = vpop.f32.mrb[0].mxu0
        %4572 = vmatprep.mubr.f32.mxu0 0.0
        %4573 = vmatmul.mubr.f32.gmra.mrb[0].mxu0 %v4458
        %v4574 = vpop.f32.mrb[0].mxu0
        %v4575 = vadd.f32 0.0, %v4574
        %v4576 = vpop.f32.mrb[0].mxu0
        %4577 = vmatprep.mubr.f32.mxu0 0.0
        %4578 = vmatmul.mubr.f32.gmra.mrb[0].mxu0 %v4461
        %v4579 = vpop.f32.mrb[0].mxu0
        %v4580 = vadd.f32 0.0, %v4579
        %v4581 = vpop.f32.mrb[0].mxu0
        %4582 = vmatprep.mubr.f32.mxu0 0.0
        %4583 = vmatmul.mubr.f32.gmra.mrb[0].mxu0 %v4464
        %v4584 = vpop.f32.mrb[0].mxu0
        %v4585 = vadd.f32 0.0, %v4584
        %v4586 = vpop.f32.mrb[0].mxu0
        %4587 = vmatprep.mubr.f32.mxu0 0.0
        %4588 = vmatmul.mubr.f32.gmra.mrb[0].mxu0 %v4467
        %v4589 = vpop.f32.mrb[0].mxu0
        %v4590 = vadd.f32 0.0, %v4589
        %v4591 = vpop.f32.mrb[0].mxu0
        %4592 = vmatprep.mubr.f32.mxu0 0.0
        %4593 = vmatmul.mubr.f32.gmra.mrb[0].mxu0 %v4470
        %v4594 = vpop.f32.mrb[0].mxu0
        %v4595 = vadd.f32 0.0, %v4594
        %v4596 = vpop.f32.mrb[0].mxu0
        %4597 = vmatprep.mubr.f32.mxu0 0.0
        %4598 = vmatmul.mubr.f32.gmra.mrb[0].mxu0 %v4473
        %v4599 = vpop.f32.mrb[0].mxu0
        %v4600 = vadd.f32 0.0, %v4599
        %v4601 = vpop.f32.mrb[0].mxu0
        %4602 = vmatprep.mubr.f32.mxu0 0.0
        %4603 = vmatmul.mubr.f32.gmra.mrb[0].mxu0 %v4476
        %v4604 = vpop.f32.mrb[0].mxu0
        %v4605 = vadd.f32 0.0, %v4604
        %v4606 = vpop.f32.mrb[0].mxu0
        %4607 = vdwg.mxu0
        %v4608 = vadd.f32 %v4411, %v4545
        %v4609 = vadd.f32 %v4412, %v4550
        %v4610 = vadd.f32 %v4413, %v4555
        %v4611 = vadd.f32 %v4414, %v4560
        %v4612 = vadd.f32 %v4415, %v4565
        %v4613 = vadd.f32 %v4416, %v4570
        %v4614 = vadd.f32 %v4417, %v4575
        %v4615 = vadd.f32 %v4418, %v4580
        %v4616 = vadd.f32 %v4419, %v4585
        %v4617 = vadd.f32 %v4420, %v4590
        %v4618 = vadd.f32 %v4421, %v4595
        %v4619 = vadd.f32 %v4422, %v4600
        %v4620 = vadd.f32 %v4423, %v4605
        %v4621 = vld [vmem:[#allocation3 + $0x14] sm:$0xff]
        %v4622 = vld [vmem:[#allocation3 + $0x1c] sm:$0xff]
        %v4623 = vld [vmem:[#allocation3 + $0x24] sm:$0xff]
        %v4624 = vld [vmem:[#allocation3 + $0x2c] sm:$0xff]
        %v4625 = vld [vmem:[#allocation3 + $0x34] sm:$0xff]
        %v4626 = vld [vmem:[#allocation3 + $0x3c] sm:$0xff]
        %v4627 = vld [vmem:[#allocation3 + $0x44] sm:$0xff]
        %v4628 = vld [vmem:[#allocation3 + $0x4c] sm:$0xff]
        %v4629 = vld [vmem:[#allocation3 + $0x54] sm:$0xff]
        %v4630 = vld [vmem:[#allocation3 + $0x5c] sm:$0xff]
        %v4631 = vld [vmem:[#allocation3 + $0x64] sm:$0xff]
        %v4632 = vld [vmem:[#allocation3 + $0x6c] sm:$0xff]
        %v4633 = vld [vmem:[#allocation3 + $0x74] sm:$0xf]
        %v4634 = vld [vmem:[%s3 + $0x60] sm:$0xff]
        %v4635 = vld [vmem:[%s3 + $0x68] sm:$0xff]
        %v4637 = vsel %vm3286, %v4621, 0
        %v4640 = vsel %vm3286, %v4622, 0
        %v4643 = vsel %vm3286, %v4623, 0
        %v4646 = vsel %vm3286, %v4624, 0
        %v4649 = vsel %vm3286, %v4625, 0
        %v4652 = vsel %vm3286, %v4626, 0
        %v4655 = vsel %vm3286, %v4627, 0
        %v4658 = vsel %vm3286, %v4628, 0
        %v4661 = vsel %vm3286, %v4629, 0
        %v4664 = vsel %vm3286, %v4630, 0
        %v4667 = vsel %vm3286, %v4631, 0
        %v4670 = vsel %vm3286, %v4632, 0
        %v4673 = vsel %vm3286, %v4633, 0
        %4675 = vmatprep.subr.mxu0 0.0
        %4676 = vmatpush1.msra.mxu0 %v4634
        %4677 = vmatprep.subr.mxu0 0.0
        %4678 = vmatpush1.msra.mxu0 %v4635
        %4679 = vmatprep.subr.mxu0 0.0
        %4680 = vmatpush1.msra.mxu0 0.0
        %4681 = vmatprep.subr.mxu0 0.0
        %4682 = vmatpush1.msra.mxu0 0.0
        %4683 = vmatprep.subr.mxu0 0.0
        %4684 = vmatpush1.msra.mxu0 0.0
        %4685 = vmatprep.subr.mxu0 0.0
        %4686 = vmatpush1.msra.mxu0 0.0
        %4687 = vmatprep.subr.mxu0 0.0
        %4688 = vmatpush1.msra.mxu0 0.0
        %4689 = vmatprep.subr.mxu0 0.0
        %4690 = vmatpush1.msra.mxu0 0.0
        %4691 = vmatprep.subr.mxu0 0.0
        %4692 = vmatpush1.msra.mxu0 0.0
        %4693 = vmatprep.subr.mxu0 0.0
        %4694 = vmatpush1.msra.mxu0 0.0
        %4695 = vmatprep.subr.mxu0 0.0
        %4696 = vmatpush1.msra.mxu0 0.0
        %4697 = vmatprep.subr.mxu0 0.0
        %4698 = vmatpush1.msra.mxu0 0.0
        %4699 = vmatprep.subr.mxu0 0.0
        %4700 = vmatpush1.msra.mxu0 0.0
        %4701 = vmatprep.subr.mxu0 0.0
        %4702 = vmatpush1.msra.mxu0 0.0
        %4703 = vmatprep.subr.mxu0 0.0
        %4704 = vmatpush1.msra.mxu0 0.0
        %4705 = vmatprep.subr.mxu0 0.0
        %4706 = vmatpush1.msra.mxu0 0.0
        %4707 = vmatprep.subr.mxu0 0.0
        %4708 = vmatpush1.msra.mxu0 0.0
        %4709 = vmatprep.subr.mxu0 0.0
        %4710 = vmatpush1.msra.mxu0 0.0
        %4711 = vmatprep.subr.mxu0 0.0
        %4712 = vmatpush1.msra.mxu0 0.0
        %4713 = vmatprep.subr.mxu0 0.0
        %4714 = vmatpush1.msra.mxu0 0.0
        %4715 = vmatprep.subr.mxu0 0.0
        %4716 = vmatpush1.msra.mxu0 0.0
        %4717 = vmatprep.subr.mxu0 0.0
        %4718 = vmatpush1.msra.mxu0 0.0
        %4719 = vmatprep.subr.mxu0 0.0
        %4720 = vmatpush1.msra.mxu0 0.0
        %4721 = vmatprep.subr.mxu0 0.0
        %4722 = vmatpush1.msra.mxu0 0.0
        %4723 = vmatprep.subr.mxu0 0.0
        %4724 = vmatpush1.msra.mxu0 0.0
        %4725 = vmatprep.subr.mxu0 0.0
        %4726 = vmatpush1.msra.mxu0 0.0
        %4727 = vmatprep.subr.mxu0 0.0
        %4728 = vmatpush1.msra.mxu0 0.0
        %4729 = vmatprep.subr.mxu0 0.0
        %4730 = vmatpush1.msra.mxu0 0.0
        %4731 = vmatprep.subr.mxu0 0.0
        %4732 = vmatpush1.msra.mxu0 0.0
        %4733 = vmatprep.subr.mxu0 0.0
        %4734 = vmatpush1.msra.mxu0 0.0
        %4735 = vmatprep.subr.mxu0 0.0
        %4736 = vmatpush1.msra.mxu0 0.0
        %4737 = vmatprep.subr.mxu0 0.0
        %4738 = vmatpush1.msra.mxu0 0.0
        %4739 = vmatprep.mubr.f32.mxu0 0.0
        %4740 = vmatmul.mubr.f32.gmra.mrb[0].mxu0 %v4637
        %v4741 = vpop.f32.mrb[0].mxu0
        %v4742 = vadd.f32 0.0, %v4741
        %v4743 = vpop.f32.mrb[0].mxu0
        %4744 = vmatprep.mubr.f32.mxu0 0.0
        %4745 = vmatmul.mubr.f32.gmra.mrb[0].mxu0 %v4640
        %v4746 = vpop.f32.mrb[0].mxu0
        %v4747 = vadd.f32 0.0, %v4746
        %v4748 = vpop.f32.mrb[0].mxu0
        %4749 = vmatprep.mubr.f32.mxu0 0.0
        %4750 = vmatmul.mubr.f32.gmra.mrb[0].mxu0 %v4643
        %v4751 = vpop.f32.mrb[0].mxu0
        %v4752 = vadd.f32 0.0, %v4751
        %v4753 = vpop.f32.mrb[0].mxu0
        %4754 = vmatprep.mubr.f32.mxu0 0.0
        %4755 = vmatmul.mubr.f32.gmra.mrb[0].mxu0 %v4646
        %v4756 = vpop.f32.mrb[0].mxu0
        %v4757 = vadd.f32 0.0, %v4756
        %v4758 = vpop.f32.mrb[0].mxu0
        %4759 = vmatprep.mubr.f32.mxu0 0.0
        %4760 = vmatmul.mubr.f32.gmra.mrb[0].mxu0 %v4649
        %v4761 = vpop.f32.mrb[0].mxu0
        %v4762 = vadd.f32 0.0, %v4761
        %v4763 = vpop.f32.mrb[0].mxu0
        %4764 = vmatprep.mubr.f32.mxu0 0.0
        %4765 = vmatmul.mubr.f32.gmra.mrb[0].mxu0 %v4652
        %v4766 = vpop.f32.mrb[0].mxu0
        %v4767 = vadd.f32 0.0, %v4766
        %v4768 = vpop.f32.mrb[0].mxu0
        %4769 = vmatprep.mubr.f32.mxu0 0.0
        %4770 = vmatmul.mubr.f32.gmra.mrb[0].mxu0 %v4655
        %v4771 = vpop.f32.mrb[0].mxu0
        %v4772 = vadd.f32 0.0, %v4771
        %v4773 = vpop.f32.mrb[0].mxu0
        %4774 = vmatprep.mubr.f32.mxu0 0.0
        %4775 = vmatmul.mubr.f32.gmra.mrb[0].mxu0 %v4658
        %v4776 = vpop.f32.mrb[0].mxu0
        %v4777 = vadd.f32 0.0, %v4776
        %v4778 = vpop.f32.mrb[0].mxu0
        %4779 = vmatprep.mubr.f32.mxu0 0.0
        %4780 = vmatmul.mubr.f32.gmra.mrb[0].mxu0 %v4661
        %v4781 = vpop.f32.mrb[0].mxu0
        %v4782 = vadd.f32 0.0, %v4781
        %v4783 = vpop.f32.mrb[0].mxu0
        %4784 = vmatprep.mubr.f32.mxu0 0.0
        %4785 = vmatmul.mubr.f32.gmra.mrb[0].mxu0 %v4664
        %v4786 = vpop.f32.mrb[0].mxu0
        %v4787 = vadd.f32 0.0, %v4786
        %v4788 = vpop.f32.mrb[0].mxu0
        %4789 = vmatprep.mubr.f32.mxu0 0.0
        %4790 = vmatmul.mubr.f32.gmra.mrb[0].mxu0 %v4667
        %v4791 = vpop.f32.mrb[0].mxu0
        %v4792 = vadd.f32 0.0, %v4791
        %v4793 = vpop.f32.mrb[0].mxu0
        %4794 = vmatprep.mubr.f32.mxu0 0.0
        %4795 = vmatmul.mubr.f32.gmra.mrb[0].mxu0 %v4670
        %v4796 = vpop.f32.mrb[0].mxu0
        %v4797 = vadd.f32 0.0, %v4796
        %v4798 = vpop.f32.mrb[0].mxu0
        %4799 = vmatprep.mubr.f32.mxu0 0.0
        %4800 = vmatmul.mubr.f32.gmra.mrb[0].mxu0 %v4673
        %v4801 = vpop.f32.mrb[0].mxu0
        %v4802 = vadd.f32 0.0, %v4801
        %v4803 = vpop.f32.mrb[0].mxu0
        %4804 = vdwg.mxu0
        %v4805 = vadd.f32 %v4608, %v4742
        %v4806 = vadd.f32 %v4609, %v4747
        %v4807 = vadd.f32 %v4610, %v4752
        %v4808 = vadd.f32 %v4611, %v4757
        %v4809 = vadd.f32 %v4612, %v4762
        %v4810 = vadd.f32 %v4613, %v4767
        %v4811 = vadd.f32 %v4614, %v4772
        %v4812 = vadd.f32 %v4615, %v4777
        %v4813 = vadd.f32 %v4616, %v4782
        %v4814 = vadd.f32 %v4617, %v4787
        %v4815 = vadd.f32 %v4618, %v4792
        %v4816 = vadd.f32 %v4619, %v4797
        %v4817 = vadd.f32 %v4620, %v4802
        %v4818 = vld [vmem:[#allocation3 + $0x15] sm:$0xff]
        %v4819 = vld [vmem:[#allocation3 + $0x1d] sm:$0xff]
        %v4820 = vld [vmem:[#allocation3 + $0x25] sm:$0xff]
        %v4821 = vld [vmem:[#allocation3 + $0x2d] sm:$0xff]
        %v4822 = vld [vmem:[#allocation3 + $0x35] sm:$0xff]
        %v4823 = vld [vmem:[#allocation3 + $0x3d] sm:$0xff]
        %v4824 = vld [vmem:[#allocation3 + $0x45] sm:$0xff]
        %v4825 = vld [vmem:[#allocation3 + $0x4d] sm:$0xff]
        %v4826 = vld [vmem:[#allocation3 + $0x55] sm:$0xff]
        %v4827 = vld [vmem:[#allocation3 + $0x5d] sm:$0xff]
        %v4828 = vld [vmem:[#allocation3 + $0x65] sm:$0xff]
        %v4829 = vld [vmem:[#allocation3 + $0x6d] sm:$0xff]
        %v4830 = vld [vmem:[#allocation3 + $0x75] sm:$0xf]
        %v4831 = vld [vmem:[%s3 + $0x70] sm:$0xff]
        %v4832 = vld [vmem:[%s3 + $0x78] sm:$0xff]
        %v4834 = vsel %vm3286, %v4818, 0
        %v4837 = vsel %vm3286, %v4819, 0
        %v4840 = vsel %vm3286, %v4820, 0
        %v4843 = vsel %vm3286, %v4821, 0
        %v4846 = vsel %vm3286, %v4822, 0
        %v4849 = vsel %vm3286, %v4823, 0
        %v4852 = vsel %vm3286, %v4824, 0
        %v4855 = vsel %vm3286, %v4825, 0
        %v4858 = vsel %vm3286, %v4826, 0
        %v4861 = vsel %vm3286, %v4827, 0
        %v4864 = vsel %vm3286, %v4828, 0
        %v4867 = vsel %vm3286, %v4829, 0
        %v4870 = vsel %vm3286, %v4830, 0
        %4872 = vmatprep.subr.mxu0 0.0
        %4873 = vmatpush1.msra.mxu0 %v4831
        %4874 = vmatprep.subr.mxu0 0.0
        %4875 = vmatpush1.msra.mxu0 %v4832
        %4876 = vmatprep.subr.mxu0 0.0
        %4877 = vmatpush1.msra.mxu0 0.0
        %4878 = vmatprep.subr.mxu0 0.0
        %4879 = vmatpush1.msra.mxu0 0.0
        %4880 = vmatprep.subr.mxu0 0.0
        %4881 = vmatpush1.msra.mxu0 0.0
        %4882 = vmatprep.subr.mxu0 0.0
        %4883 = vmatpush1.msra.mxu0 0.0
        %4884 = vmatprep.subr.mxu0 0.0
        %4885 = vmatpush1.msra.mxu0 0.0
        %4886 = vmatprep.subr.mxu0 0.0
        %4887 = vmatpush1.msra.mxu0 0.0
        %4888 = vmatprep.subr.mxu0 0.0
        %4889 = vmatpush1.msra.mxu0 0.0
        %4890 = vmatprep.subr.mxu0 0.0
        %4891 = vmatpush1.msra.mxu0 0.0
        %4892 = vmatprep.subr.mxu0 0.0
        %4893 = vmatpush1.msra.mxu0 0.0
        %4894 = vmatprep.subr.mxu0 0.0
        %4895 = vmatpush1.msra.mxu0 0.0
        %4896 = vmatprep.subr.mxu0 0.0
        %4897 = vmatpush1.msra.mxu0 0.0
        %4898 = vmatprep.subr.mxu0 0.0
        %4899 = vmatpush1.msra.mxu0 0.0
        %4900 = vmatprep.subr.mxu0 0.0
        %4901 = vmatpush1.msra.mxu0 0.0
        %4902 = vmatprep.subr.mxu0 0.0
        %4903 = vmatpush1.msra.mxu0 0.0
        %4904 = vmatprep.subr.mxu0 0.0
        %4905 = vmatpush1.msra.mxu0 0.0
        %4906 = vmatprep.subr.mxu0 0.0
        %4907 = vmatpush1.msra.mxu0 0.0
        %4908 = vmatprep.subr.mxu0 0.0
        %4909 = vmatpush1.msra.mxu0 0.0
        %4910 = vmatprep.subr.mxu0 0.0
        %4911 = vmatpush1.msra.mxu0 0.0
        %4912 = vmatprep.subr.mxu0 0.0
        %4913 = vmatpush1.msra.mxu0 0.0
        %4914 = vmatprep.subr.mxu0 0.0
        %4915 = vmatpush1.msra.mxu0 0.0
        %4916 = vmatprep.subr.mxu0 0.0
        %4917 = vmatpush1.msra.mxu0 0.0
        %4918 = vmatprep.subr.mxu0 0.0
        %4919 = vmatpush1.msra.mxu0 0.0
        %4920 = vmatprep.subr.mxu0 0.0
        %4921 = vmatpush1.msra.mxu0 0.0
        %4922 = vmatprep.subr.mxu0 0.0
        %4923 = vmatpush1.msra.mxu0 0.0
        %4924 = vmatprep.subr.mxu0 0.0
        %4925 = vmatpush1.msra.mxu0 0.0
        %4926 = vmatprep.subr.mxu0 0.0
        %4927 = vmatpush1.msra.mxu0 0.0
        %4928 = vmatprep.subr.mxu0 0.0
        %4929 = vmatpush1.msra.mxu0 0.0
        %4930 = vmatprep.subr.mxu0 0.0
        %4931 = vmatpush1.msra.mxu0 0.0
        %4932 = vmatprep.subr.mxu0 0.0
        %4933 = vmatpush1.msra.mxu0 0.0
        %4934 = vmatprep.subr.mxu0 0.0
        %4935 = vmatpush1.msra.mxu0 0.0
        %4936 = vmatprep.mubr.f32.mxu0 0.0
        %4937 = vmatmul.mubr.f32.gmra.mrb[0].mxu0 %v4834
        %v4938 = vpop.f32.mrb[0].mxu0
        %v4939 = vadd.f32 0.0, %v4938
        %v4940 = vpop.f32.mrb[0].mxu0
        %4941 = vmatprep.mubr.f32.mxu0 0.0
        %4942 = vmatmul.mubr.f32.gmra.mrb[0].mxu0 %v4837
        %v4943 = vpop.f32.mrb[0].mxu0
        %v4944 = vadd.f32 0.0, %v4943
        %v4945 = vpop.f32.mrb[0].mxu0
        %4946 = vmatprep.mubr.f32.mxu0 0.0
        %4947 = vmatmul.mubr.f32.gmra.mrb[0].mxu0 %v4840
        %v4948 = vpop.f32.mrb[0].mxu0
        %v4949 = vadd.f32 0.0, %v4948
        %v4950 = vpop.f32.mrb[0].mxu0
        %4951 = vmatprep.mubr.f32.mxu0 0.0
        %4952 = vmatmul.mubr.f32.gmra.mrb[0].mxu0 %v4843
        %v4953 = vpop.f32.mrb[0].mxu0
        %v4954 = vadd.f32 0.0, %v4953
        %v4955 = vpop.f32.mrb[0].mxu0
        %4956 = vmatprep.mubr.f32.mxu0 0.0
        %4957 = vmatmul.mubr.f32.gmra.mrb[0].mxu0 %v4846
        %v4958 = vpop.f32.mrb[0].mxu0
        %v4959 = vadd.f32 0.0, %v4958
        %v4960 = vpop.f32.mrb[0].mxu0
        %4961 = vmatprep.mubr.f32.mxu0 0.0
        %4962 = vmatmul.mubr.f32.gmra.mrb[0].mxu0 %v4849
        %v4963 = vpop.f32.mrb[0].mxu0
        %v4964 = vadd.f32 0.0, %v4963
        %v4965 = vpop.f32.mrb[0].mxu0
        %4966 = vmatprep.mubr.f32.mxu0 0.0
        %4967 = vmatmul.mubr.f32.gmra.mrb[0].mxu0 %v4852
        %v4968 = vpop.f32.mrb[0].mxu0
        %v4969 = vadd.f32 0.0, %v4968
        %v4970 = vpop.f32.mrb[0].mxu0
        %4971 = vmatprep.mubr.f32.mxu0 0.0
        %4972 = vmatmul.mubr.f32.gmra.mrb[0].mxu0 %v4855
        %v4973 = vpop.f32.mrb[0].mxu0
        %v4974 = vadd.f32 0.0, %v4973
        %v4975 = vpop.f32.mrb[0].mxu0
        %4976 = vmatprep.mubr.f32.mxu0 0.0
        %4977 = vmatmul.mubr.f32.gmra.mrb[0].mxu0 %v4858
        %v4978 = vpop.f32.mrb[0].mxu0
        %v4979 = vadd.f32 0.0, %v4978
        %v4980 = vpop.f32.mrb[0].mxu0
        %4981 = vmatprep.mubr.f32.mxu0 0.0
        %4982 = vmatmul.mubr.f32.gmra.mrb[0].mxu0 %v4861
        %v4983 = vpop.f32.mrb[0].mxu0
        %v4984 = vadd.f32 0.0, %v4983
        %v4985 = vpop.f32.mrb[0].mxu0
        %4986 = vmatprep.mubr.f32.mxu0 0.0
        %4987 = vmatmul.mubr.f32.gmra.mrb[0].mxu0 %v4864
        %v4988 = vpop.f32.mrb[0].mxu0
        %v4989 = vadd.f32 0.0, %v4988
        %v4990 = vpop.f32.mrb[0].mxu0
        %4991 = vmatprep.mubr.f32.mxu0 0.0
        %4992 = vmatmul.mubr.f32.gmra.mrb[0].mxu0 %v4867
        %v4993 = vpop.f32.mrb[0].mxu0
        %v4994 = vadd.f32 0.0, %v4993
        %v4995 = vpop.f32.mrb[0].mxu0
        %4996 = vmatprep.mubr.f32.mxu0 0.0
        %4997 = vmatmul.mubr.f32.gmra.mrb[0].mxu0 %v4870
        %v4998 = vpop.f32.mrb[0].mxu0
        %v4999 = vadd.f32 0.0, %v4998
        %v5000 = vpop.f32.mrb[0].mxu0
        %5001 = vdwg.mxu0
        %v5002 = vadd.f32 %v4805, %v4939
        %v5003 = vadd.f32 %v4806, %v4944
        %v5004 = vadd.f32 %v4807, %v4949
        %v5005 = vadd.f32 %v4808, %v4954
        %v5006 = vadd.f32 %v4809, %v4959
        %v5007 = vadd.f32 %v4810, %v4964
        %v5008 = vadd.f32 %v4811, %v4969
        %v5009 = vadd.f32 %v4812, %v4974
        %v5010 = vadd.f32 %v4813, %v4979
        %v5011 = vadd.f32 %v4814, %v4984
        %v5012 = vadd.f32 %v4815, %v4989
        %v5013 = vadd.f32 %v4816, %v4994
        %v5014 = vadd.f32 %v4817, %v4999
        %v5015 = vld [vmem:[#allocation3 + $0x16] sm:$0xff]
        %v5016 = vld [vmem:[#allocation3 + $0x1e] sm:$0xff]
        %v5017 = vld [vmem:[#allocation3 + $0x26] sm:$0xff]
        %v5018 = vld [vmem:[#allocation3 + $0x2e] sm:$0xff]
        %v5019 = vld [vmem:[#allocation3 + $0x36] sm:$0xff]
        %v5020 = vld [vmem:[#allocation3 + $0x3e] sm:$0xff]
        %v5021 = vld [vmem:[#allocation3 + $0x46] sm:$0xff]
        %v5022 = vld [vmem:[#allocation3 + $0x4e] sm:$0xff]
        %v5023 = vld [vmem:[#allocation3 + $0x56] sm:$0xff]
        %v5024 = vld [vmem:[#allocation3 + $0x5e] sm:$0xff]
        %v5025 = vld [vmem:[#allocation3 + $0x66] sm:$0xff]
        %v5026 = vld [vmem:[#allocation3 + $0x6e] sm:$0xff]
        %v5027 = vld [vmem:[#allocation3 + $0x76] sm:$0xf]
        %v5028 = vld [vmem:[%s3 + $0x80] sm:$0xff]
        %v5029 = vld [vmem:[%s3 + $0x88] sm:$0xff]
        %v5031 = vsel %vm3286, %v5015, 0
        %v5034 = vsel %vm3286, %v5016, 0
        %v5037 = vsel %vm3286, %v5017, 0
        %v5040 = vsel %vm3286, %v5018, 0
        %v5043 = vsel %vm3286, %v5019, 0
        %v5046 = vsel %vm3286, %v5020, 0
        %v5049 = vsel %vm3286, %v5021, 0
        %v5052 = vsel %vm3286, %v5022, 0
        %v5055 = vsel %vm3286, %v5023, 0
        %v5058 = vsel %vm3286, %v5024, 0
        %v5061 = vsel %vm3286, %v5025, 0
        %v5064 = vsel %vm3286, %v5026, 0
        %v5067 = vsel %vm3286, %v5027, 0
        %5069 = vmatprep.subr.mxu0 0.0
        %5070 = vmatpush1.msra.mxu0 %v5028
        %5071 = vmatprep.subr.mxu0 0.0
        %5072 = vmatpush1.msra.mxu0 %v5029
        %5073 = vmatprep.subr.mxu0 0.0
        %5074 = vmatpush1.msra.mxu0 0.0
        %5075 = vmatprep.subr.mxu0 0.0
        %5076 = vmatpush1.msra.mxu0 0.0
        %5077 = vmatprep.subr.mxu0 0.0
        %5078 = vmatpush1.msra.mxu0 0.0
        %5079 = vmatprep.subr.mxu0 0.0
        %5080 = vmatpush1.msra.mxu0 0.0
        %5081 = vmatprep.subr.mxu0 0.0
        %5082 = vmatpush1.msra.mxu0 0.0
        %5083 = vmatprep.subr.mxu0 0.0
        %5084 = vmatpush1.msra.mxu0 0.0
        %5085 = vmatprep.subr.mxu0 0.0
        %5086 = vmatpush1.msra.mxu0 0.0
        %5087 = vmatprep.subr.mxu0 0.0
        %5088 = vmatpush1.msra.mxu0 0.0
        %5089 = vmatprep.subr.mxu0 0.0
        %5090 = vmatpush1.msra.mxu0 0.0
        %5091 = vmatprep.subr.mxu0 0.0
        %5092 = vmatpush1.msra.mxu0 0.0
        %5093 = vmatprep.subr.mxu0 0.0
        %5094 = vmatpush1.msra.mxu0 0.0
        %5095 = vmatprep.subr.mxu0 0.0
        %5096 = vmatpush1.msra.mxu0 0.0
        %5097 = vmatprep.subr.mxu0 0.0
        %5098 = vmatpush1.msra.mxu0 0.0
        %5099 = vmatprep.subr.mxu0 0.0
        %5100 = vmatpush1.msra.mxu0 0.0
        %5101 = vmatprep.subr.mxu0 0.0
        %5102 = vmatpush1.msra.mxu0 0.0
        %5103 = vmatprep.subr.mxu0 0.0
        %5104 = vmatpush1.msra.mxu0 0.0
        %5105 = vmatprep.subr.mxu0 0.0
        %5106 = vmatpush1.msra.mxu0 0.0
        %5107 = vmatprep.subr.mxu0 0.0
        %5108 = vmatpush1.msra.mxu0 0.0
        %5109 = vmatprep.subr.mxu0 0.0
        %5110 = vmatpush1.msra.mxu0 0.0
        %5111 = vmatprep.subr.mxu0 0.0
        %5112 = vmatpush1.msra.mxu0 0.0
        %5113 = vmatprep.subr.mxu0 0.0
        %5114 = vmatpush1.msra.mxu0 0.0
        %5115 = vmatprep.subr.mxu0 0.0
        %5116 = vmatpush1.msra.mxu0 0.0
        %5117 = vmatprep.subr.mxu0 0.0
        %5118 = vmatpush1.msra.mxu0 0.0
        %5119 = vmatprep.subr.mxu0 0.0
        %5120 = vmatpush1.msra.mxu0 0.0
        %5121 = vmatprep.subr.mxu0 0.0
        %5122 = vmatpush1.msra.mxu0 0.0
        %5123 = vmatprep.subr.mxu0 0.0
        %5124 = vmatpush1.msra.mxu0 0.0
        %5125 = vmatprep.subr.mxu0 0.0
        %5126 = vmatpush1.msra.mxu0 0.0
        %5127 = vmatprep.subr.mxu0 0.0
        %5128 = vmatpush1.msra.mxu0 0.0
        %5129 = vmatprep.subr.mxu0 0.0
        %5130 = vmatpush1.msra.mxu0 0.0
        %5131 = vmatprep.subr.mxu0 0.0
        %5132 = vmatpush1.msra.mxu0 0.0
        %5133 = vmatprep.mubr.f32.mxu0 0.0
        %5134 = vmatmul.mubr.f32.gmra.mrb[0].mxu0 %v5031
        %v5135 = vpop.f32.mrb[0].mxu0
        %v5136 = vadd.f32 0.0, %v5135
        %v5137 = vpop.f32.mrb[0].mxu0
        %5138 = vmatprep.mubr.f32.mxu0 0.0
        %5139 = vmatmul.mubr.f32.gmra.mrb[0].mxu0 %v5034
        %v5140 = vpop.f32.mrb[0].mxu0
        %v5141 = vadd.f32 0.0, %v5140
        %v5142 = vpop.f32.mrb[0].mxu0
        %5143 = vmatprep.mubr.f32.mxu0 0.0
        %5144 = vmatmul.mubr.f32.gmra.mrb[0].mxu0 %v5037
        %v5145 = vpop.f32.mrb[0].mxu0
        %v5146 = vadd.f32 0.0, %v5145
        %v5147 = vpop.f32.mrb[0].mxu0
        %5148 = vmatprep.mubr.f32.mxu0 0.0
        %5149 = vmatmul.mubr.f32.gmra.mrb[0].mxu0 %v5040
        %v5150 = vpop.f32.mrb[0].mxu0
        %v5151 = vadd.f32 0.0, %v5150
        %v5152 = vpop.f32.mrb[0].mxu0
        %5153 = vmatprep.mubr.f32.mxu0 0.0
        %5154 = vmatmul.mubr.f32.gmra.mrb[0].mxu0 %v5043
        %v5155 = vpop.f32.mrb[0].mxu0
        %v5156 = vadd.f32 0.0, %v5155
        %v5157 = vpop.f32.mrb[0].mxu0
        %5158 = vmatprep.mubr.f32.mxu0 0.0
        %5159 = vmatmul.mubr.f32.gmra.mrb[0].mxu0 %v5046
        %v5160 = vpop.f32.mrb[0].mxu0
        %v5161 = vadd.f32 0.0, %v5160
        %v5162 = vpop.f32.mrb[0].mxu0
        %5163 = vmatprep.mubr.f32.mxu0 0.0
        %5164 = vmatmul.mubr.f32.gmra.mrb[0].mxu0 %v5049
        %v5165 = vpop.f32.mrb[0].mxu0
        %v5166 = vadd.f32 0.0, %v5165
        %v5167 = vpop.f32.mrb[0].mxu0
        %5168 = vmatprep.mubr.f32.mxu0 0.0
        %5169 = vmatmul.mubr.f32.gmra.mrb[0].mxu0 %v5052
        %v5170 = vpop.f32.mrb[0].mxu0
        %v5171 = vadd.f32 0.0, %v5170
        %v5172 = vpop.f32.mrb[0].mxu0
        %5173 = vmatprep.mubr.f32.mxu0 0.0
        %5174 = vmatmul.mubr.f32.gmra.mrb[0].mxu0 %v5055
        %v5175 = vpop.f32.mrb[0].mxu0
        %v5176 = vadd.f32 0.0, %v5175
        %v5177 = vpop.f32.mrb[0].mxu0
        %5178 = vmatprep.mubr.f32.mxu0 0.0
        %5179 = vmatmul.mubr.f32.gmra.mrb[0].mxu0 %v5058
        %v5180 = vpop.f32.mrb[0].mxu0
        %v5181 = vadd.f32 0.0, %v5180
        %v5182 = vpop.f32.mrb[0].mxu0
        %5183 = vmatprep.mubr.f32.mxu0 0.0
        %5184 = vmatmul.mubr.f32.gmra.mrb[0].mxu0 %v5061
        %v5185 = vpop.f32.mrb[0].mxu0
        %v5186 = vadd.f32 0.0, %v5185
        %v5187 = vpop.f32.mrb[0].mxu0
        %5188 = vmatprep.mubr.f32.mxu0 0.0
        %5189 = vmatmul.mubr.f32.gmra.mrb[0].mxu0 %v5064
        %v5190 = vpop.f32.mrb[0].mxu0
        %v5191 = vadd.f32 0.0, %v5190
        %v5192 = vpop.f32.mrb[0].mxu0
        %5193 = vmatprep.mubr.f32.mxu0 0.0
        %5194 = vmatmul.mubr.f32.gmra.mrb[0].mxu0 %v5067
        %v5195 = vpop.f32.mrb[0].mxu0
        %v5196 = vadd.f32 0.0, %v5195
        %v5197 = vpop.f32.mrb[0].mxu0
        %5198 = vdwg.mxu0
        %v5199 = vadd.f32 %v5002, %v5136
        %v5200 = vadd.f32 %v5003, %v5141
        %v5201 = vadd.f32 %v5004, %v5146
        %v5202 = vadd.f32 %v5005, %v5151
        %v5203 = vadd.f32 %v5006, %v5156
        %v5204 = vadd.f32 %v5007, %v5161
        %v5205 = vadd.f32 %v5008, %v5166
        %v5206 = vadd.f32 %v5009, %v5171
        %v5207 = vadd.f32 %v5010, %v5176
        %v5208 = vadd.f32 %v5011, %v5181
        %v5209 = vadd.f32 %v5012, %v5186
        %v5210 = vadd.f32 %v5013, %v5191
        %v5211 = vadd.f32 %v5014, %v5196
        %vm5212 = vcmask 261120
        %5213 = vst.msk [vmem:[#allocation4] sm:$0xff] %vm5212, %v5199
        %5214 = vst.msk [vmem:[#allocation4 + $0x8] sm:$0xff] %vm5212, %v5200
        %5215 = vst.msk [vmem:[#allocation4 + $0x10] sm:$0xff] %vm5212, %v5201
        %5216 = vst.msk [vmem:[#allocation4 + $0x18] sm:$0xff] %vm5212, %v5202
        %5217 = vst.msk [vmem:[#allocation4 + $0x20] sm:$0xff] %vm5212, %v5203
        %5218 = vst.msk [vmem:[#allocation4 + $0x28] sm:$0xff] %vm5212, %v5204
        %5219 = vst.msk [vmem:[#allocation4 + $0x30] sm:$0xff] %vm5212, %v5205
        %5220 = vst.msk [vmem:[#allocation4 + $0x38] sm:$0xff] %vm5212, %v5206
        %5221 = vst.msk [vmem:[#allocation4 + $0x40] sm:$0xff] %vm5212, %v5207
        %5222 = vst.msk [vmem:[#allocation4 + $0x48] sm:$0xff] %vm5212, %v5208
        %5223 = vst.msk [vmem:[#allocation4 + $0x50] sm:$0xff] %vm5212, %v5209
        %5224 = vst.msk [vmem:[#allocation4 + $0x58] sm:$0xff] %vm5212, %v5210
        %vm5225 = vcmask 257024
        %5226 = vst.msk [vmem:[#allocation4 + $0x60] sm:$0xf] %vm5225, %v5211
        %5227 = vst.msk [vmem:[#allocation5] sm:$0xff] %vm5212, 0.0
        %5228 = vst.msk [vmem:[#allocation5 + $0x8] sm:$0xff] %vm5212, 0.0
        %5229 = vst.msk [vmem:[#allocation5 + $0x10] sm:$0xff] %vm5212, 0.0
        %5230 = vst.msk [vmem:[#allocation5 + $0x18] sm:$0xff] %vm5212, 0.0
        %5231 = vst.msk [vmem:[#allocation5 + $0x20] sm:$0xff] %vm5212, 0.0
        %5232 = vst.msk [vmem:[#allocation5 + $0x28] sm:$0xff] %vm5212, 0.0
        %vm5233 = vcmask 254976
        %5234 = vst.msk [vmem:[#allocation5 + $0x30] sm:$0x3] %vm5233, 0.0
        %v5235 = vld [vmem:[%s4] sm:$0x1]
        %s5236 = scalar_lea.vmem [#allocation4], 11
        %v5237 = vld [vmem:[%s5236] ss:$2 sm:$0xf]
        %s5238 = scalar_lea.vmem [#allocation4], 12
        %v5239 = vld [vmem:[%s5238] ss:$2 sm:$0xf]
        %s5240 = scalar_lea.vmem [#allocation4], 21
        %v5241 = vld [vmem:[%s5240] ss:$2 sm:$0xf]
        %s5242 = scalar_lea.vmem [#allocation4], 22
        %v5243 = vld [vmem:[%s5242] ss:$2 sm:$0xf]
        %v5244 = vmax.f32 %v5237, %v5239
        %v5245 = vmax.f32 %v5241, %v5243
        %v5246 = vmax.f32 %v5244, %v5245
        %v5248 = vlaneseq
        %v5249 = vshrl.u32 %v5248, 7
        %v5250 = vsub.s32 0, %v5249
        %v5251 = vrot.slane %v5235, %v5250
        %v5253 = vadd.f32 %v5246, %v5251
        %v5254 = vmax.f32 %v5253, 0.0
        %5255 = vst.msk [vmem:[#allocation5 + $0xe] sm:$0xf] %vm5225, %v5254
        %s5256 = scalar_lea.vmem [#allocation4], 31
        %v5257 = vld [vmem:[%s5256] ss:$2 sm:$0xf]
        %s5258 = scalar_lea.vmem [#allocation4], 32
        %v5259 = vld [vmem:[%s5258] ss:$2 sm:$0xf]
        %s5260 = scalar_lea.vmem [#allocation4], 41
        %v5261 = vld [vmem:[%s5260] ss:$2 sm:$0xf]
        %s5262 = scalar_lea.vmem [#allocation4], 42
        %v5263 = vld [vmem:[%s5262] ss:$2 sm:$0xf]
        %v5264 = vmax.f32 %v5257, %v5259
        %v5265 = vmax.f32 %v5261, %v5263
        %v5266 = vmax.f32 %v5264, %v5265
        %v5267 = vadd.f32 %v5266, %v5251
        %v5268 = vmax.f32 %v5267, 0.0
        %5269 = vst.msk [vmem:[#allocation5 + $0x14] sm:$0xf] %vm5225, %v5268
        %s5270 = scalar_lea.vmem [#allocation4], 51
        %v5271 = vld [vmem:[%s5270] ss:$2 sm:$0xf]
        %s5272 = scalar_lea.vmem [#allocation4], 52
        %v5273 = vld [vmem:[%s5272] ss:$2 sm:$0xf]
        %s5274 = scalar_lea.vmem [#allocation4], 61
        %v5275 = vld [vmem:[%s5274] ss:$2 sm:$0xf]
        %s5276 = scalar_lea.vmem [#allocation4], 62
        %v5277 = vld [vmem:[%s5276] ss:$2 sm:$0xf]
        %v5278 = vmax.f32 %v5271, %v5273
        %v5279 = vmax.f32 %v5275, %v5277
        %v5280 = vmax.f32 %v5278, %v5279
        %v5281 = vadd.f32 %v5280, %v5251
        %v5282 = vmax.f32 %v5281, 0.0
        %5283 = vst.msk [vmem:[#allocation5 + $0x1a] sm:$0xf] %vm5225, %v5282
        %s5284 = scalar_lea.vmem [#allocation4], 71
        %v5285 = vld [vmem:[%s5284] ss:$2 sm:$0xf]
        %s5286 = scalar_lea.vmem [#allocation4], 72
        %v5287 = vld [vmem:[%s5286] ss:$2 sm:$0xf]
        %s5288 = scalar_lea.vmem [#allocation4], 81
        %v5289 = vld [vmem:[%s5288] ss:$2 sm:$0xf]
        %s5290 = scalar_lea.vmem [#allocation4], 82
        %v5291 = vld [vmem:[%s5290] ss:$2 sm:$0xf]
        %v5292 = vmax.f32 %v5285, %v5287
        %v5293 = vmax.f32 %v5289, %v5291
        %v5294 = vmax.f32 %v5292, %v5293
        %v5295 = vadd.f32 %v5294, %v5251
        %v5296 = vmax.f32 %v5295, 0.0
        %5297 = vst.msk [vmem:[#allocation5 + $0x20] sm:$0xf] %vm5225, %v5296
        %v5298 = vld [vmem:[#allocation5] sm:$0xff]
        %v5299 = vld [vmem:[#allocation5 + $0x8] sm:$0xff]
        %v5300 = vld [vmem:[#allocation5 + $0x10] sm:$0xff]
        %v5301 = vld [vmem:[#allocation5 + $0x18] sm:$0xff]
        %v5302 = vld [vmem:[#allocation5 + $0x20] sm:$0xf]
        %v5303 = vld [vmem:[%s5] sm:$0xff]
        %v5304 = vld [vmem:[%s5 + $0x8] sm:$0xff]
        %v5305 = vld [vmem:[%s5 + $0x10] sm:$0xff]
        %v5306 = vld [vmem:[%s5 + $0x18] sm:$0xff]
        %v5307 = vld [vmem:[#allocation5 + $0x1] sm:$0xff]
        %v5308 = vld [vmem:[#allocation5 + $0x9] sm:$0xff]
        %v5309 = vld [vmem:[#allocation5 + $0x11] sm:$0xff]
        %v5310 = vld [vmem:[#allocation5 + $0x19] sm:$0xff]
        %v5311 = vld [vmem:[#allocation5 + $0x21] sm:$0xf]
        %v5312 = vld [vmem:[%s5 + $0x20] sm:$0xff]
        %v5313 = vld [vmem:[%s5 + $0x28] sm:$0xff]
        %v5314 = vld [vmem:[%s5 + $0x30] sm:$0xff]
        %v5315 = vld [vmem:[%s5 + $0x38] sm:$0xff]
        %v5317 = vsel %vm5212, %v5307, 0
        %v5320 = vsel %vm5212, %v5308, 0
        %v5323 = vsel %vm5212, %v5309, 0
        %v5326 = vsel %vm5212, %v5310, 0
        %v5329 = vsel %vm5212, %v5311, 0
        %5331 = vmatprep.subr.mxu0 0.0
        %5332 = vmatpush1.msra.mxu0 %v5312
        %5333 = vmatprep.subr.mxu0 0.0
        %5334 = vmatpush1.msra.mxu0 %v5313
        %5335 = vmatprep.subr.mxu0 0.0
        %5336 = vmatpush1.msra.mxu0 %v5314
        %5337 = vmatprep.subr.mxu0 0.0
        %5338 = vmatpush1.msra.mxu0 %v5315
        %5339 = vmatprep.subr.mxu0 0.0
        %5340 = vmatpush1.msra.mxu0 0.0
        %5341 = vmatprep.subr.mxu0 0.0
        %5342 = vmatpush1.msra.mxu0 0.0
        %5343 = vmatprep.subr.mxu0 0.0
        %5344 = vmatpush1.msra.mxu0 0.0
        %5345 = vmatprep.subr.mxu0 0.0
        %5346 = vmatpush1.msra.mxu0 0.0
        %5347 = vmatprep.subr.mxu0 0.0
        %5348 = vmatpush1.msra.mxu0 0.0
        %5349 = vmatprep.subr.mxu0 0.0
        %5350 = vmatpush1.msra.mxu0 0.0
        %5351 = vmatprep.subr.mxu0 0.0
        %5352 = vmatpush1.msra.mxu0 0.0
        %5353 = vmatprep.subr.mxu0 0.0
        %5354 = vmatpush1.msra.mxu0 0.0
        %5355 = vmatprep.subr.mxu0 0.0
        %5356 = vmatpush1.msra.mxu0 0.0
        %5357 = vmatprep.subr.mxu0 0.0
        %5358 = vmatpush1.msra.mxu0 0.0
        %5359 = vmatprep.subr.mxu0 0.0
        %5360 = vmatpush1.msra.mxu0 0.0
        %5361 = vmatprep.subr.mxu0 0.0
        %5362 = vmatpush1.msra.mxu0 0.0
        %5363 = vmatprep.subr.mxu0 0.0
        %5364 = vmatpush1.msra.mxu0 0.0
        %5365 = vmatprep.subr.mxu0 0.0
        %5366 = vmatpush1.msra.mxu0 0.0
        %5367 = vmatprep.subr.mxu0 0.0
        %5368 = vmatpush1.msra.mxu0 0.0
        %5369 = vmatprep.subr.mxu0 0.0
        %5370 = vmatpush1.msra.mxu0 0.0
        %5371 = vmatprep.subr.mxu0 0.0
        %5372 = vmatpush1.msra.mxu0 0.0
        %5373 = vmatprep.subr.mxu0 0.0
        %5374 = vmatpush1.msra.mxu0 0.0
        %5375 = vmatprep.subr.mxu0 0.0
        %5376 = vmatpush1.msra.mxu0 0.0
        %5377 = vmatprep.subr.mxu0 0.0
        %5378 = vmatpush1.msra.mxu0 0.0
        %5379 = vmatprep.subr.mxu0 0.0
        %5380 = vmatpush1.msra.mxu0 0.0
        %5381 = vmatprep.subr.mxu0 0.0
        %5382 = vmatpush1.msra.mxu0 0.0
        %5383 = vmatprep.subr.mxu0 0.0
        %5384 = vmatpush1.msra.mxu0 0.0
        %5385 = vmatprep.subr.mxu0 0.0
        %5386 = vmatpush1.msra.mxu0 0.0
        %5387 = vmatprep.subr.mxu0 0.0
        %5388 = vmatpush1.msra.mxu0 0.0
        %5389 = vmatprep.subr.mxu0 0.0
        %5390 = vmatpush1.msra.mxu0 0.0
        %5391 = vmatprep.subr.mxu0 0.0
        %5392 = vmatpush1.msra.mxu0 0.0
        %5393 = vmatprep.subr.mxu0 0.0
        %5394 = vmatpush1.msra.mxu0 0.0
        %5395 = vmatprep.mubr.f32.mxu0 0.0
        %5396 = vmatmul.mubr.f32.gmra.mrb[0].mxu0 %v5317
        %v5397 = vpop.f32.mrb[0].mxu0
        %v5398 = vadd.f32 0.0, %v5397
        %v5399 = vpop.f32.mrb[0].mxu0
        %5400 = vmatprep.mubr.f32.mxu0 0.0
        %5401 = vmatmul.mubr.f32.gmra.mrb[0].mxu0 %v5320
        %v5402 = vpop.f32.mrb[0].mxu0
        %v5403 = vadd.f32 0.0, %v5402
        %v5404 = vpop.f32.mrb[0].mxu0
        %5405 = vmatprep.mubr.f32.mxu0 0.0
        %5406 = vmatmul.mubr.f32.gmra.mrb[0].mxu0 %v5323
        %v5407 = vpop.f32.mrb[0].mxu0
        %v5408 = vadd.f32 0.0, %v5407
        %v5409 = vpop.f32.mrb[0].mxu0
        %5410 = vmatprep.mubr.f32.mxu0 0.0
        %5411 = vmatmul.mubr.f32.gmra.mrb[0].mxu0 %v5326
        %v5412 = vpop.f32.mrb[0].mxu0
        %v5413 = vadd.f32 0.0, %v5412
        %v5414 = vpop.f32.mrb[0].mxu0
        %5415 = vmatprep.mubr.f32.mxu0 0.0
        %5416 = vmatmul.mubr.f32.gmra.mrb[0].mxu0 %v5329
        %v5417 = vpop.f32.mrb[0].mxu0
        %v5418 = vadd.f32 0.0, %v5417
        %v5419 = vpop.f32.mrb[0].mxu0
        %5420 = vdwg.mxu0
        %v5422 = vsel %vm5212, %v5298, 0
        %v5425 = vsel %vm5212, %v5299, 0
        %v5428 = vsel %vm5212, %v5300, 0
        %v5431 = vsel %vm5212, %v5301, 0
        %v5434 = vsel %vm5212, %v5302, 0
        %5436 = vmatprep.subr.mxu0 0.0
        %5437 = vmatpush1.msra.mxu0 %v5303
        %5438 = vmatprep.subr.mxu0 0.0
        %5439 = vmatpush1.msra.mxu0 %v5304
        %5440 = vmatprep.subr.mxu0 0.0
        %5441 = vmatpush1.msra.mxu0 %v5305
        %5442 = vmatprep.subr.mxu0 0.0
        %5443 = vmatpush1.msra.mxu0 %v5306
        %5444 = vmatprep.subr.mxu0 0.0
        %5445 = vmatpush1.msra.mxu0 0.0
        %5446 = vmatprep.subr.mxu0 0.0
        %5447 = vmatpush1.msra.mxu0 0.0
        %5448 = vmatprep.subr.mxu0 0.0
        %5449 = vmatpush1.msra.mxu0 0.0
        %5450 = vmatprep.subr.mxu0 0.0
        %5451 = vmatpush1.msra.mxu0 0.0
        %5452 = vmatprep.subr.mxu0 0.0
        %5453 = vmatpush1.msra.mxu0 0.0
        %5454 = vmatprep.subr.mxu0 0.0
        %5455 = vmatpush1.msra.mxu0 0.0
        %5456 = vmatprep.subr.mxu0 0.0
        %5457 = vmatpush1.msra.mxu0 0.0
        %5458 = vmatprep.subr.mxu0 0.0
        %5459 = vmatpush1.msra.mxu0 0.0
        %5460 = vmatprep.subr.mxu0 0.0
        %5461 = vmatpush1.msra.mxu0 0.0
        %5462 = vmatprep.subr.mxu0 0.0
        %5463 = vmatpush1.msra.mxu0 0.0
        %5464 = vmatprep.subr.mxu0 0.0
        %5465 = vmatpush1.msra.mxu0 0.0
        %5466 = vmatprep.subr.mxu0 0.0
        %5467 = vmatpush1.msra.mxu0 0.0
        %5468 = vmatprep.subr.mxu0 0.0
        %5469 = vmatpush1.msra.mxu0 0.0
        %5470 = vmatprep.subr.mxu0 0.0
        %5471 = vmatpush1.msra.mxu0 0.0
        %5472 = vmatprep.subr.mxu0 0.0
        %5473 = vmatpush1.msra.mxu0 0.0
        %5474 = vmatprep.subr.mxu0 0.0
        %5475 = vmatpush1.msra.mxu0 0.0
        %5476 = vmatprep.subr.mxu0 0.0
        %5477 = vmatpush1.msra.mxu0 0.0
        %5478 = vmatprep.subr.mxu0 0.0
        %5479 = vmatpush1.msra.mxu0 0.0
        %5480 = vmatprep.subr.mxu0 0.0
        %5481 = vmatpush1.msra.mxu0 0.0
        %5482 = vmatprep.subr.mxu0 0.0
        %5483 = vmatpush1.msra.mxu0 0.0
        %5484 = vmatprep.subr.mxu0 0.0
        %5485 = vmatpush1.msra.mxu0 0.0
        %5486 = vmatprep.subr.mxu0 0.0
        %5487 = vmatpush1.msra.mxu0 0.0
        %5488 = vmatprep.subr.mxu0 0.0
        %5489 = vmatpush1.msra.mxu0 0.0
        %5490 = vmatprep.subr.mxu0 0.0
        %5491 = vmatpush1.msra.mxu0 0.0
        %5492 = vmatprep.subr.mxu0 0.0
        %5493 = vmatpush1.msra.mxu0 0.0
        %5494 = vmatprep.subr.mxu0 0.0
        %5495 = vmatpush1.msra.mxu0 0.0
        %5496 = vmatprep.subr.mxu0 0.0
        %5497 = vmatpush1.msra.mxu0 0.0
        %5498 = vmatprep.subr.mxu0 0.0
        %5499 = vmatpush1.msra.mxu0 0.0
        %5500 = vmatprep.mubr.f32.mxu0 0.0
        %5501 = vmatmul.mubr.f32.gmra.mrb[0].mxu0 %v5422
        %v5502 = vpop.f32.mrb[0].mxu0
        %v5503 = vadd.f32 %v5398, %v5502
        %v5504 = vpop.f32.mrb[0].mxu0
        %5505 = vmatprep.mubr.f32.mxu0 0.0
        %5506 = vmatmul.mubr.f32.gmra.mrb[0].mxu0 %v5425
        %v5507 = vpop.f32.mrb[0].mxu0
        %v5508 = vadd.f32 %v5403, %v5507
        %v5509 = vpop.f32.mrb[0].mxu0
        %5510 = vmatprep.mubr.f32.mxu0 0.0
        %5511 = vmatmul.mubr.f32.gmra.mrb[0].mxu0 %v5428
        %v5512 = vpop.f32.mrb[0].mxu0
        %v5513 = vadd.f32 %v5408, %v5512
        %v5514 = vpop.f32.mrb[0].mxu0
        %5515 = vmatprep.mubr.f32.mxu0 0.0
        %5516 = vmatmul.mubr.f32.gmra.mrb[0].mxu0 %v5431
        %v5517 = vpop.f32.mrb[0].mxu0
        %v5518 = vadd.f32 %v5413, %v5517
        %v5519 = vpop.f32.mrb[0].mxu0
        %5520 = vmatprep.mubr.f32.mxu0 0.0
        %5521 = vmatmul.mubr.f32.gmra.mrb[0].mxu0 %v5434
        %v5522 = vpop.f32.mrb[0].mxu0
        %v5523 = vadd.f32 %v5418, %v5522
        %v5524 = vpop.f32.mrb[0].mxu0
        %5525 = vdwg.mxu0
        %v5526 = vld [vmem:[#allocation5 + $0x2] sm:$0xff]
        %v5527 = vld [vmem:[#allocation5 + $0xa] sm:$0xff]
        %v5528 = vld [vmem:[#allocation5 + $0x12] sm:$0xff]
        %v5529 = vld [vmem:[#allocation5 + $0x1a] sm:$0xff]
        %v5530 = vld [vmem:[#allocation5 + $0x22] sm:$0xf]
        %v5531 = vld [vmem:[%s5 + $0x40] sm:$0xff]
        %v5532 = vld [vmem:[%s5 + $0x48] sm:$0xff]
        %v5533 = vld [vmem:[%s5 + $0x50] sm:$0xff]
        %v5534 = vld [vmem:[%s5 + $0x58] sm:$0xff]
        %v5536 = vsel %vm5212, %v5526, 0
        %v5539 = vsel %vm5212, %v5527, 0
        %v5542 = vsel %vm5212, %v5528, 0
        %v5545 = vsel %vm5212, %v5529, 0
        %v5548 = vsel %vm5212, %v5530, 0
        %5550 = vmatprep.subr.mxu0 0.0
        %5551 = vmatpush1.msra.mxu0 %v5531
        %5552 = vmatprep.subr.mxu0 0.0
        %5553 = vmatpush1.msra.mxu0 %v5532
        %5554 = vmatprep.subr.mxu0 0.0
        %5555 = vmatpush1.msra.mxu0 %v5533
        %5556 = vmatprep.subr.mxu0 0.0
        %5557 = vmatpush1.msra.mxu0 %v5534
        %5558 = vmatprep.subr.mxu0 0.0
        %5559 = vmatpush1.msra.mxu0 0.0
        %5560 = vmatprep.subr.mxu0 0.0
        %5561 = vmatpush1.msra.mxu0 0.0
        %5562 = vmatprep.subr.mxu0 0.0
        %5563 = vmatpush1.msra.mxu0 0.0
        %5564 = vmatprep.subr.mxu0 0.0
        %5565 = vmatpush1.msra.mxu0 0.0
        %5566 = vmatprep.subr.mxu0 0.0
        %5567 = vmatpush1.msra.mxu0 0.0
        %5568 = vmatprep.subr.mxu0 0.0
        %5569 = vmatpush1.msra.mxu0 0.0
        %5570 = vmatprep.subr.mxu0 0.0
        %5571 = vmatpush1.msra.mxu0 0.0
        %5572 = vmatprep.subr.mxu0 0.0
        %5573 = vmatpush1.msra.mxu0 0.0
        %5574 = vmatprep.subr.mxu0 0.0
        %5575 = vmatpush1.msra.mxu0 0.0
        %5576 = vmatprep.subr.mxu0 0.0
        %5577 = vmatpush1.msra.mxu0 0.0
        %5578 = vmatprep.subr.mxu0 0.0
        %5579 = vmatpush1.msra.mxu0 0.0
        %5580 = vmatprep.subr.mxu0 0.0
        %5581 = vmatpush1.msra.mxu0 0.0
        %5582 = vmatprep.subr.mxu0 0.0
        %5583 = vmatpush1.msra.mxu0 0.0
        %5584 = vmatprep.subr.mxu0 0.0
        %5585 = vmatpush1.msra.mxu0 0.0
        %5586 = vmatprep.subr.mxu0 0.0
        %5587 = vmatpush1.msra.mxu0 0.0
        %5588 = vmatprep.subr.mxu0 0.0
        %5589 = vmatpush1.msra.mxu0 0.0
        %5590 = vmatprep.subr.mxu0 0.0
        %5591 = vmatpush1.msra.mxu0 0.0
        %5592 = vmatprep.subr.mxu0 0.0
        %5593 = vmatpush1.msra.mxu0 0.0
        %5594 = vmatprep.subr.mxu0 0.0
        %5595 = vmatpush1.msra.mxu0 0.0
        %5596 = vmatprep.subr.mxu0 0.0
        %5597 = vmatpush1.msra.mxu0 0.0
        %5598 = vmatprep.subr.mxu0 0.0
        %5599 = vmatpush1.msra.mxu0 0.0
        %5600 = vmatprep.subr.mxu0 0.0
        %5601 = vmatpush1.msra.mxu0 0.0
        %5602 = vmatprep.subr.mxu0 0.0
        %5603 = vmatpush1.msra.mxu0 0.0
        %5604 = vmatprep.subr.mxu0 0.0
        %5605 = vmatpush1.msra.mxu0 0.0
        %5606 = vmatprep.subr.mxu0 0.0
        %5607 = vmatpush1.msra.mxu0 0.0
        %5608 = vmatprep.subr.mxu0 0.0
        %5609 = vmatpush1.msra.mxu0 0.0
        %5610 = vmatprep.subr.mxu0 0.0
        %5611 = vmatpush1.msra.mxu0 0.0
        %5612 = vmatprep.subr.mxu0 0.0
        %5613 = vmatpush1.msra.mxu0 0.0
        %5614 = vmatprep.mubr.f32.mxu0 0.0
        %5615 = vmatmul.mubr.f32.gmra.mrb[0].mxu0 %v5536
        %v5616 = vpop.f32.mrb[0].mxu0
        %v5617 = vadd.f32 0.0, %v5616
        %v5618 = vpop.f32.mrb[0].mxu0
        %5619 = vmatprep.mubr.f32.mxu0 0.0
        %5620 = vmatmul.mubr.f32.gmra.mrb[0].mxu0 %v5539
        %v5621 = vpop.f32.mrb[0].mxu0
        %v5622 = vadd.f32 0.0, %v5621
        %v5623 = vpop.f32.mrb[0].mxu0
        %5624 = vmatprep.mubr.f32.mxu0 0.0
        %5625 = vmatmul.mubr.f32.gmra.mrb[0].mxu0 %v5542
        %v5626 = vpop.f32.mrb[0].mxu0
        %v5627 = vadd.f32 0.0, %v5626
        %v5628 = vpop.f32.mrb[0].mxu0
        %5629 = vmatprep.mubr.f32.mxu0 0.0
        %5630 = vmatmul.mubr.f32.gmra.mrb[0].mxu0 %v5545
        %v5631 = vpop.f32.mrb[0].mxu0
        %v5632 = vadd.f32 0.0, %v5631
        %v5633 = vpop.f32.mrb[0].mxu0
        %5634 = vmatprep.mubr.f32.mxu0 0.0
        %5635 = vmatmul.mubr.f32.gmra.mrb[0].mxu0 %v5548
        %v5636 = vpop.f32.mrb[0].mxu0
        %v5637 = vadd.f32 0.0, %v5636
        %v5638 = vpop.f32.mrb[0].mxu0
        %5639 = vdwg.mxu0
        %v5640 = vadd.f32 %v5503, %v5617
        %v5641 = vadd.f32 %v5508, %v5622
        %v5642 = vadd.f32 %v5513, %v5627
        %v5643 = vadd.f32 %v5518, %v5632
        %v5644 = vadd.f32 %v5523, %v5637
        %v5645 = vld [vmem:[#allocation5 + $0x6] sm:$0xff]
        %v5646 = vld [vmem:[#allocation5 + $0xe] sm:$0xff]
        %v5647 = vld [vmem:[#allocation5 + $0x16] sm:$0xff]
        %v5648 = vld [vmem:[#allocation5 + $0x1e] sm:$0xff]
        %v5649 = vld [vmem:[#allocation5 + $0x26] sm:$0xf]
        %v5650 = vld [vmem:[%s5 + $0x60] sm:$0xff]
        %v5651 = vld [vmem:[%s5 + $0x68] sm:$0xff]
        %v5652 = vld [vmem:[%s5 + $0x70] sm:$0xff]
        %v5653 = vld [vmem:[%s5 + $0x78] sm:$0xff]
        %v5655 = vsel %vm5212, %v5645, 0
        %v5658 = vsel %vm5212, %v5646, 0
        %v5661 = vsel %vm5212, %v5647, 0
        %v5664 = vsel %vm5212, %v5648, 0
        %v5667 = vsel %vm5212, %v5649, 0
        %5669 = vmatprep.subr.mxu0 0.0
        %5670 = vmatpush1.msra.mxu0 %v5650
        %5671 = vmatprep.subr.mxu0 0.0
        %5672 = vmatpush1.msra.mxu0 %v5651
        %5673 = vmatprep.subr.mxu0 0.0
        %5674 = vmatpush1.msra.mxu0 %v5652
        %5675 = vmatprep.subr.mxu0 0.0
        %5676 = vmatpush1.msra.mxu0 %v5653
        %5677 = vmatprep.subr.mxu0 0.0
        %5678 = vmatpush1.msra.mxu0 0.0
        %5679 = vmatprep.subr.mxu0 0.0
        %5680 = vmatpush1.msra.mxu0 0.0
        %5681 = vmatprep.subr.mxu0 0.0
        %5682 = vmatpush1.msra.mxu0 0.0
        %5683 = vmatprep.subr.mxu0 0.0
        %5684 = vmatpush1.msra.mxu0 0.0
        %5685 = vmatprep.subr.mxu0 0.0
        %5686 = vmatpush1.msra.mxu0 0.0
        %5687 = vmatprep.subr.mxu0 0.0
        %5688 = vmatpush1.msra.mxu0 0.0
        %5689 = vmatprep.subr.mxu0 0.0
        %5690 = vmatpush1.msra.mxu0 0.0
        %5691 = vmatprep.subr.mxu0 0.0
        %5692 = vmatpush1.msra.mxu0 0.0
        %5693 = vmatprep.subr.mxu0 0.0
        %5694 = vmatpush1.msra.mxu0 0.0
        %5695 = vmatprep.subr.mxu0 0.0
        %5696 = vmatpush1.msra.mxu0 0.0
        %5697 = vmatprep.subr.mxu0 0.0
        %5698 = vmatpush1.msra.mxu0 0.0
        %5699 = vmatprep.subr.mxu0 0.0
        %5700 = vmatpush1.msra.mxu0 0.0
        %5701 = vmatprep.subr.mxu0 0.0
        %5702 = vmatpush1.msra.mxu0 0.0
        %5703 = vmatprep.subr.mxu0 0.0
        %5704 = vmatpush1.msra.mxu0 0.0
        %5705 = vmatprep.subr.mxu0 0.0
        %5706 = vmatpush1.msra.mxu0 0.0
        %5707 = vmatprep.subr.mxu0 0.0
        %5708 = vmatpush1.msra.mxu0 0.0
        %5709 = vmatprep.subr.mxu0 0.0
        %5710 = vmatpush1.msra.mxu0 0.0
        %5711 = vmatprep.subr.mxu0 0.0
        %5712 = vmatpush1.msra.mxu0 0.0
        %5713 = vmatprep.subr.mxu0 0.0
        %5714 = vmatpush1.msra.mxu0 0.0
        %5715 = vmatprep.subr.mxu0 0.0
        %5716 = vmatpush1.msra.mxu0 0.0
        %5717 = vmatprep.subr.mxu0 0.0
        %5718 = vmatpush1.msra.mxu0 0.0
        %5719 = vmatprep.subr.mxu0 0.0
        %5720 = vmatpush1.msra.mxu0 0.0
        %5721 = vmatprep.subr.mxu0 0.0
        %5722 = vmatpush1.msra.mxu0 0.0
        %5723 = vmatprep.subr.mxu0 0.0
        %5724 = vmatpush1.msra.mxu0 0.0
        %5725 = vmatprep.subr.mxu0 0.0
        %5726 = vmatpush1.msra.mxu0 0.0
        %5727 = vmatprep.subr.mxu0 0.0
        %5728 = vmatpush1.msra.mxu0 0.0
        %5729 = vmatprep.subr.mxu0 0.0
        %5730 = vmatpush1.msra.mxu0 0.0
        %5731 = vmatprep.subr.mxu0 0.0
        %5732 = vmatpush1.msra.mxu0 0.0
        %5733 = vmatprep.mubr.f32.mxu0 0.0
        %5734 = vmatmul.mubr.f32.gmra.mrb[0].mxu0 %v5655
        %v5735 = vpop.f32.mrb[0].mxu0
        %v5736 = vadd.f32 0.0, %v5735
        %v5737 = vpop.f32.mrb[0].mxu0
        %5738 = vmatprep.mubr.f32.mxu0 0.0
        %5739 = vmatmul.mubr.f32.gmra.mrb[0].mxu0 %v5658
        %v5740 = vpop.f32.mrb[0].mxu0
        %v5741 = vadd.f32 0.0, %v5740
        %v5742 = vpop.f32.mrb[0].mxu0
        %5743 = vmatprep.mubr.f32.mxu0 0.0
        %5744 = vmatmul.mubr.f32.gmra.mrb[0].mxu0 %v5661
        %v5745 = vpop.f32.mrb[0].mxu0
        %v5746 = vadd.f32 0.0, %v5745
        %v5747 = vpop.f32.mrb[0].mxu0
        %5748 = vmatprep.mubr.f32.mxu0 0.0
        %5749 = vmatmul.mubr.f32.gmra.mrb[0].mxu0 %v5664
        %v5750 = vpop.f32.mrb[0].mxu0
        %v5751 = vadd.f32 0.0, %v5750
        %v5752 = vpop.f32.mrb[0].mxu0
        %5753 = vmatprep.mubr.f32.mxu0 0.0
        %5754 = vmatmul.mubr.f32.gmra.mrb[0].mxu0 %v5667
        %v5755 = vpop.f32.mrb[0].mxu0
        %v5756 = vadd.f32 0.0, %v5755
        %v5757 = vpop.f32.mrb[0].mxu0
        %5758 = vdwg.mxu0
        %v5759 = vadd.f32 %v5640, %v5736
        %v5760 = vadd.f32 %v5641, %v5741
        %v5761 = vadd.f32 %v5642, %v5746
        %v5762 = vadd.f32 %v5643, %v5751
        %v5763 = vadd.f32 %v5644, %v5756
        %v5764 = vld [vmem:[#allocation5 + $0x7] sm:$0xff]
        %v5765 = vld [vmem:[#allocation5 + $0xf] sm:$0xff]
        %v5766 = vld [vmem:[#allocation5 + $0x17] sm:$0xff]
        %v5767 = vld [vmem:[#allocation5 + $0x1f] sm:$0xff]
        %v5768 = vld [vmem:[#allocation5 + $0x27] sm:$0xf]
        %v5769 = vld [vmem:[%s5 + $0x80] sm:$0xff]
        %v5770 = vld [vmem:[%s5 + $0x88] sm:$0xff]
        %v5771 = vld [vmem:[%s5 + $0x90] sm:$0xff]
        %v5772 = vld [vmem:[%s5 + $0x98] sm:$0xff]
        %v5774 = vsel %vm5212, %v5764, 0
        %v5777 = vsel %vm5212, %v5765, 0
        %v5780 = vsel %vm5212, %v5766, 0
        %v5783 = vsel %vm5212, %v5767, 0
        %v5786 = vsel %vm5212, %v5768, 0
        %5788 = vmatprep.subr.mxu0 0.0
        %5789 = vmatpush1.msra.mxu0 %v5769
        %5790 = vmatprep.subr.mxu0 0.0
        %5791 = vmatpush1.msra.mxu0 %v5770
        %5792 = vmatprep.subr.mxu0 0.0
        %5793 = vmatpush1.msra.mxu0 %v5771
        %5794 = vmatprep.subr.mxu0 0.0
        %5795 = vmatpush1.msra.mxu0 %v5772
        %5796 = vmatprep.subr.mxu0 0.0
        %5797 = vmatpush1.msra.mxu0 0.0
        %5798 = vmatprep.subr.mxu0 0.0
        %5799 = vmatpush1.msra.mxu0 0.0
        %5800 = vmatprep.subr.mxu0 0.0
        %5801 = vmatpush1.msra.mxu0 0.0
        %5802 = vmatprep.subr.mxu0 0.0
        %5803 = vmatpush1.msra.mxu0 0.0
        %5804 = vmatprep.subr.mxu0 0.0
        %5805 = vmatpush1.msra.mxu0 0.0
        %5806 = vmatprep.subr.mxu0 0.0
        %5807 = vmatpush1.msra.mxu0 0.0
        %5808 = vmatprep.subr.mxu0 0.0
        %5809 = vmatpush1.msra.mxu0 0.0
        %5810 = vmatprep.subr.mxu0 0.0
        %5811 = vmatpush1.msra.mxu0 0.0
        %5812 = vmatprep.subr.mxu0 0.0
        %5813 = vmatpush1.msra.mxu0 0.0
        %5814 = vmatprep.subr.mxu0 0.0
        %5815 = vmatpush1.msra.mxu0 0.0
        %5816 = vmatprep.subr.mxu0 0.0
        %5817 = vmatpush1.msra.mxu0 0.0
        %5818 = vmatprep.subr.mxu0 0.0
        %5819 = vmatpush1.msra.mxu0 0.0
        %5820 = vmatprep.subr.mxu0 0.0
        %5821 = vmatpush1.msra.mxu0 0.0
        %5822 = vmatprep.subr.mxu0 0.0
        %5823 = vmatpush1.msra.mxu0 0.0
        %5824 = vmatprep.subr.mxu0 0.0
        %5825 = vmatpush1.msra.mxu0 0.0
        %5826 = vmatprep.subr.mxu0 0.0
        %5827 = vmatpush1.msra.mxu0 0.0
        %5828 = vmatprep.subr.mxu0 0.0
        %5829 = vmatpush1.msra.mxu0 0.0
        %5830 = vmatprep.subr.mxu0 0.0
        %5831 = vmatpush1.msra.mxu0 0.0
        %5832 = vmatprep.subr.mxu0 0.0
        %5833 = vmatpush1.msra.mxu0 0.0
        %5834 = vmatprep.subr.mxu0 0.0
        %5835 = vmatpush1.msra.mxu0 0.0
        %5836 = vmatprep.subr.mxu0 0.0
        %5837 = vmatpush1.msra.mxu0 0.0
        %5838 = vmatprep.subr.mxu0 0.0
        %5839 = vmatpush1.msra.mxu0 0.0
        %5840 = vmatprep.subr.mxu0 0.0
        %5841 = vmatpush1.msra.mxu0 0.0
        %5842 = vmatprep.subr.mxu0 0.0
        %5843 = vmatpush1.msra.mxu0 0.0
        %5844 = vmatprep.subr.mxu0 0.0
        %5845 = vmatpush1.msra.mxu0 0.0
        %5846 = vmatprep.subr.mxu0 0.0
        %5847 = vmatpush1.msra.mxu0 0.0
        %5848 = vmatprep.subr.mxu0 0.0
        %5849 = vmatpush1.msra.mxu0 0.0
        %5850 = vmatprep.subr.mxu0 0.0
        %5851 = vmatpush1.msra.mxu0 0.0
        %5852 = vmatprep.mubr.f32.mxu0 0.0
        %5853 = vmatmul.mubr.f32.gmra.mrb[0].mxu0 %v5774
        %v5854 = vpop.f32.mrb[0].mxu0
        %v5855 = vadd.f32 0.0, %v5854
        %v5856 = vpop.f32.mrb[0].mxu0
        %5857 = vmatprep.mubr.f32.mxu0 0.0
        %5858 = vmatmul.mubr.f32.gmra.mrb[0].mxu0 %v5777
        %v5859 = vpop.f32.mrb[0].mxu0
        %v5860 = vadd.f32 0.0, %v5859
        %v5861 = vpop.f32.mrb[0].mxu0
        %5862 = vmatprep.mubr.f32.mxu0 0.0
        %5863 = vmatmul.mubr.f32.gmra.mrb[0].mxu0 %v5780
        %v5864 = vpop.f32.mrb[0].mxu0
        %v5865 = vadd.f32 0.0, %v5864
        %v5866 = vpop.f32.mrb[0].mxu0
        %5867 = vmatprep.mubr.f32.mxu0 0.0
        %5868 = vmatmul.mubr.f32.gmra.mrb[0].mxu0 %v5783
        %v5869 = vpop.f32.mrb[0].mxu0
        %v5870 = vadd.f32 0.0, %v5869
        %v5871 = vpop.f32.mrb[0].mxu0
        %5872 = vmatprep.mubr.f32.mxu0 0.0
        %5873 = vmatmul.mubr.f32.gmra.mrb[0].mxu0 %v5786
        %v5874 = vpop.f32.mrb[0].mxu0
        %v5875 = vadd.f32 0.0, %v5874
        %v5876 = vpop.f32.mrb[0].mxu0
        %5877 = vdwg.mxu0
        %v5878 = vadd.f32 %v5759, %v5855
        %v5879 = vadd.f32 %v5760, %v5860
        %v5880 = vadd.f32 %v5761, %v5865
        %v5881 = vadd.f32 %v5762, %v5870
        %v5882 = vadd.f32 %v5763, %v5875
        %v5883 = vld [vmem:[#allocation5 + $0x8] sm:$0xff]
        %v5884 = vld [vmem:[#allocation5 + $0x10] sm:$0xff]
        %v5885 = vld [vmem:[#allocation5 + $0x18] sm:$0xff]
        %v5886 = vld [vmem:[#allocation5 + $0x20] sm:$0xff]
        %v5887 = vld [vmem:[#allocation5 + $0x28] sm:$0xf]
        %v5888 = vld [vmem:[%s5 + $0xa0] sm:$0xff]
        %v5889 = vld [vmem:[%s5 + $0xa8] sm:$0xff]
        %v5890 = vld [vmem:[%s5 + $0xb0] sm:$0xff]
        %v5891 = vld [vmem:[%s5 + $0xb8] sm:$0xff]
        %v5893 = vsel %vm5212, %v5883, 0
        %v5896 = vsel %vm5212, %v5884, 0
        %v5899 = vsel %vm5212, %v5885, 0
        %v5902 = vsel %vm5212, %v5886, 0
        %v5905 = vsel %vm5212, %v5887, 0
        %5907 = vmatprep.subr.mxu0 0.0
        %5908 = vmatpush1.msra.mxu0 %v5888
        %5909 = vmatprep.subr.mxu0 0.0
        %5910 = vmatpush1.msra.mxu0 %v5889
        %5911 = vmatprep.subr.mxu0 0.0
        %5912 = vmatpush1.msra.mxu0 %v5890
        %5913 = vmatprep.subr.mxu0 0.0
        %5914 = vmatpush1.msra.mxu0 %v5891
        %5915 = vmatprep.subr.mxu0 0.0
        %5916 = vmatpush1.msra.mxu0 0.0
        %5917 = vmatprep.subr.mxu0 0.0
        %5918 = vmatpush1.msra.mxu0 0.0
        %5919 = vmatprep.subr.mxu0 0.0
        %5920 = vmatpush1.msra.mxu0 0.0
        %5921 = vmatprep.subr.mxu0 0.0
        %5922 = vmatpush1.msra.mxu0 0.0
        %5923 = vmatprep.subr.mxu0 0.0
        %5924 = vmatpush1.msra.mxu0 0.0
        %5925 = vmatprep.subr.mxu0 0.0
        %5926 = vmatpush1.msra.mxu0 0.0
        %5927 = vmatprep.subr.mxu0 0.0
        %5928 = vmatpush1.msra.mxu0 0.0
        %5929 = vmatprep.subr.mxu0 0.0
        %5930 = vmatpush1.msra.mxu0 0.0
        %5931 = vmatprep.subr.mxu0 0.0
        %5932 = vmatpush1.msra.mxu0 0.0
        %5933 = vmatprep.subr.mxu0 0.0
        %5934 = vmatpush1.msra.mxu0 0.0
        %5935 = vmatprep.subr.mxu0 0.0
        %5936 = vmatpush1.msra.mxu0 0.0
        %5937 = vmatprep.subr.mxu0 0.0
        %5938 = vmatpush1.msra.mxu0 0.0
        %5939 = vmatprep.subr.mxu0 0.0
        %5940 = vmatpush1.msra.mxu0 0.0
        %5941 = vmatprep.subr.mxu0 0.0
        %5942 = vmatpush1.msra.mxu0 0.0
        %5943 = vmatprep.subr.mxu0 0.0
        %5944 = vmatpush1.msra.mxu0 0.0
        %5945 = vmatprep.subr.mxu0 0.0
        %5946 = vmatpush1.msra.mxu0 0.0
        %5947 = vmatprep.subr.mxu0 0.0
        %5948 = vmatpush1.msra.mxu0 0.0
        %5949 = vmatprep.subr.mxu0 0.0
        %5950 = vmatpush1.msra.mxu0 0.0
        %5951 = vmatprep.subr.mxu0 0.0
        %5952 = vmatpush1.msra.mxu0 0.0
        %5953 = vmatprep.subr.mxu0 0.0
        %5954 = vmatpush1.msra.mxu0 0.0
        %5955 = vmatprep.subr.mxu0 0.0
        %5956 = vmatpush1.msra.mxu0 0.0
        %5957 = vmatprep.subr.mxu0 0.0
        %5958 = vmatpush1.msra.mxu0 0.0
        %5959 = vmatprep.subr.mxu0 0.0
        %5960 = vmatpush1.msra.mxu0 0.0
        %5961 = vmatprep.subr.mxu0 0.0
        %5962 = vmatpush1.msra.mxu0 0.0
        %5963 = vmatprep.subr.mxu0 0.0
        %5964 = vmatpush1.msra.mxu0 0.0
        %5965 = vmatprep.subr.mxu0 0.0
        %5966 = vmatpush1.msra.mxu0 0.0
        %5967 = vmatprep.subr.mxu0 0.0
        %5968 = vmatpush1.msra.mxu0 0.0
        %5969 = vmatprep.subr.mxu0 0.0
        %5970 = vmatpush1.msra.mxu0 0.0
        %5971 = vmatprep.mubr.f32.mxu0 0.0
        %5972 = vmatmul.mubr.f32.gmra.mrb[0].mxu0 %v5893
        %v5973 = vpop.f32.mrb[0].mxu0
        %v5974 = vadd.f32 0.0, %v5973
        %v5975 = vpop.f32.mrb[0].mxu0
        %5976 = vmatprep.mubr.f32.mxu0 0.0
        %5977 = vmatmul.mubr.f32.gmra.mrb[0].mxu0 %v5896
        %v5978 = vpop.f32.mrb[0].mxu0
        %v5979 = vadd.f32 0.0, %v5978
        %v5980 = vpop.f32.mrb[0].mxu0
        %5981 = vmatprep.mubr.f32.mxu0 0.0
        %5982 = vmatmul.mubr.f32.gmra.mrb[0].mxu0 %v5899
        %v5983 = vpop.f32.mrb[0].mxu0
        %v5984 = vadd.f32 0.0, %v5983
        %v5985 = vpop.f32.mrb[0].mxu0
        %5986 = vmatprep.mubr.f32.mxu0 0.0
        %5987 = vmatmul.mubr.f32.gmra.mrb[0].mxu0 %v5902
        %v5988 = vpop.f32.mrb[0].mxu0
        %v5989 = vadd.f32 0.0, %v5988
        %v5990 = vpop.f32.mrb[0].mxu0
        %5991 = vmatprep.mubr.f32.mxu0 0.0
        %5992 = vmatmul.mubr.f32.gmra.mrb[0].mxu0 %v5905
        %v5993 = vpop.f32.mrb[0].mxu0
        %v5994 = vadd.f32 0.0, %v5993
        %v5995 = vpop.f32.mrb[0].mxu0
        %5996 = vdwg.mxu0
        %v5997 = vadd.f32 %v5878, %v5974
        %v5998 = vadd.f32 %v5879, %v5979
        %v5999 = vadd.f32 %v5880, %v5984
        %v6000 = vadd.f32 %v5881, %v5989
        %v6001 = vadd.f32 %v5882, %v5994
        %v6002 = vld [vmem:[#allocation5 + $0xc] sm:$0xff]
        %v6003 = vld [vmem:[#allocation5 + $0x14] sm:$0xff]
        %v6004 = vld [vmem:[#allocation5 + $0x1c] sm:$0xff]
        %v6005 = vld [vmem:[#allocation5 + $0x24] sm:$0xff]
        %v6006 = vld [vmem:[#allocation5 + $0x2c] sm:$0xf]
        %v6007 = vld [vmem:[%s5 + $0xc0] sm:$0xff]
        %v6008 = vld [vmem:[%s5 + $0xc8] sm:$0xff]
        %v6009 = vld [vmem:[%s5 + $0xd0] sm:$0xff]
        %v6010 = vld [vmem:[%s5 + $0xd8] sm:$0xff]
        %v6012 = vsel %vm5212, %v6002, 0
        %v6015 = vsel %vm5212, %v6003, 0
        %v6018 = vsel %vm5212, %v6004, 0
        %v6021 = vsel %vm5212, %v6005, 0
        %v6024 = vsel %vm5212, %v6006, 0
        %6026 = vmatprep.subr.mxu0 0.0
        %6027 = vmatpush1.msra.mxu0 %v6007
        %6028 = vmatprep.subr.mxu0 0.0
        %6029 = vmatpush1.msra.mxu0 %v6008
        %6030 = vmatprep.subr.mxu0 0.0
        %6031 = vmatpush1.msra.mxu0 %v6009
        %6032 = vmatprep.subr.mxu0 0.0
        %6033 = vmatpush1.msra.mxu0 %v6010
        %6034 = vmatprep.subr.mxu0 0.0
        %6035 = vmatpush1.msra.mxu0 0.0
        %6036 = vmatprep.subr.mxu0 0.0
        %6037 = vmatpush1.msra.mxu0 0.0
        %6038 = vmatprep.subr.mxu0 0.0
        %6039 = vmatpush1.msra.mxu0 0.0
        %6040 = vmatprep.subr.mxu0 0.0
        %6041 = vmatpush1.msra.mxu0 0.0
        %6042 = vmatprep.subr.mxu0 0.0
        %6043 = vmatpush1.msra.mxu0 0.0
        %6044 = vmatprep.subr.mxu0 0.0
        %6045 = vmatpush1.msra.mxu0 0.0
        %6046 = vmatprep.subr.mxu0 0.0
        %6047 = vmatpush1.msra.mxu0 0.0
        %6048 = vmatprep.subr.mxu0 0.0
        %6049 = vmatpush1.msra.mxu0 0.0
        %6050 = vmatprep.subr.mxu0 0.0
        %6051 = vmatpush1.msra.mxu0 0.0
        %6052 = vmatprep.subr.mxu0 0.0
        %6053 = vmatpush1.msra.mxu0 0.0
        %6054 = vmatprep.subr.mxu0 0.0
        %6055 = vmatpush1.msra.mxu0 0.0
        %6056 = vmatprep.subr.mxu0 0.0
        %6057 = vmatpush1.msra.mxu0 0.0
        %6058 = vmatprep.subr.mxu0 0.0
        %6059 = vmatpush1.msra.mxu0 0.0
        %6060 = vmatprep.subr.mxu0 0.0
        %6061 = vmatpush1.msra.mxu0 0.0
        %6062 = vmatprep.subr.mxu0 0.0
        %6063 = vmatpush1.msra.mxu0 0.0
        %6064 = vmatprep.subr.mxu0 0.0
        %6065 = vmatpush1.msra.mxu0 0.0
        %6066 = vmatprep.subr.mxu0 0.0
        %6067 = vmatpush1.msra.mxu0 0.0
        %6068 = vmatprep.subr.mxu0 0.0
        %6069 = vmatpush1.msra.mxu0 0.0
        %6070 = vmatprep.subr.mxu0 0.0
        %6071 = vmatpush1.msra.mxu0 0.0
        %6072 = vmatprep.subr.mxu0 0.0
        %6073 = vmatpush1.msra.mxu0 0.0
        %6074 = vmatprep.subr.mxu0 0.0
        %6075 = vmatpush1.msra.mxu0 0.0
        %6076 = vmatprep.subr.mxu0 0.0
        %6077 = vmatpush1.msra.mxu0 0.0
        %6078 = vmatprep.subr.mxu0 0.0
        %6079 = vmatpush1.msra.mxu0 0.0
        %6080 = vmatprep.subr.mxu0 0.0
        %6081 = vmatpush1.msra.mxu0 0.0
        %6082 = vmatprep.subr.mxu0 0.0
        %6083 = vmatpush1.msra.mxu0 0.0
        %6084 = vmatprep.subr.mxu0 0.0
        %6085 = vmatpush1.msra.mxu0 0.0
        %6086 = vmatprep.subr.mxu0 0.0
        %6087 = vmatpush1.msra.mxu0 0.0
        %6088 = vmatprep.subr.mxu0 0.0
        %6089 = vmatpush1.msra.mxu0 0.0
        %6090 = vmatprep.mubr.f32.mxu0 0.0
        %6091 = vmatmul.mubr.f32.gmra.mrb[0].mxu0 %v6012
        %v6092 = vpop.f32.mrb[0].mxu0
        %v6093 = vadd.f32 0.0, %v6092
        %v6094 = vpop.f32.mrb[0].mxu0
        %6095 = vmatprep.mubr.f32.mxu0 0.0
        %6096 = vmatmul.mubr.f32.gmra.mrb[0].mxu0 %v6015
        %v6097 = vpop.f32.mrb[0].mxu0
        %v6098 = vadd.f32 0.0, %v6097
        %v6099 = vpop.f32.mrb[0].mxu0
        %6100 = vmatprep.mubr.f32.mxu0 0.0
        %6101 = vmatmul.mubr.f32.gmra.mrb[0].mxu0 %v6018
        %v6102 = vpop.f32.mrb[0].mxu0
        %v6103 = vadd.f32 0.0, %v6102
        %v6104 = vpop.f32.mrb[0].mxu0
        %6105 = vmatprep.mubr.f32.mxu0 0.0
        %6106 = vmatmul.mubr.f32.gmra.mrb[0].mxu0 %v6021
        %v6107 = vpop.f32.mrb[0].mxu0
        %v6108 = vadd.f32 0.0, %v6107
        %v6109 = vpop.f32.mrb[0].mxu0
        %6110 = vmatprep.mubr.f32.mxu0 0.0
        %6111 = vmatmul.mubr.f32.gmra.mrb[0].mxu0 %v6024
        %v6112 = vpop.f32.mrb[0].mxu0
        %v6113 = vadd.f32 0.0, %v6112
        %v6114 = vpop.f32.mrb[0].mxu0
        %6115 = vdwg.mxu0
        %v6116 = vadd.f32 %v5997, %v6093
        %v6117 = vadd.f32 %v5998, %v6098
        %v6118 = vadd.f32 %v5999, %v6103
        %v6119 = vadd.f32 %v6000, %v6108
        %v6120 = vadd.f32 %v6001, %v6113
        %v6121 = vld [vmem:[#allocation5 + $0xd] sm:$0xff]
        %v6122 = vld [vmem:[#allocation5 + $0x15] sm:$0xff]
        %v6123 = vld [vmem:[#allocation5 + $0x1d] sm:$0xff]
        %v6124 = vld [vmem:[#allocation5 + $0x25] sm:$0xff]
        %v6125 = vld [vmem:[#allocation5 + $0x2d] sm:$0xf]
        %v6126 = vld [vmem:[%s5 + $0xe0] sm:$0xff]
        %v6127 = vld [vmem:[%s5 + $0xe8] sm:$0xff]
        %v6128 = vld [vmem:[%s5 + $0xf0] sm:$0xff]
        %v6129 = vld [vmem:[%s5 + $0xf8] sm:$0xff]
        %v6131 = vsel %vm5212, %v6121, 0
        %v6134 = vsel %vm5212, %v6122, 0
        %v6137 = vsel %vm5212, %v6123, 0
        %v6140 = vsel %vm5212, %v6124, 0
        %v6143 = vsel %vm5212, %v6125, 0
        %6145 = vmatprep.subr.mxu0 0.0
        %6146 = vmatpush1.msra.mxu0 %v6126
        %6147 = vmatprep.subr.mxu0 0.0
        %6148 = vmatpush1.msra.mxu0 %v6127
        %6149 = vmatprep.subr.mxu0 0.0
        %6150 = vmatpush1.msra.mxu0 %v6128
        %6151 = vmatprep.subr.mxu0 0.0
        %6152 = vmatpush1.msra.mxu0 %v6129
        %6153 = vmatprep.subr.mxu0 0.0
        %6154 = vmatpush1.msra.mxu0 0.0
        %6155 = vmatprep.subr.mxu0 0.0
        %6156 = vmatpush1.msra.mxu0 0.0
        %6157 = vmatprep.subr.mxu0 0.0
        %6158 = vmatpush1.msra.mxu0 0.0
        %6159 = vmatprep.subr.mxu0 0.0
        %6160 = vmatpush1.msra.mxu0 0.0
        %6161 = vmatprep.subr.mxu0 0.0
        %6162 = vmatpush1.msra.mxu0 0.0
        %6163 = vmatprep.subr.mxu0 0.0
        %6164 = vmatpush1.msra.mxu0 0.0
        %6165 = vmatprep.subr.mxu0 0.0
        %6166 = vmatpush1.msra.mxu0 0.0
        %6167 = vmatprep.subr.mxu0 0.0
        %6168 = vmatpush1.msra.mxu0 0.0
        %6169 = vmatprep.subr.mxu0 0.0
        %6170 = vmatpush1.msra.mxu0 0.0
        %6171 = vmatprep.subr.mxu0 0.0
        %6172 = vmatpush1.msra.mxu0 0.0
        %6173 = vmatprep.subr.mxu0 0.0
        %6174 = vmatpush1.msra.mxu0 0.0
        %6175 = vmatprep.subr.mxu0 0.0
        %6176 = vmatpush1.msra.mxu0 0.0
        %6177 = vmatprep.subr.mxu0 0.0
        %6178 = vmatpush1.msra.mxu0 0.0
        %6179 = vmatprep.subr.mxu0 0.0
        %6180 = vmatpush1.msra.mxu0 0.0
        %6181 = vmatprep.subr.mxu0 0.0
        %6182 = vmatpush1.msra.mxu0 0.0
        %6183 = vmatprep.subr.mxu0 0.0
        %6184 = vmatpush1.msra.mxu0 0.0
        %6185 = vmatprep.subr.mxu0 0.0
        %6186 = vmatpush1.msra.mxu0 0.0
        %6187 = vmatprep.subr.mxu0 0.0
        %6188 = vmatpush1.msra.mxu0 0.0
        %6189 = vmatprep.subr.mxu0 0.0
        %6190 = vmatpush1.msra.mxu0 0.0
        %6191 = vmatprep.subr.mxu0 0.0
        %6192 = vmatpush1.msra.mxu0 0.0
        %6193 = vmatprep.subr.mxu0 0.0
        %6194 = vmatpush1.msra.mxu0 0.0
        %6195 = vmatprep.subr.mxu0 0.0
        %6196 = vmatpush1.msra.mxu0 0.0
        %6197 = vmatprep.subr.mxu0 0.0
        %6198 = vmatpush1.msra.mxu0 0.0
        %6199 = vmatprep.subr.mxu0 0.0
        %6200 = vmatpush1.msra.mxu0 0.0
        %6201 = vmatprep.subr.mxu0 0.0
        %6202 = vmatpush1.msra.mxu0 0.0
        %6203 = vmatprep.subr.mxu0 0.0
        %6204 = vmatpush1.msra.mxu0 0.0
        %6205 = vmatprep.subr.mxu0 0.0
        %6206 = vmatpush1.msra.mxu0 0.0
        %6207 = vmatprep.subr.mxu0 0.0
        %6208 = vmatpush1.msra.mxu0 0.0
        %6209 = vmatprep.mubr.f32.mxu0 0.0
        %6210 = vmatmul.mubr.f32.gmra.mrb[0].mxu0 %v6131
        %v6211 = vpop.f32.mrb[0].mxu0
        %v6212 = vadd.f32 0.0, %v6211
        %v6213 = vpop.f32.mrb[0].mxu0
        %6214 = vmatprep.mubr.f32.mxu0 0.0
        %6215 = vmatmul.mubr.f32.gmra.mrb[0].mxu0 %v6134
        %v6216 = vpop.f32.mrb[0].mxu0
        %v6217 = vadd.f32 0.0, %v6216
        %v6218 = vpop.f32.mrb[0].mxu0
        %6219 = vmatprep.mubr.f32.mxu0 0.0
        %6220 = vmatmul.mubr.f32.gmra.mrb[0].mxu0 %v6137
        %v6221 = vpop.f32.mrb[0].mxu0
        %v6222 = vadd.f32 0.0, %v6221
        %v6223 = vpop.f32.mrb[0].mxu0
        %6224 = vmatprep.mubr.f32.mxu0 0.0
        %6225 = vmatmul.mubr.f32.gmra.mrb[0].mxu0 %v6140
        %v6226 = vpop.f32.mrb[0].mxu0
        %v6227 = vadd.f32 0.0, %v6226
        %v6228 = vpop.f32.mrb[0].mxu0
        %6229 = vmatprep.mubr.f32.mxu0 0.0
        %6230 = vmatmul.mubr.f32.gmra.mrb[0].mxu0 %v6143
        %v6231 = vpop.f32.mrb[0].mxu0
        %v6232 = vadd.f32 0.0, %v6231
        %v6233 = vpop.f32.mrb[0].mxu0
        %6234 = vdwg.mxu0
        %v6235 = vadd.f32 %v6116, %v6212
        %v6236 = vadd.f32 %v6117, %v6217
        %v6237 = vadd.f32 %v6118, %v6222
        %v6238 = vadd.f32 %v6119, %v6227
        %v6239 = vadd.f32 %v6120, %v6232
        %v6240 = vld [vmem:[#allocation5 + $0xe] sm:$0xff]
        %v6241 = vld [vmem:[#allocation5 + $0x16] sm:$0xff]
        %v6242 = vld [vmem:[#allocation5 + $0x1e] sm:$0xff]
        %v6243 = vld [vmem:[#allocation5 + $0x26] sm:$0xff]
        %v6244 = vld [vmem:[#allocation5 + $0x2e] sm:$0xf]
        %v6245 = vld [vmem:[%s5 + $0x100] sm:$0xff]
        %v6246 = vld [vmem:[%s5 + $0x108] sm:$0xff]
        %v6247 = vld [vmem:[%s5 + $0x110] sm:$0xff]
        %v6248 = vld [vmem:[%s5 + $0x118] sm:$0xff]
        %v6250 = vsel %vm5212, %v6240, 0
        %v6253 = vsel %vm5212, %v6241, 0
        %v6256 = vsel %vm5212, %v6242, 0
        %v6259 = vsel %vm5212, %v6243, 0
        %v6262 = vsel %vm5212, %v6244, 0
        %6264 = vmatprep.subr.mxu0 0.0
        %6265 = vmatpush1.msra.mxu0 %v6245
        %6266 = vmatprep.subr.mxu0 0.0
        %6267 = vmatpush1.msra.mxu0 %v6246
        %6268 = vmatprep.subr.mxu0 0.0
        %6269 = vmatpush1.msra.mxu0 %v6247
        %6270 = vmatprep.subr.mxu0 0.0
        %6271 = vmatpush1.msra.mxu0 %v6248
        %6272 = vmatprep.subr.mxu0 0.0
        %6273 = vmatpush1.msra.mxu0 0.0
        %6274 = vmatprep.subr.mxu0 0.0
        %6275 = vmatpush1.msra.mxu0 0.0
        %6276 = vmatprep.subr.mxu0 0.0
        %6277 = vmatpush1.msra.mxu0 0.0
        %6278 = vmatprep.subr.mxu0 0.0
        %6279 = vmatpush1.msra.mxu0 0.0
        %6280 = vmatprep.subr.mxu0 0.0
        %6281 = vmatpush1.msra.mxu0 0.0
        %6282 = vmatprep.subr.mxu0 0.0
        %6283 = vmatpush1.msra.mxu0 0.0
        %6284 = vmatprep.subr.mxu0 0.0
        %6285 = vmatpush1.msra.mxu0 0.0
        %6286 = vmatprep.subr.mxu0 0.0
        %6287 = vmatpush1.msra.mxu0 0.0
        %6288 = vmatprep.subr.mxu0 0.0
        %6289 = vmatpush1.msra.mxu0 0.0
        %6290 = vmatprep.subr.mxu0 0.0
        %6291 = vmatpush1.msra.mxu0 0.0
        %6292 = vmatprep.subr.mxu0 0.0
        %6293 = vmatpush1.msra.mxu0 0.0
        %6294 = vmatprep.subr.mxu0 0.0
        %6295 = vmatpush1.msra.mxu0 0.0
        %6296 = vmatprep.subr.mxu0 0.0
        %6297 = vmatpush1.msra.mxu0 0.0
        %6298 = vmatprep.subr.mxu0 0.0
        %6299 = vmatpush1.msra.mxu0 0.0
        %6300 = vmatprep.subr.mxu0 0.0
        %6301 = vmatpush1.msra.mxu0 0.0
        %6302 = vmatprep.subr.mxu0 0.0
        %6303 = vmatpush1.msra.mxu0 0.0
        %6304 = vmatprep.subr.mxu0 0.0
        %6305 = vmatpush1.msra.mxu0 0.0
        %6306 = vmatprep.subr.mxu0 0.0
        %6307 = vmatpush1.msra.mxu0 0.0
        %6308 = vmatprep.subr.mxu0 0.0
        %6309 = vmatpush1.msra.mxu0 0.0
        %6310 = vmatprep.subr.mxu0 0.0
        %6311 = vmatpush1.msra.mxu0 0.0
        %6312 = vmatprep.subr.mxu0 0.0
        %6313 = vmatpush1.msra.mxu0 0.0
        %6314 = vmatprep.subr.mxu0 0.0
        %6315 = vmatpush1.msra.mxu0 0.0
        %6316 = vmatprep.subr.mxu0 0.0
        %6317 = vmatpush1.msra.mxu0 0.0
        %6318 = vmatprep.subr.mxu0 0.0
        %6319 = vmatpush1.msra.mxu0 0.0
        %6320 = vmatprep.subr.mxu0 0.0
        %6321 = vmatpush1.msra.mxu0 0.0
        %6322 = vmatprep.subr.mxu0 0.0
        %6323 = vmatpush1.msra.mxu0 0.0
        %6324 = vmatprep.subr.mxu0 0.0
        %6325 = vmatpush1.msra.mxu0 0.0
        %6326 = vmatprep.subr.mxu0 0.0
        %6327 = vmatpush1.msra.mxu0 0.0
        %6328 = vmatprep.mubr.f32.mxu0 0.0
        %6329 = vmatmul.mubr.f32.gmra.mrb[0].mxu0 %v6250
        %v6330 = vpop.f32.mrb[0].mxu0
        %v6331 = vadd.f32 0.0, %v6330
        %v6332 = vpop.f32.mrb[0].mxu0
        %6333 = vmatprep.mubr.f32.mxu0 0.0
        %6334 = vmatmul.mubr.f32.gmra.mrb[0].mxu0 %v6253
        %v6335 = vpop.f32.mrb[0].mxu0
        %v6336 = vadd.f32 0.0, %v6335
        %v6337 = vpop.f32.mrb[0].mxu0
        %6338 = vmatprep.mubr.f32.mxu0 0.0
        %6339 = vmatmul.mubr.f32.gmra.mrb[0].mxu0 %v6256
        %v6340 = vpop.f32.mrb[0].mxu0
        %v6341 = vadd.f32 0.0, %v6340
        %v6342 = vpop.f32.mrb[0].mxu0
        %6343 = vmatprep.mubr.f32.mxu0 0.0
        %6344 = vmatmul.mubr.f32.gmra.mrb[0].mxu0 %v6259
        %v6345 = vpop.f32.mrb[0].mxu0
        %v6346 = vadd.f32 0.0, %v6345
        %v6347 = vpop.f32.mrb[0].mxu0
        %6348 = vmatprep.mubr.f32.mxu0 0.0
        %6349 = vmatmul.mubr.f32.gmra.mrb[0].mxu0 %v6262
        %v6350 = vpop.f32.mrb[0].mxu0
        %v6351 = vadd.f32 0.0, %v6350
        %v6352 = vpop.f32.mrb[0].mxu0
        %6353 = vdwg.mxu0
        %v6354 = vadd.f32 %v6235, %v6331
        %v6355 = vadd.f32 %v6236, %v6336
        %v6356 = vadd.f32 %v6237, %v6341
        %v6357 = vadd.f32 %v6238, %v6346
        %v6358 = vadd.f32 %v6239, %v6351
        %6359 = vst.msk [vmem:[#allocation6] sm:$0xff] %vm3286, %v6354
        %6360 = vst.msk [vmem:[#allocation6 + $0x8] sm:$0xff] %vm3286, %v6355
        %6361 = vst.msk [vmem:[#allocation6 + $0x10] sm:$0xff] %vm3286, %v6356
        %6362 = vst.msk [vmem:[#allocation6 + $0x18] sm:$0xff] %vm3286, %v6357
        %6363 = vst.msk [vmem:[#allocation6 + $0x20] sm:$0xf] %vm3327, %v6358
        %v6364 = vld [vmem:[#allocation6 + $0x7] sm:$0xf]
        %v6365 = vld [vmem:[#allocation6 + $0xd] sm:$0xf]
        %v6366 = vmax.f32 %v6364, %v6365
        %v6367 = vld [vmem:[#allocation6 + $0x13] sm:$0xf]
        %v6368 = vmax.f32 %v6366, %v6367
        %v6369 = vld [vmem:[#allocation6 + $0x19] sm:$0xf]
        %v6370 = vmax.f32 %v6368, %v6369
        %v6371 = vsel %vm3327, %v6370, -inf
        %v6372 = vrot.slane %v6371, 4
        %v6373 = vmax.f32 %v6371, %v6372
        %v6374 = vrot.slane %v6373, 2
        %v6375 = vmax.f32 %v6373, %v6374
        %v6376 = vrot.slane %v6375, 1
        %v6377 = vmax.f32 %v6375, %v6376
        %vm6378 = vcmask 122880
        %6379 = vst.msk [vmem:[#allocation7] sm:$0x1] %vm6378, %v6377
        %v6380 = vld [vmem:[#allocation7] sm:$0x1]
        %v6381 = vld [vmem:[%s6] sm:$0x1]
        %v6382 = vadd.f32 %v6380, %v6381
        %v6383 = vmax.f32 %v6382, 0.0
        %v6384 = vld [vmem:[%s7] sm:$0xff]
        %v6385 = vld [vmem:[%s7 + $0x8] sm:$0xff]
        %v6386 = vld [vmem:[%s8] sm:$0x1]
        %v6388 = vsel %vm3286, %v6383, 0
        %6390 = vmatprep.subr.mxu0 0.0
        %6391 = vmatpush1.msra.mxu0 %v6384
        %6392 = vmatprep.subr.mxu0 0.0
        %6393 = vmatpush1.msra.mxu0 %v6385
        %6394 = vmatprep.subr.mxu0 0.0
        %6395 = vmatpush1.msra.mxu0 0.0
        %6396 = vmatprep.subr.mxu0 0.0
        %6397 = vmatpush1.msra.mxu0 0.0
        %6398 = vmatprep.subr.mxu0 0.0
        %6399 = vmatpush1.msra.mxu0 0.0
        %6400 = vmatprep.subr.mxu0 0.0
        %6401 = vmatpush1.msra.mxu0 0.0
        %6402 = vmatprep.subr.mxu0 0.0
        %6403 = vmatpush1.msra.mxu0 0.0
        %6404 = vmatprep.subr.mxu0 0.0
        %6405 = vmatpush1.msra.mxu0 0.0
        %6406 = vmatprep.subr.mxu0 0.0
        %6407 = vmatpush1.msra.mxu0 0.0
        %6408 = vmatprep.subr.mxu0 0.0
        %6409 = vmatpush1.msra.mxu0 0.0
        %6410 = vmatprep.subr.mxu0 0.0
        %6411 = vmatpush1.msra.mxu0 0.0
        %6412 = vmatprep.subr.mxu0 0.0
        %6413 = vmatpush1.msra.mxu0 0.0
        %6414 = vmatprep.subr.mxu0 0.0
        %6415 = vmatpush1.msra.mxu0 0.0
        %6416 = vmatprep.subr.mxu0 0.0
        %6417 = vmatpush1.msra.mxu0 0.0
        %6418 = vmatprep.subr.mxu0 0.0
        %6419 = vmatpush1.msra.mxu0 0.0
        %6420 = vmatprep.subr.mxu0 0.0
        %6421 = vmatpush1.msra.mxu0 0.0
        %6422 = vmatprep.subr.mxu0 0.0
        %6423 = vmatpush1.msra.mxu0 0.0
        %6424 = vmatprep.subr.mxu0 0.0
        %6425 = vmatpush1.msra.mxu0 0.0
        %6426 = vmatprep.subr.mxu0 0.0
        %6427 = vmatpush1.msra.mxu0 0.0
        %6428 = vmatprep.subr.mxu0 0.0
        %6429 = vmatpush1.msra.mxu0 0.0
        %6430 = vmatprep.subr.mxu0 0.0
        %6431 = vmatpush1.msra.mxu0 0.0
        %6432 = vmatprep.subr.mxu0 0.0
        %6433 = vmatpush1.msra.mxu0 0.0
        %6434 = vmatprep.subr.mxu0 0.0
        %6435 = vmatpush1.msra.mxu0 0.0
        %6436 = vmatprep.subr.mxu0 0.0
        %6437 = vmatpush1.msra.mxu0 0.0
        %6438 = vmatprep.subr.mxu0 0.0
        %6439 = vmatpush1.msra.mxu0 0.0
        %6440 = vmatprep.subr.mxu0 0.0
        %6441 = vmatpush1.msra.mxu0 0.0
        %6442 = vmatprep.subr.mxu0 0.0
        %6443 = vmatpush1.msra.mxu0 0.0
        %6444 = vmatprep.subr.mxu0 0.0
        %6445 = vmatpush1.msra.mxu0 0.0
        %6446 = vmatprep.subr.mxu0 0.0
        %6447 = vmatpush1.msra.mxu0 0.0
        %6448 = vmatprep.subr.mxu0 0.0
        %6449 = vmatpush1.msra.mxu0 0.0
        %6450 = vmatprep.subr.mxu0 0.0
        %6451 = vmatpush1.msra.mxu0 0.0
        %6452 = vmatprep.subr.mxu0 0.0
        %6453 = vmatpush1.msra.mxu0 0.0
        %6454 = vmatprep.mubr.f32.mxu0 0.0
        %6455 = vmatmul.mubr.f32.gmra.mrb[0].mxu0 %v6388
        %v6456 = vpop.f32.mrb[0].mxu0
        %v6457 = vadd.f32 %v6386, %v6456
        %v6458 = vpop.f32.mrb[0].mxu0
        %6459 = vdwg.mxu0
        %vm6460 = vcmask 73728
        %6461 = vst.msk [vmem:[%s324] sm:$0x1] %vm6460, %v6457
        %s6462 = sand.u32 %s225, 1
        %s6463 = scalar_lea.sflag [#allocation9], %s6462
        %s6464 = sand.u32 %s225, 1
        %s6465 = scalar_lea.vmem [#allocation8], %s6464
        // Predicated region
        $region57: #{_lambda_.1} parent=55 // pred_check
          %p6466 = pneg %p235
        $region58: #{_lambda_.1} parent=55 // pred_check_branch
          %6468 = sbr.rel (%p6466) target = $region60
        $region59: #{_lambda_.1} parent=55 // pred_region
          %s6470 = ssub.s32 16, 16
          %6471 = vsyncadd %s6463, %s6470
          %s6472 = smul.addr %s23, 16
          %s6473 = scalar_lea.hbm %s9, %s6472
          %s6475 = sshll.u32 %s6465, 4
          %s6476 = int_to_ptr.vmem [resolvable:$true] %s6475
          %6478 = dma.vmem_to_hbm [thread:$0]  %s6476, 16, %s6473, %s6463
        $region60: #{_lambda_.1} parent=55 // pred_fallthru
          _
      $region56: #{_lambda_.1} parent=5 // pred_fallthru
        _
      %p6479 = scmp.le.s32.totalorder 2, %s18
      // Predicated region
      $region61: #{_lambda_.1} parent=5 // pred_check
        %p6480 = pneg %p6479
      $region62: #{_lambda_.1} parent=5 // pred_check_branch
        %6482 = sbr.rel (%p6480) target = $region64
      $region63: #{_lambda_.1} parent=5 // pred_region
        %s6483 = ssub.s32 %s18, 2
        // Predicated region
        $region65: #{_lambda_.1} parent=63 // pred_check
          %p6484 = pneg %p241
        $region66: #{_lambda_.1} parent=63 // pred_check_branch
          %6486 = sbr.rel (%p6484) target = $region68
        $region67: #{_lambda_.1} parent=63 // pred_region
          %s6487 = sand.u32 %s226, 1
          %s6488 = scalar_lea.sflag [#allocation9], %s6487
          %s6489 = sand.u32 %s226, 1
          %s6490 = scalar_lea.vmem [#allocation8], %s6489
          %6491 = dma.done %s6488, 16
        $region68: #{_lambda_.1} parent=63 // pred_fallthru
          _
      $region64: #{_lambda_.1} parent=5 // pred_fallthru
        _
    $region6: #{_lambda_.1} parent=1 // loop_footer
      %s22 = sadd.s32 1, %s18
    $region7: #{_lambda_.1} parent=1 // loop_footer_branch
      %17 = sbr.rel target = $region3
    $region8: #{_lambda_.1} parent=1 // loop_exit
      _
    %6492 = vsyncpa [#allocation9], 1
    %s6493 = scalar_lea.sflag [#allocation9], 1
    %6494 = vsyncpa %s6493, 1

</llo_original>
